<compile_context>
chip_gen: v5e
topology: v5e:2x2
jax: 0.10.0
libtpu: 0.0.40
codegen_flags: <defaults>
</compile_context>

<pallas_src>
import functools

import jax
import jax.numpy as jnp
from jax.experimental import pallas as pl
from jax.experimental.pallas import tpu as pltpu


LANE = 128
SUBLANE = 8


def _round_up(n: int, m: int) -> int:
    return ((n + m - 1) // m) * m


def _device_kind() -> str:
    try:
        return jax.devices()[0].device_kind.lower()
    except Exception:
        return ""


def _chip_config(kind: str) -> dict:
    """Per-generation tiling / VMEM / epilogue choices."""
    is_v5 = "v5" in kind
    is_v7 = ("7" in kind) and not is_v5 and ("v6" not in kind)
    if is_v5:
        # v5e: 128x128 MXU, no bf16 VALU, 128 MiB VMEM.
        return dict(align=128, cap=512, vmem=64 << 20, bf16_epi=False, min_steps=1)
    if is_v7:
        # v7x: 64 MiB VMEM/TC, 2 TCs -> want >=2 grid steps for large batches.
        return dict(align=128, cap=256, vmem=48 << 20, bf16_epi=True, min_steps=2)
    # v6e (or unknown chip: conservative f32 epilogue).
    return dict(align=256, cap=512, vmem=64 << 20, bf16_epi=("v6" in kind),
                min_steps=1)


def _pick_batch_tile(batch: int, cfg: dict) -> int:
    """Pick an MXU-friendly batch tile; avoid padding when a tile divides."""
    b8 = _round_up(batch, SUBLANE)
    align, cap = cfg["align"], cfg["cap"]
    if b8 <= align:
        tile = b8
    else:
        tile = align
        for cand in range(cap, align - 1, -align):
            if b8 % cand == 0:
                tile = cand
                break
    # v7x: make sure the ("parallel",) batch grid has >= 2 steps (one per TC)
    # once the batch is large enough to be worth splitting.
    if cfg["min_steps"] > 1 and b8 >= 2 * align:
        while tile > align and _round_up(batch, tile) // tile < cfg["min_steps"]:
            tile = max(align, _round_up(tile // 2, SUBLANE))
    return tile


# ---------------------------------------------------------------------------
# Fused MLP kernel: chained Linear (+ optional ReLU) layers, all in VMEM.
# ---------------------------------------------------------------------------
def _fused_mlp_kernel(x_ref, *refs, relu_flags, bf16_epilogue):
    """refs = (w0, b0, w1, b1, ..., w_{L-1}, b_{L-1}, o_ref).

    x_ref : (tile, in_pad) bf16
    w_l   : (in_pad_l, out_pad_l) bf16      b_l : (1, out_pad_l) f32
    """
    o_ref = refs[-1]
    wb = refs[:-1]

    h = x_ref[...]                               # bf16 activations
    for l, relu in enumerate(relu_flags):
        w = wb[2 * l][...]                       # bf16 weights
        b = wb[2 * l + 1][...]                   # f32 bias (1, out_pad)
        acc = jnp.dot(h.astype(jnp.bfloat16), w,
                      preferred_element_type=jnp.float32)   # MXU, f32 acc
        if relu:
            if bf16_epilogue:
                # v6e/v7x: one f32->bf16 cast, then bf16 bias add + ReLU (VALU).
                h = jnp.maximum(acc.astype(jnp.bfloat16)
                                + b.astype(jnp.bfloat16), 0.0)
            else:
                # v5e: f32 epilogue (no bf16 VALU).
                h = jnp.maximum(acc + b, 0.0)
        else:
            h = acc + b                          # final layer: stay f32
    o_ref[...] = h.astype(o_ref.dtype)


def fused_mlp(layers, x, out_features):
    """Run a chain of (w_pad_bf16, b_pad_f32, relu) layers in one pallas_call.

    x: (batch, in_pad) array; in_pad multiple of 128.
    Returns (batch, out_features) f32.
    """
    batch, in_pad = x.shape
    out_pad = layers[-1][0].shape[1]

    kind = _device_kind()
    cfg = _chip_config(kind)
    batch_tile = _pick_batch_tile(batch, cfg)
    padded_batch = _round_up(batch, batch_tile)

    x = x.astype(jnp.bfloat16)                   # halve input DMA bytes
    if padded_batch != batch:
        x = jnp.pad(x, ((0, padded_batch - batch), (0, 0)))
    grid = (padded_batch // batch_tile,)

    relu_flags = tuple(bool(r) for (_, _, r) in layers)

    in_specs = [pl.BlockSpec((batch_tile, in_pad), lambda i: (i, 0))]
    params = []
    flops = 0
    param_bytes = 0
    for w, b, _ in layers:
        # Constant params: full-array, single-buffered, VMEM-resident.
        in_specs.append(pl.BlockSpec(memory_space=pltpu.MemorySpace.VMEM))
        in_specs.append(pl.BlockSpec(memory_space=pltpu.MemorySpace.VMEM))
        params.append(w)
        params.append(b)
        flops += 2 * padded_batch * w.shape[0] * w.shape[1]
        param_bytes += w.size * w.dtype.itemsize + b.size * b.dtype.itemsize
    out_specs = pl.BlockSpec((batch_tile, out_pad), lambda i: (i, 0))

    bytes_accessed = param_bytes + x.size * 2 + padded_batch * out_pad * 4

    out = pl.pallas_call(
        functools.partial(_fused_mlp_kernel, relu_flags=relu_flags,
                          bf16_epilogue=cfg["bf16_epi"]),
        grid=grid,
        in_specs=in_specs,
        out_specs=out_specs,
        out_shape=jax.ShapeDtypeStruct((padded_batch, out_pad), jnp.float32),
        compiler_params=pltpu.CompilerParams(
            dimension_semantics=("parallel",),
            vmem_limit_bytes=cfg["vmem"],
        ),
        # Advisory cost so XLA can overlap the one-shot weight DMA when grid=(1,).
        # TODO(synk): for latency-critical serving, prefetch params via a prior
        # pallas_call (cross-call future, P10) instead of relying on the hint.
        cost_estimate=pl.CostEstimate(
            flops=flops, transcendentals=0, bytes_accessed=bytes_accessed),
    )(x, *params)

    # Single fused slice back to (batch, true_features).
    return out[:batch, :out_features]


# ---------------------------------------------------------------------------
# AutoencoderV2 parameters & forward
# ---------------------------------------------------------------------------
def init_autoencoder_params(key, input_features: int, hidden_features: int = 125):
    """nn.Linear-style init (uniform +-1/sqrt(fan_in)) at true dims, zero-padded
    to 128-lane multiples.  Weights stored transposed (in, out) in bf16; biases
    stored as (1, out_pad) f32 (cast per-chip inside the kernel)."""
    enc_dims = [input_features, 1000, 500, 250, hidden_features]
    dec_dims = [hidden_features, 250, 500, 1000, input_features]

    def make_layers(dims, key):
        layers = []
        for fan_in, fan_out in zip(dims[:-1], dims[1:]):
            key, kw, kb = jax.random.split(key, 3)
            bound = 1.0 / jnp.sqrt(jnp.float32(fan_in))
            w_t = jax.random.uniform(kw, (fan_in, fan_out), jnp.float32,
                                     minval=-bound, maxval=bound)
            b = jax.random.uniform(kb, (fan_out,), jnp.float32,
                                   minval=-bound, maxval=bound)
            in_pad = _round_up(fan_in, LANE)
            out_pad = _round_up(fan_out, LANE)
            # Zero padding: padded output lanes produce exactly 0 (zero weight
            # cols + zero bias); padded input rows multiply zero activations.
            w_pad = jnp.zeros((in_pad, out_pad), jnp.float32)
            w_pad = w_pad.at[:fan_in, :fan_out].set(w_t)
            b_pad = jnp.zeros((1, out_pad), jnp.float32).at[0, :fan_out].set(b)
            layers.append((w_pad.astype(jnp.bfloat16), b_pad))
        return layers, key

    encoder, key = make_layers(enc_dims, key)
    decoder, key = make_layers(dec_dims, key)
    return {
        "encoder": encoder,
        "decoder": decoder,
        "input_features": input_features,
        "hidden_features": hidden_features,
    }


def _pad_input(x, in_features):
    in_pad = _round_up(in_features, LANE)
    if in_pad != x.shape[1]:
        x = jnp.pad(x, ((0, 0), (0, in_pad - x.shape[1])))
    return x


def encode(params, x):
    """Latent representation: 4 encoder layers, all with ReLU, one kernel."""
    layers = [(w, b, True) for (w, b) in params["encoder"]]
    x = _pad_input(x, params["input_features"])
    return fused_mlp(layers, x, params["hidden_features"])


def autoencoder_forward(params, x):
    """Full forward: 8 layers, ReLU everywhere except the final layer."""
    enc = [(w, b, True) for (w, b) in params["encoder"]]
    dec = params["decoder"]
    dec_layers = [(w, b, i != len(dec) - 1) for i, (w, b) in enumerate(dec)]
    x = _pad_input(x, params["input_features"])
    return fused_mlp(enc + dec_layers, x, params["input_features"])


# ---------------------------------------------------------------------------
# Reference (pure JAX, identical bf16 math) for sanity check
# ---------------------------------------------------------------------------
def _reference_mlp(layers, x, out_features, bf16_epilogue):
    h = x.astype(jnp.bfloat16)
    for w, b, relu in layers:
        acc = jnp.dot(h.astype(jnp.bfloat16), w,
                      preferred_element_type=jnp.float32)
        if relu:
            if bf16_epilogue:
                h = jnp.maximum(acc.astype(jnp.bfloat16)
                                + b.astype(jnp.bfloat16), 0.0)
            else:
                h = jnp.maximum(acc + b, 0.0)
        else:
            h = acc + b
    return h.astype(jnp.float32)[:, :out_features]


def _reference_forward(params, x):
    enc = [(w, b, True) for (w, b) in params["encoder"]]
    dec = params["decoder"]
    dec_layers = [(w, b, i != len(dec) - 1) for i, (w, b) in enumerate(dec)]
    xp = _pad_input(x, params["input_features"])
    bf16_epi = _chip_config(_device_kind())["bf16_epi"]
    return _reference_mlp(enc + dec_layers, xp, params["input_features"], bf16_epi)


if __name__ == "__main__":
    batch = 8
    input_features = 256
    hidden_features = 125

    key = jax.random.PRNGKey(0)
    key, kparams, kx = jax.random.split(key, 3)

    params = init_autoencoder_params(kparams, input_features, hidden_features)
    x = jax.random.normal(kx, (batch, input_features), jnp.float32)

    out = jax.block_until_ready(autoencoder_forward(params, x))
    assert out.shape == (batch, input_features), out.shape

    lat = jax.block_until_ready(encode(params, x))
    assert lat.shape == (batch, hidden_features), lat.shape

    ref = _reference_forward(params, x)
    assert jnp.allclose(out, ref, atol=1e-2, rtol=1e-2), "mismatch vs reference"

    print("KERNEL_OK")
</pallas_src>

<mosaic_0001>
module attributes {stable_mosaic.version = 11 : i64} {
  func.func @_fused_mlp_kernel(%arg0: i32, %arg1: memref<8x256xbf16, #tpu.memory_space<vmem>>, %arg2: memref<256x1024xbf16, #tpu.memory_space<vmem>>, %arg3: memref<1x1024xf32, #tpu.memory_space<vmem>>, %arg4: memref<1024x512xbf16, #tpu.memory_space<vmem>>, %arg5: memref<1x512xf32, #tpu.memory_space<vmem>>, %arg6: memref<512x256xbf16, #tpu.memory_space<vmem>>, %arg7: memref<1x256xf32, #tpu.memory_space<vmem>>, %arg8: memref<256x128xbf16, #tpu.memory_space<vmem>>, %arg9: memref<1x128xf32, #tpu.memory_space<vmem>>, %arg10: memref<128x256xbf16, #tpu.memory_space<vmem>>, %arg11: memref<1x256xf32, #tpu.memory_space<vmem>>, %arg12: memref<256x512xbf16, #tpu.memory_space<vmem>>, %arg13: memref<1x512xf32, #tpu.memory_space<vmem>>, %arg14: memref<512x1024xbf16, #tpu.memory_space<vmem>>, %arg15: memref<1x1024xf32, #tpu.memory_space<vmem>>, %arg16: memref<1024x256xbf16, #tpu.memory_space<vmem>>, %arg17: memref<1x256xf32, #tpu.memory_space<vmem>>, %arg18: memref<8x256xf32, #tpu.memory_space<vmem>>) attributes {dimension_semantics = [#tpu.dimension_semantics<parallel>], iteration_bounds = array<i64: 1>, scalar_prefetch = 0 : i64, scratch_operands = 0 : i64, tpu.core_type = #tpu.core_type<tc>, window_params = [{transform_indices = @transform_0, window_bounds = array<i64: 8, 256>}, {pipeline_mode = #tpu.pipeline_mode<synchronous>, transform_indices = @transform_1, window_bounds = array<i64: 256, 1024>}, {pipeline_mode = #tpu.pipeline_mode<synchronous>, transform_indices = @transform_2, window_bounds = array<i64: 1, 1024>}, {pipeline_mode = #tpu.pipeline_mode<synchronous>, transform_indices = @transform_3, window_bounds = array<i64: 1024, 512>}, {pipeline_mode = #tpu.pipeline_mode<synchronous>, transform_indices = @transform_4, window_bounds = array<i64: 1, 512>}, {pipeline_mode = #tpu.pipeline_mode<synchronous>, transform_indices = @transform_5, window_bounds = array<i64: 512, 256>}, {pipeline_mode = #tpu.pipeline_mode<synchronous>, transform_indices = @transform_6, window_bounds = array<i64: 1, 256>}, {pipeline_mode = #tpu.pipeline_mode<synchronous>, transform_indices = @transform_7, window_bounds = array<i64: 256, 128>}, {pipeline_mode = #tpu.pipeline_mode<synchronous>, transform_indices = @transform_8, window_bounds = array<i64: 1, 128>}, {pipeline_mode = #tpu.pipeline_mode<synchronous>, transform_indices = @transform_9, window_bounds = array<i64: 128, 256>}, {pipeline_mode = #tpu.pipeline_mode<synchronous>, transform_indices = @transform_10, window_bounds = array<i64: 1, 256>}, {pipeline_mode = #tpu.pipeline_mode<synchronous>, transform_indices = @transform_11, window_bounds = array<i64: 256, 512>}, {pipeline_mode = #tpu.pipeline_mode<synchronous>, transform_indices = @transform_12, window_bounds = array<i64: 1, 512>}, {pipeline_mode = #tpu.pipeline_mode<synchronous>, transform_indices = @transform_13, window_bounds = array<i64: 512, 1024>}, {pipeline_mode = #tpu.pipeline_mode<synchronous>, transform_indices = @transform_14, window_bounds = array<i64: 1, 1024>}, {pipeline_mode = #tpu.pipeline_mode<synchronous>, transform_indices = @transform_15, window_bounds = array<i64: 1024, 256>}, {pipeline_mode = #tpu.pipeline_mode<synchronous>, transform_indices = @transform_16, window_bounds = array<i64: 1, 256>}, {transform_indices = @transform_17, window_bounds = array<i64: 8, 256>}]} {
    %c0 = arith.constant 0 : index
    %c0_0 = arith.constant 0 : index
    %0 = vector.load %arg1[%c0, %c0_0] : memref<8x256xbf16, #tpu.memory_space<vmem>>, vector<8x256xbf16>
    %c0_1 = arith.constant 0 : index
    %c0_2 = arith.constant 0 : index
    %1 = vector.load %arg2[%c0_1, %c0_2] : memref<256x1024xbf16, #tpu.memory_space<vmem>>, vector<256x1024xbf16>
    %c0_3 = arith.constant 0 : index
    %c0_4 = arith.constant 0 : index
    %2 = vector.load %arg3[%c0_3, %c0_4] : memref<1x1024xf32, #tpu.memory_space<vmem>>, vector<1x1024xf32>
    %cst = arith.constant dense<0.000000e+00> : vector<8x1024xf32>
    %3 = tpu.matmul %0, %1, %cst {dimension_numbers = #tpu.dot_dimension_numbers<[1], [0], [0], [1], [0, 0, 1, 1], [], []>} : vector<8x256xbf16>, vector<256x1024xbf16>, vector<8x1024xf32> -> vector<8x1024xf32>
    %4 = vector.broadcast %2 : vector<1x1024xf32> to vector<8x1024xf32>
    %5 = arith.addf %3, %4 : vector<8x1024xf32>
    %cst_5 = arith.constant 0.000000e+00 : f32
    %6 = vector.broadcast %cst_5 : f32 to vector<8x1024xf32>
    %7 = arith.maximumf %5, %6 : vector<8x1024xf32>
    %c0_6 = arith.constant 0 : index
    %c0_7 = arith.constant 0 : index
    %8 = vector.load %arg4[%c0_6, %c0_7] : memref<1024x512xbf16, #tpu.memory_space<vmem>>, vector<1024x512xbf16>
    %c0_8 = arith.constant 0 : index
    %c0_9 = arith.constant 0 : index
    %9 = vector.load %arg5[%c0_8, %c0_9] : memref<1x512xf32, #tpu.memory_space<vmem>>, vector<1x512xf32>
    %10 = arith.truncf %7 : vector<8x1024xf32> to vector<8x1024xbf16>
    %cst_10 = arith.constant dense<0.000000e+00> : vector<8x512xf32>
    %11 = tpu.matmul %10, %8, %cst_10 {dimension_numbers = #tpu.dot_dimension_numbers<[1], [0], [0], [1], [0, 0, 1, 1], [], []>} : vector<8x1024xbf16>, vector<1024x512xbf16>, vector<8x512xf32> -> vector<8x512xf32>
    %12 = vector.broadcast %9 : vector<1x512xf32> to vector<8x512xf32>
    %13 = arith.addf %11, %12 : vector<8x512xf32>
    %cst_11 = arith.constant 0.000000e+00 : f32
    %14 = vector.broadcast %cst_11 : f32 to vector<8x512xf32>
    %15 = arith.maximumf %13, %14 : vector<8x512xf32>
    %c0_12 = arith.constant 0 : index
    %c0_13 = arith.constant 0 : index
    %16 = vector.load %arg6[%c0_12, %c0_13] : memref<512x256xbf16, #tpu.memory_space<vmem>>, vector<512x256xbf16>
    %c0_14 = arith.constant 0 : index
    %c0_15 = arith.constant 0 : index
    %17 = vector.load %arg7[%c0_14, %c0_15] : memref<1x256xf32, #tpu.memory_space<vmem>>, vector<1x256xf32>
    %18 = arith.truncf %15 : vector<8x512xf32> to vector<8x512xbf16>
    %cst_16 = arith.constant dense<0.000000e+00> : vector<8x256xf32>
    %19 = tpu.matmul %18, %16, %cst_16 {dimension_numbers = #tpu.dot_dimension_numbers<[1], [0], [0], [1], [0, 0, 1, 1], [], []>} : vector<8x512xbf16>, vector<512x256xbf16>, vector<8x256xf32> -> vector<8x256xf32>
    %20 = vector.broadcast %17 : vector<1x256xf32> to vector<8x256xf32>
    %21 = arith.addf %19, %20 : vector<8x256xf32>
    %cst_17 = arith.constant 0.000000e+00 : f32
    %22 = vector.broadcast %cst_17 : f32 to vector<8x256xf32>
    %23 = arith.maximumf %21, %22 : vector<8x256xf32>
    %c0_18 = arith.constant 0 : index
    %c0_19 = arith.constant 0 : index
    %24 = vector.load %arg8[%c0_18, %c0_19] : memref<256x128xbf16, #tpu.memory_space<vmem>>, vector<256x128xbf16>
    %c0_20 = arith.constant 0 : index
    %c0_21 = arith.constant 0 : index
    %25 = vector.load %arg9[%c0_20, %c0_21] : memref<1x128xf32, #tpu.memory_space<vmem>>, vector<1x128xf32>
    %26 = arith.truncf %23 : vector<8x256xf32> to vector<8x256xbf16>
    %cst_22 = arith.constant dense<0.000000e+00> : vector<8x128xf32>
    %27 = tpu.matmul %26, %24, %cst_22 {dimension_numbers = #tpu.dot_dimension_numbers<[1], [0], [0], [1], [0, 0, 1, 1], [], []>} : vector<8x256xbf16>, vector<256x128xbf16>, vector<8x128xf32> -> vector<8x128xf32>
    %28 = vector.broadcast %25 : vector<1x128xf32> to vector<8x128xf32>
    %29 = arith.addf %27, %28 : vector<8x128xf32>
    %cst_23 = arith.constant 0.000000e+00 : f32
    %30 = vector.broadcast %cst_23 : f32 to vector<8x128xf32>
    %31 = arith.maximumf %29, %30 : vector<8x128xf32>
    %c0_24 = arith.constant 0 : index
    %c0_25 = arith.constant 0 : index
    %32 = vector.load %arg10[%c0_24, %c0_25] : memref<128x256xbf16, #tpu.memory_space<vmem>>, vector<128x256xbf16>
    %c0_26 = arith.constant 0 : index
    %c0_27 = arith.constant 0 : index
    %33 = vector.load %arg11[%c0_26, %c0_27] : memref<1x256xf32, #tpu.memory_space<vmem>>, vector<1x256xf32>
    %34 = arith.truncf %31 : vector<8x128xf32> to vector<8x128xbf16>
    %cst_28 = arith.constant dense<0.000000e+00> : vector<8x256xf32>
    %35 = tpu.matmul %34, %32, %cst_28 {dimension_numbers = #tpu.dot_dimension_numbers<[1], [0], [0], [1], [0, 0, 1, 1], [], []>} : vector<8x128xbf16>, vector<128x256xbf16>, vector<8x256xf32> -> vector<8x256xf32>
    %36 = vector.broadcast %33 : vector<1x256xf32> to vector<8x256xf32>
    %37 = arith.addf %35, %36 : vector<8x256xf32>
    %cst_29 = arith.constant 0.000000e+00 : f32
    %38 = vector.broadcast %cst_29 : f32 to vector<8x256xf32>
    %39 = arith.maximumf %37, %38 : vector<8x256xf32>
    %c0_30 = arith.constant 0 : index
    %c0_31 = arith.constant 0 : index
    %40 = vector.load %arg12[%c0_30, %c0_31] : memref<256x512xbf16, #tpu.memory_space<vmem>>, vector<256x512xbf16>
    %c0_32 = arith.constant 0 : index
    %c0_33 = arith.constant 0 : index
    %41 = vector.load %arg13[%c0_32, %c0_33] : memref<1x512xf32, #tpu.memory_space<vmem>>, vector<1x512xf32>
    %42 = arith.truncf %39 : vector<8x256xf32> to vector<8x256xbf16>
    %cst_34 = arith.constant dense<0.000000e+00> : vector<8x512xf32>
    %43 = tpu.matmul %42, %40, %cst_34 {dimension_numbers = #tpu.dot_dimension_numbers<[1], [0], [0], [1], [0, 0, 1, 1], [], []>} : vector<8x256xbf16>, vector<256x512xbf16>, vector<8x512xf32> -> vector<8x512xf32>
    %44 = vector.broadcast %41 : vector<1x512xf32> to vector<8x512xf32>
    %45 = arith.addf %43, %44 : vector<8x512xf32>
    %cst_35 = arith.constant 0.000000e+00 : f32
    %46 = vector.broadcast %cst_35 : f32 to vector<8x512xf32>
    %47 = arith.maximumf %45, %46 : vector<8x512xf32>
    %c0_36 = arith.constant 0 : index
    %c0_37 = arith.constant 0 : index
    %48 = vector.load %arg14[%c0_36, %c0_37] : memref<512x1024xbf16, #tpu.memory_space<vmem>>, vector<512x1024xbf16>
    %c0_38 = arith.constant 0 : index
    %c0_39 = arith.constant 0 : index
    %49 = vector.load %arg15[%c0_38, %c0_39] : memref<1x1024xf32, #tpu.memory_space<vmem>>, vector<1x1024xf32>
    %50 = arith.truncf %47 : vector<8x512xf32> to vector<8x512xbf16>
    %cst_40 = arith.constant dense<0.000000e+00> : vector<8x1024xf32>
    %51 = tpu.matmul %50, %48, %cst_40 {dimension_numbers = #tpu.dot_dimension_numbers<[1], [0], [0], [1], [0, 0, 1, 1], [], []>} : vector<8x512xbf16>, vector<512x1024xbf16>, vector<8x1024xf32> -> vector<8x1024xf32>
    %52 = vector.broadcast %49 : vector<1x1024xf32> to vector<8x1024xf32>
    %53 = arith.addf %51, %52 : vector<8x1024xf32>
    %cst_41 = arith.constant 0.000000e+00 : f32
    %54 = vector.broadcast %cst_41 : f32 to vector<8x1024xf32>
    %55 = arith.maximumf %53, %54 : vector<8x1024xf32>
    %c0_42 = arith.constant 0 : index
    %c0_43 = arith.constant 0 : index
    %56 = vector.load %arg16[%c0_42, %c0_43] : memref<1024x256xbf16, #tpu.memory_space<vmem>>, vector<1024x256xbf16>
    %c0_44 = arith.constant 0 : index
    %c0_45 = arith.constant 0 : index
    %57 = vector.load %arg17[%c0_44, %c0_45] : memref<1x256xf32, #tpu.memory_space<vmem>>, vector<1x256xf32>
    %58 = arith.truncf %55 : vector<8x1024xf32> to vector<8x1024xbf16>
    %cst_46 = arith.constant dense<0.000000e+00> : vector<8x256xf32>
    %59 = tpu.matmul %58, %56, %cst_46 {dimension_numbers = #tpu.dot_dimension_numbers<[1], [0], [0], [1], [0, 0, 1, 1], [], []>} : vector<8x1024xbf16>, vector<1024x256xbf16>, vector<8x256xf32> -> vector<8x256xf32>
    %60 = vector.broadcast %57 : vector<1x256xf32> to vector<8x256xf32>
    %61 = arith.addf %59, %60 : vector<8x256xf32>
    %c0_47 = arith.constant 0 : index
    %c0_48 = arith.constant 0 : index
    %62 = vector.load %arg18[%c0_47, %c0_48] : memref<8x256xf32, #tpu.memory_space<vmem>>, vector<8x256xf32>
    tpu.vector_store %arg18[%c0_47, %c0_48], %61 {strides = array<i32>} : memref<8x256xf32, #tpu.memory_space<vmem>>, vector<8x256xf32>,
    return
  }
  func.func @transform_0(%arg0: i32) -> (i32, i32) {
    %c0_i32 = arith.constant 0 : i32
    %c0_i32_0 = arith.constant 0 : i32
    return %arg0, %c0_i32 : i32, i32
  }
  func.func @transform_1(%arg0: i32) -> (i32, i32) {
    %c0_i32 = arith.constant 0 : i32
    %c0_i32_0 = arith.constant 0 : i32
    %c0_i32_1 = arith.constant 0 : i32
    return %c0_i32, %c0_i32_0 : i32, i32
  }
  func.func @transform_2(%arg0: i32) -> (i32, i32) {
    %c0_i32 = arith.constant 0 : i32
    %c0_i32_0 = arith.constant 0 : i32
    %c0_i32_1 = arith.constant 0 : i32
    return %c0_i32, %c0_i32_0 : i32, i32
  }
  func.func @transform_3(%arg0: i32) -> (i32, i32) {
    %c0_i32 = arith.constant 0 : i32
    %c0_i32_0 = arith.constant 0 : i32
    %c0_i32_1 = arith.constant 0 : i32
    return %c0_i32, %c0_i32_0 : i32, i32
  }
  func.func @transform_4(%arg0: i32) -> (i32, i32) {
    %c0_i32 = arith.constant 0 : i32
    %c0_i32_0 = arith.constant 0 : i32
    %c0_i32_1 = arith.constant 0 : i32
    return %c0_i32, %c0_i32_0 : i32, i32
  }
  func.func @transform_5(%arg0: i32) -> (i32, i32) {
    %c0_i32 = arith.constant 0 : i32
    %c0_i32_0 = arith.constant 0 : i32
    %c0_i32_1 = arith.constant 0 : i32
    return %c0_i32, %c0_i32_0 : i32, i32
  }
  func.func @transform_6(%arg0: i32) -> (i32, i32) {
    %c0_i32 = arith.constant 0 : i32
    %c0_i32_0 = arith.constant 0 : i32
    %c0_i32_1 = arith.constant 0 : i32
    return %c0_i32, %c0_i32_0 : i32, i32
  }
  func.func @transform_7(%arg0: i32) -> (i32, i32) {
    %c0_i32 = arith.constant 0 : i32
    %c0_i32_0 = arith.constant 0 : i32
    %c0_i32_1 = arith.constant 0 : i32
    return %c0_i32, %c0_i32_0 : i32, i32
  }
  func.func @transform_8(%arg0: i32) -> (i32, i32) {
    %c0_i32 = arith.constant 0 : i32
    %c0_i32_0 = arith.constant 0 : i32
    %c0_i32_1 = arith.constant 0 : i32
    return %c0_i32, %c0_i32_0 : i32, i32
  }
  func.func @transform_9(%arg0: i32) -> (i32, i32) {
    %c0_i32 = arith.constant 0 : i32
    %c0_i32_0 = arith.constant 0 : i32
    %c0_i32_1 = arith.constant 0 : i32
    return %c0_i32, %c0_i32_0 : i32, i32
  }
  func.func @transform_10(%arg0: i32) -> (i32, i32) {
    %c0_i32 = arith.constant 0 : i32
    %c0_i32_0 = arith.constant 0 : i32
    %c0_i32_1 = arith.constant 0 : i32
    return %c0_i32, %c0_i32_0 : i32, i32
  }
  func.func @transform_11(%arg0: i32) -> (i32, i32) {
    %c0_i32 = arith.constant 0 : i32
    %c0_i32_0 = arith.constant 0 : i32
    %c0_i32_1 = arith.constant 0 : i32
    return %c0_i32, %c0_i32_0 : i32, i32
  }
  func.func @transform_12(%arg0: i32) -> (i32, i32) {
    %c0_i32 = arith.constant 0 : i32
    %c0_i32_0 = arith.constant 0 : i32
    %c0_i32_1 = arith.constant 0 : i32
    return %c0_i32, %c0_i32_0 : i32, i32
  }
  func.func @transform_13(%arg0: i32) -> (i32, i32) {
    %c0_i32 = arith.constant 0 : i32
    %c0_i32_0 = arith.constant 0 : i32
    %c0_i32_1 = arith.constant 0 : i32
    return %c0_i32, %c0_i32_0 : i32, i32
  }
  func.func @transform_14(%arg0: i32) -> (i32, i32) {
    %c0_i32 = arith.constant 0 : i32
    %c0_i32_0 = arith.constant 0 : i32
    %c0_i32_1 = arith.constant 0 : i32
    return %c0_i32, %c0_i32_0 : i32, i32
  }
  func.func @transform_15(%arg0: i32) -> (i32, i32) {
    %c0_i32 = arith.constant 0 : i32
    %c0_i32_0 = arith.constant 0 : i32
    %c0_i32_1 = arith.constant 0 : i32
    return %c0_i32, %c0_i32_0 : i32, i32
  }
  func.func @transform_16(%arg0: i32) -> (i32, i32) {
    %c0_i32 = arith.constant 0 : i32
    %c0_i32_0 = arith.constant 0 : i32
    %c0_i32_1 = arith.constant 0 : i32
    return %c0_i32, %c0_i32_0 : i32, i32
  }
  func.func @transform_17(%arg0: i32) -> (i32, i32) {
    %c0_i32 = arith.constant 0 : i32
    %c0_i32_0 = arith.constant 0 : i32
    return %arg0, %c0_i32 : i32, i32
  }
}

</mosaic_0001>

<llo_original>
// kernel: tpu_custom_call.1
$region0: #{tpu_custom_call.1}
  #allocation0 [shape = 'u32[]', space=smem, size = 0x4, offset = 0x4, fixed_abs, tag = 'smem constant byte address 0x4 - core index']
  #allocation1 [shape = 'u32[72,128]{1,0:T(1,128)}', space=vmem, size = 0x9000, scoped, tag = 'internal scratch']
  %s0 = inlined_call_operand.hbm [shape: bf16[8,256], index: 0, kind: input, shape index: {}]
  %s1 = inlined_call_operand.hbm [shape: bf16[256,1024], index: 1, kind: input, shape index: {}]
  %s2 = inlined_call_operand.hbm [shape: f32[1,1024], index: 2, kind: input, shape index: {}]
  %s3 = inlined_call_operand.hbm [shape: bf16[1024,512], index: 3, kind: input, shape index: {}]
  %s4 = inlined_call_operand.hbm [shape: f32[1,512], index: 4, kind: input, shape index: {}]
  %s5 = inlined_call_operand.hbm [shape: bf16[512,256], index: 5, kind: input, shape index: {}]
  %s6 = inlined_call_operand.hbm [shape: f32[1,256], index: 6, kind: input, shape index: {}]
  %s7 = inlined_call_operand.hbm [shape: bf16[256,128], index: 7, kind: input, shape index: {}]
  %s8 = inlined_call_operand.hbm [shape: f32[1,128], index: 8, kind: input, shape index: {}]
  %s9 = inlined_call_operand.hbm [shape: bf16[128,256], index: 9, kind: input, shape index: {}]
  %s10 = inlined_call_operand.hbm [shape: f32[1,256], index: 10, kind: input, shape index: {}]
  %s11 = inlined_call_operand.hbm [shape: bf16[256,512], index: 11, kind: input, shape index: {}]
  %s12 = inlined_call_operand.vmem [shape: f32[1,512], index: 12, kind: input, shape index: {}]
  %s13 = inlined_call_operand.hbm [shape: bf16[512,1024], index: 13, kind: input, shape index: {}]
  %s14 = inlined_call_operand.vmem [shape: f32[1,1024], index: 14, kind: input, shape index: {}]
  %s15 = inlined_call_operand.hbm [shape: bf16[1024,256], index: 15, kind: input, shape index: {}]
  %s16 = inlined_call_operand.vmem [shape: f32[1,256], index: 16, kind: input, shape index: {}]
  %s17 = inlined_call_operand.hbm [shape: f32[8,256], index: 17, kind: output, shape index: {}]
  %s18 = sld [smem:[#allocation0]]
  $region134: #{tpu_custom_call.1} parent=0
    _
  %s20 = ssub.s32 1, %s18
  %s21 = scalar_select 0, %s20, %s18
  $region1: #{tpu_custom_call.1} parent=0
    #allocation2 [shape = 'u8[4096]{0}', space=vmem, size = 0x1000, scoped, tag = 'input window, operand 0, single buffered']
    #allocation3 [shape = 's32[1]{0}', space=sflag, size = 0x4, scoped, tag = 'scoped memory for tpu_custom_call.1']
    #allocation4 [shape = 's32[1]{0}', space=sflag, size = 0x4, scoped, tag = 'scoped memory for tpu_custom_call.1']
    #allocation5 [shape = 'u8[524288]{0}', space=vmem, size = 0x80000, scoped, tag = 'input window, operand 1, single buffered']
    #allocation6 [shape = 's32[1]{0}', space=sflag, size = 0x4, scoped, tag = 'scoped memory for tpu_custom_call.1']
    #allocation7 [shape = 'u8[4096]{0}', space=vmem, size = 0x1000, scoped, tag = 'input window, operand 2, single buffered']
    #allocation8 [shape = 'u8[1048576]{0}', space=vmem, size = 0x100000, scoped, tag = 'input window, operand 3, single buffered']
    #allocation9 [shape = 's32[1]{0}', space=sflag, size = 0x4, scoped, tag = 'scoped memory for tpu_custom_call.1']
    #allocation10 [shape = 'u8[2048]{0}', space=vmem, size = 0x800, scoped, tag = 'input window, operand 4, single buffered']
    #allocation11 [shape = 'u8[262144]{0}', space=vmem, size = 0x40000, scoped, tag = 'input window, operand 5, single buffered']
    #allocation12 [shape = 's32[1]{0}', space=sflag, size = 0x4, scoped, tag = 'scoped memory for tpu_custom_call.1']
    #allocation13 [shape = 'u8[1024]{0}', space=vmem, size = 0x400, scoped, tag = 'input window, operand 6, single buffered']
    #allocation14 [shape = 'u8[65536]{0}', space=vmem, size = 0x10000, scoped, tag = 'input window, operand 7, single buffered']
    #allocation15 [shape = 's32[1]{0}', space=sflag, size = 0x4, scoped, tag = 'scoped memory for tpu_custom_call.1']
    #allocation16 [shape = 'u8[512]{0}', space=vmem, size = 0x400, scoped, tag = 'input window, operand 8, single buffered']
    #allocation17 [shape = 'u8[65536]{0}', space=vmem, size = 0x10000, scoped, tag = 'input window, operand 9, single buffered']
    #allocation18 [shape = 's32[1]{0}', space=sflag, size = 0x4, scoped, tag = 'scoped memory for tpu_custom_call.1']
    #allocation19 [shape = 'u8[1024]{0}', space=vmem, size = 0x400, scoped, tag = 'input window, operand 10, single buffered']
    #allocation20 [shape = 'u8[262144]{0}', space=vmem, size = 0x40000, scoped, tag = 'input window, operand 11, single buffered']
    #allocation21 [shape = 's32[1]{0}', space=sflag, size = 0x4, scoped, tag = 'scoped memory for tpu_custom_call.1']
    #allocation22 [shape = 'u8[1048576]{0}', space=vmem, size = 0x100000, scoped, tag = 'input window, operand 13, single buffered']
    #allocation23 [shape = 'u8[524288]{0}', space=vmem, size = 0x80000, scoped, tag = 'input window, operand 15, single buffered']
    #allocation24 [shape = 's32[1]{0}', space=sflag, size = 0x4, scoped, tag = 'scoped memory for tpu_custom_call.1']
    #allocation25 [shape = 'u8[8192]{0}', space=vmem, size = 0x2000, scoped, tag = 'output window, operand 0, single buffered']
    %22 = vsyncpa [#allocation3], 0
    %23 = vsyncpa [#allocation6], 0
    %24 = vsyncpa [#allocation9], 0
    %25 = vsyncpa [#allocation12], 0
    %26 = vsyncpa [#allocation15], 0
    %27 = vsyncpa [#allocation18], 0
    %28 = vsyncpa [#allocation21], 0
    %29 = vsyncpa [#allocation24], 0
    %30 = vsyncpa [#allocation4], 0
    // Predicated region
    $region2: #{tpu_custom_call.1} parent=1 // pred_check
      _
    $region3: #{tpu_custom_call.1} parent=1 // pred_check_branch
      %32 = sbr.rel (0) target = $region5
    $region4: #{tpu_custom_call.1} parent=1 // pred_region
      %34 = vsyncadd [#allocation3], 0
      %s36 = sshll.u32 %s0, 4
      %s37 = int_to_ptr.hbm [resolvable:$true] %s36
      %s38 = sshll.u32 [#allocation2], 4
      %s39 = int_to_ptr.vmem [resolvable:$true] %s38
      %41 = dma.hbm_to_vmem [thread:$0]  %s37, 128, %s39, [#allocation3]
    $region5: #{tpu_custom_call.1} parent=1 // pred_fallthru
      _
    // Predicated region
    $region6: #{tpu_custom_call.1} parent=1 // pred_check
      _
    $region7: #{tpu_custom_call.1} parent=1 // pred_check_branch
      %43 = sbr.rel (0) target = $region9
    $region8: #{tpu_custom_call.1} parent=1 // pred_region
      %45 = vsyncadd [#allocation6], 0
      %s46 = sshll.u32 %s1, 4
      %s47 = int_to_ptr.hbm [resolvable:$true] %s46
      %s48 = sshll.u32 [#allocation5], 4
      %s49 = int_to_ptr.vmem [resolvable:$true] %s48
      %54 = dma.hbm_to_vmem [thread:$0]  %s47, 16384, %s49, [#allocation6], 512, 512, 32
    $region9: #{tpu_custom_call.1} parent=1 // pred_fallthru
      _
    // Predicated region
    $region10: #{tpu_custom_call.1} parent=1 // pred_check
      _
    $region11: #{tpu_custom_call.1} parent=1 // pred_check_branch
      %56 = sbr.rel (0) target = $region13
    $region12: #{tpu_custom_call.1} parent=1 // pred_region
      %58 = vsyncadd [#allocation6], 0
      %s60 = sshll.u32 %s2, 4
      %s61 = int_to_ptr.hbm [resolvable:$true] %s60
      %s62 = sshll.u32 [#allocation7], 4
      %s63 = int_to_ptr.vmem [resolvable:$true] %s62
      %65 = dma.hbm_to_vmem [thread:$0]  %s61, 128, %s63, [#allocation6]
    $region13: #{tpu_custom_call.1} parent=1 // pred_fallthru
      _
    // Predicated region
    $region14: #{tpu_custom_call.1} parent=1 // pred_check
      _
    $region15: #{tpu_custom_call.1} parent=1 // pred_check_branch
      %67 = sbr.rel (0) target = $region17
    $region16: #{tpu_custom_call.1} parent=1 // pred_region
      %69 = vsyncadd [#allocation9], 0
      %s70 = sshll.u32 %s3, 4
      %s71 = int_to_ptr.hbm [resolvable:$true] %s70
      %s72 = sshll.u32 [#allocation8], 4
      %s73 = int_to_ptr.vmem [resolvable:$true] %s72
      %78 = dma.hbm_to_vmem [thread:$0]  %s71, 32768, %s73, [#allocation9], 256, 256, 16
    $region17: #{tpu_custom_call.1} parent=1 // pred_fallthru
      _
    // Predicated region
    $region18: #{tpu_custom_call.1} parent=1 // pred_check
      _
    $region19: #{tpu_custom_call.1} parent=1 // pred_check_branch
      %80 = sbr.rel (0) target = $region21
    $region20: #{tpu_custom_call.1} parent=1 // pred_region
      %82 = vsyncadd [#allocation9], 0
      %s84 = sshll.u32 %s4, 4
      %s85 = int_to_ptr.hbm [resolvable:$true] %s84
      %s86 = sshll.u32 [#allocation10], 4
      %s87 = int_to_ptr.vmem [resolvable:$true] %s86
      %89 = dma.hbm_to_vmem [thread:$0]  %s85, 64, %s87, [#allocation9]
    $region21: #{tpu_custom_call.1} parent=1 // pred_fallthru
      _
    // Predicated region
    $region22: #{tpu_custom_call.1} parent=1 // pred_check
      _
    $region23: #{tpu_custom_call.1} parent=1 // pred_check_branch
      %91 = sbr.rel (0) target = $region25
    $region24: #{tpu_custom_call.1} parent=1 // pred_region
      %93 = vsyncadd [#allocation12], 0
      %s94 = sshll.u32 %s5, 4
      %s95 = int_to_ptr.hbm [resolvable:$true] %s94
      %s96 = sshll.u32 [#allocation11], 4
      %s97 = int_to_ptr.vmem [resolvable:$true] %s96
      %102 = dma.hbm_to_vmem [thread:$0]  %s95, 8192, %s97, [#allocation12], 128, 128, 8
    $region25: #{tpu_custom_call.1} parent=1 // pred_fallthru
      _
    // Predicated region
    $region26: #{tpu_custom_call.1} parent=1 // pred_check
      _
    $region27: #{tpu_custom_call.1} parent=1 // pred_check_branch
      %104 = sbr.rel (0) target = $region29
    $region28: #{tpu_custom_call.1} parent=1 // pred_region
      %106 = vsyncadd [#allocation12], 0
      %s108 = sshll.u32 %s6, 4
      %s109 = int_to_ptr.hbm [resolvable:$true] %s108
      %s110 = sshll.u32 [#allocation13], 4
      %s111 = int_to_ptr.vmem [resolvable:$true] %s110
      %113 = dma.hbm_to_vmem [thread:$0]  %s109, 32, %s111, [#allocation12]
    $region29: #{tpu_custom_call.1} parent=1 // pred_fallthru
      _
    // Predicated region
    $region30: #{tpu_custom_call.1} parent=1 // pred_check
      _
    $region31: #{tpu_custom_call.1} parent=1 // pred_check_branch
      %115 = sbr.rel (0) target = $region33
    $region32: #{tpu_custom_call.1} parent=1 // pred_region
      %117 = vsyncadd [#allocation15], 0
      %s118 = sshll.u32 %s7, 4
      %s119 = int_to_ptr.hbm [resolvable:$true] %s118
      %s120 = sshll.u32 [#allocation14], 4
      %s121 = int_to_ptr.vmem [resolvable:$true] %s120
      %126 = dma.hbm_to_vmem [thread:$0]  %s119, 2048, %s121, [#allocation15], 64, 64, 4
    $region33: #{tpu_custom_call.1} parent=1 // pred_fallthru
      _
    // Predicated region
    $region34: #{tpu_custom_call.1} parent=1 // pred_check
      _
    $region35: #{tpu_custom_call.1} parent=1 // pred_check_branch
      %128 = sbr.rel (0) target = $region37
    $region36: #{tpu_custom_call.1} parent=1 // pred_region
      %130 = vsyncadd [#allocation15], 0
      %s132 = sshll.u32 %s8, 4
      %s133 = int_to_ptr.hbm [resolvable:$true] %s132
      %s134 = sshll.u32 [#allocation16], 4
      %s135 = int_to_ptr.vmem [resolvable:$true] %s134
      %137 = dma.hbm_to_vmem [thread:$0]  %s133, 16, %s135, [#allocation15]
    $region37: #{tpu_custom_call.1} parent=1 // pred_fallthru
      _
    // Predicated region
    $region38: #{tpu_custom_call.1} parent=1 // pred_check
      _
    $region39: #{tpu_custom_call.1} parent=1 // pred_check_branch
      %139 = sbr.rel (0) target = $region41
    $region40: #{tpu_custom_call.1} parent=1 // pred_region
      %141 = vsyncadd [#allocation18], 0
      %s142 = sshll.u32 %s9, 4
      %s143 = int_to_ptr.hbm [resolvable:$true] %s142
      %s144 = sshll.u32 [#allocation17], 4
      %s145 = int_to_ptr.vmem [resolvable:$true] %s144
      %150 = dma.hbm_to_vmem [thread:$0]  %s143, 2048, %s145, [#allocation18], 128, 128, 8
    $region41: #{tpu_custom_call.1} parent=1 // pred_fallthru
      _
    // Predicated region
    $region42: #{tpu_custom_call.1} parent=1 // pred_check
      _
    $region43: #{tpu_custom_call.1} parent=1 // pred_check_branch
      %152 = sbr.rel (0) target = $region45
    $region44: #{tpu_custom_call.1} parent=1 // pred_region
      %154 = vsyncadd [#allocation18], 0
      %s156 = sshll.u32 %s10, 4
      %s157 = int_to_ptr.hbm [resolvable:$true] %s156
      %s158 = sshll.u32 [#allocation19], 4
      %s159 = int_to_ptr.vmem [resolvable:$true] %s158
      %161 = dma.hbm_to_vmem [thread:$0]  %s157, 32, %s159, [#allocation18]
    $region45: #{tpu_custom_call.1} parent=1 // pred_fallthru
      _
    // Predicated region
    $region46: #{tpu_custom_call.1} parent=1 // pred_check
      _
    $region47: #{tpu_custom_call.1} parent=1 // pred_check_branch
      %163 = sbr.rel (0) target = $region49
    $region48: #{tpu_custom_call.1} parent=1 // pred_region
      %165 = vsyncadd [#allocation21], 0
      %s166 = sshll.u32 %s11, 4
      %s167 = int_to_ptr.hbm [resolvable:$true] %s166
      %s168 = sshll.u32 [#allocation20], 4
      %s169 = int_to_ptr.vmem [resolvable:$true] %s168
      %174 = dma.hbm_to_vmem [thread:$0]  %s167, 8192, %s169, [#allocation21], 256, 256, 16
    $region49: #{tpu_custom_call.1} parent=1 // pred_fallthru
      _
    // Predicated region
    $region50: #{tpu_custom_call.1} parent=1 // pred_check
      _
    $region51: #{tpu_custom_call.1} parent=1 // pred_check_branch
      %176 = sbr.rel (0) target = $region53
    $region52: #{tpu_custom_call.1} parent=1 // pred_region
      _
    $region53: #{tpu_custom_call.1} parent=1 // pred_fallthru
      _
    // Predicated region
    $region54: #{tpu_custom_call.1} parent=1 // pred_check
      _
    $region55: #{tpu_custom_call.1} parent=1 // pred_check_branch
      %178 = sbr.rel (0) target = $region57
    $region56: #{tpu_custom_call.1} parent=1 // pred_region
      %180 = vsyncadd [#allocation21], 0
      %s181 = sshll.u32 %s13, 4
      %s182 = int_to_ptr.hbm [resolvable:$true] %s181
      %s183 = sshll.u32 [#allocation22], 4
      %s184 = int_to_ptr.vmem [resolvable:$true] %s183
      %189 = dma.hbm_to_vmem [thread:$0]  %s182, 32768, %s184, [#allocation21], 512, 512, 32
    $region57: #{tpu_custom_call.1} parent=1 // pred_fallthru
      _
    // Predicated region
    $region58: #{tpu_custom_call.1} parent=1 // pred_check
      _
    $region59: #{tpu_custom_call.1} parent=1 // pred_check_branch
      %191 = sbr.rel (0) target = $region61
    $region60: #{tpu_custom_call.1} parent=1 // pred_region
      _
    $region61: #{tpu_custom_call.1} parent=1 // pred_fallthru
      _
    // Predicated region
    $region62: #{tpu_custom_call.1} parent=1 // pred_check
      _
    $region63: #{tpu_custom_call.1} parent=1 // pred_check_branch
      %193 = sbr.rel (0) target = $region65
    $region64: #{tpu_custom_call.1} parent=1 // pred_region
      %195 = vsyncadd [#allocation24], 0
      %s196 = sshll.u32 %s15, 4
      %s197 = int_to_ptr.hbm [resolvable:$true] %s196
      %s198 = sshll.u32 [#allocation23], 4
      %s199 = int_to_ptr.vmem [resolvable:$true] %s198
      %204 = dma.hbm_to_vmem [thread:$0]  %s197, 16384, %s199, [#allocation24], 128, 128, 8
    $region65: #{tpu_custom_call.1} parent=1 // pred_fallthru
      _
    // Predicated region
    $region66: #{tpu_custom_call.1} parent=1 // pred_check
      _
    $region67: #{tpu_custom_call.1} parent=1 // pred_check_branch
      %206 = sbr.rel (0) target = $region69
    $region68: #{tpu_custom_call.1} parent=1 // pred_region
      _
    $region69: #{tpu_custom_call.1} parent=1 // pred_fallthru
      _
    // Predicated region
    $region70: #{tpu_custom_call.1} parent=1 // pred_check
      _
    $region71: #{tpu_custom_call.1} parent=1 // pred_check_branch
      %208 = sbr.rel (0) target = $region73
    $region72: #{tpu_custom_call.1} parent=1 // pred_region
      %210 = dma.done [#allocation3], 128
    $region73: #{tpu_custom_call.1} parent=1 // pred_fallthru
      _
    // Predicated region
    $region74: #{tpu_custom_call.1} parent=1 // pred_check
      _
    $region75: #{tpu_custom_call.1} parent=1 // pred_check_branch
      %212 = sbr.rel (0) target = $region77
    $region76: #{tpu_custom_call.1} parent=1 // pred_region
      %214 = dma.done [#allocation6], 16384
    $region77: #{tpu_custom_call.1} parent=1 // pred_fallthru
      _
    // Predicated region
    $region78: #{tpu_custom_call.1} parent=1 // pred_check
      _
    $region79: #{tpu_custom_call.1} parent=1 // pred_check_branch
      %216 = sbr.rel (0) target = $region81
    $region80: #{tpu_custom_call.1} parent=1 // pred_region
      %218 = dma.done [#allocation6], 128
    $region81: #{tpu_custom_call.1} parent=1 // pred_fallthru
      _
    // Predicated region
    $region82: #{tpu_custom_call.1} parent=1 // pred_check
      _
    $region83: #{tpu_custom_call.1} parent=1 // pred_check_branch
      %220 = sbr.rel (0) target = $region85
    $region84: #{tpu_custom_call.1} parent=1 // pred_region
      %222 = dma.done [#allocation9], 32768
    $region85: #{tpu_custom_call.1} parent=1 // pred_fallthru
      _
    // Predicated region
    $region86: #{tpu_custom_call.1} parent=1 // pred_check
      _
    $region87: #{tpu_custom_call.1} parent=1 // pred_check_branch
      %224 = sbr.rel (0) target = $region89
    $region88: #{tpu_custom_call.1} parent=1 // pred_region
      %226 = dma.done [#allocation9], 64
    $region89: #{tpu_custom_call.1} parent=1 // pred_fallthru
      _
    // Predicated region
    $region90: #{tpu_custom_call.1} parent=1 // pred_check
      _
    $region91: #{tpu_custom_call.1} parent=1 // pred_check_branch
      %228 = sbr.rel (0) target = $region93
    $region92: #{tpu_custom_call.1} parent=1 // pred_region
      %230 = dma.done [#allocation12], 8192
    $region93: #{tpu_custom_call.1} parent=1 // pred_fallthru
      _
    // Predicated region
    $region94: #{tpu_custom_call.1} parent=1 // pred_check
      _
    $region95: #{tpu_custom_call.1} parent=1 // pred_check_branch
      %232 = sbr.rel (0) target = $region97
    $region96: #{tpu_custom_call.1} parent=1 // pred_region
      %234 = dma.done [#allocation12], 32
    $region97: #{tpu_custom_call.1} parent=1 // pred_fallthru
      _
    // Predicated region
    $region98: #{tpu_custom_call.1} parent=1 // pred_check
      _
    $region99: #{tpu_custom_call.1} parent=1 // pred_check_branch
      %236 = sbr.rel (0) target = $region101
    $region100: #{tpu_custom_call.1} parent=1 // pred_region
      %238 = dma.done [#allocation15], 2048
    $region101: #{tpu_custom_call.1} parent=1 // pred_fallthru
      _
    // Predicated region
    $region102: #{tpu_custom_call.1} parent=1 // pred_check
      _
    $region103: #{tpu_custom_call.1} parent=1 // pred_check_branch
      %240 = sbr.rel (0) target = $region105
    $region104: #{tpu_custom_call.1} parent=1 // pred_region
      %242 = dma.done [#allocation15], 16
    $region105: #{tpu_custom_call.1} parent=1 // pred_fallthru
      _
    // Predicated region
    $region106: #{tpu_custom_call.1} parent=1 // pred_check
      _
    $region107: #{tpu_custom_call.1} parent=1 // pred_check_branch
      %244 = sbr.rel (0) target = $region109
    $region108: #{tpu_custom_call.1} parent=1 // pred_region
      %246 = dma.done [#allocation18], 2048
    $region109: #{tpu_custom_call.1} parent=1 // pred_fallthru
      _
    // Predicated region
    $region110: #{tpu_custom_call.1} parent=1 // pred_check
      _
    $region111: #{tpu_custom_call.1} parent=1 // pred_check_branch
      %248 = sbr.rel (0) target = $region113
    $region112: #{tpu_custom_call.1} parent=1 // pred_region
      %250 = dma.done [#allocation18], 32
    $region113: #{tpu_custom_call.1} parent=1 // pred_fallthru
      _
    // Predicated region
    $region114: #{tpu_custom_call.1} parent=1 // pred_check
      _
    $region115: #{tpu_custom_call.1} parent=1 // pred_check_branch
      %252 = sbr.rel (0) target = $region117
    $region116: #{tpu_custom_call.1} parent=1 // pred_region
      %254 = dma.done [#allocation21], 8192
    $region117: #{tpu_custom_call.1} parent=1 // pred_fallthru
      _
    // Predicated region
    $region118: #{tpu_custom_call.1} parent=1 // pred_check
      _
    $region119: #{tpu_custom_call.1} parent=1 // pred_check_branch
      %256 = sbr.rel (0) target = $region121
    $region120: #{tpu_custom_call.1} parent=1 // pred_region
      %258 = dma.done [#allocation21], 32768
    $region121: #{tpu_custom_call.1} parent=1 // pred_fallthru
      _
    // Predicated region
    $region122: #{tpu_custom_call.1} parent=1 // pred_check
      _
    $region123: #{tpu_custom_call.1} parent=1 // pred_check_branch
      %260 = sbr.rel (0) target = $region125
    $region124: #{tpu_custom_call.1} parent=1 // pred_region
      %262 = dma.done [#allocation24], 16384
    $region125: #{tpu_custom_call.1} parent=1 // pred_fallthru
      _
    %v263 = vld [vmem:[#allocation2] sm:$0xff]
    %v264 = vld [vmem:[#allocation5] sm:$0xff]
    %v265 = vld [vmem:[#allocation5 + $0x8] sm:$0xff]
    %v266 = vld [vmem:[#allocation5 + $0x10] sm:$0xff]
    %v267 = vld [vmem:[#allocation5 + $0x18] sm:$0xff]
    %v268 = vld [vmem:[#allocation5 + $0x20] sm:$0xff]
    %v269 = vld [vmem:[#allocation5 + $0x28] sm:$0xff]
    %v270 = vld [vmem:[#allocation5 + $0x30] sm:$0xff]
    %v271 = vld [vmem:[#allocation5 + $0x38] sm:$0xff]
    %v272 = vld [vmem:[#allocation5 + $0x40] sm:$0xff]
    %v273 = vld [vmem:[#allocation5 + $0x48] sm:$0xff]
    %v274 = vld [vmem:[#allocation5 + $0x50] sm:$0xff]
    %v275 = vld [vmem:[#allocation5 + $0x58] sm:$0xff]
    %v276 = vld [vmem:[#allocation5 + $0x60] sm:$0xff]
    %v277 = vld [vmem:[#allocation5 + $0x68] sm:$0xff]
    %v278 = vld [vmem:[#allocation5 + $0x70] sm:$0xff]
    %v279 = vld [vmem:[#allocation5 + $0x78] sm:$0xff]
    %v280 = vld [vmem:[#allocation5 + $0x80] sm:$0xff]
    %v281 = vld [vmem:[#allocation5 + $0x88] sm:$0xff]
    %v282 = vld [vmem:[#allocation5 + $0x90] sm:$0xff]
    %v283 = vld [vmem:[#allocation5 + $0x98] sm:$0xff]
    %v284 = vld [vmem:[#allocation5 + $0xa0] sm:$0xff]
    %v285 = vld [vmem:[#allocation5 + $0xa8] sm:$0xff]
    %v286 = vld [vmem:[#allocation5 + $0xb0] sm:$0xff]
    %v287 = vld [vmem:[#allocation5 + $0xb8] sm:$0xff]
    %v288 = vld [vmem:[#allocation5 + $0xc0] sm:$0xff]
    %v289 = vld [vmem:[#allocation5 + $0xc8] sm:$0xff]
    %v290 = vld [vmem:[#allocation5 + $0xd0] sm:$0xff]
    %v291 = vld [vmem:[#allocation5 + $0xd8] sm:$0xff]
    %v292 = vld [vmem:[#allocation5 + $0xe0] sm:$0xff]
    %v293 = vld [vmem:[#allocation5 + $0xe8] sm:$0xff]
    %v294 = vld [vmem:[#allocation5 + $0xf0] sm:$0xff]
    %v295 = vld [vmem:[#allocation5 + $0xf8] sm:$0xff]
    %v296 = vld [vmem:[#allocation5 + $0x100] sm:$0xff]
    %v297 = vld [vmem:[#allocation5 + $0x108] sm:$0xff]
    %v298 = vld [vmem:[#allocation5 + $0x110] sm:$0xff]
    %v299 = vld [vmem:[#allocation5 + $0x118] sm:$0xff]
    %v300 = vld [vmem:[#allocation5 + $0x120] sm:$0xff]
    %v301 = vld [vmem:[#allocation5 + $0x128] sm:$0xff]
    %v302 = vld [vmem:[#allocation5 + $0x130] sm:$0xff]
    %v303 = vld [vmem:[#allocation5 + $0x138] sm:$0xff]
    %v304 = vld [vmem:[#allocation5 + $0x140] sm:$0xff]
    %v305 = vld [vmem:[#allocation5 + $0x148] sm:$0xff]
    %v306 = vld [vmem:[#allocation5 + $0x150] sm:$0xff]
    %v307 = vld [vmem:[#allocation5 + $0x158] sm:$0xff]
    %v308 = vld [vmem:[#allocation5 + $0x160] sm:$0xff]
    %v309 = vld [vmem:[#allocation5 + $0x168] sm:$0xff]
    %v310 = vld [vmem:[#allocation5 + $0x170] sm:$0xff]
    %v311 = vld [vmem:[#allocation5 + $0x178] sm:$0xff]
    %v312 = vld [vmem:[#allocation5 + $0x180] sm:$0xff]
    %v313 = vld [vmem:[#allocation5 + $0x188] sm:$0xff]
    %v314 = vld [vmem:[#allocation5 + $0x190] sm:$0xff]
    %v315 = vld [vmem:[#allocation5 + $0x198] sm:$0xff]
    %v316 = vld [vmem:[#allocation5 + $0x1a0] sm:$0xff]
    %v317 = vld [vmem:[#allocation5 + $0x1a8] sm:$0xff]
    %v318 = vld [vmem:[#allocation5 + $0x1b0] sm:$0xff]
    %v319 = vld [vmem:[#allocation5 + $0x1b8] sm:$0xff]
    %v320 = vld [vmem:[#allocation5 + $0x1c0] sm:$0xff]
    %v321 = vld [vmem:[#allocation5 + $0x1c8] sm:$0xff]
    %v322 = vld [vmem:[#allocation5 + $0x1d0] sm:$0xff]
    %v323 = vld [vmem:[#allocation5 + $0x1d8] sm:$0xff]
    %v324 = vld [vmem:[#allocation5 + $0x1e0] sm:$0xff]
    %v325 = vld [vmem:[#allocation5 + $0x1e8] sm:$0xff]
    %v326 = vld [vmem:[#allocation5 + $0x1f0] sm:$0xff]
    %v327 = vld [vmem:[#allocation5 + $0x1f8] sm:$0xff]
    %v328 = vld [vmem:[#allocation5 + $0x200] sm:$0xff]
    %v329 = vld [vmem:[#allocation5 + $0x208] sm:$0xff]
    %v330 = vld [vmem:[#allocation5 + $0x210] sm:$0xff]
    %v331 = vld [vmem:[#allocation5 + $0x218] sm:$0xff]
    %v332 = vld [vmem:[#allocation5 + $0x220] sm:$0xff]
    %v333 = vld [vmem:[#allocation5 + $0x228] sm:$0xff]
    %v334 = vld [vmem:[#allocation5 + $0x230] sm:$0xff]
    %v335 = vld [vmem:[#allocation5 + $0x238] sm:$0xff]
    %v336 = vld [vmem:[#allocation5 + $0x240] sm:$0xff]
    %v337 = vld [vmem:[#allocation5 + $0x248] sm:$0xff]
    %v338 = vld [vmem:[#allocation5 + $0x250] sm:$0xff]
    %v339 = vld [vmem:[#allocation5 + $0x258] sm:$0xff]
    %v340 = vld [vmem:[#allocation5 + $0x260] sm:$0xff]
    %v341 = vld [vmem:[#allocation5 + $0x268] sm:$0xff]
    %v342 = vld [vmem:[#allocation5 + $0x270] sm:$0xff]
    %v343 = vld [vmem:[#allocation5 + $0x278] sm:$0xff]
    %v344 = vld [vmem:[#allocation5 + $0x280] sm:$0xff]
    %v345 = vld [vmem:[#allocation5 + $0x288] sm:$0xff]
    %v346 = vld [vmem:[#allocation5 + $0x290] sm:$0xff]
    %v347 = vld [vmem:[#allocation5 + $0x298] sm:$0xff]
    %v348 = vld [vmem:[#allocation5 + $0x2a0] sm:$0xff]
    %v349 = vld [vmem:[#allocation5 + $0x2a8] sm:$0xff]
    %v350 = vld [vmem:[#allocation5 + $0x2b0] sm:$0xff]
    %v351 = vld [vmem:[#allocation5 + $0x2b8] sm:$0xff]
    %v352 = vld [vmem:[#allocation5 + $0x2c0] sm:$0xff]
    %v353 = vld [vmem:[#allocation5 + $0x2c8] sm:$0xff]
    %v354 = vld [vmem:[#allocation5 + $0x2d0] sm:$0xff]
    %v355 = vld [vmem:[#allocation5 + $0x2d8] sm:$0xff]
    %v356 = vld [vmem:[#allocation5 + $0x2e0] sm:$0xff]
    %v357 = vld [vmem:[#allocation5 + $0x2e8] sm:$0xff]
    %v358 = vld [vmem:[#allocation5 + $0x2f0] sm:$0xff]
    %v359 = vld [vmem:[#allocation5 + $0x2f8] sm:$0xff]
    %v360 = vld [vmem:[#allocation5 + $0x300] sm:$0xff]
    %v361 = vld [vmem:[#allocation5 + $0x308] sm:$0xff]
    %v362 = vld [vmem:[#allocation5 + $0x310] sm:$0xff]
    %v363 = vld [vmem:[#allocation5 + $0x318] sm:$0xff]
    %v364 = vld [vmem:[#allocation5 + $0x320] sm:$0xff]
    %v365 = vld [vmem:[#allocation5 + $0x328] sm:$0xff]
    %v366 = vld [vmem:[#allocation5 + $0x330] sm:$0xff]
    %v367 = vld [vmem:[#allocation5 + $0x338] sm:$0xff]
    %v368 = vld [vmem:[#allocation5 + $0x340] sm:$0xff]
    %v369 = vld [vmem:[#allocation5 + $0x348] sm:$0xff]
    %v370 = vld [vmem:[#allocation5 + $0x350] sm:$0xff]
    %v371 = vld [vmem:[#allocation5 + $0x358] sm:$0xff]
    %v372 = vld [vmem:[#allocation5 + $0x360] sm:$0xff]
    %v373 = vld [vmem:[#allocation5 + $0x368] sm:$0xff]
    %v374 = vld [vmem:[#allocation5 + $0x370] sm:$0xff]
    %v375 = vld [vmem:[#allocation5 + $0x378] sm:$0xff]
    %v376 = vld [vmem:[#allocation5 + $0x380] sm:$0xff]
    %v377 = vld [vmem:[#allocation5 + $0x388] sm:$0xff]
    %v378 = vld [vmem:[#allocation5 + $0x390] sm:$0xff]
    %v379 = vld [vmem:[#allocation5 + $0x398] sm:$0xff]
    %v380 = vld [vmem:[#allocation5 + $0x3a0] sm:$0xff]
    %v381 = vld [vmem:[#allocation5 + $0x3a8] sm:$0xff]
    %v382 = vld [vmem:[#allocation5 + $0x3b0] sm:$0xff]
    %v383 = vld [vmem:[#allocation5 + $0x3b8] sm:$0xff]
    %v384 = vld [vmem:[#allocation5 + $0x3c0] sm:$0xff]
    %v385 = vld [vmem:[#allocation5 + $0x3c8] sm:$0xff]
    %v386 = vld [vmem:[#allocation5 + $0x3d0] sm:$0xff]
    %v387 = vld [vmem:[#allocation5 + $0x3d8] sm:$0xff]
    %v388 = vld [vmem:[#allocation5 + $0x3e0] sm:$0xff]
    %v389 = vld [vmem:[#allocation5 + $0x3e8] sm:$0xff]
    %v390 = vld [vmem:[#allocation5 + $0x3f0] sm:$0xff]
    %v391 = vld [vmem:[#allocation5 + $0x3f8] sm:$0xff]
    %v392 = vld [vmem:[#allocation7] sm:$0xff]
    %v394 = vperm.slane %v392, 0
    %v395 = vperm.slane %v392, 1
    %v396 = vperm.slane %v392, 2
    %v397 = vperm.slane %v392, 3
    %v398 = vperm.slane %v392, 4
    %v399 = vperm.slane %v392, 5
    %v400 = vperm.slane %v392, 6
    %v401 = vperm.slane %v392, 7
    %v411 = vunpack.c.l.b16 %v263
    %v412 = vunpack.c.h.b16 %v263
    %v413 = vpack.c.b16 %v411, %v411
    %v414 = vpack.c.b16 %v412, %v412
    %v545 = vunpack.c.l.b16 %v264
    %v546 = vunpack.c.h.b16 %v264
    %v547 = vunpack.c.l.b16 %v265
    %v548 = vunpack.c.h.b16 %v265
    %v549 = vunpack.c.l.b16 %v266
    %v550 = vunpack.c.h.b16 %v266
    %v551 = vunpack.c.l.b16 %v267
    %v552 = vunpack.c.h.b16 %v267
    %v553 = vunpack.c.l.b16 %v268
    %v554 = vunpack.c.h.b16 %v268
    %v555 = vunpack.c.l.b16 %v269
    %v556 = vunpack.c.h.b16 %v269
    %v557 = vunpack.c.l.b16 %v270
    %v558 = vunpack.c.h.b16 %v270
    %v559 = vunpack.c.l.b16 %v271
    %v560 = vunpack.c.h.b16 %v271
    %v561 = vunpack.c.l.b16 %v272
    %v562 = vunpack.c.h.b16 %v272
    %v563 = vunpack.c.l.b16 %v273
    %v564 = vunpack.c.h.b16 %v273
    %v565 = vunpack.c.l.b16 %v274
    %v566 = vunpack.c.h.b16 %v274
    %v567 = vunpack.c.l.b16 %v275
    %v568 = vunpack.c.h.b16 %v275
    %v569 = vunpack.c.l.b16 %v276
    %v570 = vunpack.c.h.b16 %v276
    %v571 = vunpack.c.l.b16 %v277
    %v572 = vunpack.c.h.b16 %v277
    %v573 = vunpack.c.l.b16 %v278
    %v574 = vunpack.c.h.b16 %v278
    %v575 = vunpack.c.l.b16 %v279
    %v576 = vunpack.c.h.b16 %v279
    %v577 = vunpack.c.l.b16 %v280
    %v578 = vunpack.c.h.b16 %v280
    %v579 = vunpack.c.l.b16 %v281
    %v580 = vunpack.c.h.b16 %v281
    %v581 = vunpack.c.l.b16 %v282
    %v582 = vunpack.c.h.b16 %v282
    %v583 = vunpack.c.l.b16 %v283
    %v584 = vunpack.c.h.b16 %v283
    %v585 = vunpack.c.l.b16 %v284
    %v586 = vunpack.c.h.b16 %v284
    %v587 = vunpack.c.l.b16 %v285
    %v588 = vunpack.c.h.b16 %v285
    %v589 = vunpack.c.l.b16 %v286
    %v590 = vunpack.c.h.b16 %v286
    %v591 = vunpack.c.l.b16 %v287
    %v592 = vunpack.c.h.b16 %v287
    %v593 = vunpack.c.l.b16 %v288
    %v594 = vunpack.c.h.b16 %v288
    %v595 = vunpack.c.l.b16 %v289
    %v596 = vunpack.c.h.b16 %v289
    %v597 = vunpack.c.l.b16 %v290
    %v598 = vunpack.c.h.b16 %v290
    %v599 = vunpack.c.l.b16 %v291
    %v600 = vunpack.c.h.b16 %v291
    %v601 = vunpack.c.l.b16 %v292
    %v602 = vunpack.c.h.b16 %v292
    %v603 = vunpack.c.l.b16 %v293
    %v604 = vunpack.c.h.b16 %v293
    %v605 = vunpack.c.l.b16 %v294
    %v606 = vunpack.c.h.b16 %v294
    %v607 = vunpack.c.l.b16 %v295
    %v608 = vunpack.c.h.b16 %v295
    %v609 = vunpack.c.l.b16 %v296
    %v610 = vunpack.c.h.b16 %v296
    %v611 = vunpack.c.l.b16 %v297
    %v612 = vunpack.c.h.b16 %v297
    %v613 = vunpack.c.l.b16 %v298
    %v614 = vunpack.c.h.b16 %v298
    %v615 = vunpack.c.l.b16 %v299
    %v616 = vunpack.c.h.b16 %v299
    %v617 = vunpack.c.l.b16 %v300
    %v618 = vunpack.c.h.b16 %v300
    %v619 = vunpack.c.l.b16 %v301
    %v620 = vunpack.c.h.b16 %v301
    %v621 = vunpack.c.l.b16 %v302
    %v622 = vunpack.c.h.b16 %v302
    %v623 = vunpack.c.l.b16 %v303
    %v624 = vunpack.c.h.b16 %v303
    %v625 = vunpack.c.l.b16 %v304
    %v626 = vunpack.c.h.b16 %v304
    %v627 = vunpack.c.l.b16 %v305
    %v628 = vunpack.c.h.b16 %v305
    %v629 = vunpack.c.l.b16 %v306
    %v630 = vunpack.c.h.b16 %v306
    %v631 = vunpack.c.l.b16 %v307
    %v632 = vunpack.c.h.b16 %v307
    %v633 = vunpack.c.l.b16 %v308
    %v634 = vunpack.c.h.b16 %v308
    %v635 = vunpack.c.l.b16 %v309
    %v636 = vunpack.c.h.b16 %v309
    %v637 = vunpack.c.l.b16 %v310
    %v638 = vunpack.c.h.b16 %v310
    %v639 = vunpack.c.l.b16 %v311
    %v640 = vunpack.c.h.b16 %v311
    %v641 = vunpack.c.l.b16 %v312
    %v642 = vunpack.c.h.b16 %v312
    %v643 = vunpack.c.l.b16 %v313
    %v644 = vunpack.c.h.b16 %v313
    %v645 = vunpack.c.l.b16 %v314
    %v646 = vunpack.c.h.b16 %v314
    %v647 = vunpack.c.l.b16 %v315
    %v648 = vunpack.c.h.b16 %v315
    %v649 = vunpack.c.l.b16 %v316
    %v650 = vunpack.c.h.b16 %v316
    %v651 = vunpack.c.l.b16 %v317
    %v652 = vunpack.c.h.b16 %v317
    %v653 = vunpack.c.l.b16 %v318
    %v654 = vunpack.c.h.b16 %v318
    %v655 = vunpack.c.l.b16 %v319
    %v656 = vunpack.c.h.b16 %v319
    %v657 = vunpack.c.l.b16 %v320
    %v658 = vunpack.c.h.b16 %v320
    %v659 = vunpack.c.l.b16 %v321
    %v660 = vunpack.c.h.b16 %v321
    %v661 = vunpack.c.l.b16 %v322
    %v662 = vunpack.c.h.b16 %v322
    %v663 = vunpack.c.l.b16 %v323
    %v664 = vunpack.c.h.b16 %v323
    %v665 = vunpack.c.l.b16 %v324
    %v666 = vunpack.c.h.b16 %v324
    %v667 = vunpack.c.l.b16 %v325
    %v668 = vunpack.c.h.b16 %v325
    %v669 = vunpack.c.l.b16 %v326
    %v670 = vunpack.c.h.b16 %v326
    %v671 = vunpack.c.l.b16 %v327
    %v672 = vunpack.c.h.b16 %v327
    %v673 = vunpack.c.l.b16 %v328
    %v674 = vunpack.c.h.b16 %v328
    %v675 = vunpack.c.l.b16 %v329
    %v676 = vunpack.c.h.b16 %v329
    %v677 = vunpack.c.l.b16 %v330
    %v678 = vunpack.c.h.b16 %v330
    %v679 = vunpack.c.l.b16 %v331
    %v680 = vunpack.c.h.b16 %v331
    %v681 = vunpack.c.l.b16 %v332
    %v682 = vunpack.c.h.b16 %v332
    %v683 = vunpack.c.l.b16 %v333
    %v684 = vunpack.c.h.b16 %v333
    %v685 = vunpack.c.l.b16 %v334
    %v686 = vunpack.c.h.b16 %v334
    %v687 = vunpack.c.l.b16 %v335
    %v688 = vunpack.c.h.b16 %v335
    %v689 = vunpack.c.l.b16 %v336
    %v690 = vunpack.c.h.b16 %v336
    %v691 = vunpack.c.l.b16 %v337
    %v692 = vunpack.c.h.b16 %v337
    %v693 = vunpack.c.l.b16 %v338
    %v694 = vunpack.c.h.b16 %v338
    %v695 = vunpack.c.l.b16 %v339
    %v696 = vunpack.c.h.b16 %v339
    %v697 = vunpack.c.l.b16 %v340
    %v698 = vunpack.c.h.b16 %v340
    %v699 = vunpack.c.l.b16 %v341
    %v700 = vunpack.c.h.b16 %v341
    %v701 = vunpack.c.l.b16 %v342
    %v702 = vunpack.c.h.b16 %v342
    %v703 = vunpack.c.l.b16 %v343
    %v704 = vunpack.c.h.b16 %v343
    %v705 = vunpack.c.l.b16 %v344
    %v706 = vunpack.c.h.b16 %v344
    %v707 = vunpack.c.l.b16 %v345
    %v708 = vunpack.c.h.b16 %v345
    %v709 = vunpack.c.l.b16 %v346
    %v710 = vunpack.c.h.b16 %v346
    %v711 = vunpack.c.l.b16 %v347
    %v712 = vunpack.c.h.b16 %v347
    %v713 = vunpack.c.l.b16 %v348
    %v714 = vunpack.c.h.b16 %v348
    %v715 = vunpack.c.l.b16 %v349
    %v716 = vunpack.c.h.b16 %v349
    %v717 = vunpack.c.l.b16 %v350
    %v718 = vunpack.c.h.b16 %v350
    %v719 = vunpack.c.l.b16 %v351
    %v720 = vunpack.c.h.b16 %v351
    %v721 = vunpack.c.l.b16 %v352
    %v722 = vunpack.c.h.b16 %v352
    %v723 = vunpack.c.l.b16 %v353
    %v724 = vunpack.c.h.b16 %v353
    %v725 = vunpack.c.l.b16 %v354
    %v726 = vunpack.c.h.b16 %v354
    %v727 = vunpack.c.l.b16 %v355
    %v728 = vunpack.c.h.b16 %v355
    %v729 = vunpack.c.l.b16 %v356
    %v730 = vunpack.c.h.b16 %v356
    %v731 = vunpack.c.l.b16 %v357
    %v732 = vunpack.c.h.b16 %v357
    %v733 = vunpack.c.l.b16 %v358
    %v734 = vunpack.c.h.b16 %v358
    %v735 = vunpack.c.l.b16 %v359
    %v736 = vunpack.c.h.b16 %v359
    %v737 = vunpack.c.l.b16 %v360
    %v738 = vunpack.c.h.b16 %v360
    %v739 = vunpack.c.l.b16 %v361
    %v740 = vunpack.c.h.b16 %v361
    %v741 = vunpack.c.l.b16 %v362
    %v742 = vunpack.c.h.b16 %v362
    %v743 = vunpack.c.l.b16 %v363
    %v744 = vunpack.c.h.b16 %v363
    %v745 = vunpack.c.l.b16 %v364
    %v746 = vunpack.c.h.b16 %v364
    %v747 = vunpack.c.l.b16 %v365
    %v748 = vunpack.c.h.b16 %v365
    %v749 = vunpack.c.l.b16 %v366
    %v750 = vunpack.c.h.b16 %v366
    %v751 = vunpack.c.l.b16 %v367
    %v752 = vunpack.c.h.b16 %v367
    %v753 = vunpack.c.l.b16 %v368
    %v754 = vunpack.c.h.b16 %v368
    %v755 = vunpack.c.l.b16 %v369
    %v756 = vunpack.c.h.b16 %v369
    %v757 = vunpack.c.l.b16 %v370
    %v758 = vunpack.c.h.b16 %v370
    %v759 = vunpack.c.l.b16 %v371
    %v760 = vunpack.c.h.b16 %v371
    %v761 = vunpack.c.l.b16 %v372
    %v762 = vunpack.c.h.b16 %v372
    %v763 = vunpack.c.l.b16 %v373
    %v764 = vunpack.c.h.b16 %v373
    %v765 = vunpack.c.l.b16 %v374
    %v766 = vunpack.c.h.b16 %v374
    %v767 = vunpack.c.l.b16 %v375
    %v768 = vunpack.c.h.b16 %v375
    %v769 = vunpack.c.l.b16 %v376
    %v770 = vunpack.c.h.b16 %v376
    %v771 = vunpack.c.l.b16 %v377
    %v772 = vunpack.c.h.b16 %v377
    %v773 = vunpack.c.l.b16 %v378
    %v774 = vunpack.c.h.b16 %v378
    %v775 = vunpack.c.l.b16 %v379
    %v776 = vunpack.c.h.b16 %v379
    %v777 = vunpack.c.l.b16 %v380
    %v778 = vunpack.c.h.b16 %v380
    %v779 = vunpack.c.l.b16 %v381
    %v780 = vunpack.c.h.b16 %v381
    %v781 = vunpack.c.l.b16 %v382
    %v782 = vunpack.c.h.b16 %v382
    %v783 = vunpack.c.l.b16 %v383
    %v784 = vunpack.c.h.b16 %v383
    %v785 = vunpack.c.l.b16 %v384
    %v786 = vunpack.c.h.b16 %v384
    %v787 = vunpack.c.l.b16 %v385
    %v788 = vunpack.c.h.b16 %v385
    %v789 = vunpack.c.l.b16 %v386
    %v790 = vunpack.c.h.b16 %v386
    %v791 = vunpack.c.l.b16 %v387
    %v792 = vunpack.c.h.b16 %v387
    %v793 = vunpack.c.l.b16 %v388
    %v794 = vunpack.c.h.b16 %v388
    %v795 = vunpack.c.l.b16 %v389
    %v796 = vunpack.c.h.b16 %v389
    %v797 = vunpack.c.l.b16 %v390
    %v798 = vunpack.c.h.b16 %v390
    %v799 = vunpack.c.l.b16 %v391
    %v800 = vunpack.c.h.b16 %v391
    %v801 = vpack.c.b16 %v553, %v545
    %v802 = vpack.c.b16 %v554, %v546
    %v803 = vpack.c.b16 %v555, %v547
    %v804 = vpack.c.b16 %v556, %v548
    %v805 = vpack.c.b16 %v557, %v549
    %v806 = vpack.c.b16 %v558, %v550
    %v807 = vpack.c.b16 %v559, %v551
    %v808 = vpack.c.b16 %v560, %v552
    %v809 = vpack.c.b16 %v569, %v561
    %v810 = vpack.c.b16 %v570, %v562
    %v811 = vpack.c.b16 %v571, %v563
    %v812 = vpack.c.b16 %v572, %v564
    %v813 = vpack.c.b16 %v573, %v565
    %v814 = vpack.c.b16 %v574, %v566
    %v815 = vpack.c.b16 %v575, %v567
    %v816 = vpack.c.b16 %v576, %v568
    %v817 = vpack.c.b16 %v585, %v577
    %v818 = vpack.c.b16 %v586, %v578
    %v819 = vpack.c.b16 %v587, %v579
    %v820 = vpack.c.b16 %v588, %v580
    %v821 = vpack.c.b16 %v589, %v581
    %v822 = vpack.c.b16 %v590, %v582
    %v823 = vpack.c.b16 %v591, %v583
    %v824 = vpack.c.b16 %v592, %v584
    %v825 = vpack.c.b16 %v601, %v593
    %v826 = vpack.c.b16 %v602, %v594
    %v827 = vpack.c.b16 %v603, %v595
    %v828 = vpack.c.b16 %v604, %v596
    %v829 = vpack.c.b16 %v605, %v597
    %v830 = vpack.c.b16 %v606, %v598
    %v831 = vpack.c.b16 %v607, %v599
    %v832 = vpack.c.b16 %v608, %v600
    %v833 = vpack.c.b16 %v617, %v609
    %v834 = vpack.c.b16 %v618, %v610
    %v835 = vpack.c.b16 %v619, %v611
    %v836 = vpack.c.b16 %v620, %v612
    %v837 = vpack.c.b16 %v621, %v613
    %v838 = vpack.c.b16 %v622, %v614
    %v839 = vpack.c.b16 %v623, %v615
    %v840 = vpack.c.b16 %v624, %v616
    %v841 = vpack.c.b16 %v633, %v625
    %v842 = vpack.c.b16 %v634, %v626
    %v843 = vpack.c.b16 %v635, %v627
    %v844 = vpack.c.b16 %v636, %v628
    %v845 = vpack.c.b16 %v637, %v629
    %v846 = vpack.c.b16 %v638, %v630
    %v847 = vpack.c.b16 %v639, %v631
    %v848 = vpack.c.b16 %v640, %v632
    %v849 = vpack.c.b16 %v649, %v641
    %v850 = vpack.c.b16 %v650, %v642
    %v851 = vpack.c.b16 %v651, %v643
    %v852 = vpack.c.b16 %v652, %v644
    %v853 = vpack.c.b16 %v653, %v645
    %v854 = vpack.c.b16 %v654, %v646
    %v855 = vpack.c.b16 %v655, %v647
    %v856 = vpack.c.b16 %v656, %v648
    %v857 = vpack.c.b16 %v665, %v657
    %v858 = vpack.c.b16 %v666, %v658
    %v859 = vpack.c.b16 %v667, %v659
    %v860 = vpack.c.b16 %v668, %v660
    %v861 = vpack.c.b16 %v669, %v661
    %v862 = vpack.c.b16 %v670, %v662
    %v863 = vpack.c.b16 %v671, %v663
    %v864 = vpack.c.b16 %v672, %v664
    %v865 = vpack.c.b16 %v681, %v673
    %v866 = vpack.c.b16 %v682, %v674
    %v867 = vpack.c.b16 %v683, %v675
    %v868 = vpack.c.b16 %v684, %v676
    %v869 = vpack.c.b16 %v685, %v677
    %v870 = vpack.c.b16 %v686, %v678
    %v871 = vpack.c.b16 %v687, %v679
    %v872 = vpack.c.b16 %v688, %v680
    %v873 = vpack.c.b16 %v697, %v689
    %v874 = vpack.c.b16 %v698, %v690
    %v875 = vpack.c.b16 %v699, %v691
    %v876 = vpack.c.b16 %v700, %v692
    %v877 = vpack.c.b16 %v701, %v693
    %v878 = vpack.c.b16 %v702, %v694
    %v879 = vpack.c.b16 %v703, %v695
    %v880 = vpack.c.b16 %v704, %v696
    %v881 = vpack.c.b16 %v713, %v705
    %v882 = vpack.c.b16 %v714, %v706
    %v883 = vpack.c.b16 %v715, %v707
    %v884 = vpack.c.b16 %v716, %v708
    %v885 = vpack.c.b16 %v717, %v709
    %v886 = vpack.c.b16 %v718, %v710
    %v887 = vpack.c.b16 %v719, %v711
    %v888 = vpack.c.b16 %v720, %v712
    %v889 = vpack.c.b16 %v729, %v721
    %v890 = vpack.c.b16 %v730, %v722
    %v891 = vpack.c.b16 %v731, %v723
    %v892 = vpack.c.b16 %v732, %v724
    %v893 = vpack.c.b16 %v733, %v725
    %v894 = vpack.c.b16 %v734, %v726
    %v895 = vpack.c.b16 %v735, %v727
    %v896 = vpack.c.b16 %v736, %v728
    %v897 = vpack.c.b16 %v745, %v737
    %v898 = vpack.c.b16 %v746, %v738
    %v899 = vpack.c.b16 %v747, %v739
    %v900 = vpack.c.b16 %v748, %v740
    %v901 = vpack.c.b16 %v749, %v741
    %v902 = vpack.c.b16 %v750, %v742
    %v903 = vpack.c.b16 %v751, %v743
    %v904 = vpack.c.b16 %v752, %v744
    %v905 = vpack.c.b16 %v761, %v753
    %v906 = vpack.c.b16 %v762, %v754
    %v907 = vpack.c.b16 %v763, %v755
    %v908 = vpack.c.b16 %v764, %v756
    %v909 = vpack.c.b16 %v765, %v757
    %v910 = vpack.c.b16 %v766, %v758
    %v911 = vpack.c.b16 %v767, %v759
    %v912 = vpack.c.b16 %v768, %v760
    %v913 = vpack.c.b16 %v777, %v769
    %v914 = vpack.c.b16 %v778, %v770
    %v915 = vpack.c.b16 %v779, %v771
    %v916 = vpack.c.b16 %v780, %v772
    %v917 = vpack.c.b16 %v781, %v773
    %v918 = vpack.c.b16 %v782, %v774
    %v919 = vpack.c.b16 %v783, %v775
    %v920 = vpack.c.b16 %v784, %v776
    %v921 = vpack.c.b16 %v793, %v785
    %v922 = vpack.c.b16 %v794, %v786
    %v923 = vpack.c.b16 %v795, %v787
    %v924 = vpack.c.b16 %v796, %v788
    %v925 = vpack.c.b16 %v797, %v789
    %v926 = vpack.c.b16 %v798, %v790
    %v927 = vpack.c.b16 %v799, %v791
    %v928 = vpack.c.b16 %v800, %v792
    %1057 = vmatpush.bf16.msra.mxu0 %v857
    %1058 = vmatpush.bf16.msra.mxu0 %v849
    %1059 = vmatpush.bf16.msra.mxu0 %v841
    %1060 = vmatpush.bf16.msra.mxu0 %v833
    %1061 = vmatpush.bf16.msra.mxu0 %v825
    %1062 = vmatpush.bf16.msra.mxu0 %v817
    %1063 = vmatpush.bf16.msra.mxu0 %v809
    %1064 = vmatpush.bf16.msra.mxu0 %v801
    %1065 = vmatmul.bf16.gmra.mxu0 %v413
    %v1066 = vpop.f32.mrf.mxu0
    %v1067 = vadd.f32 %v394, %v1066
    %v1068 = vpop.f32.mrf.mxu0
    %1069 = vdwg.mxu0
    %1070 = vmatpush.bf16.msra.mxu0 %v921
    %1071 = vmatpush.bf16.msra.mxu0 %v913
    %1072 = vmatpush.bf16.msra.mxu0 %v905
    %1073 = vmatpush.bf16.msra.mxu0 %v897
    %1074 = vmatpush.bf16.msra.mxu0 %v889
    %1075 = vmatpush.bf16.msra.mxu0 %v881
    %1076 = vmatpush.bf16.msra.mxu0 %v873
    %1077 = vmatpush.bf16.msra.mxu0 %v865
    %1078 = vmatmul.bf16.gmra.mxu0 %v414
    %v1079 = vpop.f32.mrf.mxu0
    %v1080 = vadd.f32 %v1067, %v1079
    %v1081 = vpop.f32.mrf.mxu0
    %1082 = vdwg.mxu0
    %1083 = vmatpush.bf16.msra.mxu0 %v858
    %1084 = vmatpush.bf16.msra.mxu0 %v850
    %1085 = vmatpush.bf16.msra.mxu0 %v842
    %1086 = vmatpush.bf16.msra.mxu0 %v834
    %1087 = vmatpush.bf16.msra.mxu0 %v826
    %1088 = vmatpush.bf16.msra.mxu0 %v818
    %1089 = vmatpush.bf16.msra.mxu0 %v810
    %1090 = vmatpush.bf16.msra.mxu0 %v802
    %1091 = vmatmul.bf16.gmra.mxu0 %v413
    %v1092 = vpop.f32.mrf.mxu0
    %v1093 = vadd.f32 %v395, %v1092
    %v1094 = vpop.f32.mrf.mxu0
    %1095 = vdwg.mxu0
    %1096 = vmatpush.bf16.msra.mxu0 %v922
    %1097 = vmatpush.bf16.msra.mxu0 %v914
    %1098 = vmatpush.bf16.msra.mxu0 %v906
    %1099 = vmatpush.bf16.msra.mxu0 %v898
    %1100 = vmatpush.bf16.msra.mxu0 %v890
    %1101 = vmatpush.bf16.msra.mxu0 %v882
    %1102 = vmatpush.bf16.msra.mxu0 %v874
    %1103 = vmatpush.bf16.msra.mxu0 %v866
    %1104 = vmatmul.bf16.gmra.mxu0 %v414
    %v1105 = vpop.f32.mrf.mxu0
    %v1106 = vadd.f32 %v1093, %v1105
    %v1107 = vpop.f32.mrf.mxu0
    %1108 = vdwg.mxu0
    %1109 = vmatpush.bf16.msra.mxu0 %v859
    %1110 = vmatpush.bf16.msra.mxu0 %v851
    %1111 = vmatpush.bf16.msra.mxu0 %v843
    %1112 = vmatpush.bf16.msra.mxu0 %v835
    %1113 = vmatpush.bf16.msra.mxu0 %v827
    %1114 = vmatpush.bf16.msra.mxu0 %v819
    %1115 = vmatpush.bf16.msra.mxu0 %v811
    %1116 = vmatpush.bf16.msra.mxu0 %v803
    %1117 = vmatmul.bf16.gmra.mxu0 %v413
    %v1118 = vpop.f32.mrf.mxu0
    %v1119 = vadd.f32 %v396, %v1118
    %v1120 = vpop.f32.mrf.mxu0
    %1121 = vdwg.mxu0
    %1122 = vmatpush.bf16.msra.mxu0 %v923
    %1123 = vmatpush.bf16.msra.mxu0 %v915
    %1124 = vmatpush.bf16.msra.mxu0 %v907
    %1125 = vmatpush.bf16.msra.mxu0 %v899
    %1126 = vmatpush.bf16.msra.mxu0 %v891
    %1127 = vmatpush.bf16.msra.mxu0 %v883
    %1128 = vmatpush.bf16.msra.mxu0 %v875
    %1129 = vmatpush.bf16.msra.mxu0 %v867
    %1130 = vmatmul.bf16.gmra.mxu0 %v414
    %v1131 = vpop.f32.mrf.mxu0
    %v1132 = vadd.f32 %v1119, %v1131
    %v1133 = vpop.f32.mrf.mxu0
    %1134 = vdwg.mxu0
    %1135 = vmatpush.bf16.msra.mxu0 %v860
    %1136 = vmatpush.bf16.msra.mxu0 %v852
    %1137 = vmatpush.bf16.msra.mxu0 %v844
    %1138 = vmatpush.bf16.msra.mxu0 %v836
    %1139 = vmatpush.bf16.msra.mxu0 %v828
    %1140 = vmatpush.bf16.msra.mxu0 %v820
    %1141 = vmatpush.bf16.msra.mxu0 %v812
    %1142 = vmatpush.bf16.msra.mxu0 %v804
    %1143 = vmatmul.bf16.gmra.mxu0 %v413
    %v1144 = vpop.f32.mrf.mxu0
    %v1145 = vadd.f32 %v397, %v1144
    %v1146 = vpop.f32.mrf.mxu0
    %1147 = vdwg.mxu0
    %1148 = vmatpush.bf16.msra.mxu0 %v924
    %1149 = vmatpush.bf16.msra.mxu0 %v916
    %1150 = vmatpush.bf16.msra.mxu0 %v908
    %1151 = vmatpush.bf16.msra.mxu0 %v900
    %1152 = vmatpush.bf16.msra.mxu0 %v892
    %1153 = vmatpush.bf16.msra.mxu0 %v884
    %1154 = vmatpush.bf16.msra.mxu0 %v876
    %1155 = vmatpush.bf16.msra.mxu0 %v868
    %1156 = vmatmul.bf16.gmra.mxu0 %v414
    %v1157 = vpop.f32.mrf.mxu0
    %v1158 = vadd.f32 %v1145, %v1157
    %v1159 = vpop.f32.mrf.mxu0
    %1160 = vdwg.mxu0
    %1161 = vmatpush.bf16.msra.mxu0 %v861
    %1162 = vmatpush.bf16.msra.mxu0 %v853
    %1163 = vmatpush.bf16.msra.mxu0 %v845
    %1164 = vmatpush.bf16.msra.mxu0 %v837
    %1165 = vmatpush.bf16.msra.mxu0 %v829
    %1166 = vmatpush.bf16.msra.mxu0 %v821
    %1167 = vmatpush.bf16.msra.mxu0 %v813
    %1168 = vmatpush.bf16.msra.mxu0 %v805
    %1169 = vmatmul.bf16.gmra.mxu0 %v413
    %v1170 = vpop.f32.mrf.mxu0
    %v1171 = vadd.f32 %v398, %v1170
    %v1172 = vpop.f32.mrf.mxu0
    %1173 = vdwg.mxu0
    %1174 = vmatpush.bf16.msra.mxu0 %v925
    %1175 = vmatpush.bf16.msra.mxu0 %v917
    %1176 = vmatpush.bf16.msra.mxu0 %v909
    %1177 = vmatpush.bf16.msra.mxu0 %v901
    %1178 = vmatpush.bf16.msra.mxu0 %v893
    %1179 = vmatpush.bf16.msra.mxu0 %v885
    %1180 = vmatpush.bf16.msra.mxu0 %v877
    %1181 = vmatpush.bf16.msra.mxu0 %v869
    %1182 = vmatmul.bf16.gmra.mxu0 %v414
    %v1183 = vpop.f32.mrf.mxu0
    %v1184 = vadd.f32 %v1171, %v1183
    %v1185 = vpop.f32.mrf.mxu0
    %1186 = vdwg.mxu0
    %1187 = vmatpush.bf16.msra.mxu0 %v862
    %1188 = vmatpush.bf16.msra.mxu0 %v854
    %1189 = vmatpush.bf16.msra.mxu0 %v846
    %1190 = vmatpush.bf16.msra.mxu0 %v838
    %1191 = vmatpush.bf16.msra.mxu0 %v830
    %1192 = vmatpush.bf16.msra.mxu0 %v822
    %1193 = vmatpush.bf16.msra.mxu0 %v814
    %1194 = vmatpush.bf16.msra.mxu0 %v806
    %1195 = vmatmul.bf16.gmra.mxu0 %v413
    %v1196 = vpop.f32.mrf.mxu0
    %v1197 = vadd.f32 %v399, %v1196
    %v1198 = vpop.f32.mrf.mxu0
    %1199 = vdwg.mxu0
    %1200 = vmatpush.bf16.msra.mxu0 %v926
    %1201 = vmatpush.bf16.msra.mxu0 %v918
    %1202 = vmatpush.bf16.msra.mxu0 %v910
    %1203 = vmatpush.bf16.msra.mxu0 %v902
    %1204 = vmatpush.bf16.msra.mxu0 %v894
    %1205 = vmatpush.bf16.msra.mxu0 %v886
    %1206 = vmatpush.bf16.msra.mxu0 %v878
    %1207 = vmatpush.bf16.msra.mxu0 %v870
    %1208 = vmatmul.bf16.gmra.mxu0 %v414
    %v1209 = vpop.f32.mrf.mxu0
    %v1210 = vadd.f32 %v1197, %v1209
    %v1211 = vpop.f32.mrf.mxu0
    %1212 = vdwg.mxu0
    %1213 = vmatpush.bf16.msra.mxu0 %v863
    %1214 = vmatpush.bf16.msra.mxu0 %v855
    %1215 = vmatpush.bf16.msra.mxu0 %v847
    %1216 = vmatpush.bf16.msra.mxu0 %v839
    %1217 = vmatpush.bf16.msra.mxu0 %v831
    %1218 = vmatpush.bf16.msra.mxu0 %v823
    %1219 = vmatpush.bf16.msra.mxu0 %v815
    %1220 = vmatpush.bf16.msra.mxu0 %v807
    %1221 = vmatmul.bf16.gmra.mxu0 %v413
    %v1222 = vpop.f32.mrf.mxu0
    %v1223 = vadd.f32 %v400, %v1222
    %v1224 = vpop.f32.mrf.mxu0
    %1225 = vdwg.mxu0
    %1226 = vmatpush.bf16.msra.mxu0 %v927
    %1227 = vmatpush.bf16.msra.mxu0 %v919
    %1228 = vmatpush.bf16.msra.mxu0 %v911
    %1229 = vmatpush.bf16.msra.mxu0 %v903
    %1230 = vmatpush.bf16.msra.mxu0 %v895
    %1231 = vmatpush.bf16.msra.mxu0 %v887
    %1232 = vmatpush.bf16.msra.mxu0 %v879
    %1233 = vmatpush.bf16.msra.mxu0 %v871
    %1234 = vmatmul.bf16.gmra.mxu0 %v414
    %v1235 = vpop.f32.mrf.mxu0
    %v1236 = vadd.f32 %v1223, %v1235
    %v1237 = vpop.f32.mrf.mxu0
    %1238 = vdwg.mxu0
    %1239 = vmatpush.bf16.msra.mxu0 %v864
    %1240 = vmatpush.bf16.msra.mxu0 %v856
    %1241 = vmatpush.bf16.msra.mxu0 %v848
    %1242 = vmatpush.bf16.msra.mxu0 %v840
    %1243 = vmatpush.bf16.msra.mxu0 %v832
    %1244 = vmatpush.bf16.msra.mxu0 %v824
    %1245 = vmatpush.bf16.msra.mxu0 %v816
    %1246 = vmatpush.bf16.msra.mxu0 %v808
    %1247 = vmatmul.bf16.gmra.mxu0 %v413
    %v1248 = vpop.f32.mrf.mxu0
    %v1249 = vadd.f32 %v401, %v1248
    %v1250 = vpop.f32.mrf.mxu0
    %1251 = vdwg.mxu0
    %1252 = vmatpush.bf16.msra.mxu0 %v928
    %1253 = vmatpush.bf16.msra.mxu0 %v920
    %1254 = vmatpush.bf16.msra.mxu0 %v912
    %1255 = vmatpush.bf16.msra.mxu0 %v904
    %1256 = vmatpush.bf16.msra.mxu0 %v896
    %1257 = vmatpush.bf16.msra.mxu0 %v888
    %1258 = vmatpush.bf16.msra.mxu0 %v880
    %1259 = vmatpush.bf16.msra.mxu0 %v872
    %1260 = vmatmul.bf16.gmra.mxu0 %v414
    %v1261 = vpop.f32.mrf.mxu0
    %v1262 = vadd.f32 %v1249, %v1261
    %v1263 = vpop.f32.mrf.mxu0
    %1264 = vdwg.mxu0
    %v1265 = vmax.f32 %v1080, 0.0
    %v1266 = vmax.f32 %v1106, 0.0
    %v1267 = vmax.f32 %v1132, 0.0
    %v1268 = vmax.f32 %v1158, 0.0
    %v1269 = vmax.f32 %v1184, 0.0
    %v1270 = vmax.f32 %v1210, 0.0
    %v1271 = vmax.f32 %v1236, 0.0
    %v1272 = vmax.f32 %v1262, 0.0
    %v1273 = vld [vmem:[#allocation8] sm:$0xff]
    %v1274 = vld [vmem:[#allocation8 + $0x8] sm:$0xff]
    %v1275 = vld [vmem:[#allocation8 + $0x10] sm:$0xff]
    %v1276 = vld [vmem:[#allocation8 + $0x18] sm:$0xff]
    %v1277 = vld [vmem:[#allocation8 + $0x20] sm:$0xff]
    %v1278 = vld [vmem:[#allocation8 + $0x28] sm:$0xff]
    %v1279 = vld [vmem:[#allocation8 + $0x30] sm:$0xff]
    %v1280 = vld [vmem:[#allocation8 + $0x38] sm:$0xff]
    %v1281 = vld [vmem:[#allocation8 + $0x40] sm:$0xff]
    %v1282 = vld [vmem:[#allocation8 + $0x48] sm:$0xff]
    %v1283 = vld [vmem:[#allocation8 + $0x50] sm:$0xff]
    %v1284 = vld [vmem:[#allocation8 + $0x58] sm:$0xff]
    %v1285 = vld [vmem:[#allocation8 + $0x60] sm:$0xff]
    %v1286 = vld [vmem:[#allocation8 + $0x68] sm:$0xff]
    %v1287 = vld [vmem:[#allocation8 + $0x70] sm:$0xff]
    %v1288 = vld [vmem:[#allocation8 + $0x78] sm:$0xff]
    %v1289 = vld [vmem:[#allocation8 + $0x80] sm:$0xff]
    %v1290 = vld [vmem:[#allocation8 + $0x88] sm:$0xff]
    %v1291 = vld [vmem:[#allocation8 + $0x90] sm:$0xff]
    %v1292 = vld [vmem:[#allocation8 + $0x98] sm:$0xff]
    %v1293 = vld [vmem:[#allocation8 + $0xa0] sm:$0xff]
    %v1294 = vld [vmem:[#allocation8 + $0xa8] sm:$0xff]
    %v1295 = vld [vmem:[#allocation8 + $0xb0] sm:$0xff]
    %v1296 = vld [vmem:[#allocation8 + $0xb8] sm:$0xff]
    %v1297 = vld [vmem:[#allocation8 + $0xc0] sm:$0xff]
    %v1298 = vld [vmem:[#allocation8 + $0xc8] sm:$0xff]
    %v1299 = vld [vmem:[#allocation8 + $0xd0] sm:$0xff]
    %v1300 = vld [vmem:[#allocation8 + $0xd8] sm:$0xff]
    %v1301 = vld [vmem:[#allocation8 + $0xe0] sm:$0xff]
    %v1302 = vld [vmem:[#allocation8 + $0xe8] sm:$0xff]
    %v1303 = vld [vmem:[#allocation8 + $0xf0] sm:$0xff]
    %v1304 = vld [vmem:[#allocation8 + $0xf8] sm:$0xff]
    %v1305 = vld [vmem:[#allocation8 + $0x100] sm:$0xff]
    %v1306 = vld [vmem:[#allocation8 + $0x108] sm:$0xff]
    %v1307 = vld [vmem:[#allocation8 + $0x110] sm:$0xff]
    %v1308 = vld [vmem:[#allocation8 + $0x118] sm:$0xff]
    %v1309 = vld [vmem:[#allocation8 + $0x120] sm:$0xff]
    %v1310 = vld [vmem:[#allocation8 + $0x128] sm:$0xff]
    %v1311 = vld [vmem:[#allocation8 + $0x130] sm:$0xff]
    %v1312 = vld [vmem:[#allocation8 + $0x138] sm:$0xff]
    %v1313 = vld [vmem:[#allocation8 + $0x140] sm:$0xff]
    %v1314 = vld [vmem:[#allocation8 + $0x148] sm:$0xff]
    %v1315 = vld [vmem:[#allocation8 + $0x150] sm:$0xff]
    %v1316 = vld [vmem:[#allocation8 + $0x158] sm:$0xff]
    %v1317 = vld [vmem:[#allocation8 + $0x160] sm:$0xff]
    %v1318 = vld [vmem:[#allocation8 + $0x168] sm:$0xff]
    %v1319 = vld [vmem:[#allocation8 + $0x170] sm:$0xff]
    %v1320 = vld [vmem:[#allocation8 + $0x178] sm:$0xff]
    %v1321 = vld [vmem:[#allocation8 + $0x180] sm:$0xff]
    %v1322 = vld [vmem:[#allocation8 + $0x188] sm:$0xff]
    %v1323 = vld [vmem:[#allocation8 + $0x190] sm:$0xff]
    %v1324 = vld [vmem:[#allocation8 + $0x198] sm:$0xff]
    %v1325 = vld [vmem:[#allocation8 + $0x1a0] sm:$0xff]
    %v1326 = vld [vmem:[#allocation8 + $0x1a8] sm:$0xff]
    %v1327 = vld [vmem:[#allocation8 + $0x1b0] sm:$0xff]
    %v1328 = vld [vmem:[#allocation8 + $0x1b8] sm:$0xff]
    %v1329 = vld [vmem:[#allocation8 + $0x1c0] sm:$0xff]
    %v1330 = vld [vmem:[#allocation8 + $0x1c8] sm:$0xff]
    %v1331 = vld [vmem:[#allocation8 + $0x1d0] sm:$0xff]
    %v1332 = vld [vmem:[#allocation8 + $0x1d8] sm:$0xff]
    %v1333 = vld [vmem:[#allocation8 + $0x1e0] sm:$0xff]
    %v1334 = vld [vmem:[#allocation8 + $0x1e8] sm:$0xff]
    %v1335 = vld [vmem:[#allocation8 + $0x1f0] sm:$0xff]
    %v1336 = vld [vmem:[#allocation8 + $0x1f8] sm:$0xff]
    %v1337 = vld [vmem:[#allocation8 + $0x200] sm:$0xff]
    %v1338 = vld [vmem:[#allocation8 + $0x208] sm:$0xff]
    %v1339 = vld [vmem:[#allocation8 + $0x210] sm:$0xff]
    %v1340 = vld [vmem:[#allocation8 + $0x218] sm:$0xff]
    %v1341 = vld [vmem:[#allocation8 + $0x220] sm:$0xff]
    %v1342 = vld [vmem:[#allocation8 + $0x228] sm:$0xff]
    %v1343 = vld [vmem:[#allocation8 + $0x230] sm:$0xff]
    %v1344 = vld [vmem:[#allocation8 + $0x238] sm:$0xff]
    %v1345 = vld [vmem:[#allocation8 + $0x240] sm:$0xff]
    %v1346 = vld [vmem:[#allocation8 + $0x248] sm:$0xff]
    %v1347 = vld [vmem:[#allocation8 + $0x250] sm:$0xff]
    %v1348 = vld [vmem:[#allocation8 + $0x258] sm:$0xff]
    %v1349 = vld [vmem:[#allocation8 + $0x260] sm:$0xff]
    %v1350 = vld [vmem:[#allocation8 + $0x268] sm:$0xff]
    %v1351 = vld [vmem:[#allocation8 + $0x270] sm:$0xff]
    %v1352 = vld [vmem:[#allocation8 + $0x278] sm:$0xff]
    %v1353 = vld [vmem:[#allocation8 + $0x280] sm:$0xff]
    %v1354 = vld [vmem:[#allocation8 + $0x288] sm:$0xff]
    %v1355 = vld [vmem:[#allocation8 + $0x290] sm:$0xff]
    %v1356 = vld [vmem:[#allocation8 + $0x298] sm:$0xff]
    %v1357 = vld [vmem:[#allocation8 + $0x2a0] sm:$0xff]
    %v1358 = vld [vmem:[#allocation8 + $0x2a8] sm:$0xff]
    %v1359 = vld [vmem:[#allocation8 + $0x2b0] sm:$0xff]
    %v1360 = vld [vmem:[#allocation8 + $0x2b8] sm:$0xff]
    %v1361 = vld [vmem:[#allocation8 + $0x2c0] sm:$0xff]
    %v1362 = vld [vmem:[#allocation8 + $0x2c8] sm:$0xff]
    %v1363 = vld [vmem:[#allocation8 + $0x2d0] sm:$0xff]
    %v1364 = vld [vmem:[#allocation8 + $0x2d8] sm:$0xff]
    %v1365 = vld [vmem:[#allocation8 + $0x2e0] sm:$0xff]
    %v1366 = vld [vmem:[#allocation8 + $0x2e8] sm:$0xff]
    %v1367 = vld [vmem:[#allocation8 + $0x2f0] sm:$0xff]
    %v1368 = vld [vmem:[#allocation8 + $0x2f8] sm:$0xff]
    %v1369 = vld [vmem:[#allocation8 + $0x300] sm:$0xff]
    %v1370 = vld [vmem:[#allocation8 + $0x308] sm:$0xff]
    %v1371 = vld [vmem:[#allocation8 + $0x310] sm:$0xff]
    %v1372 = vld [vmem:[#allocation8 + $0x318] sm:$0xff]
    %v1373 = vld [vmem:[#allocation8 + $0x320] sm:$0xff]
    %v1374 = vld [vmem:[#allocation8 + $0x328] sm:$0xff]
    %v1375 = vld [vmem:[#allocation8 + $0x330] sm:$0xff]
    %v1376 = vld [vmem:[#allocation8 + $0x338] sm:$0xff]
    %v1377 = vld [vmem:[#allocation8 + $0x340] sm:$0xff]
    %v1378 = vld [vmem:[#allocation8 + $0x348] sm:$0xff]
    %v1379 = vld [vmem:[#allocation8 + $0x350] sm:$0xff]
    %v1380 = vld [vmem:[#allocation8 + $0x358] sm:$0xff]
    %v1381 = vld [vmem:[#allocation8 + $0x360] sm:$0xff]
    %v1382 = vld [vmem:[#allocation8 + $0x368] sm:$0xff]
    %v1383 = vld [vmem:[#allocation8 + $0x370] sm:$0xff]
    %v1384 = vld [vmem:[#allocation8 + $0x378] sm:$0xff]
    %v1385 = vld [vmem:[#allocation8 + $0x380] sm:$0xff]
    %v1386 = vld [vmem:[#allocation8 + $0x388] sm:$0xff]
    %v1387 = vld [vmem:[#allocation8 + $0x390] sm:$0xff]
    %v1388 = vld [vmem:[#allocation8 + $0x398] sm:$0xff]
    %v1389 = vld [vmem:[#allocation8 + $0x3a0] sm:$0xff]
    %v1390 = vld [vmem:[#allocation8 + $0x3a8] sm:$0xff]
    %v1391 = vld [vmem:[#allocation8 + $0x3b0] sm:$0xff]
    %v1392 = vld [vmem:[#allocation8 + $0x3b8] sm:$0xff]
    %v1393 = vld [vmem:[#allocation8 + $0x3c0] sm:$0xff]
    %v1394 = vld [vmem:[#allocation8 + $0x3c8] sm:$0xff]
    %v1395 = vld [vmem:[#allocation8 + $0x3d0] sm:$0xff]
    %v1396 = vld [vmem:[#allocation8 + $0x3d8] sm:$0xff]
    %v1397 = vld [vmem:[#allocation8 + $0x3e0] sm:$0xff]
    %v1398 = vld [vmem:[#allocation8 + $0x3e8] sm:$0xff]
    %v1399 = vld [vmem:[#allocation8 + $0x3f0] sm:$0xff]
    %v1400 = vld [vmem:[#allocation8 + $0x3f8] sm:$0xff]
    %v1401 = vld [vmem:[#allocation8 + $0x400] sm:$0xff]
    %v1402 = vld [vmem:[#allocation8 + $0x408] sm:$0xff]
    %v1403 = vld [vmem:[#allocation8 + $0x410] sm:$0xff]
    %v1404 = vld [vmem:[#allocation8 + $0x418] sm:$0xff]
    %v1405 = vld [vmem:[#allocation8 + $0x420] sm:$0xff]
    %v1406 = vld [vmem:[#allocation8 + $0x428] sm:$0xff]
    %v1407 = vld [vmem:[#allocation8 + $0x430] sm:$0xff]
    %v1408 = vld [vmem:[#allocation8 + $0x438] sm:$0xff]
    %v1409 = vld [vmem:[#allocation8 + $0x440] sm:$0xff]
    %v1410 = vld [vmem:[#allocation8 + $0x448] sm:$0xff]
    %v1411 = vld [vmem:[#allocation8 + $0x450] sm:$0xff]
    %v1412 = vld [vmem:[#allocation8 + $0x458] sm:$0xff]
    %v1413 = vld [vmem:[#allocation8 + $0x460] sm:$0xff]
    %v1414 = vld [vmem:[#allocation8 + $0x468] sm:$0xff]
    %v1415 = vld [vmem:[#allocation8 + $0x470] sm:$0xff]
    %v1416 = vld [vmem:[#allocation8 + $0x478] sm:$0xff]
    %v1417 = vld [vmem:[#allocation8 + $0x480] sm:$0xff]
    %v1418 = vld [vmem:[#allocation8 + $0x488] sm:$0xff]
    %v1419 = vld [vmem:[#allocation8 + $0x490] sm:$0xff]
    %v1420 = vld [vmem:[#allocation8 + $0x498] sm:$0xff]
    %v1421 = vld [vmem:[#allocation8 + $0x4a0] sm:$0xff]
    %v1422 = vld [vmem:[#allocation8 + $0x4a8] sm:$0xff]
    %v1423 = vld [vmem:[#allocation8 + $0x4b0] sm:$0xff]
    %v1424 = vld [vmem:[#allocation8 + $0x4b8] sm:$0xff]
    %v1425 = vld [vmem:[#allocation8 + $0x4c0] sm:$0xff]
    %v1426 = vld [vmem:[#allocation8 + $0x4c8] sm:$0xff]
    %v1427 = vld [vmem:[#allocation8 + $0x4d0] sm:$0xff]
    %v1428 = vld [vmem:[#allocation8 + $0x4d8] sm:$0xff]
    %v1429 = vld [vmem:[#allocation8 + $0x4e0] sm:$0xff]
    %v1430 = vld [vmem:[#allocation8 + $0x4e8] sm:$0xff]
    %v1431 = vld [vmem:[#allocation8 + $0x4f0] sm:$0xff]
    %v1432 = vld [vmem:[#allocation8 + $0x4f8] sm:$0xff]
    %v1433 = vld [vmem:[#allocation8 + $0x500] sm:$0xff]
    %v1434 = vld [vmem:[#allocation8 + $0x508] sm:$0xff]
    %v1435 = vld [vmem:[#allocation8 + $0x510] sm:$0xff]
    %v1436 = vld [vmem:[#allocation8 + $0x518] sm:$0xff]
    %v1437 = vld [vmem:[#allocation8 + $0x520] sm:$0xff]
    %v1438 = vld [vmem:[#allocation8 + $0x528] sm:$0xff]
    %v1439 = vld [vmem:[#allocation8 + $0x530] sm:$0xff]
    %v1440 = vld [vmem:[#allocation8 + $0x538] sm:$0xff]
    %v1441 = vld [vmem:[#allocation8 + $0x540] sm:$0xff]
    %v1442 = vld [vmem:[#allocation8 + $0x548] sm:$0xff]
    %v1443 = vld [vmem:[#allocation8 + $0x550] sm:$0xff]
    %v1444 = vld [vmem:[#allocation8 + $0x558] sm:$0xff]
    %v1445 = vld [vmem:[#allocation8 + $0x560] sm:$0xff]
    %v1446 = vld [vmem:[#allocation8 + $0x568] sm:$0xff]
    %v1447 = vld [vmem:[#allocation8 + $0x570] sm:$0xff]
    %v1448 = vld [vmem:[#allocation8 + $0x578] sm:$0xff]
    %v1449 = vld [vmem:[#allocation8 + $0x580] sm:$0xff]
    %v1450 = vld [vmem:[#allocation8 + $0x588] sm:$0xff]
    %v1451 = vld [vmem:[#allocation8 + $0x590] sm:$0xff]
    %v1452 = vld [vmem:[#allocation8 + $0x598] sm:$0xff]
    %v1453 = vld [vmem:[#allocation8 + $0x5a0] sm:$0xff]
    %v1454 = vld [vmem:[#allocation8 + $0x5a8] sm:$0xff]
    %v1455 = vld [vmem:[#allocation8 + $0x5b0] sm:$0xff]
    %v1456 = vld [vmem:[#allocation8 + $0x5b8] sm:$0xff]
    %v1457 = vld [vmem:[#allocation8 + $0x5c0] sm:$0xff]
    %v1458 = vld [vmem:[#allocation8 + $0x5c8] sm:$0xff]
    %v1459 = vld [vmem:[#allocation8 + $0x5d0] sm:$0xff]
    %v1460 = vld [vmem:[#allocation8 + $0x5d8] sm:$0xff]
    %v1461 = vld [vmem:[#allocation8 + $0x5e0] sm:$0xff]
    %v1462 = vld [vmem:[#allocation8 + $0x5e8] sm:$0xff]
    %v1463 = vld [vmem:[#allocation8 + $0x5f0] sm:$0xff]
    %v1464 = vld [vmem:[#allocation8 + $0x5f8] sm:$0xff]
    %v1465 = vld [vmem:[#allocation8 + $0x600] sm:$0xff]
    %v1466 = vld [vmem:[#allocation8 + $0x608] sm:$0xff]
    %v1467 = vld [vmem:[#allocation8 + $0x610] sm:$0xff]
    %v1468 = vld [vmem:[#allocation8 + $0x618] sm:$0xff]
    %v1469 = vld [vmem:[#allocation8 + $0x620] sm:$0xff]
    %v1470 = vld [vmem:[#allocation8 + $0x628] sm:$0xff]
    %v1471 = vld [vmem:[#allocation8 + $0x630] sm:$0xff]
    %v1472 = vld [vmem:[#allocation8 + $0x638] sm:$0xff]
    %v1473 = vld [vmem:[#allocation8 + $0x640] sm:$0xff]
    %v1474 = vld [vmem:[#allocation8 + $0x648] sm:$0xff]
    %v1475 = vld [vmem:[#allocation8 + $0x650] sm:$0xff]
    %v1476 = vld [vmem:[#allocation8 + $0x658] sm:$0xff]
    %v1477 = vld [vmem:[#allocation8 + $0x660] sm:$0xff]
    %v1478 = vld [vmem:[#allocation8 + $0x668] sm:$0xff]
    %v1479 = vld [vmem:[#allocation8 + $0x670] sm:$0xff]
    %v1480 = vld [vmem:[#allocation8 + $0x678] sm:$0xff]
    %v1481 = vld [vmem:[#allocation8 + $0x680] sm:$0xff]
    %v1482 = vld [vmem:[#allocation8 + $0x688] sm:$0xff]
    %v1483 = vld [vmem:[#allocation8 + $0x690] sm:$0xff]
    %v1484 = vld [vmem:[#allocation8 + $0x698] sm:$0xff]
    %v1485 = vld [vmem:[#allocation8 + $0x6a0] sm:$0xff]
    %v1486 = vld [vmem:[#allocation8 + $0x6a8] sm:$0xff]
    %v1487 = vld [vmem:[#allocation8 + $0x6b0] sm:$0xff]
    %v1488 = vld [vmem:[#allocation8 + $0x6b8] sm:$0xff]
    %v1489 = vld [vmem:[#allocation8 + $0x6c0] sm:$0xff]
    %v1490 = vld [vmem:[#allocation8 + $0x6c8] sm:$0xff]
    %v1491 = vld [vmem:[#allocation8 + $0x6d0] sm:$0xff]
    %v1492 = vld [vmem:[#allocation8 + $0x6d8] sm:$0xff]
    %v1493 = vld [vmem:[#allocation8 + $0x6e0] sm:$0xff]
    %v1494 = vld [vmem:[#allocation8 + $0x6e8] sm:$0xff]
    %v1495 = vld [vmem:[#allocation8 + $0x6f0] sm:$0xff]
    %v1496 = vld [vmem:[#allocation8 + $0x6f8] sm:$0xff]
    %v1497 = vld [vmem:[#allocation8 + $0x700] sm:$0xff]
    %v1498 = vld [vmem:[#allocation8 + $0x708] sm:$0xff]
    %v1499 = vld [vmem:[#allocation8 + $0x710] sm:$0xff]
    %v1500 = vld [vmem:[#allocation8 + $0x718] sm:$0xff]
    %v1501 = vld [vmem:[#allocation8 + $0x720] sm:$0xff]
    %v1502 = vld [vmem:[#allocation8 + $0x728] sm:$0xff]
    %v1503 = vld [vmem:[#allocation8 + $0x730] sm:$0xff]
    %v1504 = vld [vmem:[#allocation8 + $0x738] sm:$0xff]
    %v1505 = vld [vmem:[#allocation8 + $0x740] sm:$0xff]
    %v1506 = vld [vmem:[#allocation8 + $0x748] sm:$0xff]
    %v1507 = vld [vmem:[#allocation8 + $0x750] sm:$0xff]
    %v1508 = vld [vmem:[#allocation8 + $0x758] sm:$0xff]
    %v1509 = vld [vmem:[#allocation8 + $0x760] sm:$0xff]
    %v1510 = vld [vmem:[#allocation8 + $0x768] sm:$0xff]
    %v1511 = vld [vmem:[#allocation8 + $0x770] sm:$0xff]
    %v1512 = vld [vmem:[#allocation8 + $0x778] sm:$0xff]
    %v1513 = vld [vmem:[#allocation8 + $0x780] sm:$0xff]
    %v1514 = vld [vmem:[#allocation8 + $0x788] sm:$0xff]
    %v1515 = vld [vmem:[#allocation8 + $0x790] sm:$0xff]
    %v1516 = vld [vmem:[#allocation8 + $0x798] sm:$0xff]
    %v1517 = vld [vmem:[#allocation8 + $0x7a0] sm:$0xff]
    %v1518 = vld [vmem:[#allocation8 + $0x7a8] sm:$0xff]
    %v1519 = vld [vmem:[#allocation8 + $0x7b0] sm:$0xff]
    %v1520 = vld [vmem:[#allocation8 + $0x7b8] sm:$0xff]
    %v1521 = vld [vmem:[#allocation8 + $0x7c0] sm:$0xff]
    %v1522 = vld [vmem:[#allocation8 + $0x7c8] sm:$0xff]
    %v1523 = vld [vmem:[#allocation8 + $0x7d0] sm:$0xff]
    %v1524 = vld [vmem:[#allocation8 + $0x7d8] sm:$0xff]
    %v1525 = vld [vmem:[#allocation8 + $0x7e0] sm:$0xff]
    %v1526 = vld [vmem:[#allocation8 + $0x7e8] sm:$0xff]
    %v1527 = vld [vmem:[#allocation8 + $0x7f0] sm:$0xff]
    %v1528 = vld [vmem:[#allocation8 + $0x7f8] sm:$0xff]
    %v1529 = vld [vmem:[#allocation10] sm:$0xf]
    %v1530 = vpack.c.bf16 %v1265, %v1265
    %v1531 = vpack.c.bf16 %v1266, %v1266
    %v1532 = vpack.c.bf16 %v1267, %v1267
    %v1533 = vpack.c.bf16 %v1268, %v1268
    %v1534 = vpack.c.bf16 %v1269, %v1269
    %v1535 = vpack.c.bf16 %v1270, %v1270
    %v1536 = vpack.c.bf16 %v1271, %v1271
    %v1537 = vpack.c.bf16 %v1272, %v1272
    %v1539 = vperm.slane %v1529, 0
    %v1540 = vperm.slane %v1529, 1
    %v1541 = vperm.slane %v1529, 2
    %v1542 = vperm.slane %v1529, 3
    %v1803 = vunpack.c.l.b16 %v1273
    %v1804 = vunpack.c.h.b16 %v1273
    %v1805 = vunpack.c.l.b16 %v1274
    %v1806 = vunpack.c.h.b16 %v1274
    %v1807 = vunpack.c.l.b16 %v1275
    %v1808 = vunpack.c.h.b16 %v1275
    %v1809 = vunpack.c.l.b16 %v1276
    %v1810 = vunpack.c.h.b16 %v1276
    %v1811 = vunpack.c.l.b16 %v1277
    %v1812 = vunpack.c.h.b16 %v1277
    %v1813 = vunpack.c.l.b16 %v1278
    %v1814 = vunpack.c.h.b16 %v1278
    %v1815 = vunpack.c.l.b16 %v1279
    %v1816 = vunpack.c.h.b16 %v1279
    %v1817 = vunpack.c.l.b16 %v1280
    %v1818 = vunpack.c.h.b16 %v1280
    %v1819 = vunpack.c.l.b16 %v1281
    %v1820 = vunpack.c.h.b16 %v1281
    %v1821 = vunpack.c.l.b16 %v1282
    %v1822 = vunpack.c.h.b16 %v1282
    %v1823 = vunpack.c.l.b16 %v1283
    %v1824 = vunpack.c.h.b16 %v1283
    %v1825 = vunpack.c.l.b16 %v1284
    %v1826 = vunpack.c.h.b16 %v1284
    %v1827 = vunpack.c.l.b16 %v1285
    %v1828 = vunpack.c.h.b16 %v1285
    %v1829 = vunpack.c.l.b16 %v1286
    %v1830 = vunpack.c.h.b16 %v1286
    %v1831 = vunpack.c.l.b16 %v1287
    %v1832 = vunpack.c.h.b16 %v1287
    %v1833 = vunpack.c.l.b16 %v1288
    %v1834 = vunpack.c.h.b16 %v1288
    %v1835 = vunpack.c.l.b16 %v1289
    %v1836 = vunpack.c.h.b16 %v1289
    %v1837 = vunpack.c.l.b16 %v1290
    %v1838 = vunpack.c.h.b16 %v1290
    %v1839 = vunpack.c.l.b16 %v1291
    %v1840 = vunpack.c.h.b16 %v1291
    %v1841 = vunpack.c.l.b16 %v1292
    %v1842 = vunpack.c.h.b16 %v1292
    %v1843 = vunpack.c.l.b16 %v1293
    %v1844 = vunpack.c.h.b16 %v1293
    %v1845 = vunpack.c.l.b16 %v1294
    %v1846 = vunpack.c.h.b16 %v1294
    %v1847 = vunpack.c.l.b16 %v1295
    %v1848 = vunpack.c.h.b16 %v1295
    %v1849 = vunpack.c.l.b16 %v1296
    %v1850 = vunpack.c.h.b16 %v1296
    %v1851 = vunpack.c.l.b16 %v1297
    %v1852 = vunpack.c.h.b16 %v1297
    %v1853 = vunpack.c.l.b16 %v1298
    %v1854 = vunpack.c.h.b16 %v1298
    %v1855 = vunpack.c.l.b16 %v1299
    %v1856 = vunpack.c.h.b16 %v1299
    %v1857 = vunpack.c.l.b16 %v1300
    %v1858 = vunpack.c.h.b16 %v1300
    %v1859 = vunpack.c.l.b16 %v1301
    %v1860 = vunpack.c.h.b16 %v1301
    %v1861 = vunpack.c.l.b16 %v1302
    %v1862 = vunpack.c.h.b16 %v1302
    %v1863 = vunpack.c.l.b16 %v1303
    %v1864 = vunpack.c.h.b16 %v1303
    %v1865 = vunpack.c.l.b16 %v1304
    %v1866 = vunpack.c.h.b16 %v1304
    %v1867 = vunpack.c.l.b16 %v1305
    %v1868 = vunpack.c.h.b16 %v1305
    %v1869 = vunpack.c.l.b16 %v1306
    %v1870 = vunpack.c.h.b16 %v1306
    %v1871 = vunpack.c.l.b16 %v1307
    %v1872 = vunpack.c.h.b16 %v1307
    %v1873 = vunpack.c.l.b16 %v1308
    %v1874 = vunpack.c.h.b16 %v1308
    %v1875 = vunpack.c.l.b16 %v1309
    %v1876 = vunpack.c.h.b16 %v1309
    %v1877 = vunpack.c.l.b16 %v1310
    %v1878 = vunpack.c.h.b16 %v1310
    %v1879 = vunpack.c.l.b16 %v1311
    %v1880 = vunpack.c.h.b16 %v1311
    %v1881 = vunpack.c.l.b16 %v1312
    %v1882 = vunpack.c.h.b16 %v1312
    %v1883 = vunpack.c.l.b16 %v1313
    %v1884 = vunpack.c.h.b16 %v1313
    %v1885 = vunpack.c.l.b16 %v1314
    %v1886 = vunpack.c.h.b16 %v1314
    %v1887 = vunpack.c.l.b16 %v1315
    %v1888 = vunpack.c.h.b16 %v1315
    %v1889 = vunpack.c.l.b16 %v1316
    %v1890 = vunpack.c.h.b16 %v1316
    %v1891 = vunpack.c.l.b16 %v1317
    %v1892 = vunpack.c.h.b16 %v1317
    %v1893 = vunpack.c.l.b16 %v1318
    %v1894 = vunpack.c.h.b16 %v1318
    %v1895 = vunpack.c.l.b16 %v1319
    %v1896 = vunpack.c.h.b16 %v1319
    %v1897 = vunpack.c.l.b16 %v1320
    %v1898 = vunpack.c.h.b16 %v1320
    %v1899 = vunpack.c.l.b16 %v1321
    %v1900 = vunpack.c.h.b16 %v1321
    %v1901 = vunpack.c.l.b16 %v1322
    %v1902 = vunpack.c.h.b16 %v1322
    %v1903 = vunpack.c.l.b16 %v1323
    %v1904 = vunpack.c.h.b16 %v1323
    %v1905 = vunpack.c.l.b16 %v1324
    %v1906 = vunpack.c.h.b16 %v1324
    %v1907 = vunpack.c.l.b16 %v1325
    %v1908 = vunpack.c.h.b16 %v1325
    %v1909 = vunpack.c.l.b16 %v1326
    %v1910 = vunpack.c.h.b16 %v1326
    %v1911 = vunpack.c.l.b16 %v1327
    %v1912 = vunpack.c.h.b16 %v1327
    %v1913 = vunpack.c.l.b16 %v1328
    %v1914 = vunpack.c.h.b16 %v1328
    %v1915 = vunpack.c.l.b16 %v1329
    %v1916 = vunpack.c.h.b16 %v1329
    %v1917 = vunpack.c.l.b16 %v1330
    %v1918 = vunpack.c.h.b16 %v1330
    %v1919 = vunpack.c.l.b16 %v1331
    %v1920 = vunpack.c.h.b16 %v1331
    %v1921 = vunpack.c.l.b16 %v1332
    %v1922 = vunpack.c.h.b16 %v1332
    %v1923 = vunpack.c.l.b16 %v1333
    %v1924 = vunpack.c.h.b16 %v1333
    %v1925 = vunpack.c.l.b16 %v1334
    %v1926 = vunpack.c.h.b16 %v1334
    %v1927 = vunpack.c.l.b16 %v1335
    %v1928 = vunpack.c.h.b16 %v1335
    %v1929 = vunpack.c.l.b16 %v1336
    %v1930 = vunpack.c.h.b16 %v1336
    %v1931 = vunpack.c.l.b16 %v1337
    %v1932 = vunpack.c.h.b16 %v1337
    %v1933 = vunpack.c.l.b16 %v1338
    %v1934 = vunpack.c.h.b16 %v1338
    %v1935 = vunpack.c.l.b16 %v1339
    %v1936 = vunpack.c.h.b16 %v1339
    %v1937 = vunpack.c.l.b16 %v1340
    %v1938 = vunpack.c.h.b16 %v1340
    %v1939 = vunpack.c.l.b16 %v1341
    %v1940 = vunpack.c.h.b16 %v1341
    %v1941 = vunpack.c.l.b16 %v1342
    %v1942 = vunpack.c.h.b16 %v1342
    %v1943 = vunpack.c.l.b16 %v1343
    %v1944 = vunpack.c.h.b16 %v1343
    %v1945 = vunpack.c.l.b16 %v1344
    %v1946 = vunpack.c.h.b16 %v1344
    %v1947 = vunpack.c.l.b16 %v1345
    %v1948 = vunpack.c.h.b16 %v1345
    %v1949 = vunpack.c.l.b16 %v1346
    %v1950 = vunpack.c.h.b16 %v1346
    %v1951 = vunpack.c.l.b16 %v1347
    %v1952 = vunpack.c.h.b16 %v1347
    %v1953 = vunpack.c.l.b16 %v1348
    %v1954 = vunpack.c.h.b16 %v1348
    %v1955 = vunpack.c.l.b16 %v1349
    %v1956 = vunpack.c.h.b16 %v1349
    %v1957 = vunpack.c.l.b16 %v1350
    %v1958 = vunpack.c.h.b16 %v1350
    %v1959 = vunpack.c.l.b16 %v1351
    %v1960 = vunpack.c.h.b16 %v1351
    %v1961 = vunpack.c.l.b16 %v1352
    %v1962 = vunpack.c.h.b16 %v1352
    %v1963 = vunpack.c.l.b16 %v1353
    %v1964 = vunpack.c.h.b16 %v1353
    %v1965 = vunpack.c.l.b16 %v1354
    %v1966 = vunpack.c.h.b16 %v1354
    %v1967 = vunpack.c.l.b16 %v1355
    %v1968 = vunpack.c.h.b16 %v1355
    %v1969 = vunpack.c.l.b16 %v1356
    %v1970 = vunpack.c.h.b16 %v1356
    %v1971 = vunpack.c.l.b16 %v1357
    %v1972 = vunpack.c.h.b16 %v1357
    %v1973 = vunpack.c.l.b16 %v1358
    %v1974 = vunpack.c.h.b16 %v1358
    %v1975 = vunpack.c.l.b16 %v1359
    %v1976 = vunpack.c.h.b16 %v1359
    %v1977 = vunpack.c.l.b16 %v1360
    %v1978 = vunpack.c.h.b16 %v1360
    %v1979 = vunpack.c.l.b16 %v1361
    %v1980 = vunpack.c.h.b16 %v1361
    %v1981 = vunpack.c.l.b16 %v1362
    %v1982 = vunpack.c.h.b16 %v1362
    %v1983 = vunpack.c.l.b16 %v1363
    %v1984 = vunpack.c.h.b16 %v1363
    %v1985 = vunpack.c.l.b16 %v1364
    %v1986 = vunpack.c.h.b16 %v1364
    %v1987 = vunpack.c.l.b16 %v1365
    %v1988 = vunpack.c.h.b16 %v1365
    %v1989 = vunpack.c.l.b16 %v1366
    %v1990 = vunpack.c.h.b16 %v1366
    %v1991 = vunpack.c.l.b16 %v1367
    %v1992 = vunpack.c.h.b16 %v1367
    %v1993 = vunpack.c.l.b16 %v1368
    %v1994 = vunpack.c.h.b16 %v1368
    %v1995 = vunpack.c.l.b16 %v1369
    %v1996 = vunpack.c.h.b16 %v1369
    %v1997 = vunpack.c.l.b16 %v1370
    %v1998 = vunpack.c.h.b16 %v1370
    %v1999 = vunpack.c.l.b16 %v1371
    %v2000 = vunpack.c.h.b16 %v1371
    %v2001 = vunpack.c.l.b16 %v1372
    %v2002 = vunpack.c.h.b16 %v1372
    %v2003 = vunpack.c.l.b16 %v1373
    %v2004 = vunpack.c.h.b16 %v1373
    %v2005 = vunpack.c.l.b16 %v1374
    %v2006 = vunpack.c.h.b16 %v1374
    %v2007 = vunpack.c.l.b16 %v1375
    %v2008 = vunpack.c.h.b16 %v1375
    %v2009 = vunpack.c.l.b16 %v1376
    %v2010 = vunpack.c.h.b16 %v1376
    %v2011 = vunpack.c.l.b16 %v1377
    %v2012 = vunpack.c.h.b16 %v1377
    %v2013 = vunpack.c.l.b16 %v1378
    %v2014 = vunpack.c.h.b16 %v1378
    %v2015 = vunpack.c.l.b16 %v1379
    %v2016 = vunpack.c.h.b16 %v1379
    %v2017 = vunpack.c.l.b16 %v1380
    %v2018 = vunpack.c.h.b16 %v1380
    %v2019 = vunpack.c.l.b16 %v1381
    %v2020 = vunpack.c.h.b16 %v1381
    %v2021 = vunpack.c.l.b16 %v1382
    %v2022 = vunpack.c.h.b16 %v1382
    %v2023 = vunpack.c.l.b16 %v1383
    %v2024 = vunpack.c.h.b16 %v1383
    %v2025 = vunpack.c.l.b16 %v1384
    %v2026 = vunpack.c.h.b16 %v1384
    %v2027 = vunpack.c.l.b16 %v1385
    %v2028 = vunpack.c.h.b16 %v1385
    %v2029 = vunpack.c.l.b16 %v1386
    %v2030 = vunpack.c.h.b16 %v1386
    %v2031 = vunpack.c.l.b16 %v1387
    %v2032 = vunpack.c.h.b16 %v1387
    %v2033 = vunpack.c.l.b16 %v1388
    %v2034 = vunpack.c.h.b16 %v1388
    %v2035 = vunpack.c.l.b16 %v1389
    %v2036 = vunpack.c.h.b16 %v1389
    %v2037 = vunpack.c.l.b16 %v1390
    %v2038 = vunpack.c.h.b16 %v1390
    %v2039 = vunpack.c.l.b16 %v1391
    %v2040 = vunpack.c.h.b16 %v1391
    %v2041 = vunpack.c.l.b16 %v1392
    %v2042 = vunpack.c.h.b16 %v1392
    %v2043 = vunpack.c.l.b16 %v1393
    %v2044 = vunpack.c.h.b16 %v1393
    %v2045 = vunpack.c.l.b16 %v1394
    %v2046 = vunpack.c.h.b16 %v1394
    %v2047 = vunpack.c.l.b16 %v1395
    %v2048 = vunpack.c.h.b16 %v1395
    %v2049 = vunpack.c.l.b16 %v1396
    %v2050 = vunpack.c.h.b16 %v1396
    %v2051 = vunpack.c.l.b16 %v1397
    %v2052 = vunpack.c.h.b16 %v1397
    %v2053 = vunpack.c.l.b16 %v1398
    %v2054 = vunpack.c.h.b16 %v1398
    %v2055 = vunpack.c.l.b16 %v1399
    %v2056 = vunpack.c.h.b16 %v1399
    %v2057 = vunpack.c.l.b16 %v1400
    %v2058 = vunpack.c.h.b16 %v1400
    %v2059 = vunpack.c.l.b16 %v1401
    %v2060 = vunpack.c.h.b16 %v1401
    %v2061 = vunpack.c.l.b16 %v1402
    %v2062 = vunpack.c.h.b16 %v1402
    %v2063 = vunpack.c.l.b16 %v1403
    %v2064 = vunpack.c.h.b16 %v1403
    %v2065 = vunpack.c.l.b16 %v1404
    %v2066 = vunpack.c.h.b16 %v1404
    %v2067 = vunpack.c.l.b16 %v1405
    %v2068 = vunpack.c.h.b16 %v1405
    %v2069 = vunpack.c.l.b16 %v1406
    %v2070 = vunpack.c.h.b16 %v1406
    %v2071 = vunpack.c.l.b16 %v1407
    %v2072 = vunpack.c.h.b16 %v1407
    %v2073 = vunpack.c.l.b16 %v1408
    %v2074 = vunpack.c.h.b16 %v1408
    %v2075 = vunpack.c.l.b16 %v1409
    %v2076 = vunpack.c.h.b16 %v1409
    %v2077 = vunpack.c.l.b16 %v1410
    %v2078 = vunpack.c.h.b16 %v1410
    %v2079 = vunpack.c.l.b16 %v1411
    %v2080 = vunpack.c.h.b16 %v1411
    %v2081 = vunpack.c.l.b16 %v1412
    %v2082 = vunpack.c.h.b16 %v1412
    %v2083 = vunpack.c.l.b16 %v1413
    %v2084 = vunpack.c.h.b16 %v1413
    %v2085 = vunpack.c.l.b16 %v1414
    %v2086 = vunpack.c.h.b16 %v1414
    %v2087 = vunpack.c.l.b16 %v1415
    %v2088 = vunpack.c.h.b16 %v1415
    %v2089 = vunpack.c.l.b16 %v1416
    %v2090 = vunpack.c.h.b16 %v1416
    %v2091 = vunpack.c.l.b16 %v1417
    %v2092 = vunpack.c.h.b16 %v1417
    %v2093 = vunpack.c.l.b16 %v1418
    %v2094 = vunpack.c.h.b16 %v1418
    %v2095 = vunpack.c.l.b16 %v1419
    %v2096 = vunpack.c.h.b16 %v1419
    %v2097 = vunpack.c.l.b16 %v1420
    %v2098 = vunpack.c.h.b16 %v1420
    %v2099 = vunpack.c.l.b16 %v1421
    %v2100 = vunpack.c.h.b16 %v1421
    %v2101 = vunpack.c.l.b16 %v1422
    %v2102 = vunpack.c.h.b16 %v1422
    %v2103 = vunpack.c.l.b16 %v1423
    %v2104 = vunpack.c.h.b16 %v1423
    %v2105 = vunpack.c.l.b16 %v1424
    %v2106 = vunpack.c.h.b16 %v1424
    %v2107 = vunpack.c.l.b16 %v1425
    %v2108 = vunpack.c.h.b16 %v1425
    %v2109 = vunpack.c.l.b16 %v1426
    %v2110 = vunpack.c.h.b16 %v1426
    %v2111 = vunpack.c.l.b16 %v1427
    %v2112 = vunpack.c.h.b16 %v1427
    %v2113 = vunpack.c.l.b16 %v1428
    %v2114 = vunpack.c.h.b16 %v1428
    %v2115 = vunpack.c.l.b16 %v1429
    %v2116 = vunpack.c.h.b16 %v1429
    %v2117 = vunpack.c.l.b16 %v1430
    %v2118 = vunpack.c.h.b16 %v1430
    %v2119 = vunpack.c.l.b16 %v1431
    %v2120 = vunpack.c.h.b16 %v1431
    %v2121 = vunpack.c.l.b16 %v1432
    %v2122 = vunpack.c.h.b16 %v1432
    %v2123 = vunpack.c.l.b16 %v1433
    %v2124 = vunpack.c.h.b16 %v1433
    %v2125 = vunpack.c.l.b16 %v1434
    %v2126 = vunpack.c.h.b16 %v1434
    %v2127 = vunpack.c.l.b16 %v1435
    %v2128 = vunpack.c.h.b16 %v1435
    %v2129 = vunpack.c.l.b16 %v1436
    %v2130 = vunpack.c.h.b16 %v1436
    %v2131 = vunpack.c.l.b16 %v1437
    %v2132 = vunpack.c.h.b16 %v1437
    %v2133 = vunpack.c.l.b16 %v1438
    %v2134 = vunpack.c.h.b16 %v1438
    %v2135 = vunpack.c.l.b16 %v1439
    %v2136 = vunpack.c.h.b16 %v1439
    %v2137 = vunpack.c.l.b16 %v1440
    %v2138 = vunpack.c.h.b16 %v1440
    %v2139 = vunpack.c.l.b16 %v1441
    %v2140 = vunpack.c.h.b16 %v1441
    %v2141 = vunpack.c.l.b16 %v1442
    %v2142 = vunpack.c.h.b16 %v1442
    %v2143 = vunpack.c.l.b16 %v1443
    %v2144 = vunpack.c.h.b16 %v1443
    %v2145 = vunpack.c.l.b16 %v1444
    %v2146 = vunpack.c.h.b16 %v1444
    %v2147 = vunpack.c.l.b16 %v1445
    %v2148 = vunpack.c.h.b16 %v1445
    %v2149 = vunpack.c.l.b16 %v1446
    %v2150 = vunpack.c.h.b16 %v1446
    %v2151 = vunpack.c.l.b16 %v1447
    %v2152 = vunpack.c.h.b16 %v1447
    %v2153 = vunpack.c.l.b16 %v1448
    %v2154 = vunpack.c.h.b16 %v1448
    %v2155 = vunpack.c.l.b16 %v1449
    %v2156 = vunpack.c.h.b16 %v1449
    %v2157 = vunpack.c.l.b16 %v1450
    %v2158 = vunpack.c.h.b16 %v1450
    %v2159 = vunpack.c.l.b16 %v1451
    %v2160 = vunpack.c.h.b16 %v1451
    %v2161 = vunpack.c.l.b16 %v1452
    %v2162 = vunpack.c.h.b16 %v1452
    %v2163 = vunpack.c.l.b16 %v1453
    %v2164 = vunpack.c.h.b16 %v1453
    %v2165 = vunpack.c.l.b16 %v1454
    %v2166 = vunpack.c.h.b16 %v1454
    %v2167 = vunpack.c.l.b16 %v1455
    %v2168 = vunpack.c.h.b16 %v1455
    %v2169 = vunpack.c.l.b16 %v1456
    %v2170 = vunpack.c.h.b16 %v1456
    %v2171 = vunpack.c.l.b16 %v1457
    %v2172 = vunpack.c.h.b16 %v1457
    %v2173 = vunpack.c.l.b16 %v1458
    %v2174 = vunpack.c.h.b16 %v1458
    %v2175 = vunpack.c.l.b16 %v1459
    %v2176 = vunpack.c.h.b16 %v1459
    %v2177 = vunpack.c.l.b16 %v1460
    %v2178 = vunpack.c.h.b16 %v1460
    %v2179 = vunpack.c.l.b16 %v1461
    %v2180 = vunpack.c.h.b16 %v1461
    %v2181 = vunpack.c.l.b16 %v1462
    %v2182 = vunpack.c.h.b16 %v1462
    %v2183 = vunpack.c.l.b16 %v1463
    %v2184 = vunpack.c.h.b16 %v1463
    %v2185 = vunpack.c.l.b16 %v1464
    %v2186 = vunpack.c.h.b16 %v1464
    %v2187 = vunpack.c.l.b16 %v1465
    %v2188 = vunpack.c.h.b16 %v1465
    %v2189 = vunpack.c.l.b16 %v1466
    %v2190 = vunpack.c.h.b16 %v1466
    %v2191 = vunpack.c.l.b16 %v1467
    %v2192 = vunpack.c.h.b16 %v1467
    %v2193 = vunpack.c.l.b16 %v1468
    %v2194 = vunpack.c.h.b16 %v1468
    %v2195 = vunpack.c.l.b16 %v1469
    %v2196 = vunpack.c.h.b16 %v1469
    %v2197 = vunpack.c.l.b16 %v1470
    %v2198 = vunpack.c.h.b16 %v1470
    %v2199 = vunpack.c.l.b16 %v1471
    %v2200 = vunpack.c.h.b16 %v1471
    %v2201 = vunpack.c.l.b16 %v1472
    %v2202 = vunpack.c.h.b16 %v1472
    %v2203 = vunpack.c.l.b16 %v1473
    %v2204 = vunpack.c.h.b16 %v1473
    %v2205 = vunpack.c.l.b16 %v1474
    %v2206 = vunpack.c.h.b16 %v1474
    %v2207 = vunpack.c.l.b16 %v1475
    %v2208 = vunpack.c.h.b16 %v1475
    %v2209 = vunpack.c.l.b16 %v1476
    %v2210 = vunpack.c.h.b16 %v1476
    %v2211 = vunpack.c.l.b16 %v1477
    %v2212 = vunpack.c.h.b16 %v1477
    %v2213 = vunpack.c.l.b16 %v1478
    %v2214 = vunpack.c.h.b16 %v1478
    %v2215 = vunpack.c.l.b16 %v1479
    %v2216 = vunpack.c.h.b16 %v1479
    %v2217 = vunpack.c.l.b16 %v1480
    %v2218 = vunpack.c.h.b16 %v1480
    %v2219 = vunpack.c.l.b16 %v1481
    %v2220 = vunpack.c.h.b16 %v1481
    %v2221 = vunpack.c.l.b16 %v1482
    %v2222 = vunpack.c.h.b16 %v1482
    %v2223 = vunpack.c.l.b16 %v1483
    %v2224 = vunpack.c.h.b16 %v1483
    %v2225 = vunpack.c.l.b16 %v1484
    %v2226 = vunpack.c.h.b16 %v1484
    %v2227 = vunpack.c.l.b16 %v1485
    %v2228 = vunpack.c.h.b16 %v1485
    %v2229 = vunpack.c.l.b16 %v1486
    %v2230 = vunpack.c.h.b16 %v1486
    %v2231 = vunpack.c.l.b16 %v1487
    %v2232 = vunpack.c.h.b16 %v1487
    %v2233 = vunpack.c.l.b16 %v1488
    %v2234 = vunpack.c.h.b16 %v1488
    %v2235 = vunpack.c.l.b16 %v1489
    %v2236 = vunpack.c.h.b16 %v1489
    %v2237 = vunpack.c.l.b16 %v1490
    %v2238 = vunpack.c.h.b16 %v1490
    %v2239 = vunpack.c.l.b16 %v1491
    %v2240 = vunpack.c.h.b16 %v1491
    %v2241 = vunpack.c.l.b16 %v1492
    %v2242 = vunpack.c.h.b16 %v1492
    %v2243 = vunpack.c.l.b16 %v1493
    %v2244 = vunpack.c.h.b16 %v1493
    %v2245 = vunpack.c.l.b16 %v1494
    %v2246 = vunpack.c.h.b16 %v1494
    %v2247 = vunpack.c.l.b16 %v1495
    %v2248 = vunpack.c.h.b16 %v1495
    %v2249 = vunpack.c.l.b16 %v1496
    %v2250 = vunpack.c.h.b16 %v1496
    %v2251 = vunpack.c.l.b16 %v1497
    %v2252 = vunpack.c.h.b16 %v1497
    %v2253 = vunpack.c.l.b16 %v1498
    %v2254 = vunpack.c.h.b16 %v1498
    %v2255 = vunpack.c.l.b16 %v1499
    %v2256 = vunpack.c.h.b16 %v1499
    %v2257 = vunpack.c.l.b16 %v1500
    %v2258 = vunpack.c.h.b16 %v1500
    %v2259 = vunpack.c.l.b16 %v1501
    %v2260 = vunpack.c.h.b16 %v1501
    %v2261 = vunpack.c.l.b16 %v1502
    %v2262 = vunpack.c.h.b16 %v1502
    %v2263 = vunpack.c.l.b16 %v1503
    %v2264 = vunpack.c.h.b16 %v1503
    %v2265 = vunpack.c.l.b16 %v1504
    %v2266 = vunpack.c.h.b16 %v1504
    %v2267 = vunpack.c.l.b16 %v1505
    %v2268 = vunpack.c.h.b16 %v1505
    %v2269 = vunpack.c.l.b16 %v1506
    %v2270 = vunpack.c.h.b16 %v1506
    %v2271 = vunpack.c.l.b16 %v1507
    %v2272 = vunpack.c.h.b16 %v1507
    %v2273 = vunpack.c.l.b16 %v1508
    %v2274 = vunpack.c.h.b16 %v1508
    %v2275 = vunpack.c.l.b16 %v1509
    %v2276 = vunpack.c.h.b16 %v1509
    %v2277 = vunpack.c.l.b16 %v1510
    %v2278 = vunpack.c.h.b16 %v1510
    %v2279 = vunpack.c.l.b16 %v1511
    %v2280 = vunpack.c.h.b16 %v1511
    %v2281 = vunpack.c.l.b16 %v1512
    %v2282 = vunpack.c.h.b16 %v1512
    %v2283 = vunpack.c.l.b16 %v1513
    %v2284 = vunpack.c.h.b16 %v1513
    %v2285 = vunpack.c.l.b16 %v1514
    %v2286 = vunpack.c.h.b16 %v1514
    %v2287 = vunpack.c.l.b16 %v1515
    %v2288 = vunpack.c.h.b16 %v1515
    %v2289 = vunpack.c.l.b16 %v1516
    %v2290 = vunpack.c.h.b16 %v1516
    %v2291 = vunpack.c.l.b16 %v1517
    %v2292 = vunpack.c.h.b16 %v1517
    %v2293 = vunpack.c.l.b16 %v1518
    %v2294 = vunpack.c.h.b16 %v1518
    %v2295 = vunpack.c.l.b16 %v1519
    %v2296 = vunpack.c.h.b16 %v1519
    %v2297 = vunpack.c.l.b16 %v1520
    %v2298 = vunpack.c.h.b16 %v1520
    %v2299 = vunpack.c.l.b16 %v1521
    %v2300 = vunpack.c.h.b16 %v1521
    %v2301 = vunpack.c.l.b16 %v1522
    %v2302 = vunpack.c.h.b16 %v1522
    %v2303 = vunpack.c.l.b16 %v1523
    %v2304 = vunpack.c.h.b16 %v1523
    %v2305 = vunpack.c.l.b16 %v1524
    %v2306 = vunpack.c.h.b16 %v1524
    %v2307 = vunpack.c.l.b16 %v1525
    %v2308 = vunpack.c.h.b16 %v1525
    %v2309 = vunpack.c.l.b16 %v1526
    %v2310 = vunpack.c.h.b16 %v1526
    %v2311 = vunpack.c.l.b16 %v1527
    %v2312 = vunpack.c.h.b16 %v1527
    %v2313 = vunpack.c.l.b16 %v1528
    %v2314 = vunpack.c.h.b16 %v1528
    %v2315 = vpack.c.b16 %v1807, %v1803
    %v2316 = vpack.c.b16 %v1808, %v1804
    %v2317 = vpack.c.b16 %v1809, %v1805
    %v2318 = vpack.c.b16 %v1810, %v1806
    %v2319 = vpack.c.b16 %v1815, %v1811
    %v2320 = vpack.c.b16 %v1816, %v1812
    %v2321 = vpack.c.b16 %v1817, %v1813
    %v2322 = vpack.c.b16 %v1818, %v1814
    %v2323 = vpack.c.b16 %v1823, %v1819
    %v2324 = vpack.c.b16 %v1824, %v1820
    %v2325 = vpack.c.b16 %v1825, %v1821
    %v2326 = vpack.c.b16 %v1826, %v1822
    %v2327 = vpack.c.b16 %v1831, %v1827
    %v2328 = vpack.c.b16 %v1832, %v1828
    %v2329 = vpack.c.b16 %v1833, %v1829
    %v2330 = vpack.c.b16 %v1834, %v1830
    %v2331 = vpack.c.b16 %v1839, %v1835
    %v2332 = vpack.c.b16 %v1840, %v1836
    %v2333 = vpack.c.b16 %v1841, %v1837
    %v2334 = vpack.c.b16 %v1842, %v1838
    %v2335 = vpack.c.b16 %v1847, %v1843
    %v2336 = vpack.c.b16 %v1848, %v1844
    %v2337 = vpack.c.b16 %v1849, %v1845
    %v2338 = vpack.c.b16 %v1850, %v1846
    %v2339 = vpack.c.b16 %v1855, %v1851
    %v2340 = vpack.c.b16 %v1856, %v1852
    %v2341 = vpack.c.b16 %v1857, %v1853
    %v2342 = vpack.c.b16 %v1858, %v1854
    %v2343 = vpack.c.b16 %v1863, %v1859
    %v2344 = vpack.c.b16 %v1864, %v1860
    %v2345 = vpack.c.b16 %v1865, %v1861
    %v2346 = vpack.c.b16 %v1866, %v1862
    %v2347 = vpack.c.b16 %v1871, %v1867
    %v2348 = vpack.c.b16 %v1872, %v1868
    %v2349 = vpack.c.b16 %v1873, %v1869
    %v2350 = vpack.c.b16 %v1874, %v1870
    %v2351 = vpack.c.b16 %v1879, %v1875
    %v2352 = vpack.c.b16 %v1880, %v1876
    %v2353 = vpack.c.b16 %v1881, %v1877
    %v2354 = vpack.c.b16 %v1882, %v1878
    %v2355 = vpack.c.b16 %v1887, %v1883
    %v2356 = vpack.c.b16 %v1888, %v1884
    %v2357 = vpack.c.b16 %v1889, %v1885
    %v2358 = vpack.c.b16 %v1890, %v1886
    %v2359 = vpack.c.b16 %v1895, %v1891
    %v2360 = vpack.c.b16 %v1896, %v1892
    %v2361 = vpack.c.b16 %v1897, %v1893
    %v2362 = vpack.c.b16 %v1898, %v1894
    %v2363 = vpack.c.b16 %v1903, %v1899
    %v2364 = vpack.c.b16 %v1904, %v1900
    %v2365 = vpack.c.b16 %v1905, %v1901
    %v2366 = vpack.c.b16 %v1906, %v1902
    %v2367 = vpack.c.b16 %v1911, %v1907
    %v2368 = vpack.c.b16 %v1912, %v1908
    %v2369 = vpack.c.b16 %v1913, %v1909
    %v2370 = vpack.c.b16 %v1914, %v1910
    %v2371 = vpack.c.b16 %v1919, %v1915
    %v2372 = vpack.c.b16 %v1920, %v1916
    %v2373 = vpack.c.b16 %v1921, %v1917
    %v2374 = vpack.c.b16 %v1922, %v1918
    %v2375 = vpack.c.b16 %v1927, %v1923
    %v2376 = vpack.c.b16 %v1928, %v1924
    %v2377 = vpack.c.b16 %v1929, %v1925
    %v2378 = vpack.c.b16 %v1930, %v1926
    %v2379 = vpack.c.b16 %v1935, %v1931
    %v2380 = vpack.c.b16 %v1936, %v1932
    %v2381 = vpack.c.b16 %v1937, %v1933
    %v2382 = vpack.c.b16 %v1938, %v1934
    %v2383 = vpack.c.b16 %v1943, %v1939
    %v2384 = vpack.c.b16 %v1944, %v1940
    %v2385 = vpack.c.b16 %v1945, %v1941
    %v2386 = vpack.c.b16 %v1946, %v1942
    %v2387 = vpack.c.b16 %v1951, %v1947
    %v2388 = vpack.c.b16 %v1952, %v1948
    %v2389 = vpack.c.b16 %v1953, %v1949
    %v2390 = vpack.c.b16 %v1954, %v1950
    %v2391 = vpack.c.b16 %v1959, %v1955
    %v2392 = vpack.c.b16 %v1960, %v1956
    %v2393 = vpack.c.b16 %v1961, %v1957
    %v2394 = vpack.c.b16 %v1962, %v1958
    %v2395 = vpack.c.b16 %v1967, %v1963
    %v2396 = vpack.c.b16 %v1968, %v1964
    %v2397 = vpack.c.b16 %v1969, %v1965
    %v2398 = vpack.c.b16 %v1970, %v1966
    %v2399 = vpack.c.b16 %v1975, %v1971
    %v2400 = vpack.c.b16 %v1976, %v1972
    %v2401 = vpack.c.b16 %v1977, %v1973
    %v2402 = vpack.c.b16 %v1978, %v1974
    %v2403 = vpack.c.b16 %v1983, %v1979
    %v2404 = vpack.c.b16 %v1984, %v1980
    %v2405 = vpack.c.b16 %v1985, %v1981
    %v2406 = vpack.c.b16 %v1986, %v1982
    %v2407 = vpack.c.b16 %v1991, %v1987
    %v2408 = vpack.c.b16 %v1992, %v1988
    %v2409 = vpack.c.b16 %v1993, %v1989
    %v2410 = vpack.c.b16 %v1994, %v1990
    %v2411 = vpack.c.b16 %v1999, %v1995
    %v2412 = vpack.c.b16 %v2000, %v1996
    %v2413 = vpack.c.b16 %v2001, %v1997
    %v2414 = vpack.c.b16 %v2002, %v1998
    %v2415 = vpack.c.b16 %v2007, %v2003
    %v2416 = vpack.c.b16 %v2008, %v2004
    %v2417 = vpack.c.b16 %v2009, %v2005
    %v2418 = vpack.c.b16 %v2010, %v2006
    %v2419 = vpack.c.b16 %v2015, %v2011
    %v2420 = vpack.c.b16 %v2016, %v2012
    %v2421 = vpack.c.b16 %v2017, %v2013
    %v2422 = vpack.c.b16 %v2018, %v2014
    %v2423 = vpack.c.b16 %v2023, %v2019
    %v2424 = vpack.c.b16 %v2024, %v2020
    %v2425 = vpack.c.b16 %v2025, %v2021
    %v2426 = vpack.c.b16 %v2026, %v2022
    %v2427 = vpack.c.b16 %v2031, %v2027
    %v2428 = vpack.c.b16 %v2032, %v2028
    %v2429 = vpack.c.b16 %v2033, %v2029
    %v2430 = vpack.c.b16 %v2034, %v2030
    %v2431 = vpack.c.b16 %v2039, %v2035
    %v2432 = vpack.c.b16 %v2040, %v2036
    %v2433 = vpack.c.b16 %v2041, %v2037
    %v2434 = vpack.c.b16 %v2042, %v2038
    %v2435 = vpack.c.b16 %v2047, %v2043
    %v2436 = vpack.c.b16 %v2048, %v2044
    %v2437 = vpack.c.b16 %v2049, %v2045
    %v2438 = vpack.c.b16 %v2050, %v2046
    %v2439 = vpack.c.b16 %v2055, %v2051
    %v2440 = vpack.c.b16 %v2056, %v2052
    %v2441 = vpack.c.b16 %v2057, %v2053
    %v2442 = vpack.c.b16 %v2058, %v2054
    %v2443 = vpack.c.b16 %v2063, %v2059
    %v2444 = vpack.c.b16 %v2064, %v2060
    %v2445 = vpack.c.b16 %v2065, %v2061
    %v2446 = vpack.c.b16 %v2066, %v2062
    %v2447 = vpack.c.b16 %v2071, %v2067
    %v2448 = vpack.c.b16 %v2072, %v2068
    %v2449 = vpack.c.b16 %v2073, %v2069
    %v2450 = vpack.c.b16 %v2074, %v2070
    %v2451 = vpack.c.b16 %v2079, %v2075
    %v2452 = vpack.c.b16 %v2080, %v2076
    %v2453 = vpack.c.b16 %v2081, %v2077
    %v2454 = vpack.c.b16 %v2082, %v2078
    %v2455 = vpack.c.b16 %v2087, %v2083
    %v2456 = vpack.c.b16 %v2088, %v2084
    %v2457 = vpack.c.b16 %v2089, %v2085
    %v2458 = vpack.c.b16 %v2090, %v2086
    %v2459 = vpack.c.b16 %v2095, %v2091
    %v2460 = vpack.c.b16 %v2096, %v2092
    %v2461 = vpack.c.b16 %v2097, %v2093
    %v2462 = vpack.c.b16 %v2098, %v2094
    %v2463 = vpack.c.b16 %v2103, %v2099
    %v2464 = vpack.c.b16 %v2104, %v2100
    %v2465 = vpack.c.b16 %v2105, %v2101
    %v2466 = vpack.c.b16 %v2106, %v2102
    %v2467 = vpack.c.b16 %v2111, %v2107
    %v2468 = vpack.c.b16 %v2112, %v2108
    %v2469 = vpack.c.b16 %v2113, %v2109
    %v2470 = vpack.c.b16 %v2114, %v2110
    %v2471 = vpack.c.b16 %v2119, %v2115
    %v2472 = vpack.c.b16 %v2120, %v2116
    %v2473 = vpack.c.b16 %v2121, %v2117
    %v2474 = vpack.c.b16 %v2122, %v2118
    %v2475 = vpack.c.b16 %v2127, %v2123
    %v2476 = vpack.c.b16 %v2128, %v2124
    %v2477 = vpack.c.b16 %v2129, %v2125
    %v2478 = vpack.c.b16 %v2130, %v2126
    %v2479 = vpack.c.b16 %v2135, %v2131
    %v2480 = vpack.c.b16 %v2136, %v2132
    %v2481 = vpack.c.b16 %v2137, %v2133
    %v2482 = vpack.c.b16 %v2138, %v2134
    %v2483 = vpack.c.b16 %v2143, %v2139
    %v2484 = vpack.c.b16 %v2144, %v2140
    %v2485 = vpack.c.b16 %v2145, %v2141
    %v2486 = vpack.c.b16 %v2146, %v2142
    %v2487 = vpack.c.b16 %v2151, %v2147
    %v2488 = vpack.c.b16 %v2152, %v2148
    %v2489 = vpack.c.b16 %v2153, %v2149
    %v2490 = vpack.c.b16 %v2154, %v2150
    %v2491 = vpack.c.b16 %v2159, %v2155
    %v2492 = vpack.c.b16 %v2160, %v2156
    %v2493 = vpack.c.b16 %v2161, %v2157
    %v2494 = vpack.c.b16 %v2162, %v2158
    %v2495 = vpack.c.b16 %v2167, %v2163
    %v2496 = vpack.c.b16 %v2168, %v2164
    %v2497 = vpack.c.b16 %v2169, %v2165
    %v2498 = vpack.c.b16 %v2170, %v2166
    %v2499 = vpack.c.b16 %v2175, %v2171
    %v2500 = vpack.c.b16 %v2176, %v2172
    %v2501 = vpack.c.b16 %v2177, %v2173
    %v2502 = vpack.c.b16 %v2178, %v2174
    %v2503 = vpack.c.b16 %v2183, %v2179
    %v2504 = vpack.c.b16 %v2184, %v2180
    %v2505 = vpack.c.b16 %v2185, %v2181
    %v2506 = vpack.c.b16 %v2186, %v2182
    %v2507 = vpack.c.b16 %v2191, %v2187
    %v2508 = vpack.c.b16 %v2192, %v2188
    %v2509 = vpack.c.b16 %v2193, %v2189
    %v2510 = vpack.c.b16 %v2194, %v2190
    %v2511 = vpack.c.b16 %v2199, %v2195
    %v2512 = vpack.c.b16 %v2200, %v2196
    %v2513 = vpack.c.b16 %v2201, %v2197
    %v2514 = vpack.c.b16 %v2202, %v2198
    %v2515 = vpack.c.b16 %v2207, %v2203
    %v2516 = vpack.c.b16 %v2208, %v2204
    %v2517 = vpack.c.b16 %v2209, %v2205
    %v2518 = vpack.c.b16 %v2210, %v2206
    %v2519 = vpack.c.b16 %v2215, %v2211
    %v2520 = vpack.c.b16 %v2216, %v2212
    %v2521 = vpack.c.b16 %v2217, %v2213
    %v2522 = vpack.c.b16 %v2218, %v2214
    %v2523 = vpack.c.b16 %v2223, %v2219
    %v2524 = vpack.c.b16 %v2224, %v2220
    %v2525 = vpack.c.b16 %v2225, %v2221
    %v2526 = vpack.c.b16 %v2226, %v2222
    %v2527 = vpack.c.b16 %v2231, %v2227
    %v2528 = vpack.c.b16 %v2232, %v2228
    %v2529 = vpack.c.b16 %v2233, %v2229
    %v2530 = vpack.c.b16 %v2234, %v2230
    %v2531 = vpack.c.b16 %v2239, %v2235
    %v2532 = vpack.c.b16 %v2240, %v2236
    %v2533 = vpack.c.b16 %v2241, %v2237
    %v2534 = vpack.c.b16 %v2242, %v2238
    %v2535 = vpack.c.b16 %v2247, %v2243
    %v2536 = vpack.c.b16 %v2248, %v2244
    %v2537 = vpack.c.b16 %v2249, %v2245
    %v2538 = vpack.c.b16 %v2250, %v2246
    %v2539 = vpack.c.b16 %v2255, %v2251
    %v2540 = vpack.c.b16 %v2256, %v2252
    %v2541 = vpack.c.b16 %v2257, %v2253
    %v2542 = vpack.c.b16 %v2258, %v2254
    %v2543 = vpack.c.b16 %v2263, %v2259
    %v2544 = vpack.c.b16 %v2264, %v2260
    %v2545 = vpack.c.b16 %v2265, %v2261
    %v2546 = vpack.c.b16 %v2266, %v2262
    %v2547 = vpack.c.b16 %v2271, %v2267
    %v2548 = vpack.c.b16 %v2272, %v2268
    %v2549 = vpack.c.b16 %v2273, %v2269
    %v2550 = vpack.c.b16 %v2274, %v2270
    %v2551 = vpack.c.b16 %v2279, %v2275
    %v2552 = vpack.c.b16 %v2280, %v2276
    %v2553 = vpack.c.b16 %v2281, %v2277
    %v2554 = vpack.c.b16 %v2282, %v2278
    %v2555 = vpack.c.b16 %v2287, %v2283
    %v2556 = vpack.c.b16 %v2288, %v2284
    %v2557 = vpack.c.b16 %v2289, %v2285
    %v2558 = vpack.c.b16 %v2290, %v2286
    %v2559 = vpack.c.b16 %v2295, %v2291
    %v2560 = vpack.c.b16 %v2296, %v2292
    %v2561 = vpack.c.b16 %v2297, %v2293
    %v2562 = vpack.c.b16 %v2298, %v2294
    %v2563 = vpack.c.b16 %v2303, %v2299
    %v2564 = vpack.c.b16 %v2304, %v2300
    %v2565 = vpack.c.b16 %v2305, %v2301
    %v2566 = vpack.c.b16 %v2306, %v2302
    %v2567 = vpack.c.b16 %v2311, %v2307
    %v2568 = vpack.c.b16 %v2312, %v2308
    %v2569 = vpack.c.b16 %v2313, %v2309
    %v2570 = vpack.c.b16 %v2314, %v2310
    %2827 = vmatpush.bf16.msra.mxu0 %v2343
    %2828 = vmatpush.bf16.msra.mxu0 %v2339
    %2829 = vmatpush.bf16.msra.mxu0 %v2335
    %2830 = vmatpush.bf16.msra.mxu0 %v2331
    %2831 = vmatpush.bf16.msra.mxu0 %v2327
    %2832 = vmatpush.bf16.msra.mxu0 %v2323
    %2833 = vmatpush.bf16.msra.mxu0 %v2319
    %2834 = vmatpush.bf16.msra.mxu0 %v2315
    %2835 = vmatmul.bf16.gmra.mxu0 %v1530
    %v2836 = vpop.f32.mrf.mxu0
    %v2837 = vadd.f32 %v1539, %v2836
    %v2838 = vpop.f32.mrf.mxu0
    %2839 = vdwg.mxu0
    %2840 = vmatpush.bf16.msra.mxu0 %v2375
    %2841 = vmatpush.bf16.msra.mxu0 %v2371
    %2842 = vmatpush.bf16.msra.mxu0 %v2367
    %2843 = vmatpush.bf16.msra.mxu0 %v2363
    %2844 = vmatpush.bf16.msra.mxu0 %v2359
    %2845 = vmatpush.bf16.msra.mxu0 %v2355
    %2846 = vmatpush.bf16.msra.mxu0 %v2351
    %2847 = vmatpush.bf16.msra.mxu0 %v2347
    %2848 = vmatmul.bf16.gmra.mxu0 %v1531
    %v2849 = vpop.f32.mrf.mxu0
    %v2850 = vadd.f32 %v2837, %v2849
    %v2851 = vpop.f32.mrf.mxu0
    %2852 = vdwg.mxu0
    %2853 = vmatpush.bf16.msra.mxu0 %v2407
    %2854 = vmatpush.bf16.msra.mxu0 %v2403
    %2855 = vmatpush.bf16.msra.mxu0 %v2399
    %2856 = vmatpush.bf16.msra.mxu0 %v2395
    %2857 = vmatpush.bf16.msra.mxu0 %v2391
    %2858 = vmatpush.bf16.msra.mxu0 %v2387
    %2859 = vmatpush.bf16.msra.mxu0 %v2383
    %2860 = vmatpush.bf16.msra.mxu0 %v2379
    %2861 = vmatmul.bf16.gmra.mxu0 %v1532
    %v2862 = vpop.f32.mrf.mxu0
    %v2863 = vadd.f32 %v2850, %v2862
    %v2864 = vpop.f32.mrf.mxu0
    %2865 = vdwg.mxu0
    %2866 = vmatpush.bf16.msra.mxu0 %v2439
    %2867 = vmatpush.bf16.msra.mxu0 %v2435
    %2868 = vmatpush.bf16.msra.mxu0 %v2431
    %2869 = vmatpush.bf16.msra.mxu0 %v2427
    %2870 = vmatpush.bf16.msra.mxu0 %v2423
    %2871 = vmatpush.bf16.msra.mxu0 %v2419
    %2872 = vmatpush.bf16.msra.mxu0 %v2415
    %2873 = vmatpush.bf16.msra.mxu0 %v2411
    %2874 = vmatmul.bf16.gmra.mxu0 %v1533
    %v2875 = vpop.f32.mrf.mxu0
    %v2876 = vadd.f32 %v2863, %v2875
    %v2877 = vpop.f32.mrf.mxu0
    %2878 = vdwg.mxu0
    %2879 = vmatpush.bf16.msra.mxu0 %v2471
    %2880 = vmatpush.bf16.msra.mxu0 %v2467
    %2881 = vmatpush.bf16.msra.mxu0 %v2463
    %2882 = vmatpush.bf16.msra.mxu0 %v2459
    %2883 = vmatpush.bf16.msra.mxu0 %v2455
    %2884 = vmatpush.bf16.msra.mxu0 %v2451
    %2885 = vmatpush.bf16.msra.mxu0 %v2447
    %2886 = vmatpush.bf16.msra.mxu0 %v2443
    %2887 = vmatmul.bf16.gmra.mxu0 %v1534
    %v2888 = vpop.f32.mrf.mxu0
    %v2889 = vadd.f32 %v2876, %v2888
    %v2890 = vpop.f32.mrf.mxu0
    %2891 = vdwg.mxu0
    %2892 = vmatpush.bf16.msra.mxu0 %v2503
    %2893 = vmatpush.bf16.msra.mxu0 %v2499
    %2894 = vmatpush.bf16.msra.mxu0 %v2495
    %2895 = vmatpush.bf16.msra.mxu0 %v2491
    %2896 = vmatpush.bf16.msra.mxu0 %v2487
    %2897 = vmatpush.bf16.msra.mxu0 %v2483
    %2898 = vmatpush.bf16.msra.mxu0 %v2479
    %2899 = vmatpush.bf16.msra.mxu0 %v2475
    %2900 = vmatmul.bf16.gmra.mxu0 %v1535
    %v2901 = vpop.f32.mrf.mxu0
    %v2902 = vadd.f32 %v2889, %v2901
    %v2903 = vpop.f32.mrf.mxu0
    %2904 = vdwg.mxu0
    %2905 = vmatpush.bf16.msra.mxu0 %v2535
    %2906 = vmatpush.bf16.msra.mxu0 %v2531
    %2907 = vmatpush.bf16.msra.mxu0 %v2527
    %2908 = vmatpush.bf16.msra.mxu0 %v2523
    %2909 = vmatpush.bf16.msra.mxu0 %v2519
    %2910 = vmatpush.bf16.msra.mxu0 %v2515
    %2911 = vmatpush.bf16.msra.mxu0 %v2511
    %2912 = vmatpush.bf16.msra.mxu0 %v2507
    %2913 = vmatmul.bf16.gmra.mxu0 %v1536
    %v2914 = vpop.f32.mrf.mxu0
    %v2915 = vadd.f32 %v2902, %v2914
    %v2916 = vpop.f32.mrf.mxu0
    %2917 = vdwg.mxu0
    %2918 = vmatpush.bf16.msra.mxu0 %v2567
    %2919 = vmatpush.bf16.msra.mxu0 %v2563
    %2920 = vmatpush.bf16.msra.mxu0 %v2559
    %2921 = vmatpush.bf16.msra.mxu0 %v2555
    %2922 = vmatpush.bf16.msra.mxu0 %v2551
    %2923 = vmatpush.bf16.msra.mxu0 %v2547
    %2924 = vmatpush.bf16.msra.mxu0 %v2543
    %2925 = vmatpush.bf16.msra.mxu0 %v2539
    %2926 = vmatmul.bf16.gmra.mxu0 %v1537
    %v2927 = vpop.f32.mrf.mxu0
    %v2928 = vadd.f32 %v2915, %v2927
    %v2929 = vpop.f32.mrf.mxu0
    %2930 = vdwg.mxu0
    %2931 = vmatpush.bf16.msra.mxu0 %v2344
    %2932 = vmatpush.bf16.msra.mxu0 %v2340
    %2933 = vmatpush.bf16.msra.mxu0 %v2336
    %2934 = vmatpush.bf16.msra.mxu0 %v2332
    %2935 = vmatpush.bf16.msra.mxu0 %v2328
    %2936 = vmatpush.bf16.msra.mxu0 %v2324
    %2937 = vmatpush.bf16.msra.mxu0 %v2320
    %2938 = vmatpush.bf16.msra.mxu0 %v2316
    %2939 = vmatmul.bf16.gmra.mxu0 %v1530
    %v2940 = vpop.f32.mrf.mxu0
    %v2941 = vadd.f32 %v1540, %v2940
    %v2942 = vpop.f32.mrf.mxu0
    %2943 = vdwg.mxu0
    %2944 = vmatpush.bf16.msra.mxu0 %v2376
    %2945 = vmatpush.bf16.msra.mxu0 %v2372
    %2946 = vmatpush.bf16.msra.mxu0 %v2368
    %2947 = vmatpush.bf16.msra.mxu0 %v2364
    %2948 = vmatpush.bf16.msra.mxu0 %v2360
    %2949 = vmatpush.bf16.msra.mxu0 %v2356
    %2950 = vmatpush.bf16.msra.mxu0 %v2352
    %2951 = vmatpush.bf16.msra.mxu0 %v2348
    %2952 = vmatmul.bf16.gmra.mxu0 %v1531
    %v2953 = vpop.f32.mrf.mxu0
    %v2954 = vadd.f32 %v2941, %v2953
    %v2955 = vpop.f32.mrf.mxu0
    %2956 = vdwg.mxu0
    %2957 = vmatpush.bf16.msra.mxu0 %v2408
    %2958 = vmatpush.bf16.msra.mxu0 %v2404
    %2959 = vmatpush.bf16.msra.mxu0 %v2400
    %2960 = vmatpush.bf16.msra.mxu0 %v2396
    %2961 = vmatpush.bf16.msra.mxu0 %v2392
    %2962 = vmatpush.bf16.msra.mxu0 %v2388
    %2963 = vmatpush.bf16.msra.mxu0 %v2384
    %2964 = vmatpush.bf16.msra.mxu0 %v2380
    %2965 = vmatmul.bf16.gmra.mxu0 %v1532
    %v2966 = vpop.f32.mrf.mxu0
    %v2967 = vadd.f32 %v2954, %v2966
    %v2968 = vpop.f32.mrf.mxu0
    %2969 = vdwg.mxu0
    %2970 = vmatpush.bf16.msra.mxu0 %v2440
    %2971 = vmatpush.bf16.msra.mxu0 %v2436
    %2972 = vmatpush.bf16.msra.mxu0 %v2432
    %2973 = vmatpush.bf16.msra.mxu0 %v2428
    %2974 = vmatpush.bf16.msra.mxu0 %v2424
    %2975 = vmatpush.bf16.msra.mxu0 %v2420
    %2976 = vmatpush.bf16.msra.mxu0 %v2416
    %2977 = vmatpush.bf16.msra.mxu0 %v2412
    %2978 = vmatmul.bf16.gmra.mxu0 %v1533
    %v2979 = vpop.f32.mrf.mxu0
    %v2980 = vadd.f32 %v2967, %v2979
    %v2981 = vpop.f32.mrf.mxu0
    %2982 = vdwg.mxu0
    %2983 = vmatpush.bf16.msra.mxu0 %v2472
    %2984 = vmatpush.bf16.msra.mxu0 %v2468
    %2985 = vmatpush.bf16.msra.mxu0 %v2464
    %2986 = vmatpush.bf16.msra.mxu0 %v2460
    %2987 = vmatpush.bf16.msra.mxu0 %v2456
    %2988 = vmatpush.bf16.msra.mxu0 %v2452
    %2989 = vmatpush.bf16.msra.mxu0 %v2448
    %2990 = vmatpush.bf16.msra.mxu0 %v2444
    %2991 = vmatmul.bf16.gmra.mxu0 %v1534
    %v2992 = vpop.f32.mrf.mxu0
    %v2993 = vadd.f32 %v2980, %v2992
    %v2994 = vpop.f32.mrf.mxu0
    %2995 = vdwg.mxu0
    %2996 = vmatpush.bf16.msra.mxu0 %v2504
    %2997 = vmatpush.bf16.msra.mxu0 %v2500
    %2998 = vmatpush.bf16.msra.mxu0 %v2496
    %2999 = vmatpush.bf16.msra.mxu0 %v2492
    %3000 = vmatpush.bf16.msra.mxu0 %v2488
    %3001 = vmatpush.bf16.msra.mxu0 %v2484
    %3002 = vmatpush.bf16.msra.mxu0 %v2480
    %3003 = vmatpush.bf16.msra.mxu0 %v2476
    %3004 = vmatmul.bf16.gmra.mxu0 %v1535
    %v3005 = vpop.f32.mrf.mxu0
    %v3006 = vadd.f32 %v2993, %v3005
    %v3007 = vpop.f32.mrf.mxu0
    %3008 = vdwg.mxu0
    %3009 = vmatpush.bf16.msra.mxu0 %v2536
    %3010 = vmatpush.bf16.msra.mxu0 %v2532
    %3011 = vmatpush.bf16.msra.mxu0 %v2528
    %3012 = vmatpush.bf16.msra.mxu0 %v2524
    %3013 = vmatpush.bf16.msra.mxu0 %v2520
    %3014 = vmatpush.bf16.msra.mxu0 %v2516
    %3015 = vmatpush.bf16.msra.mxu0 %v2512
    %3016 = vmatpush.bf16.msra.mxu0 %v2508
    %3017 = vmatmul.bf16.gmra.mxu0 %v1536
    %v3018 = vpop.f32.mrf.mxu0
    %v3019 = vadd.f32 %v3006, %v3018
    %v3020 = vpop.f32.mrf.mxu0
    %3021 = vdwg.mxu0
    %3022 = vmatpush.bf16.msra.mxu0 %v2568
    %3023 = vmatpush.bf16.msra.mxu0 %v2564
    %3024 = vmatpush.bf16.msra.mxu0 %v2560
    %3025 = vmatpush.bf16.msra.mxu0 %v2556
    %3026 = vmatpush.bf16.msra.mxu0 %v2552
    %3027 = vmatpush.bf16.msra.mxu0 %v2548
    %3028 = vmatpush.bf16.msra.mxu0 %v2544
    %3029 = vmatpush.bf16.msra.mxu0 %v2540
    %3030 = vmatmul.bf16.gmra.mxu0 %v1537
    %v3031 = vpop.f32.mrf.mxu0
    %v3032 = vadd.f32 %v3019, %v3031
    %v3033 = vpop.f32.mrf.mxu0
    %3034 = vdwg.mxu0
    %3035 = vmatpush.bf16.msra.mxu0 %v2345
    %3036 = vmatpush.bf16.msra.mxu0 %v2341
    %3037 = vmatpush.bf16.msra.mxu0 %v2337
    %3038 = vmatpush.bf16.msra.mxu0 %v2333
    %3039 = vmatpush.bf16.msra.mxu0 %v2329
    %3040 = vmatpush.bf16.msra.mxu0 %v2325
    %3041 = vmatpush.bf16.msra.mxu0 %v2321
    %3042 = vmatpush.bf16.msra.mxu0 %v2317
    %3043 = vmatmul.bf16.gmra.mxu0 %v1530
    %v3044 = vpop.f32.mrf.mxu0
    %v3045 = vadd.f32 %v1541, %v3044
    %v3046 = vpop.f32.mrf.mxu0
    %3047 = vdwg.mxu0
    %3048 = vmatpush.bf16.msra.mxu0 %v2377
    %3049 = vmatpush.bf16.msra.mxu0 %v2373
    %3050 = vmatpush.bf16.msra.mxu0 %v2369
    %3051 = vmatpush.bf16.msra.mxu0 %v2365
    %3052 = vmatpush.bf16.msra.mxu0 %v2361
    %3053 = vmatpush.bf16.msra.mxu0 %v2357
    %3054 = vmatpush.bf16.msra.mxu0 %v2353
    %3055 = vmatpush.bf16.msra.mxu0 %v2349
    %3056 = vmatmul.bf16.gmra.mxu0 %v1531
    %v3057 = vpop.f32.mrf.mxu0
    %v3058 = vadd.f32 %v3045, %v3057
    %v3059 = vpop.f32.mrf.mxu0
    %3060 = vdwg.mxu0
    %3061 = vmatpush.bf16.msra.mxu0 %v2409
    %3062 = vmatpush.bf16.msra.mxu0 %v2405
    %3063 = vmatpush.bf16.msra.mxu0 %v2401
    %3064 = vmatpush.bf16.msra.mxu0 %v2397
    %3065 = vmatpush.bf16.msra.mxu0 %v2393
    %3066 = vmatpush.bf16.msra.mxu0 %v2389
    %3067 = vmatpush.bf16.msra.mxu0 %v2385
    %3068 = vmatpush.bf16.msra.mxu0 %v2381
    %3069 = vmatmul.bf16.gmra.mxu0 %v1532
    %v3070 = vpop.f32.mrf.mxu0
    %v3071 = vadd.f32 %v3058, %v3070
    %v3072 = vpop.f32.mrf.mxu0
    %3073 = vdwg.mxu0
    %3074 = vmatpush.bf16.msra.mxu0 %v2441
    %3075 = vmatpush.bf16.msra.mxu0 %v2437
    %3076 = vmatpush.bf16.msra.mxu0 %v2433
    %3077 = vmatpush.bf16.msra.mxu0 %v2429
    %3078 = vmatpush.bf16.msra.mxu0 %v2425
    %3079 = vmatpush.bf16.msra.mxu0 %v2421
    %3080 = vmatpush.bf16.msra.mxu0 %v2417
    %3081 = vmatpush.bf16.msra.mxu0 %v2413
    %3082 = vmatmul.bf16.gmra.mxu0 %v1533
    %v3083 = vpop.f32.mrf.mxu0
    %v3084 = vadd.f32 %v3071, %v3083
    %v3085 = vpop.f32.mrf.mxu0
    %3086 = vdwg.mxu0
    %3087 = vmatpush.bf16.msra.mxu0 %v2473
    %3088 = vmatpush.bf16.msra.mxu0 %v2469
    %3089 = vmatpush.bf16.msra.mxu0 %v2465
    %3090 = vmatpush.bf16.msra.mxu0 %v2461
    %3091 = vmatpush.bf16.msra.mxu0 %v2457
    %3092 = vmatpush.bf16.msra.mxu0 %v2453
    %3093 = vmatpush.bf16.msra.mxu0 %v2449
    %3094 = vmatpush.bf16.msra.mxu0 %v2445
    %3095 = vmatmul.bf16.gmra.mxu0 %v1534
    %v3096 = vpop.f32.mrf.mxu0
    %v3097 = vadd.f32 %v3084, %v3096
    %v3098 = vpop.f32.mrf.mxu0
    %3099 = vdwg.mxu0
    %3100 = vmatpush.bf16.msra.mxu0 %v2505
    %3101 = vmatpush.bf16.msra.mxu0 %v2501
    %3102 = vmatpush.bf16.msra.mxu0 %v2497
    %3103 = vmatpush.bf16.msra.mxu0 %v2493
    %3104 = vmatpush.bf16.msra.mxu0 %v2489
    %3105 = vmatpush.bf16.msra.mxu0 %v2485
    %3106 = vmatpush.bf16.msra.mxu0 %v2481
    %3107 = vmatpush.bf16.msra.mxu0 %v2477
    %3108 = vmatmul.bf16.gmra.mxu0 %v1535
    %v3109 = vpop.f32.mrf.mxu0
    %v3110 = vadd.f32 %v3097, %v3109
    %v3111 = vpop.f32.mrf.mxu0
    %3112 = vdwg.mxu0
    %3113 = vmatpush.bf16.msra.mxu0 %v2537
    %3114 = vmatpush.bf16.msra.mxu0 %v2533
    %3115 = vmatpush.bf16.msra.mxu0 %v2529
    %3116 = vmatpush.bf16.msra.mxu0 %v2525
    %3117 = vmatpush.bf16.msra.mxu0 %v2521
    %3118 = vmatpush.bf16.msra.mxu0 %v2517
    %3119 = vmatpush.bf16.msra.mxu0 %v2513
    %3120 = vmatpush.bf16.msra.mxu0 %v2509
    %3121 = vmatmul.bf16.gmra.mxu0 %v1536
    %v3122 = vpop.f32.mrf.mxu0
    %v3123 = vadd.f32 %v3110, %v3122
    %v3124 = vpop.f32.mrf.mxu0
    %3125 = vdwg.mxu0
    %3126 = vmatpush.bf16.msra.mxu0 %v2569
    %3127 = vmatpush.bf16.msra.mxu0 %v2565
    %3128 = vmatpush.bf16.msra.mxu0 %v2561
    %3129 = vmatpush.bf16.msra.mxu0 %v2557
    %3130 = vmatpush.bf16.msra.mxu0 %v2553
    %3131 = vmatpush.bf16.msra.mxu0 %v2549
    %3132 = vmatpush.bf16.msra.mxu0 %v2545
    %3133 = vmatpush.bf16.msra.mxu0 %v2541
    %3134 = vmatmul.bf16.gmra.mxu0 %v1537
    %v3135 = vpop.f32.mrf.mxu0
    %v3136 = vadd.f32 %v3123, %v3135
    %v3137 = vpop.f32.mrf.mxu0
    %3138 = vdwg.mxu0
    %3139 = vmatpush.bf16.msra.mxu0 %v2346
    %3140 = vmatpush.bf16.msra.mxu0 %v2342
    %3141 = vmatpush.bf16.msra.mxu0 %v2338
    %3142 = vmatpush.bf16.msra.mxu0 %v2334
    %3143 = vmatpush.bf16.msra.mxu0 %v2330
    %3144 = vmatpush.bf16.msra.mxu0 %v2326
    %3145 = vmatpush.bf16.msra.mxu0 %v2322
    %3146 = vmatpush.bf16.msra.mxu0 %v2318
    %3147 = vmatmul.bf16.gmra.mxu0 %v1530
    %v3148 = vpop.f32.mrf.mxu0
    %v3149 = vadd.f32 %v1542, %v3148
    %v3150 = vpop.f32.mrf.mxu0
    %3151 = vdwg.mxu0
    %3152 = vmatpush.bf16.msra.mxu0 %v2378
    %3153 = vmatpush.bf16.msra.mxu0 %v2374
    %3154 = vmatpush.bf16.msra.mxu0 %v2370
    %3155 = vmatpush.bf16.msra.mxu0 %v2366
    %3156 = vmatpush.bf16.msra.mxu0 %v2362
    %3157 = vmatpush.bf16.msra.mxu0 %v2358
    %3158 = vmatpush.bf16.msra.mxu0 %v2354
    %3159 = vmatpush.bf16.msra.mxu0 %v2350
    %3160 = vmatmul.bf16.gmra.mxu0 %v1531
    %v3161 = vpop.f32.mrf.mxu0
    %v3162 = vadd.f32 %v3149, %v3161
    %v3163 = vpop.f32.mrf.mxu0
    %3164 = vdwg.mxu0
    %3165 = vmatpush.bf16.msra.mxu0 %v2410
    %3166 = vmatpush.bf16.msra.mxu0 %v2406
    %3167 = vmatpush.bf16.msra.mxu0 %v2402
    %3168 = vmatpush.bf16.msra.mxu0 %v2398
    %3169 = vmatpush.bf16.msra.mxu0 %v2394
    %3170 = vmatpush.bf16.msra.mxu0 %v2390
    %3171 = vmatpush.bf16.msra.mxu0 %v2386
    %3172 = vmatpush.bf16.msra.mxu0 %v2382
    %3173 = vmatmul.bf16.gmra.mxu0 %v1532
    %v3174 = vpop.f32.mrf.mxu0
    %v3175 = vadd.f32 %v3162, %v3174
    %v3176 = vpop.f32.mrf.mxu0
    %3177 = vdwg.mxu0
    %3178 = vmatpush.bf16.msra.mxu0 %v2442
    %3179 = vmatpush.bf16.msra.mxu0 %v2438
    %3180 = vmatpush.bf16.msra.mxu0 %v2434
    %3181 = vmatpush.bf16.msra.mxu0 %v2430
    %3182 = vmatpush.bf16.msra.mxu0 %v2426
    %3183 = vmatpush.bf16.msra.mxu0 %v2422
    %3184 = vmatpush.bf16.msra.mxu0 %v2418
    %3185 = vmatpush.bf16.msra.mxu0 %v2414
    %3186 = vmatmul.bf16.gmra.mxu0 %v1533
    %v3187 = vpop.f32.mrf.mxu0
    %v3188 = vadd.f32 %v3175, %v3187
    %v3189 = vpop.f32.mrf.mxu0
    %3190 = vdwg.mxu0
    %3191 = vmatpush.bf16.msra.mxu0 %v2474
    %3192 = vmatpush.bf16.msra.mxu0 %v2470
    %3193 = vmatpush.bf16.msra.mxu0 %v2466
    %3194 = vmatpush.bf16.msra.mxu0 %v2462
    %3195 = vmatpush.bf16.msra.mxu0 %v2458
    %3196 = vmatpush.bf16.msra.mxu0 %v2454
    %3197 = vmatpush.bf16.msra.mxu0 %v2450
    %3198 = vmatpush.bf16.msra.mxu0 %v2446
    %3199 = vmatmul.bf16.gmra.mxu0 %v1534
    %v3200 = vpop.f32.mrf.mxu0
    %v3201 = vadd.f32 %v3188, %v3200
    %v3202 = vpop.f32.mrf.mxu0
    %3203 = vdwg.mxu0
    %3204 = vmatpush.bf16.msra.mxu0 %v2506
    %3205 = vmatpush.bf16.msra.mxu0 %v2502
    %3206 = vmatpush.bf16.msra.mxu0 %v2498
    %3207 = vmatpush.bf16.msra.mxu0 %v2494
    %3208 = vmatpush.bf16.msra.mxu0 %v2490
    %3209 = vmatpush.bf16.msra.mxu0 %v2486
    %3210 = vmatpush.bf16.msra.mxu0 %v2482
    %3211 = vmatpush.bf16.msra.mxu0 %v2478
    %3212 = vmatmul.bf16.gmra.mxu0 %v1535
    %v3213 = vpop.f32.mrf.mxu0
    %v3214 = vadd.f32 %v3201, %v3213
    %v3215 = vpop.f32.mrf.mxu0
    %3216 = vdwg.mxu0
    %3217 = vmatpush.bf16.msra.mxu0 %v2538
    %3218 = vmatpush.bf16.msra.mxu0 %v2534
    %3219 = vmatpush.bf16.msra.mxu0 %v2530
    %3220 = vmatpush.bf16.msra.mxu0 %v2526
    %3221 = vmatpush.bf16.msra.mxu0 %v2522
    %3222 = vmatpush.bf16.msra.mxu0 %v2518
    %3223 = vmatpush.bf16.msra.mxu0 %v2514
    %3224 = vmatpush.bf16.msra.mxu0 %v2510
    %3225 = vmatmul.bf16.gmra.mxu0 %v1536
    %v3226 = vpop.f32.mrf.mxu0
    %v3227 = vadd.f32 %v3214, %v3226
    %v3228 = vpop.f32.mrf.mxu0
    %3229 = vdwg.mxu0
    %3230 = vmatpush.bf16.msra.mxu0 %v2570
    %3231 = vmatpush.bf16.msra.mxu0 %v2566
    %3232 = vmatpush.bf16.msra.mxu0 %v2562
    %3233 = vmatpush.bf16.msra.mxu0 %v2558
    %3234 = vmatpush.bf16.msra.mxu0 %v2554
    %3235 = vmatpush.bf16.msra.mxu0 %v2550
    %3236 = vmatpush.bf16.msra.mxu0 %v2546
    %3237 = vmatpush.bf16.msra.mxu0 %v2542
    %3238 = vmatmul.bf16.gmra.mxu0 %v1537
    %v3239 = vpop.f32.mrf.mxu0
    %v3240 = vadd.f32 %v3227, %v3239
    %v3241 = vpop.f32.mrf.mxu0
    %3242 = vdwg.mxu0
    %v3243 = vmax.f32 %v2928, 0.0
    %v3244 = vmax.f32 %v3032, 0.0
    %v3245 = vmax.f32 %v3136, 0.0
    %v3246 = vmax.f32 %v3240, 0.0
    %v3247 = vld [vmem:[#allocation11] sm:$0xff]
    %v3248 = vld [vmem:[#allocation11 + $0x8] sm:$0xff]
    %v3249 = vld [vmem:[#allocation11 + $0x10] sm:$0xff]
    %v3250 = vld [vmem:[#allocation11 + $0x18] sm:$0xff]
    %v3251 = vld [vmem:[#allocation11 + $0x20] sm:$0xff]
    %v3252 = vld [vmem:[#allocation11 + $0x28] sm:$0xff]
    %v3253 = vld [vmem:[#allocation11 + $0x30] sm:$0xff]
    %v3254 = vld [vmem:[#allocation11 + $0x38] sm:$0xff]
    %v3255 = vld [vmem:[#allocation11 + $0x40] sm:$0xff]
    %v3256 = vld [vmem:[#allocation11 + $0x48] sm:$0xff]
    %v3257 = vld [vmem:[#allocation11 + $0x50] sm:$0xff]
    %v3258 = vld [vmem:[#allocation11 + $0x58] sm:$0xff]
    %v3259 = vld [vmem:[#allocation11 + $0x60] sm:$0xff]
    %v3260 = vld [vmem:[#allocation11 + $0x68] sm:$0xff]
    %v3261 = vld [vmem:[#allocation11 + $0x70] sm:$0xff]
    %v3262 = vld [vmem:[#allocation11 + $0x78] sm:$0xff]
    %v3263 = vld [vmem:[#allocation11 + $0x80] sm:$0xff]
    %v3264 = vld [vmem:[#allocation11 + $0x88] sm:$0xff]
    %v3265 = vld [vmem:[#allocation11 + $0x90] sm:$0xff]
    %v3266 = vld [vmem:[#allocation11 + $0x98] sm:$0xff]
    %v3267 = vld [vmem:[#allocation11 + $0xa0] sm:$0xff]
    %v3268 = vld [vmem:[#allocation11 + $0xa8] sm:$0xff]
    %v3269 = vld [vmem:[#allocation11 + $0xb0] sm:$0xff]
    %v3270 = vld [vmem:[#allocation11 + $0xb8] sm:$0xff]
    %v3271 = vld [vmem:[#allocation11 + $0xc0] sm:$0xff]
    %v3272 = vld [vmem:[#allocation11 + $0xc8] sm:$0xff]
    %v3273 = vld [vmem:[#allocation11 + $0xd0] sm:$0xff]
    %v3274 = vld [vmem:[#allocation11 + $0xd8] sm:$0xff]
    %v3275 = vld [vmem:[#allocation11 + $0xe0] sm:$0xff]
    %v3276 = vld [vmem:[#allocation11 + $0xe8] sm:$0xff]
    %v3277 = vld [vmem:[#allocation11 + $0xf0] sm:$0xff]
    %v3278 = vld [vmem:[#allocation11 + $0xf8] sm:$0xff]
    %v3279 = vld [vmem:[#allocation11 + $0x100] sm:$0xff]
    %v3280 = vld [vmem:[#allocation11 + $0x108] sm:$0xff]
    %v3281 = vld [vmem:[#allocation11 + $0x110] sm:$0xff]
    %v3282 = vld [vmem:[#allocation11 + $0x118] sm:$0xff]
    %v3283 = vld [vmem:[#allocation11 + $0x120] sm:$0xff]
    %v3284 = vld [vmem:[#allocation11 + $0x128] sm:$0xff]
    %v3285 = vld [vmem:[#allocation11 + $0x130] sm:$0xff]
    %v3286 = vld [vmem:[#allocation11 + $0x138] sm:$0xff]
    %v3287 = vld [vmem:[#allocation11 + $0x140] sm:$0xff]
    %v3288 = vld [vmem:[#allocation11 + $0x148] sm:$0xff]
    %v3289 = vld [vmem:[#allocation11 + $0x150] sm:$0xff]
    %v3290 = vld [vmem:[#allocation11 + $0x158] sm:$0xff]
    %v3291 = vld [vmem:[#allocation11 + $0x160] sm:$0xff]
    %v3292 = vld [vmem:[#allocation11 + $0x168] sm:$0xff]
    %v3293 = vld [vmem:[#allocation11 + $0x170] sm:$0xff]
    %v3294 = vld [vmem:[#allocation11 + $0x178] sm:$0xff]
    %v3295 = vld [vmem:[#allocation11 + $0x180] sm:$0xff]
    %v3296 = vld [vmem:[#allocation11 + $0x188] sm:$0xff]
    %v3297 = vld [vmem:[#allocation11 + $0x190] sm:$0xff]
    %v3298 = vld [vmem:[#allocation11 + $0x198] sm:$0xff]
    %v3299 = vld [vmem:[#allocation11 + $0x1a0] sm:$0xff]
    %v3300 = vld [vmem:[#allocation11 + $0x1a8] sm:$0xff]
    %v3301 = vld [vmem:[#allocation11 + $0x1b0] sm:$0xff]
    %v3302 = vld [vmem:[#allocation11 + $0x1b8] sm:$0xff]
    %v3303 = vld [vmem:[#allocation11 + $0x1c0] sm:$0xff]
    %v3304 = vld [vmem:[#allocation11 + $0x1c8] sm:$0xff]
    %v3305 = vld [vmem:[#allocation11 + $0x1d0] sm:$0xff]
    %v3306 = vld [vmem:[#allocation11 + $0x1d8] sm:$0xff]
    %v3307 = vld [vmem:[#allocation11 + $0x1e0] sm:$0xff]
    %v3308 = vld [vmem:[#allocation11 + $0x1e8] sm:$0xff]
    %v3309 = vld [vmem:[#allocation11 + $0x1f0] sm:$0xff]
    %v3310 = vld [vmem:[#allocation11 + $0x1f8] sm:$0xff]
    %v3311 = vld [vmem:[#allocation13] sm:$0x3]
    %v3312 = vpack.c.bf16 %v3243, %v3243
    %v3313 = vpack.c.bf16 %v3244, %v3244
    %v3314 = vpack.c.bf16 %v3245, %v3245
    %v3315 = vpack.c.bf16 %v3246, %v3246
    %v3317 = vperm.slane %v3311, 0
    %v3318 = vperm.slane %v3311, 1
    %v3385 = vunpack.c.l.b16 %v3247
    %v3386 = vunpack.c.h.b16 %v3247
    %v3387 = vunpack.c.l.b16 %v3248
    %v3388 = vunpack.c.h.b16 %v3248
    %v3389 = vunpack.c.l.b16 %v3249
    %v3390 = vunpack.c.h.b16 %v3249
    %v3391 = vunpack.c.l.b16 %v3250
    %v3392 = vunpack.c.h.b16 %v3250
    %v3393 = vunpack.c.l.b16 %v3251
    %v3394 = vunpack.c.h.b16 %v3251
    %v3395 = vunpack.c.l.b16 %v3252
    %v3396 = vunpack.c.h.b16 %v3252
    %v3397 = vunpack.c.l.b16 %v3253
    %v3398 = vunpack.c.h.b16 %v3253
    %v3399 = vunpack.c.l.b16 %v3254
    %v3400 = vunpack.c.h.b16 %v3254
    %v3401 = vunpack.c.l.b16 %v3255
    %v3402 = vunpack.c.h.b16 %v3255
    %v3403 = vunpack.c.l.b16 %v3256
    %v3404 = vunpack.c.h.b16 %v3256
    %v3405 = vunpack.c.l.b16 %v3257
    %v3406 = vunpack.c.h.b16 %v3257
    %v3407 = vunpack.c.l.b16 %v3258
    %v3408 = vunpack.c.h.b16 %v3258
    %v3409 = vunpack.c.l.b16 %v3259
    %v3410 = vunpack.c.h.b16 %v3259
    %v3411 = vunpack.c.l.b16 %v3260
    %v3412 = vunpack.c.h.b16 %v3260
    %v3413 = vunpack.c.l.b16 %v3261
    %v3414 = vunpack.c.h.b16 %v3261
    %v3415 = vunpack.c.l.b16 %v3262
    %v3416 = vunpack.c.h.b16 %v3262
    %v3417 = vunpack.c.l.b16 %v3263
    %v3418 = vunpack.c.h.b16 %v3263
    %v3419 = vunpack.c.l.b16 %v3264
    %v3420 = vunpack.c.h.b16 %v3264
    %v3421 = vunpack.c.l.b16 %v3265
    %v3422 = vunpack.c.h.b16 %v3265
    %v3423 = vunpack.c.l.b16 %v3266
    %v3424 = vunpack.c.h.b16 %v3266
    %v3425 = vunpack.c.l.b16 %v3267
    %v3426 = vunpack.c.h.b16 %v3267
    %v3427 = vunpack.c.l.b16 %v3268
    %v3428 = vunpack.c.h.b16 %v3268
    %v3429 = vunpack.c.l.b16 %v3269
    %v3430 = vunpack.c.h.b16 %v3269
    %v3431 = vunpack.c.l.b16 %v3270
    %v3432 = vunpack.c.h.b16 %v3270
    %v3433 = vunpack.c.l.b16 %v3271
    %v3434 = vunpack.c.h.b16 %v3271
    %v3435 = vunpack.c.l.b16 %v3272
    %v3436 = vunpack.c.h.b16 %v3272
    %v3437 = vunpack.c.l.b16 %v3273
    %v3438 = vunpack.c.h.b16 %v3273
    %v3439 = vunpack.c.l.b16 %v3274
    %v3440 = vunpack.c.h.b16 %v3274
    %v3441 = vunpack.c.l.b16 %v3275
    %v3442 = vunpack.c.h.b16 %v3275
    %v3443 = vunpack.c.l.b16 %v3276
    %v3444 = vunpack.c.h.b16 %v3276
    %v3445 = vunpack.c.l.b16 %v3277
    %v3446 = vunpack.c.h.b16 %v3277
    %v3447 = vunpack.c.l.b16 %v3278
    %v3448 = vunpack.c.h.b16 %v3278
    %v3449 = vunpack.c.l.b16 %v3279
    %v3450 = vunpack.c.h.b16 %v3279
    %v3451 = vunpack.c.l.b16 %v3280
    %v3452 = vunpack.c.h.b16 %v3280
    %v3453 = vunpack.c.l.b16 %v3281
    %v3454 = vunpack.c.h.b16 %v3281
    %v3455 = vunpack.c.l.b16 %v3282
    %v3456 = vunpack.c.h.b16 %v3282
    %v3457 = vunpack.c.l.b16 %v3283
    %v3458 = vunpack.c.h.b16 %v3283
    %v3459 = vunpack.c.l.b16 %v3284
    %v3460 = vunpack.c.h.b16 %v3284
    %v3461 = vunpack.c.l.b16 %v3285
    %v3462 = vunpack.c.h.b16 %v3285
    %v3463 = vunpack.c.l.b16 %v3286
    %v3464 = vunpack.c.h.b16 %v3286
    %v3465 = vunpack.c.l.b16 %v3287
    %v3466 = vunpack.c.h.b16 %v3287
    %v3467 = vunpack.c.l.b16 %v3288
    %v3468 = vunpack.c.h.b16 %v3288
    %v3469 = vunpack.c.l.b16 %v3289
    %v3470 = vunpack.c.h.b16 %v3289
    %v3471 = vunpack.c.l.b16 %v3290
    %v3472 = vunpack.c.h.b16 %v3290
    %v3473 = vunpack.c.l.b16 %v3291
    %v3474 = vunpack.c.h.b16 %v3291
    %v3475 = vunpack.c.l.b16 %v3292
    %v3476 = vunpack.c.h.b16 %v3292
    %v3477 = vunpack.c.l.b16 %v3293
    %v3478 = vunpack.c.h.b16 %v3293
    %v3479 = vunpack.c.l.b16 %v3294
    %v3480 = vunpack.c.h.b16 %v3294
    %v3481 = vunpack.c.l.b16 %v3295
    %v3482 = vunpack.c.h.b16 %v3295
    %v3483 = vunpack.c.l.b16 %v3296
    %v3484 = vunpack.c.h.b16 %v3296
    %v3485 = vunpack.c.l.b16 %v3297
    %v3486 = vunpack.c.h.b16 %v3297
    %v3487 = vunpack.c.l.b16 %v3298
    %v3488 = vunpack.c.h.b16 %v3298
    %v3489 = vunpack.c.l.b16 %v3299
    %v3490 = vunpack.c.h.b16 %v3299
    %v3491 = vunpack.c.l.b16 %v3300
    %v3492 = vunpack.c.h.b16 %v3300
    %v3493 = vunpack.c.l.b16 %v3301
    %v3494 = vunpack.c.h.b16 %v3301
    %v3495 = vunpack.c.l.b16 %v3302
    %v3496 = vunpack.c.h.b16 %v3302
    %v3497 = vunpack.c.l.b16 %v3303
    %v3498 = vunpack.c.h.b16 %v3303
    %v3499 = vunpack.c.l.b16 %v3304
    %v3500 = vunpack.c.h.b16 %v3304
    %v3501 = vunpack.c.l.b16 %v3305
    %v3502 = vunpack.c.h.b16 %v3305
    %v3503 = vunpack.c.l.b16 %v3306
    %v3504 = vunpack.c.h.b16 %v3306
    %v3505 = vunpack.c.l.b16 %v3307
    %v3506 = vunpack.c.h.b16 %v3307
    %v3507 = vunpack.c.l.b16 %v3308
    %v3508 = vunpack.c.h.b16 %v3308
    %v3509 = vunpack.c.l.b16 %v3309
    %v3510 = vunpack.c.h.b16 %v3309
    %v3511 = vunpack.c.l.b16 %v3310
    %v3512 = vunpack.c.h.b16 %v3310
    %v3513 = vpack.c.b16 %v3387, %v3385
    %v3514 = vpack.c.b16 %v3388, %v3386
    %v3515 = vpack.c.b16 %v3391, %v3389
    %v3516 = vpack.c.b16 %v3392, %v3390
    %v3517 = vpack.c.b16 %v3395, %v3393
    %v3518 = vpack.c.b16 %v3396, %v3394
    %v3519 = vpack.c.b16 %v3399, %v3397
    %v3520 = vpack.c.b16 %v3400, %v3398
    %v3521 = vpack.c.b16 %v3403, %v3401
    %v3522 = vpack.c.b16 %v3404, %v3402
    %v3523 = vpack.c.b16 %v3407, %v3405
    %v3524 = vpack.c.b16 %v3408, %v3406
    %v3525 = vpack.c.b16 %v3411, %v3409
    %v3526 = vpack.c.b16 %v3412, %v3410
    %v3527 = vpack.c.b16 %v3415, %v3413
    %v3528 = vpack.c.b16 %v3416, %v3414
    %v3529 = vpack.c.b16 %v3419, %v3417
    %v3530 = vpack.c.b16 %v3420, %v3418
    %v3531 = vpack.c.b16 %v3423, %v3421
    %v3532 = vpack.c.b16 %v3424, %v3422
    %v3533 = vpack.c.b16 %v3427, %v3425
    %v3534 = vpack.c.b16 %v3428, %v3426
    %v3535 = vpack.c.b16 %v3431, %v3429
    %v3536 = vpack.c.b16 %v3432, %v3430
    %v3537 = vpack.c.b16 %v3435, %v3433
    %v3538 = vpack.c.b16 %v3436, %v3434
    %v3539 = vpack.c.b16 %v3439, %v3437
    %v3540 = vpack.c.b16 %v3440, %v3438
    %v3541 = vpack.c.b16 %v3443, %v3441
    %v3542 = vpack.c.b16 %v3444, %v3442
    %v3543 = vpack.c.b16 %v3447, %v3445
    %v3544 = vpack.c.b16 %v3448, %v3446
    %v3545 = vpack.c.b16 %v3451, %v3449
    %v3546 = vpack.c.b16 %v3452, %v3450
    %v3547 = vpack.c.b16 %v3455, %v3453
    %v3548 = vpack.c.b16 %v3456, %v3454
    %v3549 = vpack.c.b16 %v3459, %v3457
    %v3550 = vpack.c.b16 %v3460, %v3458
    %v3551 = vpack.c.b16 %v3463, %v3461
    %v3552 = vpack.c.b16 %v3464, %v3462
    %v3553 = vpack.c.b16 %v3467, %v3465
    %v3554 = vpack.c.b16 %v3468, %v3466
    %v3555 = vpack.c.b16 %v3471, %v3469
    %v3556 = vpack.c.b16 %v3472, %v3470
    %v3557 = vpack.c.b16 %v3475, %v3473
    %v3558 = vpack.c.b16 %v3476, %v3474
    %v3559 = vpack.c.b16 %v3479, %v3477
    %v3560 = vpack.c.b16 %v3480, %v3478
    %v3561 = vpack.c.b16 %v3483, %v3481
    %v3562 = vpack.c.b16 %v3484, %v3482
    %v3563 = vpack.c.b16 %v3487, %v3485
    %v3564 = vpack.c.b16 %v3488, %v3486
    %v3565 = vpack.c.b16 %v3491, %v3489
    %v3566 = vpack.c.b16 %v3492, %v3490
    %v3567 = vpack.c.b16 %v3495, %v3493
    %v3568 = vpack.c.b16 %v3496, %v3494
    %v3569 = vpack.c.b16 %v3499, %v3497
    %v3570 = vpack.c.b16 %v3500, %v3498
    %v3571 = vpack.c.b16 %v3503, %v3501
    %v3572 = vpack.c.b16 %v3504, %v3502
    %v3573 = vpack.c.b16 %v3507, %v3505
    %v3574 = vpack.c.b16 %v3508, %v3506
    %v3575 = vpack.c.b16 %v3511, %v3509
    %v3576 = vpack.c.b16 %v3512, %v3510
    %3641 = vmatpush.bf16.msra.mxu0 %v3527
    %3642 = vmatpush.bf16.msra.mxu0 %v3525
    %3643 = vmatpush.bf16.msra.mxu0 %v3523
    %3644 = vmatpush.bf16.msra.mxu0 %v3521
    %3645 = vmatpush.bf16.msra.mxu0 %v3519
    %3646 = vmatpush.bf16.msra.mxu0 %v3517
    %3647 = vmatpush.bf16.msra.mxu0 %v3515
    %3648 = vmatpush.bf16.msra.mxu0 %v3513
    %3649 = vmatmul.bf16.gmra.mxu0 %v3312
    %v3650 = vpop.f32.mrf.mxu0
    %v3651 = vadd.f32 %v3317, %v3650
    %v3652 = vpop.f32.mrf.mxu0
    %3653 = vdwg.mxu0
    %3654 = vmatpush.bf16.msra.mxu0 %v3543
    %3655 = vmatpush.bf16.msra.mxu0 %v3541
    %3656 = vmatpush.bf16.msra.mxu0 %v3539
    %3657 = vmatpush.bf16.msra.mxu0 %v3537
    %3658 = vmatpush.bf16.msra.mxu0 %v3535
    %3659 = vmatpush.bf16.msra.mxu0 %v3533
    %3660 = vmatpush.bf16.msra.mxu0 %v3531
    %3661 = vmatpush.bf16.msra.mxu0 %v3529
    %3662 = vmatmul.bf16.gmra.mxu0 %v3313
    %v3663 = vpop.f32.mrf.mxu0
    %v3664 = vadd.f32 %v3651, %v3663
    %v3665 = vpop.f32.mrf.mxu0
    %3666 = vdwg.mxu0
    %3667 = vmatpush.bf16.msra.mxu0 %v3559
    %3668 = vmatpush.bf16.msra.mxu0 %v3557
    %3669 = vmatpush.bf16.msra.mxu0 %v3555
    %3670 = vmatpush.bf16.msra.mxu0 %v3553
    %3671 = vmatpush.bf16.msra.mxu0 %v3551
    %3672 = vmatpush.bf16.msra.mxu0 %v3549
    %3673 = vmatpush.bf16.msra.mxu0 %v3547
    %3674 = vmatpush.bf16.msra.mxu0 %v3545
    %3675 = vmatmul.bf16.gmra.mxu0 %v3314
    %v3676 = vpop.f32.mrf.mxu0
    %v3677 = vadd.f32 %v3664, %v3676
    %v3678 = vpop.f32.mrf.mxu0
    %3679 = vdwg.mxu0
    %3680 = vmatpush.bf16.msra.mxu0 %v3575
    %3681 = vmatpush.bf16.msra.mxu0 %v3573
    %3682 = vmatpush.bf16.msra.mxu0 %v3571
    %3683 = vmatpush.bf16.msra.mxu0 %v3569
    %3684 = vmatpush.bf16.msra.mxu0 %v3567
    %3685 = vmatpush.bf16.msra.mxu0 %v3565
    %3686 = vmatpush.bf16.msra.mxu0 %v3563
    %3687 = vmatpush.bf16.msra.mxu0 %v3561
    %3688 = vmatmul.bf16.gmra.mxu0 %v3315
    %v3689 = vpop.f32.mrf.mxu0
    %v3690 = vadd.f32 %v3677, %v3689
    %v3691 = vpop.f32.mrf.mxu0
    %3692 = vdwg.mxu0
    %3693 = vmatpush.bf16.msra.mxu0 %v3528
    %3694 = vmatpush.bf16.msra.mxu0 %v3526
    %3695 = vmatpush.bf16.msra.mxu0 %v3524
    %3696 = vmatpush.bf16.msra.mxu0 %v3522
    %3697 = vmatpush.bf16.msra.mxu0 %v3520
    %3698 = vmatpush.bf16.msra.mxu0 %v3518
    %3699 = vmatpush.bf16.msra.mxu0 %v3516
    %3700 = vmatpush.bf16.msra.mxu0 %v3514
    %3701 = vmatmul.bf16.gmra.mxu0 %v3312
    %v3702 = vpop.f32.mrf.mxu0
    %v3703 = vadd.f32 %v3318, %v3702
    %v3704 = vpop.f32.mrf.mxu0
    %3705 = vdwg.mxu0
    %3706 = vmatpush.bf16.msra.mxu0 %v3544
    %3707 = vmatpush.bf16.msra.mxu0 %v3542
    %3708 = vmatpush.bf16.msra.mxu0 %v3540
    %3709 = vmatpush.bf16.msra.mxu0 %v3538
    %3710 = vmatpush.bf16.msra.mxu0 %v3536
    %3711 = vmatpush.bf16.msra.mxu0 %v3534
    %3712 = vmatpush.bf16.msra.mxu0 %v3532
    %3713 = vmatpush.bf16.msra.mxu0 %v3530
    %3714 = vmatmul.bf16.gmra.mxu0 %v3313
    %v3715 = vpop.f32.mrf.mxu0
    %v3716 = vadd.f32 %v3703, %v3715
    %v3717 = vpop.f32.mrf.mxu0
    %3718 = vdwg.mxu0
    %3719 = vmatpush.bf16.msra.mxu0 %v3560
    %3720 = vmatpush.bf16.msra.mxu0 %v3558
    %3721 = vmatpush.bf16.msra.mxu0 %v3556
    %3722 = vmatpush.bf16.msra.mxu0 %v3554
    %3723 = vmatpush.bf16.msra.mxu0 %v3552
    %3724 = vmatpush.bf16.msra.mxu0 %v3550
    %3725 = vmatpush.bf16.msra.mxu0 %v3548
    %3726 = vmatpush.bf16.msra.mxu0 %v3546
    %3727 = vmatmul.bf16.gmra.mxu0 %v3314
    %v3728 = vpop.f32.mrf.mxu0
    %v3729 = vadd.f32 %v3716, %v3728
    %v3730 = vpop.f32.mrf.mxu0
    %3731 = vdwg.mxu0
    %3732 = vmatpush.bf16.msra.mxu0 %v3576
    %3733 = vmatpush.bf16.msra.mxu0 %v3574
    %3734 = vmatpush.bf16.msra.mxu0 %v3572
    %3735 = vmatpush.bf16.msra.mxu0 %v3570
    %3736 = vmatpush.bf16.msra.mxu0 %v3568
    %3737 = vmatpush.bf16.msra.mxu0 %v3566
    %3738 = vmatpush.bf16.msra.mxu0 %v3564
    %3739 = vmatpush.bf16.msra.mxu0 %v3562
    %3740 = vmatmul.bf16.gmra.mxu0 %v3315
    %v3741 = vpop.f32.mrf.mxu0
    %v3742 = vadd.f32 %v3729, %v3741
    %v3743 = vpop.f32.mrf.mxu0
    %3744 = vdwg.mxu0
    %v3745 = vmax.f32 %v3690, 0.0
    %v3746 = vmax.f32 %v3742, 0.0
    %v3747 = vld [vmem:[#allocation14] sm:$0xf]
    %v3748 = vld [vmem:[#allocation14 + $0x4] sm:$0xf]
    %v3749 = vld [vmem:[#allocation14 + $0x8] sm:$0xf]
    %v3750 = vld [vmem:[#allocation14 + $0xc] sm:$0xf]
    %v3751 = vld [vmem:[#allocation14 + $0x10] sm:$0xf]
    %v3752 = vld [vmem:[#allocation14 + $0x14] sm:$0xf]
    %v3753 = vld [vmem:[#allocation14 + $0x18] sm:$0xf]
    %v3754 = vld [vmem:[#allocation14 + $0x1c] sm:$0xf]
    %v3755 = vld [vmem:[#allocation14 + $0x20] sm:$0xf]
    %v3756 = vld [vmem:[#allocation14 + $0x24] sm:$0xf]
    %v3757 = vld [vmem:[#allocation14 + $0x28] sm:$0xf]
    %v3758 = vld [vmem:[#allocation14 + $0x2c] sm:$0xf]
    %v3759 = vld [vmem:[#allocation14 + $0x30] sm:$0xf]
    %v3760 = vld [vmem:[#allocation14 + $0x34] sm:$0xf]
    %v3761 = vld [vmem:[#allocation14 + $0x38] sm:$0xf]
    %v3762 = vld [vmem:[#allocation14 + $0x3c] sm:$0xf]
    %v3763 = vld [vmem:[#allocation14 + $0x40] sm:$0xf]
    %v3764 = vld [vmem:[#allocation14 + $0x44] sm:$0xf]
    %v3765 = vld [vmem:[#allocation14 + $0x48] sm:$0xf]
    %v3766 = vld [vmem:[#allocation14 + $0x4c] sm:$0xf]
    %v3767 = vld [vmem:[#allocation14 + $0x50] sm:$0xf]
    %v3768 = vld [vmem:[#allocation14 + $0x54] sm:$0xf]
    %v3769 = vld [vmem:[#allocation14 + $0x58] sm:$0xf]
    %v3770 = vld [vmem:[#allocation14 + $0x5c] sm:$0xf]
    %v3771 = vld [vmem:[#allocation14 + $0x60] sm:$0xf]
    %v3772 = vld [vmem:[#allocation14 + $0x64] sm:$0xf]
    %v3773 = vld [vmem:[#allocation14 + $0x68] sm:$0xf]
    %v3774 = vld [vmem:[#allocation14 + $0x6c] sm:$0xf]
    %v3775 = vld [vmem:[#allocation14 + $0x70] sm:$0xf]
    %v3776 = vld [vmem:[#allocation14 + $0x74] sm:$0xf]
    %v3777 = vld [vmem:[#allocation14 + $0x78] sm:$0xf]
    %v3778 = vld [vmem:[#allocation14 + $0x7c] sm:$0xf]
    %v3779 = vld [vmem:[#allocation16] sm:$0x1]
    %v3780 = vpack.c.bf16 %v3745, %v3745
    %v3781 = vpack.c.bf16 %v3746, %v3746
    %v3783 = vperm.slane %v3779, 0
    %v3817 = vunpack.c.l.b16 %v3747
    %v3818 = vunpack.c.l.b16 %v3748
    %v3819 = vunpack.c.l.b16 %v3749
    %v3820 = vunpack.c.l.b16 %v3750
    %v3821 = vunpack.c.l.b16 %v3751
    %v3822 = vunpack.c.l.b16 %v3752
    %v3823 = vunpack.c.l.b16 %v3753
    %v3824 = vunpack.c.l.b16 %v3754
    %v3825 = vunpack.c.l.b16 %v3755
    %v3826 = vunpack.c.l.b16 %v3756
    %v3827 = vunpack.c.l.b16 %v3757
    %v3828 = vunpack.c.l.b16 %v3758
    %v3829 = vunpack.c.l.b16 %v3759
    %v3830 = vunpack.c.l.b16 %v3760
    %v3831 = vunpack.c.l.b16 %v3761
    %v3832 = vunpack.c.l.b16 %v3762
    %v3833 = vunpack.c.l.b16 %v3763
    %v3834 = vunpack.c.l.b16 %v3764
    %v3835 = vunpack.c.l.b16 %v3765
    %v3836 = vunpack.c.l.b16 %v3766
    %v3837 = vunpack.c.l.b16 %v3767
    %v3838 = vunpack.c.l.b16 %v3768
    %v3839 = vunpack.c.l.b16 %v3769
    %v3840 = vunpack.c.l.b16 %v3770
    %v3841 = vunpack.c.l.b16 %v3771
    %v3842 = vunpack.c.l.b16 %v3772
    %v3843 = vunpack.c.l.b16 %v3773
    %v3844 = vunpack.c.l.b16 %v3774
    %v3845 = vunpack.c.l.b16 %v3775
    %v3846 = vunpack.c.l.b16 %v3776
    %v3847 = vunpack.c.l.b16 %v3777
    %v3848 = vunpack.c.l.b16 %v3778
    %v3849 = vpack.c.b16 %v3818, %v3817
    %v3850 = vpack.c.b16 %v3820, %v3819
    %v3851 = vpack.c.b16 %v3822, %v3821
    %v3852 = vpack.c.b16 %v3824, %v3823
    %v3853 = vpack.c.b16 %v3826, %v3825
    %v3854 = vpack.c.b16 %v3828, %v3827
    %v3855 = vpack.c.b16 %v3830, %v3829
    %v3856 = vpack.c.b16 %v3832, %v3831
    %v3857 = vpack.c.b16 %v3834, %v3833
    %v3858 = vpack.c.b16 %v3836, %v3835
    %v3859 = vpack.c.b16 %v3838, %v3837
    %v3860 = vpack.c.b16 %v3840, %v3839
    %v3861 = vpack.c.b16 %v3842, %v3841
    %v3862 = vpack.c.b16 %v3844, %v3843
    %v3863 = vpack.c.b16 %v3846, %v3845
    %v3864 = vpack.c.b16 %v3848, %v3847
    %3881 = vmatpush.bf16.msra.mxu0 %v3856
    %3882 = vmatpush.bf16.msra.mxu0 %v3855
    %3883 = vmatpush.bf16.msra.mxu0 %v3854
    %3884 = vmatpush.bf16.msra.mxu0 %v3853
    %3885 = vmatpush.bf16.msra.mxu0 %v3852
    %3886 = vmatpush.bf16.msra.mxu0 %v3851
    %3887 = vmatpush.bf16.msra.mxu0 %v3850
    %3888 = vmatpush.bf16.msra.mxu0 %v3849
    %3889 = vmatmul.bf16.gmra.mxu0 %v3780
    %v3890 = vpop.f32.mrf.mxu0
    %v3891 = vadd.f32 %v3783, %v3890
    %v3892 = vpop.f32.mrf.mxu0
    %3893 = vdwg.mxu0
    %3894 = vmatpush.bf16.msra.mxu0 %v3864
    %3895 = vmatpush.bf16.msra.mxu0 %v3863
    %3896 = vmatpush.bf16.msra.mxu0 %v3862
    %3897 = vmatpush.bf16.msra.mxu0 %v3861
    %3898 = vmatpush.bf16.msra.mxu0 %v3860
    %3899 = vmatpush.bf16.msra.mxu0 %v3859
    %3900 = vmatpush.bf16.msra.mxu0 %v3858
    %3901 = vmatpush.bf16.msra.mxu0 %v3857
    %3902 = vmatmul.bf16.gmra.mxu0 %v3781
    %v3903 = vpop.f32.mrf.mxu0
    %v3904 = vadd.f32 %v3891, %v3903
    %v3905 = vpop.f32.mrf.mxu0
    %3906 = vdwg.mxu0
    %v3907 = vmax.f32 %v3904, 0.0
    %v3908 = vld [vmem:[#allocation17] sm:$0xff]
    %v3909 = vld [vmem:[#allocation17 + $0x8] sm:$0xff]
    %v3910 = vld [vmem:[#allocation17 + $0x10] sm:$0xff]
    %v3911 = vld [vmem:[#allocation17 + $0x18] sm:$0xff]
    %v3912 = vld [vmem:[#allocation17 + $0x20] sm:$0xff]
    %v3913 = vld [vmem:[#allocation17 + $0x28] sm:$0xff]
    %v3914 = vld [vmem:[#allocation17 + $0x30] sm:$0xff]
    %v3915 = vld [vmem:[#allocation17 + $0x38] sm:$0xff]
    %v3916 = vld [vmem:[#allocation17 + $0x40] sm:$0xff]
    %v3917 = vld [vmem:[#allocation17 + $0x48] sm:$0xff]
    %v3918 = vld [vmem:[#allocation17 + $0x50] sm:$0xff]
    %v3919 = vld [vmem:[#allocation17 + $0x58] sm:$0xff]
    %v3920 = vld [vmem:[#allocation17 + $0x60] sm:$0xff]
    %v3921 = vld [vmem:[#allocation17 + $0x68] sm:$0xff]
    %v3922 = vld [vmem:[#allocation17 + $0x70] sm:$0xff]
    %v3923 = vld [vmem:[#allocation17 + $0x78] sm:$0xff]
    %v3924 = vld [vmem:[#allocation19] sm:$0x3]
    %v3925 = vpack.c.bf16 %v3907, %v3907
    %v3927 = vperm.slane %v3924, 0
    %v3928 = vperm.slane %v3924, 1
    %v3947 = vunpack.c.l.b16 %v3908
    %v3948 = vunpack.c.h.b16 %v3908
    %v3949 = vunpack.c.l.b16 %v3909
    %v3950 = vunpack.c.h.b16 %v3909
    %v3951 = vunpack.c.l.b16 %v3910
    %v3952 = vunpack.c.h.b16 %v3910
    %v3953 = vunpack.c.l.b16 %v3911
    %v3954 = vunpack.c.h.b16 %v3911
    %v3955 = vunpack.c.l.b16 %v3912
    %v3956 = vunpack.c.h.b16 %v3912
    %v3957 = vunpack.c.l.b16 %v3913
    %v3958 = vunpack.c.h.b16 %v3913
    %v3959 = vunpack.c.l.b16 %v3914
    %v3960 = vunpack.c.h.b16 %v3914
    %v3961 = vunpack.c.l.b16 %v3915
    %v3962 = vunpack.c.h.b16 %v3915
    %v3963 = vunpack.c.l.b16 %v3916
    %v3964 = vunpack.c.h.b16 %v3916
    %v3965 = vunpack.c.l.b16 %v3917
    %v3966 = vunpack.c.h.b16 %v3917
    %v3967 = vunpack.c.l.b16 %v3918
    %v3968 = vunpack.c.h.b16 %v3918
    %v3969 = vunpack.c.l.b16 %v3919
    %v3970 = vunpack.c.h.b16 %v3919
    %v3971 = vunpack.c.l.b16 %v3920
    %v3972 = vunpack.c.h.b16 %v3920
    %v3973 = vunpack.c.l.b16 %v3921
    %v3974 = vunpack.c.h.b16 %v3921
    %v3975 = vunpack.c.l.b16 %v3922
    %v3976 = vunpack.c.h.b16 %v3922
    %v3977 = vunpack.c.l.b16 %v3923
    %v3978 = vunpack.c.h.b16 %v3923
    %v3979 = vpack.c.b16 %v3949, %v3947
    %v3980 = vpack.c.b16 %v3950, %v3948
    %v3981 = vpack.c.b16 %v3953, %v3951
    %v3982 = vpack.c.b16 %v3954, %v3952
    %v3983 = vpack.c.b16 %v3957, %v3955
    %v3984 = vpack.c.b16 %v3958, %v3956
    %v3985 = vpack.c.b16 %v3961, %v3959
    %v3986 = vpack.c.b16 %v3962, %v3960
    %v3987 = vpack.c.b16 %v3965, %v3963
    %v3988 = vpack.c.b16 %v3966, %v3964
    %v3989 = vpack.c.b16 %v3969, %v3967
    %v3990 = vpack.c.b16 %v3970, %v3968
    %v3991 = vpack.c.b16 %v3973, %v3971
    %v3992 = vpack.c.b16 %v3974, %v3972
    %v3993 = vpack.c.b16 %v3977, %v3975
    %v3994 = vpack.c.b16 %v3978, %v3976
    %4011 = vmatpush.bf16.msra.mxu0 %v3993
    %4012 = vmatpush.bf16.msra.mxu0 %v3991
    %4013 = vmatpush.bf16.msra.mxu0 %v3989
    %4014 = vmatpush.bf16.msra.mxu0 %v3987
    %4015 = vmatpush.bf16.msra.mxu0 %v3985
    %4016 = vmatpush.bf16.msra.mxu0 %v3983
    %4017 = vmatpush.bf16.msra.mxu0 %v3981
    %4018 = vmatpush.bf16.msra.mxu0 %v3979
    %4019 = vmatmul.bf16.gmra.mxu0 %v3925
    %v4020 = vpop.f32.mrf.mxu0
    %v4021 = vadd.f32 %v3927, %v4020
    %v4022 = vpop.f32.mrf.mxu0
    %4023 = vdwg.mxu0
    %4024 = vmatpush.bf16.msra.mxu0 %v3994
    %4025 = vmatpush.bf16.msra.mxu0 %v3992
    %4026 = vmatpush.bf16.msra.mxu0 %v3990
    %4027 = vmatpush.bf16.msra.mxu0 %v3988
    %4028 = vmatpush.bf16.msra.mxu0 %v3986
    %4029 = vmatpush.bf16.msra.mxu0 %v3984
    %4030 = vmatpush.bf16.msra.mxu0 %v3982
    %4031 = vmatpush.bf16.msra.mxu0 %v3980
    %4032 = vmatmul.bf16.gmra.mxu0 %v3925
    %v4033 = vpop.f32.mrf.mxu0
    %v4034 = vadd.f32 %v3928, %v4033
    %v4035 = vpop.f32.mrf.mxu0
    %4036 = vdwg.mxu0
    %v4037 = vmax.f32 %v4021, 0.0
    %v4038 = vmax.f32 %v4034, 0.0
    %v4039 = vld [vmem:[#allocation20] sm:$0xff]
    %v4040 = vld [vmem:[#allocation20 + $0x8] sm:$0xff]
    %v4041 = vld [vmem:[#allocation20 + $0x10] sm:$0xff]
    %v4042 = vld [vmem:[#allocation20 + $0x18] sm:$0xff]
    %v4043 = vld [vmem:[#allocation20 + $0x20] sm:$0xff]
    %v4044 = vld [vmem:[#allocation20 + $0x28] sm:$0xff]
    %v4045 = vld [vmem:[#allocation20 + $0x30] sm:$0xff]
    %v4046 = vld [vmem:[#allocation20 + $0x38] sm:$0xff]
    %v4047 = vld [vmem:[#allocation20 + $0x40] sm:$0xff]
    %v4048 = vld [vmem:[#allocation20 + $0x48] sm:$0xff]
    %v4049 = vld [vmem:[#allocation20 + $0x50] sm:$0xff]
    %v4050 = vld [vmem:[#allocation20 + $0x58] sm:$0xff]
    %v4051 = vld [vmem:[#allocation20 + $0x60] sm:$0xff]
    %v4052 = vld [vmem:[#allocation20 + $0x68] sm:$0xff]
    %v4053 = vld [vmem:[#allocation20 + $0x70] sm:$0xff]
    %v4054 = vld [vmem:[#allocation20 + $0x78] sm:$0xff]
    %v4055 = vld [vmem:[#allocation20 + $0x80] sm:$0xff]
    %v4056 = vld [vmem:[#allocation20 + $0x88] sm:$0xff]
    %v4057 = vld [vmem:[#allocation20 + $0x90] sm:$0xff]
    %v4058 = vld [vmem:[#allocation20 + $0x98] sm:$0xff]
    %v4059 = vld [vmem:[#allocation20 + $0xa0] sm:$0xff]
    %v4060 = vld [vmem:[#allocation20 + $0xa8] sm:$0xff]
    %v4061 = vld [vmem:[#allocation20 + $0xb0] sm:$0xff]
    %v4062 = vld [vmem:[#allocation20 + $0xb8] sm:$0xff]
    %v4063 = vld [vmem:[#allocation20 + $0xc0] sm:$0xff]
    %v4064 = vld [vmem:[#allocation20 + $0xc8] sm:$0xff]
    %v4065 = vld [vmem:[#allocation20 + $0xd0] sm:$0xff]
    %v4066 = vld [vmem:[#allocation20 + $0xd8] sm:$0xff]
    %v4067 = vld [vmem:[#allocation20 + $0xe0] sm:$0xff]
    %v4068 = vld [vmem:[#allocation20 + $0xe8] sm:$0xff]
    %v4069 = vld [vmem:[#allocation20 + $0xf0] sm:$0xff]
    %v4070 = vld [vmem:[#allocation20 + $0xf8] sm:$0xff]
    %v4071 = vld [vmem:[#allocation20 + $0x100] sm:$0xff]
    %v4072 = vld [vmem:[#allocation20 + $0x108] sm:$0xff]
    %v4073 = vld [vmem:[#allocation20 + $0x110] sm:$0xff]
    %v4074 = vld [vmem:[#allocation20 + $0x118] sm:$0xff]
    %v4075 = vld [vmem:[#allocation20 + $0x120] sm:$0xff]
    %v4076 = vld [vmem:[#allocation20 + $0x128] sm:$0xff]
    %v4077 = vld [vmem:[#allocation20 + $0x130] sm:$0xff]
    %v4078 = vld [vmem:[#allocation20 + $0x138] sm:$0xff]
    %v4079 = vld [vmem:[#allocation20 + $0x140] sm:$0xff]
    %v4080 = vld [vmem:[#allocation20 + $0x148] sm:$0xff]
    %v4081 = vld [vmem:[#allocation20 + $0x150] sm:$0xff]
    %v4082 = vld [vmem:[#allocation20 + $0x158] sm:$0xff]
    %v4083 = vld [vmem:[#allocation20 + $0x160] sm:$0xff]
    %v4084 = vld [vmem:[#allocation20 + $0x168] sm:$0xff]
    %v4085 = vld [vmem:[#allocation20 + $0x170] sm:$0xff]
    %v4086 = vld [vmem:[#allocation20 + $0x178] sm:$0xff]
    %v4087 = vld [vmem:[#allocation20 + $0x180] sm:$0xff]
    %v4088 = vld [vmem:[#allocation20 + $0x188] sm:$0xff]
    %v4089 = vld [vmem:[#allocation20 + $0x190] sm:$0xff]
    %v4090 = vld [vmem:[#allocation20 + $0x198] sm:$0xff]
    %v4091 = vld [vmem:[#allocation20 + $0x1a0] sm:$0xff]
    %v4092 = vld [vmem:[#allocation20 + $0x1a8] sm:$0xff]
    %v4093 = vld [vmem:[#allocation20 + $0x1b0] sm:$0xff]
    %v4094 = vld [vmem:[#allocation20 + $0x1b8] sm:$0xff]
    %v4095 = vld [vmem:[#allocation20 + $0x1c0] sm:$0xff]
    %v4096 = vld [vmem:[#allocation20 + $0x1c8] sm:$0xff]
    %v4097 = vld [vmem:[#allocation20 + $0x1d0] sm:$0xff]
    %v4098 = vld [vmem:[#allocation20 + $0x1d8] sm:$0xff]
    %v4099 = vld [vmem:[#allocation20 + $0x1e0] sm:$0xff]
    %v4100 = vld [vmem:[#allocation20 + $0x1e8] sm:$0xff]
    %v4101 = vld [vmem:[#allocation20 + $0x1f0] sm:$0xff]
    %v4102 = vld [vmem:[#allocation20 + $0x1f8] sm:$0xff]
    %v4103 = vld [vmem:[%s12] sm:$0xf]
    %v4104 = vpack.c.bf16 %v4037, %v4037
    %v4105 = vpack.c.bf16 %v4038, %v4038
    %v4107 = vperm.slane %v4103, 0
    %v4108 = vperm.slane %v4103, 1
    %v4109 = vperm.slane %v4103, 2
    %v4110 = vperm.slane %v4103, 3
    %v4179 = vunpack.c.l.b16 %v4039
    %v4180 = vunpack.c.h.b16 %v4039
    %v4181 = vunpack.c.l.b16 %v4040
    %v4182 = vunpack.c.h.b16 %v4040
    %v4183 = vunpack.c.l.b16 %v4041
    %v4184 = vunpack.c.h.b16 %v4041
    %v4185 = vunpack.c.l.b16 %v4042
    %v4186 = vunpack.c.h.b16 %v4042
    %v4187 = vunpack.c.l.b16 %v4043
    %v4188 = vunpack.c.h.b16 %v4043
    %v4189 = vunpack.c.l.b16 %v4044
    %v4190 = vunpack.c.h.b16 %v4044
    %v4191 = vunpack.c.l.b16 %v4045
    %v4192 = vunpack.c.h.b16 %v4045
    %v4193 = vunpack.c.l.b16 %v4046
    %v4194 = vunpack.c.h.b16 %v4046
    %v4195 = vunpack.c.l.b16 %v4047
    %v4196 = vunpack.c.h.b16 %v4047
    %v4197 = vunpack.c.l.b16 %v4048
    %v4198 = vunpack.c.h.b16 %v4048
    %v4199 = vunpack.c.l.b16 %v4049
    %v4200 = vunpack.c.h.b16 %v4049
    %v4201 = vunpack.c.l.b16 %v4050
    %v4202 = vunpack.c.h.b16 %v4050
    %v4203 = vunpack.c.l.b16 %v4051
    %v4204 = vunpack.c.h.b16 %v4051
    %v4205 = vunpack.c.l.b16 %v4052
    %v4206 = vunpack.c.h.b16 %v4052
    %v4207 = vunpack.c.l.b16 %v4053
    %v4208 = vunpack.c.h.b16 %v4053
    %v4209 = vunpack.c.l.b16 %v4054
    %v4210 = vunpack.c.h.b16 %v4054
    %v4211 = vunpack.c.l.b16 %v4055
    %v4212 = vunpack.c.h.b16 %v4055
    %v4213 = vunpack.c.l.b16 %v4056
    %v4214 = vunpack.c.h.b16 %v4056
    %v4215 = vunpack.c.l.b16 %v4057
    %v4216 = vunpack.c.h.b16 %v4057
    %v4217 = vunpack.c.l.b16 %v4058
    %v4218 = vunpack.c.h.b16 %v4058
    %v4219 = vunpack.c.l.b16 %v4059
    %v4220 = vunpack.c.h.b16 %v4059
    %v4221 = vunpack.c.l.b16 %v4060
    %v4222 = vunpack.c.h.b16 %v4060
    %v4223 = vunpack.c.l.b16 %v4061
    %v4224 = vunpack.c.h.b16 %v4061
    %v4225 = vunpack.c.l.b16 %v4062
    %v4226 = vunpack.c.h.b16 %v4062
    %v4227 = vunpack.c.l.b16 %v4063
    %v4228 = vunpack.c.h.b16 %v4063
    %v4229 = vunpack.c.l.b16 %v4064
    %v4230 = vunpack.c.h.b16 %v4064
    %v4231 = vunpack.c.l.b16 %v4065
    %v4232 = vunpack.c.h.b16 %v4065
    %v4233 = vunpack.c.l.b16 %v4066
    %v4234 = vunpack.c.h.b16 %v4066
    %v4235 = vunpack.c.l.b16 %v4067
    %v4236 = vunpack.c.h.b16 %v4067
    %v4237 = vunpack.c.l.b16 %v4068
    %v4238 = vunpack.c.h.b16 %v4068
    %v4239 = vunpack.c.l.b16 %v4069
    %v4240 = vunpack.c.h.b16 %v4069
    %v4241 = vunpack.c.l.b16 %v4070
    %v4242 = vunpack.c.h.b16 %v4070
    %v4243 = vunpack.c.l.b16 %v4071
    %v4244 = vunpack.c.h.b16 %v4071
    %v4245 = vunpack.c.l.b16 %v4072
    %v4246 = vunpack.c.h.b16 %v4072
    %v4247 = vunpack.c.l.b16 %v4073
    %v4248 = vunpack.c.h.b16 %v4073
    %v4249 = vunpack.c.l.b16 %v4074
    %v4250 = vunpack.c.h.b16 %v4074
    %v4251 = vunpack.c.l.b16 %v4075
    %v4252 = vunpack.c.h.b16 %v4075
    %v4253 = vunpack.c.l.b16 %v4076
    %v4254 = vunpack.c.h.b16 %v4076
    %v4255 = vunpack.c.l.b16 %v4077
    %v4256 = vunpack.c.h.b16 %v4077
    %v4257 = vunpack.c.l.b16 %v4078
    %v4258 = vunpack.c.h.b16 %v4078
    %v4259 = vunpack.c.l.b16 %v4079
    %v4260 = vunpack.c.h.b16 %v4079
    %v4261 = vunpack.c.l.b16 %v4080
    %v4262 = vunpack.c.h.b16 %v4080
    %v4263 = vunpack.c.l.b16 %v4081
    %v4264 = vunpack.c.h.b16 %v4081
    %v4265 = vunpack.c.l.b16 %v4082
    %v4266 = vunpack.c.h.b16 %v4082
    %v4267 = vunpack.c.l.b16 %v4083
    %v4268 = vunpack.c.h.b16 %v4083
    %v4269 = vunpack.c.l.b16 %v4084
    %v4270 = vunpack.c.h.b16 %v4084
    %v4271 = vunpack.c.l.b16 %v4085
    %v4272 = vunpack.c.h.b16 %v4085
    %v4273 = vunpack.c.l.b16 %v4086
    %v4274 = vunpack.c.h.b16 %v4086
    %v4275 = vunpack.c.l.b16 %v4087
    %v4276 = vunpack.c.h.b16 %v4087
    %v4277 = vunpack.c.l.b16 %v4088
    %v4278 = vunpack.c.h.b16 %v4088
    %v4279 = vunpack.c.l.b16 %v4089
    %v4280 = vunpack.c.h.b16 %v4089
    %v4281 = vunpack.c.l.b16 %v4090
    %v4282 = vunpack.c.h.b16 %v4090
    %v4283 = vunpack.c.l.b16 %v4091
    %v4284 = vunpack.c.h.b16 %v4091
    %v4285 = vunpack.c.l.b16 %v4092
    %v4286 = vunpack.c.h.b16 %v4092
    %v4287 = vunpack.c.l.b16 %v4093
    %v4288 = vunpack.c.h.b16 %v4093
    %v4289 = vunpack.c.l.b16 %v4094
    %v4290 = vunpack.c.h.b16 %v4094
    %v4291 = vunpack.c.l.b16 %v4095
    %v4292 = vunpack.c.h.b16 %v4095
    %v4293 = vunpack.c.l.b16 %v4096
    %v4294 = vunpack.c.h.b16 %v4096
    %v4295 = vunpack.c.l.b16 %v4097
    %v4296 = vunpack.c.h.b16 %v4097
    %v4297 = vunpack.c.l.b16 %v4098
    %v4298 = vunpack.c.h.b16 %v4098
    %v4299 = vunpack.c.l.b16 %v4099
    %v4300 = vunpack.c.h.b16 %v4099
    %v4301 = vunpack.c.l.b16 %v4100
    %v4302 = vunpack.c.h.b16 %v4100
    %v4303 = vunpack.c.l.b16 %v4101
    %v4304 = vunpack.c.h.b16 %v4101
    %v4305 = vunpack.c.l.b16 %v4102
    %v4306 = vunpack.c.h.b16 %v4102
    %v4307 = vpack.c.b16 %v4183, %v4179
    %v4308 = vpack.c.b16 %v4184, %v4180
    %v4309 = vpack.c.b16 %v4185, %v4181
    %v4310 = vpack.c.b16 %v4186, %v4182
    %v4311 = vpack.c.b16 %v4191, %v4187
    %v4312 = vpack.c.b16 %v4192, %v4188
    %v4313 = vpack.c.b16 %v4193, %v4189
    %v4314 = vpack.c.b16 %v4194, %v4190
    %v4315 = vpack.c.b16 %v4199, %v4195
    %v4316 = vpack.c.b16 %v4200, %v4196
    %v4317 = vpack.c.b16 %v4201, %v4197
    %v4318 = vpack.c.b16 %v4202, %v4198
    %v4319 = vpack.c.b16 %v4207, %v4203
    %v4320 = vpack.c.b16 %v4208, %v4204
    %v4321 = vpack.c.b16 %v4209, %v4205
    %v4322 = vpack.c.b16 %v4210, %v4206
    %v4323 = vpack.c.b16 %v4215, %v4211
    %v4324 = vpack.c.b16 %v4216, %v4212
    %v4325 = vpack.c.b16 %v4217, %v4213
    %v4326 = vpack.c.b16 %v4218, %v4214
    %v4327 = vpack.c.b16 %v4223, %v4219
    %v4328 = vpack.c.b16 %v4224, %v4220
    %v4329 = vpack.c.b16 %v4225, %v4221
    %v4330 = vpack.c.b16 %v4226, %v4222
    %v4331 = vpack.c.b16 %v4231, %v4227
    %v4332 = vpack.c.b16 %v4232, %v4228
    %v4333 = vpack.c.b16 %v4233, %v4229
    %v4334 = vpack.c.b16 %v4234, %v4230
    %v4335 = vpack.c.b16 %v4239, %v4235
    %v4336 = vpack.c.b16 %v4240, %v4236
    %v4337 = vpack.c.b16 %v4241, %v4237
    %v4338 = vpack.c.b16 %v4242, %v4238
    %v4339 = vpack.c.b16 %v4247, %v4243
    %v4340 = vpack.c.b16 %v4248, %v4244
    %v4341 = vpack.c.b16 %v4249, %v4245
    %v4342 = vpack.c.b16 %v4250, %v4246
    %v4343 = vpack.c.b16 %v4255, %v4251
    %v4344 = vpack.c.b16 %v4256, %v4252
    %v4345 = vpack.c.b16 %v4257, %v4253
    %v4346 = vpack.c.b16 %v4258, %v4254
    %v4347 = vpack.c.b16 %v4263, %v4259
    %v4348 = vpack.c.b16 %v4264, %v4260
    %v4349 = vpack.c.b16 %v4265, %v4261
    %v4350 = vpack.c.b16 %v4266, %v4262
    %v4351 = vpack.c.b16 %v4271, %v4267
    %v4352 = vpack.c.b16 %v4272, %v4268
    %v4353 = vpack.c.b16 %v4273, %v4269
    %v4354 = vpack.c.b16 %v4274, %v4270
    %v4355 = vpack.c.b16 %v4279, %v4275
    %v4356 = vpack.c.b16 %v4280, %v4276
    %v4357 = vpack.c.b16 %v4281, %v4277
    %v4358 = vpack.c.b16 %v4282, %v4278
    %v4359 = vpack.c.b16 %v4287, %v4283
    %v4360 = vpack.c.b16 %v4288, %v4284
    %v4361 = vpack.c.b16 %v4289, %v4285
    %v4362 = vpack.c.b16 %v4290, %v4286
    %v4363 = vpack.c.b16 %v4295, %v4291
    %v4364 = vpack.c.b16 %v4296, %v4292
    %v4365 = vpack.c.b16 %v4297, %v4293
    %v4366 = vpack.c.b16 %v4298, %v4294
    %v4367 = vpack.c.b16 %v4303, %v4299
    %v4368 = vpack.c.b16 %v4304, %v4300
    %v4369 = vpack.c.b16 %v4305, %v4301
    %v4370 = vpack.c.b16 %v4306, %v4302
    %4435 = vmatpush.bf16.msra.mxu0 %v4335
    %4436 = vmatpush.bf16.msra.mxu0 %v4331
    %4437 = vmatpush.bf16.msra.mxu0 %v4327
    %4438 = vmatpush.bf16.msra.mxu0 %v4323
    %4439 = vmatpush.bf16.msra.mxu0 %v4319
    %4440 = vmatpush.bf16.msra.mxu0 %v4315
    %4441 = vmatpush.bf16.msra.mxu0 %v4311
    %4442 = vmatpush.bf16.msra.mxu0 %v4307
    %4443 = vmatmul.bf16.gmra.mxu0 %v4104
    %v4444 = vpop.f32.mrf.mxu0
    %v4445 = vadd.f32 %v4107, %v4444
    %v4446 = vpop.f32.mrf.mxu0
    %4447 = vdwg.mxu0
    %4448 = vmatpush.bf16.msra.mxu0 %v4367
    %4449 = vmatpush.bf16.msra.mxu0 %v4363
    %4450 = vmatpush.bf16.msra.mxu0 %v4359
    %4451 = vmatpush.bf16.msra.mxu0 %v4355
    %4452 = vmatpush.bf16.msra.mxu0 %v4351
    %4453 = vmatpush.bf16.msra.mxu0 %v4347
    %4454 = vmatpush.bf16.msra.mxu0 %v4343
    %4455 = vmatpush.bf16.msra.mxu0 %v4339
    %4456 = vmatmul.bf16.gmra.mxu0 %v4105
    %v4457 = vpop.f32.mrf.mxu0
    %v4458 = vadd.f32 %v4445, %v4457
    %v4459 = vpop.f32.mrf.mxu0
    %4460 = vdwg.mxu0
    %4461 = vmatpush.bf16.msra.mxu0 %v4336
    %4462 = vmatpush.bf16.msra.mxu0 %v4332
    %4463 = vmatpush.bf16.msra.mxu0 %v4328
    %4464 = vmatpush.bf16.msra.mxu0 %v4324
    %4465 = vmatpush.bf16.msra.mxu0 %v4320
    %4466 = vmatpush.bf16.msra.mxu0 %v4316
    %4467 = vmatpush.bf16.msra.mxu0 %v4312
    %4468 = vmatpush.bf16.msra.mxu0 %v4308
    %4469 = vmatmul.bf16.gmra.mxu0 %v4104
    %v4470 = vpop.f32.mrf.mxu0
    %v4471 = vadd.f32 %v4108, %v4470
    %v4472 = vpop.f32.mrf.mxu0
    %4473 = vdwg.mxu0
    %4474 = vmatpush.bf16.msra.mxu0 %v4368
    %4475 = vmatpush.bf16.msra.mxu0 %v4364
    %4476 = vmatpush.bf16.msra.mxu0 %v4360
    %4477 = vmatpush.bf16.msra.mxu0 %v4356
    %4478 = vmatpush.bf16.msra.mxu0 %v4352
    %4479 = vmatpush.bf16.msra.mxu0 %v4348
    %4480 = vmatpush.bf16.msra.mxu0 %v4344
    %4481 = vmatpush.bf16.msra.mxu0 %v4340
    %4482 = vmatmul.bf16.gmra.mxu0 %v4105
    %v4483 = vpop.f32.mrf.mxu0
    %v4484 = vadd.f32 %v4471, %v4483
    %v4485 = vpop.f32.mrf.mxu0
    %4486 = vdwg.mxu0
    %4487 = vmatpush.bf16.msra.mxu0 %v4337
    %4488 = vmatpush.bf16.msra.mxu0 %v4333
    %4489 = vmatpush.bf16.msra.mxu0 %v4329
    %4490 = vmatpush.bf16.msra.mxu0 %v4325
    %4491 = vmatpush.bf16.msra.mxu0 %v4321
    %4492 = vmatpush.bf16.msra.mxu0 %v4317
    %4493 = vmatpush.bf16.msra.mxu0 %v4313
    %4494 = vmatpush.bf16.msra.mxu0 %v4309
    %4495 = vmatmul.bf16.gmra.mxu0 %v4104
    %v4496 = vpop.f32.mrf.mxu0
    %v4497 = vadd.f32 %v4109, %v4496
    %v4498 = vpop.f32.mrf.mxu0
    %4499 = vdwg.mxu0
    %4500 = vmatpush.bf16.msra.mxu0 %v4369
    %4501 = vmatpush.bf16.msra.mxu0 %v4365
    %4502 = vmatpush.bf16.msra.mxu0 %v4361
    %4503 = vmatpush.bf16.msra.mxu0 %v4357
    %4504 = vmatpush.bf16.msra.mxu0 %v4353
    %4505 = vmatpush.bf16.msra.mxu0 %v4349
    %4506 = vmatpush.bf16.msra.mxu0 %v4345
    %4507 = vmatpush.bf16.msra.mxu0 %v4341
    %4508 = vmatmul.bf16.gmra.mxu0 %v4105
    %v4509 = vpop.f32.mrf.mxu0
    %v4510 = vadd.f32 %v4497, %v4509
    %v4511 = vpop.f32.mrf.mxu0
    %4512 = vdwg.mxu0
    %4513 = vmatpush.bf16.msra.mxu0 %v4338
    %4514 = vmatpush.bf16.msra.mxu0 %v4334
    %4515 = vmatpush.bf16.msra.mxu0 %v4330
    %4516 = vmatpush.bf16.msra.mxu0 %v4326
    %4517 = vmatpush.bf16.msra.mxu0 %v4322
    %4518 = vmatpush.bf16.msra.mxu0 %v4318
    %4519 = vmatpush.bf16.msra.mxu0 %v4314
    %4520 = vmatpush.bf16.msra.mxu0 %v4310
    %4521 = vmatmul.bf16.gmra.mxu0 %v4104
    %v4522 = vpop.f32.mrf.mxu0
    %v4523 = vadd.f32 %v4110, %v4522
    %v4524 = vpop.f32.mrf.mxu0
    %4525 = vdwg.mxu0
    %4526 = vmatpush.bf16.msra.mxu0 %v4370
    %4527 = vmatpush.bf16.msra.mxu0 %v4366
    %4528 = vmatpush.bf16.msra.mxu0 %v4362
    %4529 = vmatpush.bf16.msra.mxu0 %v4358
    %4530 = vmatpush.bf16.msra.mxu0 %v4354
    %4531 = vmatpush.bf16.msra.mxu0 %v4350
    %4532 = vmatpush.bf16.msra.mxu0 %v4346
    %4533 = vmatpush.bf16.msra.mxu0 %v4342
    %4534 = vmatmul.bf16.gmra.mxu0 %v4105
    %v4535 = vpop.f32.mrf.mxu0
    %v4536 = vadd.f32 %v4523, %v4535
    %v4537 = vpop.f32.mrf.mxu0
    %4538 = vdwg.mxu0
    %v4539 = vmax.f32 %v4458, 0.0
    %v4540 = vmax.f32 %v4484, 0.0
    %v4541 = vmax.f32 %v4510, 0.0
    %v4542 = vmax.f32 %v4536, 0.0
    %v4543 = vld [vmem:[#allocation22] sm:$0xff]
    %v4544 = vld [vmem:[#allocation22 + $0x8] sm:$0xff]
    %v4545 = vld [vmem:[#allocation22 + $0x10] sm:$0xff]
    %v4546 = vld [vmem:[#allocation22 + $0x18] sm:$0xff]
    %v4547 = vld [vmem:[#allocation22 + $0x20] sm:$0xff]
    %v4548 = vld [vmem:[#allocation22 + $0x28] sm:$0xff]
    %v4549 = vld [vmem:[#allocation22 + $0x30] sm:$0xff]
    %v4550 = vld [vmem:[#allocation22 + $0x38] sm:$0xff]
    %v4551 = vld [vmem:[#allocation22 + $0x40] sm:$0xff]
    %v4552 = vld [vmem:[#allocation22 + $0x48] sm:$0xff]
    %v4553 = vld [vmem:[#allocation22 + $0x50] sm:$0xff]
    %v4554 = vld [vmem:[#allocation22 + $0x58] sm:$0xff]
    %v4555 = vld [vmem:[#allocation22 + $0x60] sm:$0xff]
    %v4556 = vld [vmem:[#allocation22 + $0x68] sm:$0xff]
    %v4557 = vld [vmem:[#allocation22 + $0x70] sm:$0xff]
    %v4558 = vld [vmem:[#allocation22 + $0x78] sm:$0xff]
    %v4559 = vld [vmem:[#allocation22 + $0x80] sm:$0xff]
    %v4560 = vld [vmem:[#allocation22 + $0x88] sm:$0xff]
    %v4561 = vld [vmem:[#allocation22 + $0x90] sm:$0xff]
    %v4562 = vld [vmem:[#allocation22 + $0x98] sm:$0xff]
    %v4563 = vld [vmem:[#allocation22 + $0xa0] sm:$0xff]
    %v4564 = vld [vmem:[#allocation22 + $0xa8] sm:$0xff]
    %v4565 = vld [vmem:[#allocation22 + $0xb0] sm:$0xff]
    %v4566 = vld [vmem:[#allocation22 + $0xb8] sm:$0xff]
    %v4567 = vld [vmem:[#allocation22 + $0xc0] sm:$0xff]
    %v4568 = vld [vmem:[#allocation22 + $0xc8] sm:$0xff]
    %v4569 = vld [vmem:[#allocation22 + $0xd0] sm:$0xff]
    %v4570 = vld [vmem:[#allocation22 + $0xd8] sm:$0xff]
    %v4571 = vld [vmem:[#allocation22 + $0xe0] sm:$0xff]
    %v4572 = vld [vmem:[#allocation22 + $0xe8] sm:$0xff]
    %v4573 = vld [vmem:[#allocation22 + $0xf0] sm:$0xff]
    %v4574 = vld [vmem:[#allocation22 + $0xf8] sm:$0xff]
    %v4575 = vld [vmem:[#allocation22 + $0x100] sm:$0xff]
    %v4576 = vld [vmem:[#allocation22 + $0x108] sm:$0xff]
    %v4577 = vld [vmem:[#allocation22 + $0x110] sm:$0xff]
    %v4578 = vld [vmem:[#allocation22 + $0x118] sm:$0xff]
    %v4579 = vld [vmem:[#allocation22 + $0x120] sm:$0xff]
    %v4580 = vld [vmem:[#allocation22 + $0x128] sm:$0xff]
    %v4581 = vld [vmem:[#allocation22 + $0x130] sm:$0xff]
    %v4582 = vld [vmem:[#allocation22 + $0x138] sm:$0xff]
    %v4583 = vld [vmem:[#allocation22 + $0x140] sm:$0xff]
    %v4584 = vld [vmem:[#allocation22 + $0x148] sm:$0xff]
    %v4585 = vld [vmem:[#allocation22 + $0x150] sm:$0xff]
    %v4586 = vld [vmem:[#allocation22 + $0x158] sm:$0xff]
    %v4587 = vld [vmem:[#allocation22 + $0x160] sm:$0xff]
    %v4588 = vld [vmem:[#allocation22 + $0x168] sm:$0xff]
    %v4589 = vld [vmem:[#allocation22 + $0x170] sm:$0xff]
    %v4590 = vld [vmem:[#allocation22 + $0x178] sm:$0xff]
    %v4591 = vld [vmem:[#allocation22 + $0x180] sm:$0xff]
    %v4592 = vld [vmem:[#allocation22 + $0x188] sm:$0xff]
    %v4593 = vld [vmem:[#allocation22 + $0x190] sm:$0xff]
    %v4594 = vld [vmem:[#allocation22 + $0x198] sm:$0xff]
    %v4595 = vld [vmem:[#allocation22 + $0x1a0] sm:$0xff]
    %v4596 = vld [vmem:[#allocation22 + $0x1a8] sm:$0xff]
    %v4597 = vld [vmem:[#allocation22 + $0x1b0] sm:$0xff]
    %v4598 = vld [vmem:[#allocation22 + $0x1b8] sm:$0xff]
    %v4599 = vld [vmem:[#allocation22 + $0x1c0] sm:$0xff]
    %v4600 = vld [vmem:[#allocation22 + $0x1c8] sm:$0xff]
    %v4601 = vld [vmem:[#allocation22 + $0x1d0] sm:$0xff]
    %v4602 = vld [vmem:[#allocation22 + $0x1d8] sm:$0xff]
    %v4603 = vld [vmem:[#allocation22 + $0x1e0] sm:$0xff]
    %v4604 = vld [vmem:[#allocation22 + $0x1e8] sm:$0xff]
    %v4605 = vld [vmem:[#allocation22 + $0x1f0] sm:$0xff]
    %v4606 = vld [vmem:[#allocation22 + $0x1f8] sm:$0xff]
    %v4607 = vld [vmem:[#allocation22 + $0x200] sm:$0xff]
    %v4608 = vld [vmem:[#allocation22 + $0x208] sm:$0xff]
    %v4609 = vld [vmem:[#allocation22 + $0x210] sm:$0xff]
    %v4610 = vld [vmem:[#allocation22 + $0x218] sm:$0xff]
    %v4611 = vld [vmem:[#allocation22 + $0x220] sm:$0xff]
    %v4612 = vld [vmem:[#allocation22 + $0x228] sm:$0xff]
    %v4613 = vld [vmem:[#allocation22 + $0x230] sm:$0xff]
    %v4614 = vld [vmem:[#allocation22 + $0x238] sm:$0xff]
    %v4615 = vld [vmem:[#allocation22 + $0x240] sm:$0xff]
    %v4616 = vld [vmem:[#allocation22 + $0x248] sm:$0xff]
    %v4617 = vld [vmem:[#allocation22 + $0x250] sm:$0xff]
    %v4618 = vld [vmem:[#allocation22 + $0x258] sm:$0xff]
    %v4619 = vld [vmem:[#allocation22 + $0x260] sm:$0xff]
    %v4620 = vld [vmem:[#allocation22 + $0x268] sm:$0xff]
    %v4621 = vld [vmem:[#allocation22 + $0x270] sm:$0xff]
    %v4622 = vld [vmem:[#allocation22 + $0x278] sm:$0xff]
    %v4623 = vld [vmem:[#allocation22 + $0x280] sm:$0xff]
    %v4624 = vld [vmem:[#allocation22 + $0x288] sm:$0xff]
    %v4625 = vld [vmem:[#allocation22 + $0x290] sm:$0xff]
    %v4626 = vld [vmem:[#allocation22 + $0x298] sm:$0xff]
    %v4627 = vld [vmem:[#allocation22 + $0x2a0] sm:$0xff]
    %v4628 = vld [vmem:[#allocation22 + $0x2a8] sm:$0xff]
    %v4629 = vld [vmem:[#allocation22 + $0x2b0] sm:$0xff]
    %v4630 = vld [vmem:[#allocation22 + $0x2b8] sm:$0xff]
    %v4631 = vld [vmem:[#allocation22 + $0x2c0] sm:$0xff]
    %v4632 = vld [vmem:[#allocation22 + $0x2c8] sm:$0xff]
    %v4633 = vld [vmem:[#allocation22 + $0x2d0] sm:$0xff]
    %v4634 = vld [vmem:[#allocation22 + $0x2d8] sm:$0xff]
    %v4635 = vld [vmem:[#allocation22 + $0x2e0] sm:$0xff]
    %v4636 = vld [vmem:[#allocation22 + $0x2e8] sm:$0xff]
    %v4637 = vld [vmem:[#allocation22 + $0x2f0] sm:$0xff]
    %v4638 = vld [vmem:[#allocation22 + $0x2f8] sm:$0xff]
    %v4639 = vld [vmem:[#allocation22 + $0x300] sm:$0xff]
    %v4640 = vld [vmem:[#allocation22 + $0x308] sm:$0xff]
    %v4641 = vld [vmem:[#allocation22 + $0x310] sm:$0xff]
    %v4642 = vld [vmem:[#allocation22 + $0x318] sm:$0xff]
    %v4643 = vld [vmem:[#allocation22 + $0x320] sm:$0xff]
    %v4644 = vld [vmem:[#allocation22 + $0x328] sm:$0xff]
    %v4645 = vld [vmem:[#allocation22 + $0x330] sm:$0xff]
    %v4646 = vld [vmem:[#allocation22 + $0x338] sm:$0xff]
    %v4647 = vld [vmem:[#allocation22 + $0x340] sm:$0xff]
    %v4648 = vld [vmem:[#allocation22 + $0x348] sm:$0xff]
    %v4649 = vld [vmem:[#allocation22 + $0x350] sm:$0xff]
    %v4650 = vld [vmem:[#allocation22 + $0x358] sm:$0xff]
    %v4651 = vld [vmem:[#allocation22 + $0x360] sm:$0xff]
    %v4652 = vld [vmem:[#allocation22 + $0x368] sm:$0xff]
    %v4653 = vld [vmem:[#allocation22 + $0x370] sm:$0xff]
    %v4654 = vld [vmem:[#allocation22 + $0x378] sm:$0xff]
    %v4655 = vld [vmem:[#allocation22 + $0x380] sm:$0xff]
    %v4656 = vld [vmem:[#allocation22 + $0x388] sm:$0xff]
    %v4657 = vld [vmem:[#allocation22 + $0x390] sm:$0xff]
    %v4658 = vld [vmem:[#allocation22 + $0x398] sm:$0xff]
    %v4659 = vld [vmem:[#allocation22 + $0x3a0] sm:$0xff]
    %v4660 = vld [vmem:[#allocation22 + $0x3a8] sm:$0xff]
    %v4661 = vld [vmem:[#allocation22 + $0x3b0] sm:$0xff]
    %v4662 = vld [vmem:[#allocation22 + $0x3b8] sm:$0xff]
    %v4663 = vld [vmem:[#allocation22 + $0x3c0] sm:$0xff]
    %v4664 = vld [vmem:[#allocation22 + $0x3c8] sm:$0xff]
    %v4665 = vld [vmem:[#allocation22 + $0x3d0] sm:$0xff]
    %v4666 = vld [vmem:[#allocation22 + $0x3d8] sm:$0xff]
    %v4667 = vld [vmem:[#allocation22 + $0x3e0] sm:$0xff]
    %v4668 = vld [vmem:[#allocation22 + $0x3e8] sm:$0xff]
    %v4669 = vld [vmem:[#allocation22 + $0x3f0] sm:$0xff]
    %v4670 = vld [vmem:[#allocation22 + $0x3f8] sm:$0xff]
    %v4671 = vld [vmem:[#allocation22 + $0x400] sm:$0xff]
    %v4672 = vld [vmem:[#allocation22 + $0x408] sm:$0xff]
    %v4673 = vld [vmem:[#allocation22 + $0x410] sm:$0xff]
    %v4674 = vld [vmem:[#allocation22 + $0x418] sm:$0xff]
    %v4675 = vld [vmem:[#allocation22 + $0x420] sm:$0xff]
    %v4676 = vld [vmem:[#allocation22 + $0x428] sm:$0xff]
    %v4677 = vld [vmem:[#allocation22 + $0x430] sm:$0xff]
    %v4678 = vld [vmem:[#allocation22 + $0x438] sm:$0xff]
    %v4679 = vld [vmem:[#allocation22 + $0x440] sm:$0xff]
    %v4680 = vld [vmem:[#allocation22 + $0x448] sm:$0xff]
    %v4681 = vld [vmem:[#allocation22 + $0x450] sm:$0xff]
    %v4682 = vld [vmem:[#allocation22 + $0x458] sm:$0xff]
    %v4683 = vld [vmem:[#allocation22 + $0x460] sm:$0xff]
    %v4684 = vld [vmem:[#allocation22 + $0x468] sm:$0xff]
    %v4685 = vld [vmem:[#allocation22 + $0x470] sm:$0xff]
    %v4686 = vld [vmem:[#allocation22 + $0x478] sm:$0xff]
    %v4687 = vld [vmem:[#allocation22 + $0x480] sm:$0xff]
    %v4688 = vld [vmem:[#allocation22 + $0x488] sm:$0xff]
    %v4689 = vld [vmem:[#allocation22 + $0x490] sm:$0xff]
    %v4690 = vld [vmem:[#allocation22 + $0x498] sm:$0xff]
    %v4691 = vld [vmem:[#allocation22 + $0x4a0] sm:$0xff]
    %v4692 = vld [vmem:[#allocation22 + $0x4a8] sm:$0xff]
    %v4693 = vld [vmem:[#allocation22 + $0x4b0] sm:$0xff]
    %v4694 = vld [vmem:[#allocation22 + $0x4b8] sm:$0xff]
    %v4695 = vld [vmem:[#allocation22 + $0x4c0] sm:$0xff]
    %v4696 = vld [vmem:[#allocation22 + $0x4c8] sm:$0xff]
    %v4697 = vld [vmem:[#allocation22 + $0x4d0] sm:$0xff]
    %v4698 = vld [vmem:[#allocation22 + $0x4d8] sm:$0xff]
    %v4699 = vld [vmem:[#allocation22 + $0x4e0] sm:$0xff]
    %v4700 = vld [vmem:[#allocation22 + $0x4e8] sm:$0xff]
    %v4701 = vld [vmem:[#allocation22 + $0x4f0] sm:$0xff]
    %v4702 = vld [vmem:[#allocation22 + $0x4f8] sm:$0xff]
    %v4703 = vld [vmem:[#allocation22 + $0x500] sm:$0xff]
    %v4704 = vld [vmem:[#allocation22 + $0x508] sm:$0xff]
    %v4705 = vld [vmem:[#allocation22 + $0x510] sm:$0xff]
    %v4706 = vld [vmem:[#allocation22 + $0x518] sm:$0xff]
    %v4707 = vld [vmem:[#allocation22 + $0x520] sm:$0xff]
    %v4708 = vld [vmem:[#allocation22 + $0x528] sm:$0xff]
    %v4709 = vld [vmem:[#allocation22 + $0x530] sm:$0xff]
    %v4710 = vld [vmem:[#allocation22 + $0x538] sm:$0xff]
    %v4711 = vld [vmem:[#allocation22 + $0x540] sm:$0xff]
    %v4712 = vld [vmem:[#allocation22 + $0x548] sm:$0xff]
    %v4713 = vld [vmem:[#allocation22 + $0x550] sm:$0xff]
    %v4714 = vld [vmem:[#allocation22 + $0x558] sm:$0xff]
    %v4715 = vld [vmem:[#allocation22 + $0x560] sm:$0xff]
    %v4716 = vld [vmem:[#allocation22 + $0x568] sm:$0xff]
    %v4717 = vld [vmem:[#allocation22 + $0x570] sm:$0xff]
    %v4718 = vld [vmem:[#allocation22 + $0x578] sm:$0xff]
    %v4719 = vld [vmem:[#allocation22 + $0x580] sm:$0xff]
    %v4720 = vld [vmem:[#allocation22 + $0x588] sm:$0xff]
    %v4721 = vld [vmem:[#allocation22 + $0x590] sm:$0xff]
    %v4722 = vld [vmem:[#allocation22 + $0x598] sm:$0xff]
    %v4723 = vld [vmem:[#allocation22 + $0x5a0] sm:$0xff]
    %v4724 = vld [vmem:[#allocation22 + $0x5a8] sm:$0xff]
    %v4725 = vld [vmem:[#allocation22 + $0x5b0] sm:$0xff]
    %v4726 = vld [vmem:[#allocation22 + $0x5b8] sm:$0xff]
    %v4727 = vld [vmem:[#allocation22 + $0x5c0] sm:$0xff]
    %v4728 = vld [vmem:[#allocation22 + $0x5c8] sm:$0xff]
    %v4729 = vld [vmem:[#allocation22 + $0x5d0] sm:$0xff]
    %v4730 = vld [vmem:[#allocation22 + $0x5d8] sm:$0xff]
    %v4731 = vld [vmem:[#allocation22 + $0x5e0] sm:$0xff]
    %v4732 = vld [vmem:[#allocation22 + $0x5e8] sm:$0xff]
    %v4733 = vld [vmem:[#allocation22 + $0x5f0] sm:$0xff]
    %v4734 = vld [vmem:[#allocation22 + $0x5f8] sm:$0xff]
    %v4735 = vld [vmem:[#allocation22 + $0x600] sm:$0xff]
    %v4736 = vld [vmem:[#allocation22 + $0x608] sm:$0xff]
    %v4737 = vld [vmem:[#allocation22 + $0x610] sm:$0xff]
    %v4738 = vld [vmem:[#allocation22 + $0x618] sm:$0xff]
    %v4739 = vld [vmem:[#allocation22 + $0x620] sm:$0xff]
    %v4740 = vld [vmem:[#allocation22 + $0x628] sm:$0xff]
    %v4741 = vld [vmem:[#allocation22 + $0x630] sm:$0xff]
    %v4742 = vld [vmem:[#allocation22 + $0x638] sm:$0xff]
    %v4743 = vld [vmem:[#allocation22 + $0x640] sm:$0xff]
    %v4744 = vld [vmem:[#allocation22 + $0x648] sm:$0xff]
    %v4745 = vld [vmem:[#allocation22 + $0x650] sm:$0xff]
    %v4746 = vld [vmem:[#allocation22 + $0x658] sm:$0xff]
    %v4747 = vld [vmem:[#allocation22 + $0x660] sm:$0xff]
    %v4748 = vld [vmem:[#allocation22 + $0x668] sm:$0xff]
    %v4749 = vld [vmem:[#allocation22 + $0x670] sm:$0xff]
    %v4750 = vld [vmem:[#allocation22 + $0x678] sm:$0xff]
    %v4751 = vld [vmem:[#allocation22 + $0x680] sm:$0xff]
    %v4752 = vld [vmem:[#allocation22 + $0x688] sm:$0xff]
    %v4753 = vld [vmem:[#allocation22 + $0x690] sm:$0xff]
    %v4754 = vld [vmem:[#allocation22 + $0x698] sm:$0xff]
    %v4755 = vld [vmem:[#allocation22 + $0x6a0] sm:$0xff]
    %v4756 = vld [vmem:[#allocation22 + $0x6a8] sm:$0xff]
    %v4757 = vld [vmem:[#allocation22 + $0x6b0] sm:$0xff]
    %v4758 = vld [vmem:[#allocation22 + $0x6b8] sm:$0xff]
    %v4759 = vld [vmem:[#allocation22 + $0x6c0] sm:$0xff]
    %v4760 = vld [vmem:[#allocation22 + $0x6c8] sm:$0xff]
    %v4761 = vld [vmem:[#allocation22 + $0x6d0] sm:$0xff]
    %v4762 = vld [vmem:[#allocation22 + $0x6d8] sm:$0xff]
    %v4763 = vld [vmem:[#allocation22 + $0x6e0] sm:$0xff]
    %v4764 = vld [vmem:[#allocation22 + $0x6e8] sm:$0xff]
    %v4765 = vld [vmem:[#allocation22 + $0x6f0] sm:$0xff]
    %v4766 = vld [vmem:[#allocation22 + $0x6f8] sm:$0xff]
    %v4767 = vld [vmem:[#allocation22 + $0x700] sm:$0xff]
    %v4768 = vld [vmem:[#allocation22 + $0x708] sm:$0xff]
    %v4769 = vld [vmem:[#allocation22 + $0x710] sm:$0xff]
    %v4770 = vld [vmem:[#allocation22 + $0x718] sm:$0xff]
    %v4771 = vld [vmem:[#allocation22 + $0x720] sm:$0xff]
    %v4772 = vld [vmem:[#allocation22 + $0x728] sm:$0xff]
    %v4773 = vld [vmem:[#allocation22 + $0x730] sm:$0xff]
    %v4774 = vld [vmem:[#allocation22 + $0x738] sm:$0xff]
    %v4775 = vld [vmem:[#allocation22 + $0x740] sm:$0xff]
    %v4776 = vld [vmem:[#allocation22 + $0x748] sm:$0xff]
    %v4777 = vld [vmem:[#allocation22 + $0x750] sm:$0xff]
    %v4778 = vld [vmem:[#allocation22 + $0x758] sm:$0xff]
    %v4779 = vld [vmem:[#allocation22 + $0x760] sm:$0xff]
    %v4780 = vld [vmem:[#allocation22 + $0x768] sm:$0xff]
    %v4781 = vld [vmem:[#allocation22 + $0x770] sm:$0xff]
    %v4782 = vld [vmem:[#allocation22 + $0x778] sm:$0xff]
    %v4783 = vld [vmem:[#allocation22 + $0x780] sm:$0xff]
    %v4784 = vld [vmem:[#allocation22 + $0x788] sm:$0xff]
    %v4785 = vld [vmem:[#allocation22 + $0x790] sm:$0xff]
    %v4786 = vld [vmem:[#allocation22 + $0x798] sm:$0xff]
    %v4787 = vld [vmem:[#allocation22 + $0x7a0] sm:$0xff]
    %v4788 = vld [vmem:[#allocation22 + $0x7a8] sm:$0xff]
    %v4789 = vld [vmem:[#allocation22 + $0x7b0] sm:$0xff]
    %v4790 = vld [vmem:[#allocation22 + $0x7b8] sm:$0xff]
    %v4791 = vld [vmem:[#allocation22 + $0x7c0] sm:$0xff]
    %v4792 = vld [vmem:[#allocation22 + $0x7c8] sm:$0xff]
    %v4793 = vld [vmem:[#allocation22 + $0x7d0] sm:$0xff]
    %v4794 = vld [vmem:[#allocation22 + $0x7d8] sm:$0xff]
    %v4795 = vld [vmem:[#allocation22 + $0x7e0] sm:$0xff]
    %v4796 = vld [vmem:[#allocation22 + $0x7e8] sm:$0xff]
    %v4797 = vld [vmem:[#allocation22 + $0x7f0] sm:$0xff]
    %v4798 = vld [vmem:[#allocation22 + $0x7f8] sm:$0xff]
    %v4799 = vld [vmem:[%s14] sm:$0xff]
    %v4800 = vpack.c.bf16 %v4539, %v4539
    %v4801 = vpack.c.bf16 %v4540, %v4540
    %v4802 = vpack.c.bf16 %v4541, %v4541
    %v4803 = vpack.c.bf16 %v4542, %v4542
    %v4805 = vperm.slane %v4799, 0
    %v4806 = vperm.slane %v4799, 1
    %v4807 = vperm.slane %v4799, 2
    %v4808 = vperm.slane %v4799, 3
    %v4809 = vperm.slane %v4799, 4
    %v4810 = vperm.slane %v4799, 5
    %v4811 = vperm.slane %v4799, 6
    %v4812 = vperm.slane %v4799, 7
    %v5077 = vunpack.c.l.b16 %v4543
    %v5078 = vunpack.c.h.b16 %v4543
    %v5079 = vunpack.c.l.b16 %v4544
    %v5080 = vunpack.c.h.b16 %v4544
    %v5081 = vunpack.c.l.b16 %v4545
    %v5082 = vunpack.c.h.b16 %v4545
    %v5083 = vunpack.c.l.b16 %v4546
    %v5084 = vunpack.c.h.b16 %v4546
    %v5085 = vunpack.c.l.b16 %v4547
    %v5086 = vunpack.c.h.b16 %v4547
    %v5087 = vunpack.c.l.b16 %v4548
    %v5088 = vunpack.c.h.b16 %v4548
    %v5089 = vunpack.c.l.b16 %v4549
    %v5090 = vunpack.c.h.b16 %v4549
    %v5091 = vunpack.c.l.b16 %v4550
    %v5092 = vunpack.c.h.b16 %v4550
    %v5093 = vunpack.c.l.b16 %v4551
    %v5094 = vunpack.c.h.b16 %v4551
    %v5095 = vunpack.c.l.b16 %v4552
    %v5096 = vunpack.c.h.b16 %v4552
    %v5097 = vunpack.c.l.b16 %v4553
    %v5098 = vunpack.c.h.b16 %v4553
    %v5099 = vunpack.c.l.b16 %v4554
    %v5100 = vunpack.c.h.b16 %v4554
    %v5101 = vunpack.c.l.b16 %v4555
    %v5102 = vunpack.c.h.b16 %v4555
    %v5103 = vunpack.c.l.b16 %v4556
    %v5104 = vunpack.c.h.b16 %v4556
    %v5105 = vunpack.c.l.b16 %v4557
    %v5106 = vunpack.c.h.b16 %v4557
    %v5107 = vunpack.c.l.b16 %v4558
    %v5108 = vunpack.c.h.b16 %v4558
    %v5109 = vunpack.c.l.b16 %v4559
    %v5110 = vunpack.c.h.b16 %v4559
    %v5111 = vunpack.c.l.b16 %v4560
    %v5112 = vunpack.c.h.b16 %v4560
    %v5113 = vunpack.c.l.b16 %v4561
    %v5114 = vunpack.c.h.b16 %v4561
    %v5115 = vunpack.c.l.b16 %v4562
    %v5116 = vunpack.c.h.b16 %v4562
    %v5117 = vunpack.c.l.b16 %v4563
    %v5118 = vunpack.c.h.b16 %v4563
    %v5119 = vunpack.c.l.b16 %v4564
    %v5120 = vunpack.c.h.b16 %v4564
    %v5121 = vunpack.c.l.b16 %v4565
    %v5122 = vunpack.c.h.b16 %v4565
    %v5123 = vunpack.c.l.b16 %v4566
    %v5124 = vunpack.c.h.b16 %v4566
    %v5125 = vunpack.c.l.b16 %v4567
    %v5126 = vunpack.c.h.b16 %v4567
    %v5127 = vunpack.c.l.b16 %v4568
    %v5128 = vunpack.c.h.b16 %v4568
    %v5129 = vunpack.c.l.b16 %v4569
    %v5130 = vunpack.c.h.b16 %v4569
    %v5131 = vunpack.c.l.b16 %v4570
    %v5132 = vunpack.c.h.b16 %v4570
    %v5133 = vunpack.c.l.b16 %v4571
    %v5134 = vunpack.c.h.b16 %v4571
    %v5135 = vunpack.c.l.b16 %v4572
    %v5136 = vunpack.c.h.b16 %v4572
    %v5137 = vunpack.c.l.b16 %v4573
    %v5138 = vunpack.c.h.b16 %v4573
    %v5139 = vunpack.c.l.b16 %v4574
    %v5140 = vunpack.c.h.b16 %v4574
    %v5141 = vunpack.c.l.b16 %v4575
    %v5142 = vunpack.c.h.b16 %v4575
    %v5143 = vunpack.c.l.b16 %v4576
    %v5144 = vunpack.c.h.b16 %v4576
    %v5145 = vunpack.c.l.b16 %v4577
    %v5146 = vunpack.c.h.b16 %v4577
    %v5147 = vunpack.c.l.b16 %v4578
    %v5148 = vunpack.c.h.b16 %v4578
    %v5149 = vunpack.c.l.b16 %v4579
    %v5150 = vunpack.c.h.b16 %v4579
    %v5151 = vunpack.c.l.b16 %v4580
    %v5152 = vunpack.c.h.b16 %v4580
    %v5153 = vunpack.c.l.b16 %v4581
    %v5154 = vunpack.c.h.b16 %v4581
    %v5155 = vunpack.c.l.b16 %v4582
    %v5156 = vunpack.c.h.b16 %v4582
    %v5157 = vunpack.c.l.b16 %v4583
    %v5158 = vunpack.c.h.b16 %v4583
    %v5159 = vunpack.c.l.b16 %v4584
    %v5160 = vunpack.c.h.b16 %v4584
    %v5161 = vunpack.c.l.b16 %v4585
    %v5162 = vunpack.c.h.b16 %v4585
    %v5163 = vunpack.c.l.b16 %v4586
    %v5164 = vunpack.c.h.b16 %v4586
    %v5165 = vunpack.c.l.b16 %v4587
    %v5166 = vunpack.c.h.b16 %v4587
    %v5167 = vunpack.c.l.b16 %v4588
    %v5168 = vunpack.c.h.b16 %v4588
    %v5169 = vunpack.c.l.b16 %v4589
    %v5170 = vunpack.c.h.b16 %v4589
    %v5171 = vunpack.c.l.b16 %v4590
    %v5172 = vunpack.c.h.b16 %v4590
    %v5173 = vunpack.c.l.b16 %v4591
    %v5174 = vunpack.c.h.b16 %v4591
    %v5175 = vunpack.c.l.b16 %v4592
    %v5176 = vunpack.c.h.b16 %v4592
    %v5177 = vunpack.c.l.b16 %v4593
    %v5178 = vunpack.c.h.b16 %v4593
    %v5179 = vunpack.c.l.b16 %v4594
    %v5180 = vunpack.c.h.b16 %v4594
    %v5181 = vunpack.c.l.b16 %v4595
    %v5182 = vunpack.c.h.b16 %v4595
    %v5183 = vunpack.c.l.b16 %v4596
    %v5184 = vunpack.c.h.b16 %v4596
    %v5185 = vunpack.c.l.b16 %v4597
    %v5186 = vunpack.c.h.b16 %v4597
    %v5187 = vunpack.c.l.b16 %v4598
    %v5188 = vunpack.c.h.b16 %v4598
    %v5189 = vunpack.c.l.b16 %v4599
    %v5190 = vunpack.c.h.b16 %v4599
    %v5191 = vunpack.c.l.b16 %v4600
    %v5192 = vunpack.c.h.b16 %v4600
    %v5193 = vunpack.c.l.b16 %v4601
    %v5194 = vunpack.c.h.b16 %v4601
    %v5195 = vunpack.c.l.b16 %v4602
    %v5196 = vunpack.c.h.b16 %v4602
    %v5197 = vunpack.c.l.b16 %v4603
    %v5198 = vunpack.c.h.b16 %v4603
    %v5199 = vunpack.c.l.b16 %v4604
    %v5200 = vunpack.c.h.b16 %v4604
    %v5201 = vunpack.c.l.b16 %v4605
    %v5202 = vunpack.c.h.b16 %v4605
    %v5203 = vunpack.c.l.b16 %v4606
    %v5204 = vunpack.c.h.b16 %v4606
    %v5205 = vunpack.c.l.b16 %v4607
    %v5206 = vunpack.c.h.b16 %v4607
    %v5207 = vunpack.c.l.b16 %v4608
    %v5208 = vunpack.c.h.b16 %v4608
    %v5209 = vunpack.c.l.b16 %v4609
    %v5210 = vunpack.c.h.b16 %v4609
    %v5211 = vunpack.c.l.b16 %v4610
    %v5212 = vunpack.c.h.b16 %v4610
    %v5213 = vunpack.c.l.b16 %v4611
    %v5214 = vunpack.c.h.b16 %v4611
    %v5215 = vunpack.c.l.b16 %v4612
    %v5216 = vunpack.c.h.b16 %v4612
    %v5217 = vunpack.c.l.b16 %v4613
    %v5218 = vunpack.c.h.b16 %v4613
    %v5219 = vunpack.c.l.b16 %v4614
    %v5220 = vunpack.c.h.b16 %v4614
    %v5221 = vunpack.c.l.b16 %v4615
    %v5222 = vunpack.c.h.b16 %v4615
    %v5223 = vunpack.c.l.b16 %v4616
    %v5224 = vunpack.c.h.b16 %v4616
    %v5225 = vunpack.c.l.b16 %v4617
    %v5226 = vunpack.c.h.b16 %v4617
    %v5227 = vunpack.c.l.b16 %v4618
    %v5228 = vunpack.c.h.b16 %v4618
    %v5229 = vunpack.c.l.b16 %v4619
    %v5230 = vunpack.c.h.b16 %v4619
    %v5231 = vunpack.c.l.b16 %v4620
    %v5232 = vunpack.c.h.b16 %v4620
    %v5233 = vunpack.c.l.b16 %v4621
    %v5234 = vunpack.c.h.b16 %v4621
    %v5235 = vunpack.c.l.b16 %v4622
    %v5236 = vunpack.c.h.b16 %v4622
    %v5237 = vunpack.c.l.b16 %v4623
    %v5238 = vunpack.c.h.b16 %v4623
    %v5239 = vunpack.c.l.b16 %v4624
    %v5240 = vunpack.c.h.b16 %v4624
    %v5241 = vunpack.c.l.b16 %v4625
    %v5242 = vunpack.c.h.b16 %v4625
    %v5243 = vunpack.c.l.b16 %v4626
    %v5244 = vunpack.c.h.b16 %v4626
    %v5245 = vunpack.c.l.b16 %v4627
    %v5246 = vunpack.c.h.b16 %v4627
    %v5247 = vunpack.c.l.b16 %v4628
    %v5248 = vunpack.c.h.b16 %v4628
    %v5249 = vunpack.c.l.b16 %v4629
    %v5250 = vunpack.c.h.b16 %v4629
    %v5251 = vunpack.c.l.b16 %v4630
    %v5252 = vunpack.c.h.b16 %v4630
    %v5253 = vunpack.c.l.b16 %v4631
    %v5254 = vunpack.c.h.b16 %v4631
    %v5255 = vunpack.c.l.b16 %v4632
    %v5256 = vunpack.c.h.b16 %v4632
    %v5257 = vunpack.c.l.b16 %v4633
    %v5258 = vunpack.c.h.b16 %v4633
    %v5259 = vunpack.c.l.b16 %v4634
    %v5260 = vunpack.c.h.b16 %v4634
    %v5261 = vunpack.c.l.b16 %v4635
    %v5262 = vunpack.c.h.b16 %v4635
    %v5263 = vunpack.c.l.b16 %v4636
    %v5264 = vunpack.c.h.b16 %v4636
    %v5265 = vunpack.c.l.b16 %v4637
    %v5266 = vunpack.c.h.b16 %v4637
    %v5267 = vunpack.c.l.b16 %v4638
    %v5268 = vunpack.c.h.b16 %v4638
    %v5269 = vunpack.c.l.b16 %v4639
    %v5270 = vunpack.c.h.b16 %v4639
    %v5271 = vunpack.c.l.b16 %v4640
    %v5272 = vunpack.c.h.b16 %v4640
    %v5273 = vunpack.c.l.b16 %v4641
    %v5274 = vunpack.c.h.b16 %v4641
    %v5275 = vunpack.c.l.b16 %v4642
    %v5276 = vunpack.c.h.b16 %v4642
    %v5277 = vunpack.c.l.b16 %v4643
    %v5278 = vunpack.c.h.b16 %v4643
    %v5279 = vunpack.c.l.b16 %v4644
    %v5280 = vunpack.c.h.b16 %v4644
    %v5281 = vunpack.c.l.b16 %v4645
    %v5282 = vunpack.c.h.b16 %v4645
    %v5283 = vunpack.c.l.b16 %v4646
    %v5284 = vunpack.c.h.b16 %v4646
    %v5285 = vunpack.c.l.b16 %v4647
    %v5286 = vunpack.c.h.b16 %v4647
    %v5287 = vunpack.c.l.b16 %v4648
    %v5288 = vunpack.c.h.b16 %v4648
    %v5289 = vunpack.c.l.b16 %v4649
    %v5290 = vunpack.c.h.b16 %v4649
    %v5291 = vunpack.c.l.b16 %v4650
    %v5292 = vunpack.c.h.b16 %v4650
    %v5293 = vunpack.c.l.b16 %v4651
    %v5294 = vunpack.c.h.b16 %v4651
    %v5295 = vunpack.c.l.b16 %v4652
    %v5296 = vunpack.c.h.b16 %v4652
    %v5297 = vunpack.c.l.b16 %v4653
    %v5298 = vunpack.c.h.b16 %v4653
    %v5299 = vunpack.c.l.b16 %v4654
    %v5300 = vunpack.c.h.b16 %v4654
    %v5301 = vunpack.c.l.b16 %v4655
    %v5302 = vunpack.c.h.b16 %v4655
    %v5303 = vunpack.c.l.b16 %v4656
    %v5304 = vunpack.c.h.b16 %v4656
    %v5305 = vunpack.c.l.b16 %v4657
    %v5306 = vunpack.c.h.b16 %v4657
    %v5307 = vunpack.c.l.b16 %v4658
    %v5308 = vunpack.c.h.b16 %v4658
    %v5309 = vunpack.c.l.b16 %v4659
    %v5310 = vunpack.c.h.b16 %v4659
    %v5311 = vunpack.c.l.b16 %v4660
    %v5312 = vunpack.c.h.b16 %v4660
    %v5313 = vunpack.c.l.b16 %v4661
    %v5314 = vunpack.c.h.b16 %v4661
    %v5315 = vunpack.c.l.b16 %v4662
    %v5316 = vunpack.c.h.b16 %v4662
    %v5317 = vunpack.c.l.b16 %v4663
    %v5318 = vunpack.c.h.b16 %v4663
    %v5319 = vunpack.c.l.b16 %v4664
    %v5320 = vunpack.c.h.b16 %v4664
    %v5321 = vunpack.c.l.b16 %v4665
    %v5322 = vunpack.c.h.b16 %v4665
    %v5323 = vunpack.c.l.b16 %v4666
    %v5324 = vunpack.c.h.b16 %v4666
    %v5325 = vunpack.c.l.b16 %v4667
    %v5326 = vunpack.c.h.b16 %v4667
    %v5327 = vunpack.c.l.b16 %v4668
    %v5328 = vunpack.c.h.b16 %v4668
    %v5329 = vunpack.c.l.b16 %v4669
    %v5330 = vunpack.c.h.b16 %v4669
    %v5331 = vunpack.c.l.b16 %v4670
    %v5332 = vunpack.c.h.b16 %v4670
    %v5333 = vunpack.c.l.b16 %v4671
    %v5334 = vunpack.c.h.b16 %v4671
    %v5335 = vunpack.c.l.b16 %v4672
    %v5336 = vunpack.c.h.b16 %v4672
    %v5337 = vunpack.c.l.b16 %v4673
    %v5338 = vunpack.c.h.b16 %v4673
    %v5339 = vunpack.c.l.b16 %v4674
    %v5340 = vunpack.c.h.b16 %v4674
    %v5341 = vunpack.c.l.b16 %v4675
    %v5342 = vunpack.c.h.b16 %v4675
    %v5343 = vunpack.c.l.b16 %v4676
    %v5344 = vunpack.c.h.b16 %v4676
    %v5345 = vunpack.c.l.b16 %v4677
    %v5346 = vunpack.c.h.b16 %v4677
    %v5347 = vunpack.c.l.b16 %v4678
    %v5348 = vunpack.c.h.b16 %v4678
    %v5349 = vunpack.c.l.b16 %v4679
    %v5350 = vunpack.c.h.b16 %v4679
    %v5351 = vunpack.c.l.b16 %v4680
    %v5352 = vunpack.c.h.b16 %v4680
    %v5353 = vunpack.c.l.b16 %v4681
    %v5354 = vunpack.c.h.b16 %v4681
    %v5355 = vunpack.c.l.b16 %v4682
    %v5356 = vunpack.c.h.b16 %v4682
    %v5357 = vunpack.c.l.b16 %v4683
    %v5358 = vunpack.c.h.b16 %v4683
    %v5359 = vunpack.c.l.b16 %v4684
    %v5360 = vunpack.c.h.b16 %v4684
    %v5361 = vunpack.c.l.b16 %v4685
    %v5362 = vunpack.c.h.b16 %v4685
    %v5363 = vunpack.c.l.b16 %v4686
    %v5364 = vunpack.c.h.b16 %v4686
    %v5365 = vunpack.c.l.b16 %v4687
    %v5366 = vunpack.c.h.b16 %v4687
    %v5367 = vunpack.c.l.b16 %v4688
    %v5368 = vunpack.c.h.b16 %v4688
    %v5369 = vunpack.c.l.b16 %v4689
    %v5370 = vunpack.c.h.b16 %v4689
    %v5371 = vunpack.c.l.b16 %v4690
    %v5372 = vunpack.c.h.b16 %v4690
    %v5373 = vunpack.c.l.b16 %v4691
    %v5374 = vunpack.c.h.b16 %v4691
    %v5375 = vunpack.c.l.b16 %v4692
    %v5376 = vunpack.c.h.b16 %v4692
    %v5377 = vunpack.c.l.b16 %v4693
    %v5378 = vunpack.c.h.b16 %v4693
    %v5379 = vunpack.c.l.b16 %v4694
    %v5380 = vunpack.c.h.b16 %v4694
    %v5381 = vunpack.c.l.b16 %v4695
    %v5382 = vunpack.c.h.b16 %v4695
    %v5383 = vunpack.c.l.b16 %v4696
    %v5384 = vunpack.c.h.b16 %v4696
    %v5385 = vunpack.c.l.b16 %v4697
    %v5386 = vunpack.c.h.b16 %v4697
    %v5387 = vunpack.c.l.b16 %v4698
    %v5388 = vunpack.c.h.b16 %v4698
    %v5389 = vunpack.c.l.b16 %v4699
    %v5390 = vunpack.c.h.b16 %v4699
    %v5391 = vunpack.c.l.b16 %v4700
    %v5392 = vunpack.c.h.b16 %v4700
    %v5393 = vunpack.c.l.b16 %v4701
    %v5394 = vunpack.c.h.b16 %v4701
    %v5395 = vunpack.c.l.b16 %v4702
    %v5396 = vunpack.c.h.b16 %v4702
    %v5397 = vunpack.c.l.b16 %v4703
    %v5398 = vunpack.c.h.b16 %v4703
    %v5399 = vunpack.c.l.b16 %v4704
    %v5400 = vunpack.c.h.b16 %v4704
    %v5401 = vunpack.c.l.b16 %v4705
    %v5402 = vunpack.c.h.b16 %v4705
    %v5403 = vunpack.c.l.b16 %v4706
    %v5404 = vunpack.c.h.b16 %v4706
    %v5405 = vunpack.c.l.b16 %v4707
    %v5406 = vunpack.c.h.b16 %v4707
    %v5407 = vunpack.c.l.b16 %v4708
    %v5408 = vunpack.c.h.b16 %v4708
    %v5409 = vunpack.c.l.b16 %v4709
    %v5410 = vunpack.c.h.b16 %v4709
    %v5411 = vunpack.c.l.b16 %v4710
    %v5412 = vunpack.c.h.b16 %v4710
    %v5413 = vunpack.c.l.b16 %v4711
    %v5414 = vunpack.c.h.b16 %v4711
    %v5415 = vunpack.c.l.b16 %v4712
    %v5416 = vunpack.c.h.b16 %v4712
    %v5417 = vunpack.c.l.b16 %v4713
    %v5418 = vunpack.c.h.b16 %v4713
    %v5419 = vunpack.c.l.b16 %v4714
    %v5420 = vunpack.c.h.b16 %v4714
    %v5421 = vunpack.c.l.b16 %v4715
    %v5422 = vunpack.c.h.b16 %v4715
    %v5423 = vunpack.c.l.b16 %v4716
    %v5424 = vunpack.c.h.b16 %v4716
    %v5425 = vunpack.c.l.b16 %v4717
    %v5426 = vunpack.c.h.b16 %v4717
    %v5427 = vunpack.c.l.b16 %v4718
    %v5428 = vunpack.c.h.b16 %v4718
    %v5429 = vunpack.c.l.b16 %v4719
    %v5430 = vunpack.c.h.b16 %v4719
    %v5431 = vunpack.c.l.b16 %v4720
    %v5432 = vunpack.c.h.b16 %v4720
    %v5433 = vunpack.c.l.b16 %v4721
    %v5434 = vunpack.c.h.b16 %v4721
    %v5435 = vunpack.c.l.b16 %v4722
    %v5436 = vunpack.c.h.b16 %v4722
    %v5437 = vunpack.c.l.b16 %v4723
    %v5438 = vunpack.c.h.b16 %v4723
    %v5439 = vunpack.c.l.b16 %v4724
    %v5440 = vunpack.c.h.b16 %v4724
    %v5441 = vunpack.c.l.b16 %v4725
    %v5442 = vunpack.c.h.b16 %v4725
    %v5443 = vunpack.c.l.b16 %v4726
    %v5444 = vunpack.c.h.b16 %v4726
    %v5445 = vunpack.c.l.b16 %v4727
    %v5446 = vunpack.c.h.b16 %v4727
    %v5447 = vunpack.c.l.b16 %v4728
    %v5448 = vunpack.c.h.b16 %v4728
    %v5449 = vunpack.c.l.b16 %v4729
    %v5450 = vunpack.c.h.b16 %v4729
    %v5451 = vunpack.c.l.b16 %v4730
    %v5452 = vunpack.c.h.b16 %v4730
    %v5453 = vunpack.c.l.b16 %v4731
    %v5454 = vunpack.c.h.b16 %v4731
    %v5455 = vunpack.c.l.b16 %v4732
    %v5456 = vunpack.c.h.b16 %v4732
    %v5457 = vunpack.c.l.b16 %v4733
    %v5458 = vunpack.c.h.b16 %v4733
    %v5459 = vunpack.c.l.b16 %v4734
    %v5460 = vunpack.c.h.b16 %v4734
    %v5461 = vunpack.c.l.b16 %v4735
    %v5462 = vunpack.c.h.b16 %v4735
    %v5463 = vunpack.c.l.b16 %v4736
    %v5464 = vunpack.c.h.b16 %v4736
    %v5465 = vunpack.c.l.b16 %v4737
    %v5466 = vunpack.c.h.b16 %v4737
    %v5467 = vunpack.c.l.b16 %v4738
    %v5468 = vunpack.c.h.b16 %v4738
    %v5469 = vunpack.c.l.b16 %v4739
    %v5470 = vunpack.c.h.b16 %v4739
    %v5471 = vunpack.c.l.b16 %v4740
    %v5472 = vunpack.c.h.b16 %v4740
    %v5473 = vunpack.c.l.b16 %v4741
    %v5474 = vunpack.c.h.b16 %v4741
    %v5475 = vunpack.c.l.b16 %v4742
    %v5476 = vunpack.c.h.b16 %v4742
    %v5477 = vunpack.c.l.b16 %v4743
    %v5478 = vunpack.c.h.b16 %v4743
    %v5479 = vunpack.c.l.b16 %v4744
    %v5480 = vunpack.c.h.b16 %v4744
    %v5481 = vunpack.c.l.b16 %v4745
    %v5482 = vunpack.c.h.b16 %v4745
    %v5483 = vunpack.c.l.b16 %v4746
    %v5484 = vunpack.c.h.b16 %v4746
    %v5485 = vunpack.c.l.b16 %v4747
    %v5486 = vunpack.c.h.b16 %v4747
    %v5487 = vunpack.c.l.b16 %v4748
    %v5488 = vunpack.c.h.b16 %v4748
    %v5489 = vunpack.c.l.b16 %v4749
    %v5490 = vunpack.c.h.b16 %v4749
    %v5491 = vunpack.c.l.b16 %v4750
    %v5492 = vunpack.c.h.b16 %v4750
    %v5493 = vunpack.c.l.b16 %v4751
    %v5494 = vunpack.c.h.b16 %v4751
    %v5495 = vunpack.c.l.b16 %v4752
    %v5496 = vunpack.c.h.b16 %v4752
    %v5497 = vunpack.c.l.b16 %v4753
    %v5498 = vunpack.c.h.b16 %v4753
    %v5499 = vunpack.c.l.b16 %v4754
    %v5500 = vunpack.c.h.b16 %v4754
    %v5501 = vunpack.c.l.b16 %v4755
    %v5502 = vunpack.c.h.b16 %v4755
    %v5503 = vunpack.c.l.b16 %v4756
    %v5504 = vunpack.c.h.b16 %v4756
    %v5505 = vunpack.c.l.b16 %v4757
    %v5506 = vunpack.c.h.b16 %v4757
    %v5507 = vunpack.c.l.b16 %v4758
    %v5508 = vunpack.c.h.b16 %v4758
    %v5509 = vunpack.c.l.b16 %v4759
    %v5510 = vunpack.c.h.b16 %v4759
    %v5511 = vunpack.c.l.b16 %v4760
    %v5512 = vunpack.c.h.b16 %v4760
    %v5513 = vunpack.c.l.b16 %v4761
    %v5514 = vunpack.c.h.b16 %v4761
    %v5515 = vunpack.c.l.b16 %v4762
    %v5516 = vunpack.c.h.b16 %v4762
    %v5517 = vunpack.c.l.b16 %v4763
    %v5518 = vunpack.c.h.b16 %v4763
    %v5519 = vunpack.c.l.b16 %v4764
    %v5520 = vunpack.c.h.b16 %v4764
    %v5521 = vunpack.c.l.b16 %v4765
    %v5522 = vunpack.c.h.b16 %v4765
    %v5523 = vunpack.c.l.b16 %v4766
    %v5524 = vunpack.c.h.b16 %v4766
    %v5525 = vunpack.c.l.b16 %v4767
    %v5526 = vunpack.c.h.b16 %v4767
    %v5527 = vunpack.c.l.b16 %v4768
    %v5528 = vunpack.c.h.b16 %v4768
    %v5529 = vunpack.c.l.b16 %v4769
    %v5530 = vunpack.c.h.b16 %v4769
    %v5531 = vunpack.c.l.b16 %v4770
    %v5532 = vunpack.c.h.b16 %v4770
    %v5533 = vunpack.c.l.b16 %v4771
    %v5534 = vunpack.c.h.b16 %v4771
    %v5535 = vunpack.c.l.b16 %v4772
    %v5536 = vunpack.c.h.b16 %v4772
    %v5537 = vunpack.c.l.b16 %v4773
    %v5538 = vunpack.c.h.b16 %v4773
    %v5539 = vunpack.c.l.b16 %v4774
    %v5540 = vunpack.c.h.b16 %v4774
    %v5541 = vunpack.c.l.b16 %v4775
    %v5542 = vunpack.c.h.b16 %v4775
    %v5543 = vunpack.c.l.b16 %v4776
    %v5544 = vunpack.c.h.b16 %v4776
    %v5545 = vunpack.c.l.b16 %v4777
    %v5546 = vunpack.c.h.b16 %v4777
    %v5547 = vunpack.c.l.b16 %v4778
    %v5548 = vunpack.c.h.b16 %v4778
    %v5549 = vunpack.c.l.b16 %v4779
    %v5550 = vunpack.c.h.b16 %v4779
    %v5551 = vunpack.c.l.b16 %v4780
    %v5552 = vunpack.c.h.b16 %v4780
    %v5553 = vunpack.c.l.b16 %v4781
    %v5554 = vunpack.c.h.b16 %v4781
    %v5555 = vunpack.c.l.b16 %v4782
    %v5556 = vunpack.c.h.b16 %v4782
    %v5557 = vunpack.c.l.b16 %v4783
    %v5558 = vunpack.c.h.b16 %v4783
    %v5559 = vunpack.c.l.b16 %v4784
    %v5560 = vunpack.c.h.b16 %v4784
    %v5561 = vunpack.c.l.b16 %v4785
    %v5562 = vunpack.c.h.b16 %v4785
    %v5563 = vunpack.c.l.b16 %v4786
    %v5564 = vunpack.c.h.b16 %v4786
    %v5565 = vunpack.c.l.b16 %v4787
    %v5566 = vunpack.c.h.b16 %v4787
    %v5567 = vunpack.c.l.b16 %v4788
    %v5568 = vunpack.c.h.b16 %v4788
    %v5569 = vunpack.c.l.b16 %v4789
    %v5570 = vunpack.c.h.b16 %v4789
    %v5571 = vunpack.c.l.b16 %v4790
    %v5572 = vunpack.c.h.b16 %v4790
    %v5573 = vunpack.c.l.b16 %v4791
    %v5574 = vunpack.c.h.b16 %v4791
    %v5575 = vunpack.c.l.b16 %v4792
    %v5576 = vunpack.c.h.b16 %v4792
    %v5577 = vunpack.c.l.b16 %v4793
    %v5578 = vunpack.c.h.b16 %v4793
    %v5579 = vunpack.c.l.b16 %v4794
    %v5580 = vunpack.c.h.b16 %v4794
    %v5581 = vunpack.c.l.b16 %v4795
    %v5582 = vunpack.c.h.b16 %v4795
    %v5583 = vunpack.c.l.b16 %v4796
    %v5584 = vunpack.c.h.b16 %v4796
    %v5585 = vunpack.c.l.b16 %v4797
    %v5586 = vunpack.c.h.b16 %v4797
    %v5587 = vunpack.c.l.b16 %v4798
    %v5588 = vunpack.c.h.b16 %v4798
    %v5589 = vpack.c.b16 %v5085, %v5077
    %v5590 = vpack.c.b16 %v5086, %v5078
    %v5591 = vpack.c.b16 %v5087, %v5079
    %v5592 = vpack.c.b16 %v5088, %v5080
    %v5593 = vpack.c.b16 %v5089, %v5081
    %v5594 = vpack.c.b16 %v5090, %v5082
    %v5595 = vpack.c.b16 %v5091, %v5083
    %v5596 = vpack.c.b16 %v5092, %v5084
    %v5597 = vpack.c.b16 %v5101, %v5093
    %v5598 = vpack.c.b16 %v5102, %v5094
    %v5599 = vpack.c.b16 %v5103, %v5095
    %v5600 = vpack.c.b16 %v5104, %v5096
    %v5601 = vpack.c.b16 %v5105, %v5097
    %v5602 = vpack.c.b16 %v5106, %v5098
    %v5603 = vpack.c.b16 %v5107, %v5099
    %v5604 = vpack.c.b16 %v5108, %v5100
    %v5605 = vpack.c.b16 %v5117, %v5109
    %v5606 = vpack.c.b16 %v5118, %v5110
    %v5607 = vpack.c.b16 %v5119, %v5111
    %v5608 = vpack.c.b16 %v5120, %v5112
    %v5609 = vpack.c.b16 %v5121, %v5113
    %v5610 = vpack.c.b16 %v5122, %v5114
    %v5611 = vpack.c.b16 %v5123, %v5115
    %v5612 = vpack.c.b16 %v5124, %v5116
    %v5613 = vpack.c.b16 %v5133, %v5125
    %v5614 = vpack.c.b16 %v5134, %v5126
    %v5615 = vpack.c.b16 %v5135, %v5127
    %v5616 = vpack.c.b16 %v5136, %v5128
    %v5617 = vpack.c.b16 %v5137, %v5129
    %v5618 = vpack.c.b16 %v5138, %v5130
    %v5619 = vpack.c.b16 %v5139, %v5131
    %v5620 = vpack.c.b16 %v5140, %v5132
    %v5621 = vpack.c.b16 %v5149, %v5141
    %v5622 = vpack.c.b16 %v5150, %v5142
    %v5623 = vpack.c.b16 %v5151, %v5143
    %v5624 = vpack.c.b16 %v5152, %v5144
    %v5625 = vpack.c.b16 %v5153, %v5145
    %v5626 = vpack.c.b16 %v5154, %v5146
    %v5627 = vpack.c.b16 %v5155, %v5147
    %v5628 = vpack.c.b16 %v5156, %v5148
    %v5629 = vpack.c.b16 %v5165, %v5157
    %v5630 = vpack.c.b16 %v5166, %v5158
    %v5631 = vpack.c.b16 %v5167, %v5159
    %v5632 = vpack.c.b16 %v5168, %v5160
    %v5633 = vpack.c.b16 %v5169, %v5161
    %v5634 = vpack.c.b16 %v5170, %v5162
    %v5635 = vpack.c.b16 %v5171, %v5163
    %v5636 = vpack.c.b16 %v5172, %v5164
    %v5637 = vpack.c.b16 %v5181, %v5173
    %v5638 = vpack.c.b16 %v5182, %v5174
    %v5639 = vpack.c.b16 %v5183, %v5175
    %v5640 = vpack.c.b16 %v5184, %v5176
    %v5641 = vpack.c.b16 %v5185, %v5177
    %v5642 = vpack.c.b16 %v5186, %v5178
    %v5643 = vpack.c.b16 %v5187, %v5179
    %v5644 = vpack.c.b16 %v5188, %v5180
    %v5645 = vpack.c.b16 %v5197, %v5189
    %v5646 = vpack.c.b16 %v5198, %v5190
    %v5647 = vpack.c.b16 %v5199, %v5191
    %v5648 = vpack.c.b16 %v5200, %v5192
    %v5649 = vpack.c.b16 %v5201, %v5193
    %v5650 = vpack.c.b16 %v5202, %v5194
    %v5651 = vpack.c.b16 %v5203, %v5195
    %v5652 = vpack.c.b16 %v5204, %v5196
    %v5653 = vpack.c.b16 %v5213, %v5205
    %v5654 = vpack.c.b16 %v5214, %v5206
    %v5655 = vpack.c.b16 %v5215, %v5207
    %v5656 = vpack.c.b16 %v5216, %v5208
    %v5657 = vpack.c.b16 %v5217, %v5209
    %v5658 = vpack.c.b16 %v5218, %v5210
    %v5659 = vpack.c.b16 %v5219, %v5211
    %v5660 = vpack.c.b16 %v5220, %v5212
    %v5661 = vpack.c.b16 %v5229, %v5221
    %v5662 = vpack.c.b16 %v5230, %v5222
    %v5663 = vpack.c.b16 %v5231, %v5223
    %v5664 = vpack.c.b16 %v5232, %v5224
    %v5665 = vpack.c.b16 %v5233, %v5225
    %v5666 = vpack.c.b16 %v5234, %v5226
    %v5667 = vpack.c.b16 %v5235, %v5227
    %v5668 = vpack.c.b16 %v5236, %v5228
    %v5669 = vpack.c.b16 %v5245, %v5237
    %v5670 = vpack.c.b16 %v5246, %v5238
    %v5671 = vpack.c.b16 %v5247, %v5239
    %v5672 = vpack.c.b16 %v5248, %v5240
    %v5673 = vpack.c.b16 %v5249, %v5241
    %v5674 = vpack.c.b16 %v5250, %v5242
    %v5675 = vpack.c.b16 %v5251, %v5243
    %v5676 = vpack.c.b16 %v5252, %v5244
    %v5677 = vpack.c.b16 %v5261, %v5253
    %v5678 = vpack.c.b16 %v5262, %v5254
    %v5679 = vpack.c.b16 %v5263, %v5255
    %v5680 = vpack.c.b16 %v5264, %v5256
    %v5681 = vpack.c.b16 %v5265, %v5257
    %v5682 = vpack.c.b16 %v5266, %v5258
    %v5683 = vpack.c.b16 %v5267, %v5259
    %v5684 = vpack.c.b16 %v5268, %v5260
    %v5685 = vpack.c.b16 %v5277, %v5269
    %v5686 = vpack.c.b16 %v5278, %v5270
    %v5687 = vpack.c.b16 %v5279, %v5271
    %v5688 = vpack.c.b16 %v5280, %v5272
    %v5689 = vpack.c.b16 %v5281, %v5273
    %v5690 = vpack.c.b16 %v5282, %v5274
    %v5691 = vpack.c.b16 %v5283, %v5275
    %v5692 = vpack.c.b16 %v5284, %v5276
    %v5693 = vpack.c.b16 %v5293, %v5285
    %v5694 = vpack.c.b16 %v5294, %v5286
    %v5695 = vpack.c.b16 %v5295, %v5287
    %v5696 = vpack.c.b16 %v5296, %v5288
    %v5697 = vpack.c.b16 %v5297, %v5289
    %v5698 = vpack.c.b16 %v5298, %v5290
    %v5699 = vpack.c.b16 %v5299, %v5291
    %v5700 = vpack.c.b16 %v5300, %v5292
    %v5701 = vpack.c.b16 %v5309, %v5301
    %v5702 = vpack.c.b16 %v5310, %v5302
    %v5703 = vpack.c.b16 %v5311, %v5303
    %v5704 = vpack.c.b16 %v5312, %v5304
    %v5705 = vpack.c.b16 %v5313, %v5305
    %v5706 = vpack.c.b16 %v5314, %v5306
    %v5707 = vpack.c.b16 %v5315, %v5307
    %v5708 = vpack.c.b16 %v5316, %v5308
    %v5709 = vpack.c.b16 %v5325, %v5317
    %v5710 = vpack.c.b16 %v5326, %v5318
    %v5711 = vpack.c.b16 %v5327, %v5319
    %v5712 = vpack.c.b16 %v5328, %v5320
    %v5713 = vpack.c.b16 %v5329, %v5321
    %v5714 = vpack.c.b16 %v5330, %v5322
    %v5715 = vpack.c.b16 %v5331, %v5323
    %v5716 = vpack.c.b16 %v5332, %v5324
    %v5717 = vpack.c.b16 %v5341, %v5333
    %v5718 = vpack.c.b16 %v5342, %v5334
    %v5719 = vpack.c.b16 %v5343, %v5335
    %v5720 = vpack.c.b16 %v5344, %v5336
    %v5721 = vpack.c.b16 %v5345, %v5337
    %v5722 = vpack.c.b16 %v5346, %v5338
    %v5723 = vpack.c.b16 %v5347, %v5339
    %v5724 = vpack.c.b16 %v5348, %v5340
    %v5725 = vpack.c.b16 %v5357, %v5349
    %v5726 = vpack.c.b16 %v5358, %v5350
    %v5727 = vpack.c.b16 %v5359, %v5351
    %v5728 = vpack.c.b16 %v5360, %v5352
    %v5729 = vpack.c.b16 %v5361, %v5353
    %v5730 = vpack.c.b16 %v5362, %v5354
    %v5731 = vpack.c.b16 %v5363, %v5355
    %v5732 = vpack.c.b16 %v5364, %v5356
    %v5733 = vpack.c.b16 %v5373, %v5365
    %v5734 = vpack.c.b16 %v5374, %v5366
    %v5735 = vpack.c.b16 %v5375, %v5367
    %v5736 = vpack.c.b16 %v5376, %v5368
    %v5737 = vpack.c.b16 %v5377, %v5369
    %v5738 = vpack.c.b16 %v5378, %v5370
    %v5739 = vpack.c.b16 %v5379, %v5371
    %v5740 = vpack.c.b16 %v5380, %v5372
    %v5741 = vpack.c.b16 %v5389, %v5381
    %v5742 = vpack.c.b16 %v5390, %v5382
    %v5743 = vpack.c.b16 %v5391, %v5383
    %v5744 = vpack.c.b16 %v5392, %v5384
    %v5745 = vpack.c.b16 %v5393, %v5385
    %v5746 = vpack.c.b16 %v5394, %v5386
    %v5747 = vpack.c.b16 %v5395, %v5387
    %v5748 = vpack.c.b16 %v5396, %v5388
    %v5749 = vpack.c.b16 %v5405, %v5397
    %v5750 = vpack.c.b16 %v5406, %v5398
    %v5751 = vpack.c.b16 %v5407, %v5399
    %v5752 = vpack.c.b16 %v5408, %v5400
    %v5753 = vpack.c.b16 %v5409, %v5401
    %v5754 = vpack.c.b16 %v5410, %v5402
    %v5755 = vpack.c.b16 %v5411, %v5403
    %v5756 = vpack.c.b16 %v5412, %v5404
    %v5757 = vpack.c.b16 %v5421, %v5413
    %v5758 = vpack.c.b16 %v5422, %v5414
    %v5759 = vpack.c.b16 %v5423, %v5415
    %v5760 = vpack.c.b16 %v5424, %v5416
    %v5761 = vpack.c.b16 %v5425, %v5417
    %v5762 = vpack.c.b16 %v5426, %v5418
    %v5763 = vpack.c.b16 %v5427, %v5419
    %v5764 = vpack.c.b16 %v5428, %v5420
    %v5765 = vpack.c.b16 %v5437, %v5429
    %v5766 = vpack.c.b16 %v5438, %v5430
    %v5767 = vpack.c.b16 %v5439, %v5431
    %v5768 = vpack.c.b16 %v5440, %v5432
    %v5769 = vpack.c.b16 %v5441, %v5433
    %v5770 = vpack.c.b16 %v5442, %v5434
    %v5771 = vpack.c.b16 %v5443, %v5435
    %v5772 = vpack.c.b16 %v5444, %v5436
    %v5773 = vpack.c.b16 %v5453, %v5445
    %v5774 = vpack.c.b16 %v5454, %v5446
    %v5775 = vpack.c.b16 %v5455, %v5447
    %v5776 = vpack.c.b16 %v5456, %v5448
    %v5777 = vpack.c.b16 %v5457, %v5449
    %v5778 = vpack.c.b16 %v5458, %v5450
    %v5779 = vpack.c.b16 %v5459, %v5451
    %v5780 = vpack.c.b16 %v5460, %v5452
    %v5781 = vpack.c.b16 %v5469, %v5461
    %v5782 = vpack.c.b16 %v5470, %v5462
    %v5783 = vpack.c.b16 %v5471, %v5463
    %v5784 = vpack.c.b16 %v5472, %v5464
    %v5785 = vpack.c.b16 %v5473, %v5465
    %v5786 = vpack.c.b16 %v5474, %v5466
    %v5787 = vpack.c.b16 %v5475, %v5467
    %v5788 = vpack.c.b16 %v5476, %v5468
    %v5789 = vpack.c.b16 %v5485, %v5477
    %v5790 = vpack.c.b16 %v5486, %v5478
    %v5791 = vpack.c.b16 %v5487, %v5479
    %v5792 = vpack.c.b16 %v5488, %v5480
    %v5793 = vpack.c.b16 %v5489, %v5481
    %v5794 = vpack.c.b16 %v5490, %v5482
    %v5795 = vpack.c.b16 %v5491, %v5483
    %v5796 = vpack.c.b16 %v5492, %v5484
    %v5797 = vpack.c.b16 %v5501, %v5493
    %v5798 = vpack.c.b16 %v5502, %v5494
    %v5799 = vpack.c.b16 %v5503, %v5495
    %v5800 = vpack.c.b16 %v5504, %v5496
    %v5801 = vpack.c.b16 %v5505, %v5497
    %v5802 = vpack.c.b16 %v5506, %v5498
    %v5803 = vpack.c.b16 %v5507, %v5499
    %v5804 = vpack.c.b16 %v5508, %v5500
    %v5805 = vpack.c.b16 %v5517, %v5509
    %v5806 = vpack.c.b16 %v5518, %v5510
    %v5807 = vpack.c.b16 %v5519, %v5511
    %v5808 = vpack.c.b16 %v5520, %v5512
    %v5809 = vpack.c.b16 %v5521, %v5513
    %v5810 = vpack.c.b16 %v5522, %v5514
    %v5811 = vpack.c.b16 %v5523, %v5515
    %v5812 = vpack.c.b16 %v5524, %v5516
    %v5813 = vpack.c.b16 %v5533, %v5525
    %v5814 = vpack.c.b16 %v5534, %v5526
    %v5815 = vpack.c.b16 %v5535, %v5527
    %v5816 = vpack.c.b16 %v5536, %v5528
    %v5817 = vpack.c.b16 %v5537, %v5529
    %v5818 = vpack.c.b16 %v5538, %v5530
    %v5819 = vpack.c.b16 %v5539, %v5531
    %v5820 = vpack.c.b16 %v5540, %v5532
    %v5821 = vpack.c.b16 %v5549, %v5541
    %v5822 = vpack.c.b16 %v5550, %v5542
    %v5823 = vpack.c.b16 %v5551, %v5543
    %v5824 = vpack.c.b16 %v5552, %v5544
    %v5825 = vpack.c.b16 %v5553, %v5545
    %v5826 = vpack.c.b16 %v5554, %v5546
    %v5827 = vpack.c.b16 %v5555, %v5547
    %v5828 = vpack.c.b16 %v5556, %v5548
    %v5829 = vpack.c.b16 %v5565, %v5557
    %v5830 = vpack.c.b16 %v5566, %v5558
    %v5831 = vpack.c.b16 %v5567, %v5559
    %v5832 = vpack.c.b16 %v5568, %v5560
    %v5833 = vpack.c.b16 %v5569, %v5561
    %v5834 = vpack.c.b16 %v5570, %v5562
    %v5835 = vpack.c.b16 %v5571, %v5563
    %v5836 = vpack.c.b16 %v5572, %v5564
    %v5837 = vpack.c.b16 %v5581, %v5573
    %v5838 = vpack.c.b16 %v5582, %v5574
    %v5839 = vpack.c.b16 %v5583, %v5575
    %v5840 = vpack.c.b16 %v5584, %v5576
    %v5841 = vpack.c.b16 %v5585, %v5577
    %v5842 = vpack.c.b16 %v5586, %v5578
    %v5843 = vpack.c.b16 %v5587, %v5579
    %v5844 = vpack.c.b16 %v5588, %v5580
    %6101 = vmatpush.bf16.msra.mxu0 %v5645
    %6102 = vmatpush.bf16.msra.mxu0 %v5637
    %6103 = vmatpush.bf16.msra.mxu0 %v5629
    %6104 = vmatpush.bf16.msra.mxu0 %v5621
    %6105 = vmatpush.bf16.msra.mxu0 %v5613
    %6106 = vmatpush.bf16.msra.mxu0 %v5605
    %6107 = vmatpush.bf16.msra.mxu0 %v5597
    %6108 = vmatpush.bf16.msra.mxu0 %v5589
    %6109 = vmatmul.bf16.gmra.mxu0 %v4800
    %v6110 = vpop.f32.mrf.mxu0
    %v6111 = vadd.f32 %v4805, %v6110
    %v6112 = vpop.f32.mrf.mxu0
    %6113 = vdwg.mxu0
    %6114 = vmatpush.bf16.msra.mxu0 %v5709
    %6115 = vmatpush.bf16.msra.mxu0 %v5701
    %6116 = vmatpush.bf16.msra.mxu0 %v5693
    %6117 = vmatpush.bf16.msra.mxu0 %v5685
    %6118 = vmatpush.bf16.msra.mxu0 %v5677
    %6119 = vmatpush.bf16.msra.mxu0 %v5669
    %6120 = vmatpush.bf16.msra.mxu0 %v5661
    %6121 = vmatpush.bf16.msra.mxu0 %v5653
    %6122 = vmatmul.bf16.gmra.mxu0 %v4801
    %v6123 = vpop.f32.mrf.mxu0
    %v6124 = vadd.f32 %v6111, %v6123
    %v6125 = vpop.f32.mrf.mxu0
    %6126 = vdwg.mxu0
    %6127 = vmatpush.bf16.msra.mxu0 %v5773
    %6128 = vmatpush.bf16.msra.mxu0 %v5765
    %6129 = vmatpush.bf16.msra.mxu0 %v5757
    %6130 = vmatpush.bf16.msra.mxu0 %v5749
    %6131 = vmatpush.bf16.msra.mxu0 %v5741
    %6132 = vmatpush.bf16.msra.mxu0 %v5733
    %6133 = vmatpush.bf16.msra.mxu0 %v5725
    %6134 = vmatpush.bf16.msra.mxu0 %v5717
    %6135 = vmatmul.bf16.gmra.mxu0 %v4802
    %v6136 = vpop.f32.mrf.mxu0
    %v6137 = vadd.f32 %v6124, %v6136
    %v6138 = vpop.f32.mrf.mxu0
    %6139 = vdwg.mxu0
    %6140 = vmatpush.bf16.msra.mxu0 %v5837
    %6141 = vmatpush.bf16.msra.mxu0 %v5829
    %6142 = vmatpush.bf16.msra.mxu0 %v5821
    %6143 = vmatpush.bf16.msra.mxu0 %v5813
    %6144 = vmatpush.bf16.msra.mxu0 %v5805
    %6145 = vmatpush.bf16.msra.mxu0 %v5797
    %6146 = vmatpush.bf16.msra.mxu0 %v5789
    %6147 = vmatpush.bf16.msra.mxu0 %v5781
    %6148 = vmatmul.bf16.gmra.mxu0 %v4803
    %v6149 = vpop.f32.mrf.mxu0
    %v6150 = vadd.f32 %v6137, %v6149
    %v6151 = vpop.f32.mrf.mxu0
    %6152 = vdwg.mxu0
    %6153 = vmatpush.bf16.msra.mxu0 %v5646
    %6154 = vmatpush.bf16.msra.mxu0 %v5638
    %6155 = vmatpush.bf16.msra.mxu0 %v5630
    %6156 = vmatpush.bf16.msra.mxu0 %v5622
    %6157 = vmatpush.bf16.msra.mxu0 %v5614
    %6158 = vmatpush.bf16.msra.mxu0 %v5606
    %6159 = vmatpush.bf16.msra.mxu0 %v5598
    %6160 = vmatpush.bf16.msra.mxu0 %v5590
    %6161 = vmatmul.bf16.gmra.mxu0 %v4800
    %v6162 = vpop.f32.mrf.mxu0
    %v6163 = vadd.f32 %v4806, %v6162
    %v6164 = vpop.f32.mrf.mxu0
    %6165 = vdwg.mxu0
    %6166 = vmatpush.bf16.msra.mxu0 %v5710
    %6167 = vmatpush.bf16.msra.mxu0 %v5702
    %6168 = vmatpush.bf16.msra.mxu0 %v5694
    %6169 = vmatpush.bf16.msra.mxu0 %v5686
    %6170 = vmatpush.bf16.msra.mxu0 %v5678
    %6171 = vmatpush.bf16.msra.mxu0 %v5670
    %6172 = vmatpush.bf16.msra.mxu0 %v5662
    %6173 = vmatpush.bf16.msra.mxu0 %v5654
    %6174 = vmatmul.bf16.gmra.mxu0 %v4801
    %v6175 = vpop.f32.mrf.mxu0
    %v6176 = vadd.f32 %v6163, %v6175
    %v6177 = vpop.f32.mrf.mxu0
    %6178 = vdwg.mxu0
    %6179 = vmatpush.bf16.msra.mxu0 %v5774
    %6180 = vmatpush.bf16.msra.mxu0 %v5766
    %6181 = vmatpush.bf16.msra.mxu0 %v5758
    %6182 = vmatpush.bf16.msra.mxu0 %v5750
    %6183 = vmatpush.bf16.msra.mxu0 %v5742
    %6184 = vmatpush.bf16.msra.mxu0 %v5734
    %6185 = vmatpush.bf16.msra.mxu0 %v5726
    %6186 = vmatpush.bf16.msra.mxu0 %v5718
    %6187 = vmatmul.bf16.gmra.mxu0 %v4802
    %v6188 = vpop.f32.mrf.mxu0
    %v6189 = vadd.f32 %v6176, %v6188
    %v6190 = vpop.f32.mrf.mxu0
    %6191 = vdwg.mxu0
    %6192 = vmatpush.bf16.msra.mxu0 %v5838
    %6193 = vmatpush.bf16.msra.mxu0 %v5830
    %6194 = vmatpush.bf16.msra.mxu0 %v5822
    %6195 = vmatpush.bf16.msra.mxu0 %v5814
    %6196 = vmatpush.bf16.msra.mxu0 %v5806
    %6197 = vmatpush.bf16.msra.mxu0 %v5798
    %6198 = vmatpush.bf16.msra.mxu0 %v5790
    %6199 = vmatpush.bf16.msra.mxu0 %v5782
    %6200 = vmatmul.bf16.gmra.mxu0 %v4803
    %v6201 = vpop.f32.mrf.mxu0
    %v6202 = vadd.f32 %v6189, %v6201
    %v6203 = vpop.f32.mrf.mxu0
    %6204 = vdwg.mxu0
    %6205 = vmatpush.bf16.msra.mxu0 %v5647
    %6206 = vmatpush.bf16.msra.mxu0 %v5639
    %6207 = vmatpush.bf16.msra.mxu0 %v5631
    %6208 = vmatpush.bf16.msra.mxu0 %v5623
    %6209 = vmatpush.bf16.msra.mxu0 %v5615
    %6210 = vmatpush.bf16.msra.mxu0 %v5607
    %6211 = vmatpush.bf16.msra.mxu0 %v5599
    %6212 = vmatpush.bf16.msra.mxu0 %v5591
    %6213 = vmatmul.bf16.gmra.mxu0 %v4800
    %v6214 = vpop.f32.mrf.mxu0
    %v6215 = vadd.f32 %v4807, %v6214
    %v6216 = vpop.f32.mrf.mxu0
    %6217 = vdwg.mxu0
    %6218 = vmatpush.bf16.msra.mxu0 %v5711
    %6219 = vmatpush.bf16.msra.mxu0 %v5703
    %6220 = vmatpush.bf16.msra.mxu0 %v5695
    %6221 = vmatpush.bf16.msra.mxu0 %v5687
    %6222 = vmatpush.bf16.msra.mxu0 %v5679
    %6223 = vmatpush.bf16.msra.mxu0 %v5671
    %6224 = vmatpush.bf16.msra.mxu0 %v5663
    %6225 = vmatpush.bf16.msra.mxu0 %v5655
    %6226 = vmatmul.bf16.gmra.mxu0 %v4801
    %v6227 = vpop.f32.mrf.mxu0
    %v6228 = vadd.f32 %v6215, %v6227
    %v6229 = vpop.f32.mrf.mxu0
    %6230 = vdwg.mxu0
    %6231 = vmatpush.bf16.msra.mxu0 %v5775
    %6232 = vmatpush.bf16.msra.mxu0 %v5767
    %6233 = vmatpush.bf16.msra.mxu0 %v5759
    %6234 = vmatpush.bf16.msra.mxu0 %v5751
    %6235 = vmatpush.bf16.msra.mxu0 %v5743
    %6236 = vmatpush.bf16.msra.mxu0 %v5735
    %6237 = vmatpush.bf16.msra.mxu0 %v5727
    %6238 = vmatpush.bf16.msra.mxu0 %v5719
    %6239 = vmatmul.bf16.gmra.mxu0 %v4802
    %v6240 = vpop.f32.mrf.mxu0
    %v6241 = vadd.f32 %v6228, %v6240
    %v6242 = vpop.f32.mrf.mxu0
    %6243 = vdwg.mxu0
    %6244 = vmatpush.bf16.msra.mxu0 %v5839
    %6245 = vmatpush.bf16.msra.mxu0 %v5831
    %6246 = vmatpush.bf16.msra.mxu0 %v5823
    %6247 = vmatpush.bf16.msra.mxu0 %v5815
    %6248 = vmatpush.bf16.msra.mxu0 %v5807
    %6249 = vmatpush.bf16.msra.mxu0 %v5799
    %6250 = vmatpush.bf16.msra.mxu0 %v5791
    %6251 = vmatpush.bf16.msra.mxu0 %v5783
    %6252 = vmatmul.bf16.gmra.mxu0 %v4803
    %v6253 = vpop.f32.mrf.mxu0
    %v6254 = vadd.f32 %v6241, %v6253
    %v6255 = vpop.f32.mrf.mxu0
    %6256 = vdwg.mxu0
    %6257 = vmatpush.bf16.msra.mxu0 %v5648
    %6258 = vmatpush.bf16.msra.mxu0 %v5640
    %6259 = vmatpush.bf16.msra.mxu0 %v5632
    %6260 = vmatpush.bf16.msra.mxu0 %v5624
    %6261 = vmatpush.bf16.msra.mxu0 %v5616
    %6262 = vmatpush.bf16.msra.mxu0 %v5608
    %6263 = vmatpush.bf16.msra.mxu0 %v5600
    %6264 = vmatpush.bf16.msra.mxu0 %v5592
    %6265 = vmatmul.bf16.gmra.mxu0 %v4800
    %v6266 = vpop.f32.mrf.mxu0
    %v6267 = vadd.f32 %v4808, %v6266
    %v6268 = vpop.f32.mrf.mxu0
    %6269 = vdwg.mxu0
    %6270 = vmatpush.bf16.msra.mxu0 %v5712
    %6271 = vmatpush.bf16.msra.mxu0 %v5704
    %6272 = vmatpush.bf16.msra.mxu0 %v5696
    %6273 = vmatpush.bf16.msra.mxu0 %v5688
    %6274 = vmatpush.bf16.msra.mxu0 %v5680
    %6275 = vmatpush.bf16.msra.mxu0 %v5672
    %6276 = vmatpush.bf16.msra.mxu0 %v5664
    %6277 = vmatpush.bf16.msra.mxu0 %v5656
    %6278 = vmatmul.bf16.gmra.mxu0 %v4801
    %v6279 = vpop.f32.mrf.mxu0
    %v6280 = vadd.f32 %v6267, %v6279
    %v6281 = vpop.f32.mrf.mxu0
    %6282 = vdwg.mxu0
    %6283 = vmatpush.bf16.msra.mxu0 %v5776
    %6284 = vmatpush.bf16.msra.mxu0 %v5768
    %6285 = vmatpush.bf16.msra.mxu0 %v5760
    %6286 = vmatpush.bf16.msra.mxu0 %v5752
    %6287 = vmatpush.bf16.msra.mxu0 %v5744
    %6288 = vmatpush.bf16.msra.mxu0 %v5736
    %6289 = vmatpush.bf16.msra.mxu0 %v5728
    %6290 = vmatpush.bf16.msra.mxu0 %v5720
    %6291 = vmatmul.bf16.gmra.mxu0 %v4802
    %v6292 = vpop.f32.mrf.mxu0
    %v6293 = vadd.f32 %v6280, %v6292
    %v6294 = vpop.f32.mrf.mxu0
    %6295 = vdwg.mxu0
    %6296 = vmatpush.bf16.msra.mxu0 %v5840
    %6297 = vmatpush.bf16.msra.mxu0 %v5832
    %6298 = vmatpush.bf16.msra.mxu0 %v5824
    %6299 = vmatpush.bf16.msra.mxu0 %v5816
    %6300 = vmatpush.bf16.msra.mxu0 %v5808
    %6301 = vmatpush.bf16.msra.mxu0 %v5800
    %6302 = vmatpush.bf16.msra.mxu0 %v5792
    %6303 = vmatpush.bf16.msra.mxu0 %v5784
    %6304 = vmatmul.bf16.gmra.mxu0 %v4803
    %v6305 = vpop.f32.mrf.mxu0
    %v6306 = vadd.f32 %v6293, %v6305
    %v6307 = vpop.f32.mrf.mxu0
    %6308 = vdwg.mxu0
    %6309 = vmatpush.bf16.msra.mxu0 %v5649
    %6310 = vmatpush.bf16.msra.mxu0 %v5641
    %6311 = vmatpush.bf16.msra.mxu0 %v5633
    %6312 = vmatpush.bf16.msra.mxu0 %v5625
    %6313 = vmatpush.bf16.msra.mxu0 %v5617
    %6314 = vmatpush.bf16.msra.mxu0 %v5609
    %6315 = vmatpush.bf16.msra.mxu0 %v5601
    %6316 = vmatpush.bf16.msra.mxu0 %v5593
    %6317 = vmatmul.bf16.gmra.mxu0 %v4800
    %v6318 = vpop.f32.mrf.mxu0
    %v6319 = vadd.f32 %v4809, %v6318
    %v6320 = vpop.f32.mrf.mxu0
    %6321 = vdwg.mxu0
    %6322 = vmatpush.bf16.msra.mxu0 %v5713
    %6323 = vmatpush.bf16.msra.mxu0 %v5705
    %6324 = vmatpush.bf16.msra.mxu0 %v5697
    %6325 = vmatpush.bf16.msra.mxu0 %v5689
    %6326 = vmatpush.bf16.msra.mxu0 %v5681
    %6327 = vmatpush.bf16.msra.mxu0 %v5673
    %6328 = vmatpush.bf16.msra.mxu0 %v5665
    %6329 = vmatpush.bf16.msra.mxu0 %v5657
    %6330 = vmatmul.bf16.gmra.mxu0 %v4801
    %v6331 = vpop.f32.mrf.mxu0
    %v6332 = vadd.f32 %v6319, %v6331
    %v6333 = vpop.f32.mrf.mxu0
    %6334 = vdwg.mxu0
    %6335 = vmatpush.bf16.msra.mxu0 %v5777
    %6336 = vmatpush.bf16.msra.mxu0 %v5769
    %6337 = vmatpush.bf16.msra.mxu0 %v5761
    %6338 = vmatpush.bf16.msra.mxu0 %v5753
    %6339 = vmatpush.bf16.msra.mxu0 %v5745
    %6340 = vmatpush.bf16.msra.mxu0 %v5737
    %6341 = vmatpush.bf16.msra.mxu0 %v5729
    %6342 = vmatpush.bf16.msra.mxu0 %v5721
    %6343 = vmatmul.bf16.gmra.mxu0 %v4802
    %v6344 = vpop.f32.mrf.mxu0
    %v6345 = vadd.f32 %v6332, %v6344
    %v6346 = vpop.f32.mrf.mxu0
    %6347 = vdwg.mxu0
    %6348 = vmatpush.bf16.msra.mxu0 %v5841
    %6349 = vmatpush.bf16.msra.mxu0 %v5833
    %6350 = vmatpush.bf16.msra.mxu0 %v5825
    %6351 = vmatpush.bf16.msra.mxu0 %v5817
    %6352 = vmatpush.bf16.msra.mxu0 %v5809
    %6353 = vmatpush.bf16.msra.mxu0 %v5801
    %6354 = vmatpush.bf16.msra.mxu0 %v5793
    %6355 = vmatpush.bf16.msra.mxu0 %v5785
    %6356 = vmatmul.bf16.gmra.mxu0 %v4803
    %v6357 = vpop.f32.mrf.mxu0
    %v6358 = vadd.f32 %v6345, %v6357
    %v6359 = vpop.f32.mrf.mxu0
    %6360 = vdwg.mxu0
    %6361 = vmatpush.bf16.msra.mxu0 %v5650
    %6362 = vmatpush.bf16.msra.mxu0 %v5642
    %6363 = vmatpush.bf16.msra.mxu0 %v5634
    %6364 = vmatpush.bf16.msra.mxu0 %v5626
    %6365 = vmatpush.bf16.msra.mxu0 %v5618
    %6366 = vmatpush.bf16.msra.mxu0 %v5610
    %6367 = vmatpush.bf16.msra.mxu0 %v5602
    %6368 = vmatpush.bf16.msra.mxu0 %v5594
    %6369 = vmatmul.bf16.gmra.mxu0 %v4800
    %v6370 = vpop.f32.mrf.mxu0
    %v6371 = vadd.f32 %v4810, %v6370
    %v6372 = vpop.f32.mrf.mxu0
    %6373 = vdwg.mxu0
    %6374 = vmatpush.bf16.msra.mxu0 %v5714
    %6375 = vmatpush.bf16.msra.mxu0 %v5706
    %6376 = vmatpush.bf16.msra.mxu0 %v5698
    %6377 = vmatpush.bf16.msra.mxu0 %v5690
    %6378 = vmatpush.bf16.msra.mxu0 %v5682
    %6379 = vmatpush.bf16.msra.mxu0 %v5674
    %6380 = vmatpush.bf16.msra.mxu0 %v5666
    %6381 = vmatpush.bf16.msra.mxu0 %v5658
    %6382 = vmatmul.bf16.gmra.mxu0 %v4801
    %v6383 = vpop.f32.mrf.mxu0
    %v6384 = vadd.f32 %v6371, %v6383
    %v6385 = vpop.f32.mrf.mxu0
    %6386 = vdwg.mxu0
    %6387 = vmatpush.bf16.msra.mxu0 %v5778
    %6388 = vmatpush.bf16.msra.mxu0 %v5770
    %6389 = vmatpush.bf16.msra.mxu0 %v5762
    %6390 = vmatpush.bf16.msra.mxu0 %v5754
    %6391 = vmatpush.bf16.msra.mxu0 %v5746
    %6392 = vmatpush.bf16.msra.mxu0 %v5738
    %6393 = vmatpush.bf16.msra.mxu0 %v5730
    %6394 = vmatpush.bf16.msra.mxu0 %v5722
    %6395 = vmatmul.bf16.gmra.mxu0 %v4802
    %v6396 = vpop.f32.mrf.mxu0
    %v6397 = vadd.f32 %v6384, %v6396
    %v6398 = vpop.f32.mrf.mxu0
    %6399 = vdwg.mxu0
    %6400 = vmatpush.bf16.msra.mxu0 %v5842
    %6401 = vmatpush.bf16.msra.mxu0 %v5834
    %6402 = vmatpush.bf16.msra.mxu0 %v5826
    %6403 = vmatpush.bf16.msra.mxu0 %v5818
    %6404 = vmatpush.bf16.msra.mxu0 %v5810
    %6405 = vmatpush.bf16.msra.mxu0 %v5802
    %6406 = vmatpush.bf16.msra.mxu0 %v5794
    %6407 = vmatpush.bf16.msra.mxu0 %v5786
    %6408 = vmatmul.bf16.gmra.mxu0 %v4803
    %v6409 = vpop.f32.mrf.mxu0
    %v6410 = vadd.f32 %v6397, %v6409
    %v6411 = vpop.f32.mrf.mxu0
    %6412 = vdwg.mxu0
    %6413 = vmatpush.bf16.msra.mxu0 %v5651
    %6414 = vmatpush.bf16.msra.mxu0 %v5643
    %6415 = vmatpush.bf16.msra.mxu0 %v5635
    %6416 = vmatpush.bf16.msra.mxu0 %v5627
    %6417 = vmatpush.bf16.msra.mxu0 %v5619
    %6418 = vmatpush.bf16.msra.mxu0 %v5611
    %6419 = vmatpush.bf16.msra.mxu0 %v5603
    %6420 = vmatpush.bf16.msra.mxu0 %v5595
    %6421 = vmatmul.bf16.gmra.mxu0 %v4800
    %v6422 = vpop.f32.mrf.mxu0
    %v6423 = vadd.f32 %v4811, %v6422
    %v6424 = vpop.f32.mrf.mxu0
    %6425 = vdwg.mxu0
    %6426 = vmatpush.bf16.msra.mxu0 %v5715
    %6427 = vmatpush.bf16.msra.mxu0 %v5707
    %6428 = vmatpush.bf16.msra.mxu0 %v5699
    %6429 = vmatpush.bf16.msra.mxu0 %v5691
    %6430 = vmatpush.bf16.msra.mxu0 %v5683
    %6431 = vmatpush.bf16.msra.mxu0 %v5675
    %6432 = vmatpush.bf16.msra.mxu0 %v5667
    %6433 = vmatpush.bf16.msra.mxu0 %v5659
    %6434 = vmatmul.bf16.gmra.mxu0 %v4801
    %v6435 = vpop.f32.mrf.mxu0
    %v6436 = vadd.f32 %v6423, %v6435
    %v6437 = vpop.f32.mrf.mxu0
    %6438 = vdwg.mxu0
    %6439 = vmatpush.bf16.msra.mxu0 %v5779
    %6440 = vmatpush.bf16.msra.mxu0 %v5771
    %6441 = vmatpush.bf16.msra.mxu0 %v5763
    %6442 = vmatpush.bf16.msra.mxu0 %v5755
    %6443 = vmatpush.bf16.msra.mxu0 %v5747
    %6444 = vmatpush.bf16.msra.mxu0 %v5739
    %6445 = vmatpush.bf16.msra.mxu0 %v5731
    %6446 = vmatpush.bf16.msra.mxu0 %v5723
    %6447 = vmatmul.bf16.gmra.mxu0 %v4802
    %v6448 = vpop.f32.mrf.mxu0
    %v6449 = vadd.f32 %v6436, %v6448
    %v6450 = vpop.f32.mrf.mxu0
    %6451 = vdwg.mxu0
    %6452 = vmatpush.bf16.msra.mxu0 %v5843
    %6453 = vmatpush.bf16.msra.mxu0 %v5835
    %6454 = vmatpush.bf16.msra.mxu0 %v5827
    %6455 = vmatpush.bf16.msra.mxu0 %v5819
    %6456 = vmatpush.bf16.msra.mxu0 %v5811
    %6457 = vmatpush.bf16.msra.mxu0 %v5803
    %6458 = vmatpush.bf16.msra.mxu0 %v5795
    %6459 = vmatpush.bf16.msra.mxu0 %v5787
    %6460 = vmatmul.bf16.gmra.mxu0 %v4803
    %v6461 = vpop.f32.mrf.mxu0
    %v6462 = vadd.f32 %v6449, %v6461
    %v6463 = vpop.f32.mrf.mxu0
    %6464 = vdwg.mxu0
    %6465 = vmatpush.bf16.msra.mxu0 %v5652
    %6466 = vmatpush.bf16.msra.mxu0 %v5644
    %6467 = vmatpush.bf16.msra.mxu0 %v5636
    %6468 = vmatpush.bf16.msra.mxu0 %v5628
    %6469 = vmatpush.bf16.msra.mxu0 %v5620
    %6470 = vmatpush.bf16.msra.mxu0 %v5612
    %6471 = vmatpush.bf16.msra.mxu0 %v5604
    %6472 = vmatpush.bf16.msra.mxu0 %v5596
    %6473 = vmatmul.bf16.gmra.mxu0 %v4800
    %v6474 = vpop.f32.mrf.mxu0
    %v6475 = vadd.f32 %v4812, %v6474
    %v6476 = vpop.f32.mrf.mxu0
    %6477 = vdwg.mxu0
    %6478 = vmatpush.bf16.msra.mxu0 %v5716
    %6479 = vmatpush.bf16.msra.mxu0 %v5708
    %6480 = vmatpush.bf16.msra.mxu0 %v5700
    %6481 = vmatpush.bf16.msra.mxu0 %v5692
    %6482 = vmatpush.bf16.msra.mxu0 %v5684
    %6483 = vmatpush.bf16.msra.mxu0 %v5676
    %6484 = vmatpush.bf16.msra.mxu0 %v5668
    %6485 = vmatpush.bf16.msra.mxu0 %v5660
    %6486 = vmatmul.bf16.gmra.mxu0 %v4801
    %v6487 = vpop.f32.mrf.mxu0
    %v6488 = vadd.f32 %v6475, %v6487
    %v6489 = vpop.f32.mrf.mxu0
    %6490 = vdwg.mxu0
    %6491 = vmatpush.bf16.msra.mxu0 %v5780
    %6492 = vmatpush.bf16.msra.mxu0 %v5772
    %6493 = vmatpush.bf16.msra.mxu0 %v5764
    %6494 = vmatpush.bf16.msra.mxu0 %v5756
    %6495 = vmatpush.bf16.msra.mxu0 %v5748
    %6496 = vmatpush.bf16.msra.mxu0 %v5740
    %6497 = vmatpush.bf16.msra.mxu0 %v5732
    %6498 = vmatpush.bf16.msra.mxu0 %v5724
    %6499 = vmatmul.bf16.gmra.mxu0 %v4802
    %v6500 = vpop.f32.mrf.mxu0
    %v6501 = vadd.f32 %v6488, %v6500
    %v6502 = vpop.f32.mrf.mxu0
    %6503 = vdwg.mxu0
    %6504 = vmatpush.bf16.msra.mxu0 %v5844
    %6505 = vmatpush.bf16.msra.mxu0 %v5836
    %6506 = vmatpush.bf16.msra.mxu0 %v5828
    %6507 = vmatpush.bf16.msra.mxu0 %v5820
    %6508 = vmatpush.bf16.msra.mxu0 %v5812
    %6509 = vmatpush.bf16.msra.mxu0 %v5804
    %6510 = vmatpush.bf16.msra.mxu0 %v5796
    %6511 = vmatpush.bf16.msra.mxu0 %v5788
    %6512 = vmatmul.bf16.gmra.mxu0 %v4803
    %v6513 = vpop.f32.mrf.mxu0
    %v6514 = vadd.f32 %v6501, %v6513
    %v6515 = vpop.f32.mrf.mxu0
    %6516 = vdwg.mxu0
    %v6517 = vmax.f32 %v6150, 0.0
    %v6518 = vmax.f32 %v6202, 0.0
    %v6519 = vmax.f32 %v6254, 0.0
    %v6520 = vmax.f32 %v6306, 0.0
    %v6521 = vmax.f32 %v6358, 0.0
    %v6522 = vmax.f32 %v6410, 0.0
    %v6523 = vmax.f32 %v6462, 0.0
    %v6524 = vmax.f32 %v6514, 0.0
    %v6525 = vld [vmem:[#allocation23] sm:$0xff]
    %v6526 = vld [vmem:[#allocation23 + $0x8] sm:$0xff]
    %v6527 = vld [vmem:[#allocation23 + $0x10] sm:$0xff]
    %v6528 = vld [vmem:[#allocation23 + $0x18] sm:$0xff]
    %v6529 = vld [vmem:[#allocation23 + $0x20] sm:$0xff]
    %v6530 = vld [vmem:[#allocation23 + $0x28] sm:$0xff]
    %v6531 = vld [vmem:[#allocation23 + $0x30] sm:$0xff]
    %v6532 = vld [vmem:[#allocation23 + $0x38] sm:$0xff]
    %v6533 = vld [vmem:[#allocation23 + $0x40] sm:$0xff]
    %v6534 = vld [vmem:[#allocation23 + $0x48] sm:$0xff]
    %v6535 = vld [vmem:[#allocation23 + $0x50] sm:$0xff]
    %v6536 = vld [vmem:[#allocation23 + $0x58] sm:$0xff]
    %v6537 = vld [vmem:[#allocation23 + $0x60] sm:$0xff]
    %v6538 = vld [vmem:[#allocation23 + $0x68] sm:$0xff]
    %v6539 = vld [vmem:[#allocation23 + $0x70] sm:$0xff]
    %v6540 = vld [vmem:[#allocation23 + $0x78] sm:$0xff]
    %v6541 = vld [vmem:[#allocation23 + $0x80] sm:$0xff]
    %v6542 = vld [vmem:[#allocation23 + $0x88] sm:$0xff]
    %v6543 = vld [vmem:[#allocation23 + $0x90] sm:$0xff]
    %v6544 = vld [vmem:[#allocation23 + $0x98] sm:$0xff]
    %v6545 = vld [vmem:[#allocation23 + $0xa0] sm:$0xff]
    %v6546 = vld [vmem:[#allocation23 + $0xa8] sm:$0xff]
    %v6547 = vld [vmem:[#allocation23 + $0xb0] sm:$0xff]
    %v6548 = vld [vmem:[#allocation23 + $0xb8] sm:$0xff]
    %v6549 = vld [vmem:[#allocation23 + $0xc0] sm:$0xff]
    %v6550 = vld [vmem:[#allocation23 + $0xc8] sm:$0xff]
    %v6551 = vld [vmem:[#allocation23 + $0xd0] sm:$0xff]
    %v6552 = vld [vmem:[#allocation23 + $0xd8] sm:$0xff]
    %v6553 = vld [vmem:[#allocation23 + $0xe0] sm:$0xff]
    %v6554 = vld [vmem:[#allocation23 + $0xe8] sm:$0xff]
    %v6555 = vld [vmem:[#allocation23 + $0xf0] sm:$0xff]
    %v6556 = vld [vmem:[#allocation23 + $0xf8] sm:$0xff]
    %v6557 = vld [vmem:[#allocation23 + $0x100] sm:$0xff]
    %v6558 = vld [vmem:[#allocation23 + $0x108] sm:$0xff]
    %v6559 = vld [vmem:[#allocation23 + $0x110] sm:$0xff]
    %v6560 = vld [vmem:[#allocation23 + $0x118] sm:$0xff]
    %v6561 = vld [vmem:[#allocation23 + $0x120] sm:$0xff]
    %v6562 = vld [vmem:[#allocation23 + $0x128] sm:$0xff]
    %v6563 = vld [vmem:[#allocation23 + $0x130] sm:$0xff]
    %v6564 = vld [vmem:[#allocation23 + $0x138] sm:$0xff]
    %v6565 = vld [vmem:[#allocation23 + $0x140] sm:$0xff]
    %v6566 = vld [vmem:[#allocation23 + $0x148] sm:$0xff]
    %v6567 = vld [vmem:[#allocation23 + $0x150] sm:$0xff]
    %v6568 = vld [vmem:[#allocation23 + $0x158] sm:$0xff]
    %v6569 = vld [vmem:[#allocation23 + $0x160] sm:$0xff]
    %v6570 = vld [vmem:[#allocation23 + $0x168] sm:$0xff]
    %v6571 = vld [vmem:[#allocation23 + $0x170] sm:$0xff]
    %v6572 = vld [vmem:[#allocation23 + $0x178] sm:$0xff]
    %v6573 = vld [vmem:[#allocation23 + $0x180] sm:$0xff]
    %v6574 = vld [vmem:[#allocation23 + $0x188] sm:$0xff]
    %v6575 = vld [vmem:[#allocation23 + $0x190] sm:$0xff]
    %v6576 = vld [vmem:[#allocation23 + $0x198] sm:$0xff]
    %v6577 = vld [vmem:[#allocation23 + $0x1a0] sm:$0xff]
    %v6578 = vld [vmem:[#allocation23 + $0x1a8] sm:$0xff]
    %v6579 = vld [vmem:[#allocation23 + $0x1b0] sm:$0xff]
    %v6580 = vld [vmem:[#allocation23 + $0x1b8] sm:$0xff]
    %v6581 = vld [vmem:[#allocation23 + $0x1c0] sm:$0xff]
    %v6582 = vld [vmem:[#allocation23 + $0x1c8] sm:$0xff]
    %v6583 = vld [vmem:[#allocation23 + $0x1d0] sm:$0xff]
    %v6584 = vld [vmem:[#allocation23 + $0x1d8] sm:$0xff]
    %v6585 = vld [vmem:[#allocation23 + $0x1e0] sm:$0xff]
    %v6586 = vld [vmem:[#allocation23 + $0x1e8] sm:$0xff]
    %v6587 = vld [vmem:[#allocation23 + $0x1f0] sm:$0xff]
    %v6588 = vld [vmem:[#allocation23 + $0x1f8] sm:$0xff]
    %v6589 = vld [vmem:[#allocation23 + $0x200] sm:$0xff]
    %v6590 = vld [vmem:[#allocation23 + $0x208] sm:$0xff]
    %v6591 = vld [vmem:[#allocation23 + $0x210] sm:$0xff]
    %v6592 = vld [vmem:[#allocation23 + $0x218] sm:$0xff]
    %v6593 = vld [vmem:[#allocation23 + $0x220] sm:$0xff]
    %v6594 = vld [vmem:[#allocation23 + $0x228] sm:$0xff]
    %v6595 = vld [vmem:[#allocation23 + $0x230] sm:$0xff]
    %v6596 = vld [vmem:[#allocation23 + $0x238] sm:$0xff]
    %v6597 = vld [vmem:[#allocation23 + $0x240] sm:$0xff]
    %v6598 = vld [vmem:[#allocation23 + $0x248] sm:$0xff]
    %v6599 = vld [vmem:[#allocation23 + $0x250] sm:$0xff]
    %v6600 = vld [vmem:[#allocation23 + $0x258] sm:$0xff]
    %v6601 = vld [vmem:[#allocation23 + $0x260] sm:$0xff]
    %v6602 = vld [vmem:[#allocation23 + $0x268] sm:$0xff]
    %v6603 = vld [vmem:[#allocation23 + $0x270] sm:$0xff]
    %v6604 = vld [vmem:[#allocation23 + $0x278] sm:$0xff]
    %v6605 = vld [vmem:[#allocation23 + $0x280] sm:$0xff]
    %v6606 = vld [vmem:[#allocation23 + $0x288] sm:$0xff]
    %v6607 = vld [vmem:[#allocation23 + $0x290] sm:$0xff]
    %v6608 = vld [vmem:[#allocation23 + $0x298] sm:$0xff]
    %v6609 = vld [vmem:[#allocation23 + $0x2a0] sm:$0xff]
    %v6610 = vld [vmem:[#allocation23 + $0x2a8] sm:$0xff]
    %v6611 = vld [vmem:[#allocation23 + $0x2b0] sm:$0xff]
    %v6612 = vld [vmem:[#allocation23 + $0x2b8] sm:$0xff]
    %v6613 = vld [vmem:[#allocation23 + $0x2c0] sm:$0xff]
    %v6614 = vld [vmem:[#allocation23 + $0x2c8] sm:$0xff]
    %v6615 = vld [vmem:[#allocation23 + $0x2d0] sm:$0xff]
    %v6616 = vld [vmem:[#allocation23 + $0x2d8] sm:$0xff]
    %v6617 = vld [vmem:[#allocation23 + $0x2e0] sm:$0xff]
    %v6618 = vld [vmem:[#allocation23 + $0x2e8] sm:$0xff]
    %v6619 = vld [vmem:[#allocation23 + $0x2f0] sm:$0xff]
    %v6620 = vld [vmem:[#allocation23 + $0x2f8] sm:$0xff]
    %v6621 = vld [vmem:[#allocation23 + $0x300] sm:$0xff]
    %v6622 = vld [vmem:[#allocation23 + $0x308] sm:$0xff]
    %v6623 = vld [vmem:[#allocation23 + $0x310] sm:$0xff]
    %v6624 = vld [vmem:[#allocation23 + $0x318] sm:$0xff]
    %v6625 = vld [vmem:[#allocation23 + $0x320] sm:$0xff]
    %v6626 = vld [vmem:[#allocation23 + $0x328] sm:$0xff]
    %v6627 = vld [vmem:[#allocation23 + $0x330] sm:$0xff]
    %v6628 = vld [vmem:[#allocation23 + $0x338] sm:$0xff]
    %v6629 = vld [vmem:[#allocation23 + $0x340] sm:$0xff]
    %v6630 = vld [vmem:[#allocation23 + $0x348] sm:$0xff]
    %v6631 = vld [vmem:[#allocation23 + $0x350] sm:$0xff]
    %v6632 = vld [vmem:[#allocation23 + $0x358] sm:$0xff]
    %v6633 = vld [vmem:[#allocation23 + $0x360] sm:$0xff]
    %v6634 = vld [vmem:[#allocation23 + $0x368] sm:$0xff]
    %v6635 = vld [vmem:[#allocation23 + $0x370] sm:$0xff]
    %v6636 = vld [vmem:[#allocation23 + $0x378] sm:$0xff]
    %v6637 = vld [vmem:[#allocation23 + $0x380] sm:$0xff]
    %v6638 = vld [vmem:[#allocation23 + $0x388] sm:$0xff]
    %v6639 = vld [vmem:[#allocation23 + $0x390] sm:$0xff]
    %v6640 = vld [vmem:[#allocation23 + $0x398] sm:$0xff]
    %v6641 = vld [vmem:[#allocation23 + $0x3a0] sm:$0xff]
    %v6642 = vld [vmem:[#allocation23 + $0x3a8] sm:$0xff]
    %v6643 = vld [vmem:[#allocation23 + $0x3b0] sm:$0xff]
    %v6644 = vld [vmem:[#allocation23 + $0x3b8] sm:$0xff]
    %v6645 = vld [vmem:[#allocation23 + $0x3c0] sm:$0xff]
    %v6646 = vld [vmem:[#allocation23 + $0x3c8] sm:$0xff]
    %v6647 = vld [vmem:[#allocation23 + $0x3d0] sm:$0xff]
    %v6648 = vld [vmem:[#allocation23 + $0x3d8] sm:$0xff]
    %v6649 = vld [vmem:[#allocation23 + $0x3e0] sm:$0xff]
    %v6650 = vld [vmem:[#allocation23 + $0x3e8] sm:$0xff]
    %v6651 = vld [vmem:[#allocation23 + $0x3f0] sm:$0xff]
    %v6652 = vld [vmem:[#allocation23 + $0x3f8] sm:$0xff]
    %v6653 = vld [vmem:[%s16] sm:$0x3]
    %v6654 = vpack.c.bf16 %v6517, %v6517
    %v6655 = vpack.c.bf16 %v6518, %v6518
    %v6656 = vpack.c.bf16 %v6519, %v6519
    %v6657 = vpack.c.bf16 %v6520, %v6520
    %v6658 = vpack.c.bf16 %v6521, %v6521
    %v6659 = vpack.c.bf16 %v6522, %v6522
    %v6660 = vpack.c.bf16 %v6523, %v6523
    %v6661 = vpack.c.bf16 %v6524, %v6524
    %v6663 = vperm.slane %v6653, 0
    %v6664 = vperm.slane %v6653, 1
    %v6795 = vunpack.c.l.b16 %v6525
    %v6796 = vunpack.c.h.b16 %v6525
    %v6797 = vunpack.c.l.b16 %v6526
    %v6798 = vunpack.c.h.b16 %v6526
    %v6799 = vunpack.c.l.b16 %v6527
    %v6800 = vunpack.c.h.b16 %v6527
    %v6801 = vunpack.c.l.b16 %v6528
    %v6802 = vunpack.c.h.b16 %v6528
    %v6803 = vunpack.c.l.b16 %v6529
    %v6804 = vunpack.c.h.b16 %v6529
    %v6805 = vunpack.c.l.b16 %v6530
    %v6806 = vunpack.c.h.b16 %v6530
    %v6807 = vunpack.c.l.b16 %v6531
    %v6808 = vunpack.c.h.b16 %v6531
    %v6809 = vunpack.c.l.b16 %v6532
    %v6810 = vunpack.c.h.b16 %v6532
    %v6811 = vunpack.c.l.b16 %v6533
    %v6812 = vunpack.c.h.b16 %v6533
    %v6813 = vunpack.c.l.b16 %v6534
    %v6814 = vunpack.c.h.b16 %v6534
    %v6815 = vunpack.c.l.b16 %v6535
    %v6816 = vunpack.c.h.b16 %v6535
    %v6817 = vunpack.c.l.b16 %v6536
    %v6818 = vunpack.c.h.b16 %v6536
    %v6819 = vunpack.c.l.b16 %v6537
    %v6820 = vunpack.c.h.b16 %v6537
    %v6821 = vunpack.c.l.b16 %v6538
    %v6822 = vunpack.c.h.b16 %v6538
    %v6823 = vunpack.c.l.b16 %v6539
    %v6824 = vunpack.c.h.b16 %v6539
    %v6825 = vunpack.c.l.b16 %v6540
    %v6826 = vunpack.c.h.b16 %v6540
    %v6827 = vunpack.c.l.b16 %v6541
    %v6828 = vunpack.c.h.b16 %v6541
    %v6829 = vunpack.c.l.b16 %v6542
    %v6830 = vunpack.c.h.b16 %v6542
    %v6831 = vunpack.c.l.b16 %v6543
    %v6832 = vunpack.c.h.b16 %v6543
    %v6833 = vunpack.c.l.b16 %v6544
    %v6834 = vunpack.c.h.b16 %v6544
    %v6835 = vunpack.c.l.b16 %v6545
    %v6836 = vunpack.c.h.b16 %v6545
    %v6837 = vunpack.c.l.b16 %v6546
    %v6838 = vunpack.c.h.b16 %v6546
    %v6839 = vunpack.c.l.b16 %v6547
    %v6840 = vunpack.c.h.b16 %v6547
    %v6841 = vunpack.c.l.b16 %v6548
    %v6842 = vunpack.c.h.b16 %v6548
    %v6843 = vunpack.c.l.b16 %v6549
    %v6844 = vunpack.c.h.b16 %v6549
    %v6845 = vunpack.c.l.b16 %v6550
    %v6846 = vunpack.c.h.b16 %v6550
    %v6847 = vunpack.c.l.b16 %v6551
    %v6848 = vunpack.c.h.b16 %v6551
    %v6849 = vunpack.c.l.b16 %v6552
    %v6850 = vunpack.c.h.b16 %v6552
    %v6851 = vunpack.c.l.b16 %v6553
    %v6852 = vunpack.c.h.b16 %v6553
    %v6853 = vunpack.c.l.b16 %v6554
    %v6854 = vunpack.c.h.b16 %v6554
    %v6855 = vunpack.c.l.b16 %v6555
    %v6856 = vunpack.c.h.b16 %v6555
    %v6857 = vunpack.c.l.b16 %v6556
    %v6858 = vunpack.c.h.b16 %v6556
    %v6859 = vunpack.c.l.b16 %v6557
    %v6860 = vunpack.c.h.b16 %v6557
    %v6861 = vunpack.c.l.b16 %v6558
    %v6862 = vunpack.c.h.b16 %v6558
    %v6863 = vunpack.c.l.b16 %v6559
    %v6864 = vunpack.c.h.b16 %v6559
    %v6865 = vunpack.c.l.b16 %v6560
    %v6866 = vunpack.c.h.b16 %v6560
    %v6867 = vunpack.c.l.b16 %v6561
    %v6868 = vunpack.c.h.b16 %v6561
    %v6869 = vunpack.c.l.b16 %v6562
    %v6870 = vunpack.c.h.b16 %v6562
    %v6871 = vunpack.c.l.b16 %v6563
    %v6872 = vunpack.c.h.b16 %v6563
    %v6873 = vunpack.c.l.b16 %v6564
    %v6874 = vunpack.c.h.b16 %v6564
    %v6875 = vunpack.c.l.b16 %v6565
    %v6876 = vunpack.c.h.b16 %v6565
    %v6877 = vunpack.c.l.b16 %v6566
    %v6878 = vunpack.c.h.b16 %v6566
    %v6879 = vunpack.c.l.b16 %v6567
    %v6880 = vunpack.c.h.b16 %v6567
    %v6881 = vunpack.c.l.b16 %v6568
    %v6882 = vunpack.c.h.b16 %v6568
    %v6883 = vunpack.c.l.b16 %v6569
    %v6884 = vunpack.c.h.b16 %v6569
    %v6885 = vunpack.c.l.b16 %v6570
    %v6886 = vunpack.c.h.b16 %v6570
    %v6887 = vunpack.c.l.b16 %v6571
    %v6888 = vunpack.c.h.b16 %v6571
    %v6889 = vunpack.c.l.b16 %v6572
    %v6890 = vunpack.c.h.b16 %v6572
    %v6891 = vunpack.c.l.b16 %v6573
    %v6892 = vunpack.c.h.b16 %v6573
    %v6893 = vunpack.c.l.b16 %v6574
    %v6894 = vunpack.c.h.b16 %v6574
    %v6895 = vunpack.c.l.b16 %v6575
    %v6896 = vunpack.c.h.b16 %v6575
    %v6897 = vunpack.c.l.b16 %v6576
    %v6898 = vunpack.c.h.b16 %v6576
    %v6899 = vunpack.c.l.b16 %v6577
    %v6900 = vunpack.c.h.b16 %v6577
    %v6901 = vunpack.c.l.b16 %v6578
    %v6902 = vunpack.c.h.b16 %v6578
    %v6903 = vunpack.c.l.b16 %v6579
    %v6904 = vunpack.c.h.b16 %v6579
    %v6905 = vunpack.c.l.b16 %v6580
    %v6906 = vunpack.c.h.b16 %v6580
    %v6907 = vunpack.c.l.b16 %v6581
    %v6908 = vunpack.c.h.b16 %v6581
    %v6909 = vunpack.c.l.b16 %v6582
    %v6910 = vunpack.c.h.b16 %v6582
    %v6911 = vunpack.c.l.b16 %v6583
    %v6912 = vunpack.c.h.b16 %v6583
    %v6913 = vunpack.c.l.b16 %v6584
    %v6914 = vunpack.c.h.b16 %v6584
    %v6915 = vunpack.c.l.b16 %v6585
    %v6916 = vunpack.c.h.b16 %v6585
    %v6917 = vunpack.c.l.b16 %v6586
    %v6918 = vunpack.c.h.b16 %v6586
    %v6919 = vunpack.c.l.b16 %v6587
    %v6920 = vunpack.c.h.b16 %v6587
    %v6921 = vunpack.c.l.b16 %v6588
    %v6922 = vunpack.c.h.b16 %v6588
    %v6923 = vunpack.c.l.b16 %v6589
    %v6924 = vunpack.c.h.b16 %v6589
    %v6925 = vunpack.c.l.b16 %v6590
    %v6926 = vunpack.c.h.b16 %v6590
    %v6927 = vunpack.c.l.b16 %v6591
    %v6928 = vunpack.c.h.b16 %v6591
    %v6929 = vunpack.c.l.b16 %v6592
    %v6930 = vunpack.c.h.b16 %v6592
    %v6931 = vunpack.c.l.b16 %v6593
    %v6932 = vunpack.c.h.b16 %v6593
    %v6933 = vunpack.c.l.b16 %v6594
    %v6934 = vunpack.c.h.b16 %v6594
    %v6935 = vunpack.c.l.b16 %v6595
    %v6936 = vunpack.c.h.b16 %v6595
    %v6937 = vunpack.c.l.b16 %v6596
    %v6938 = vunpack.c.h.b16 %v6596
    %v6939 = vunpack.c.l.b16 %v6597
    %v6940 = vunpack.c.h.b16 %v6597
    %v6941 = vunpack.c.l.b16 %v6598
    %v6942 = vunpack.c.h.b16 %v6598
    %v6943 = vunpack.c.l.b16 %v6599
    %v6944 = vunpack.c.h.b16 %v6599
    %v6945 = vunpack.c.l.b16 %v6600
    %v6946 = vunpack.c.h.b16 %v6600
    %v6947 = vunpack.c.l.b16 %v6601
    %v6948 = vunpack.c.h.b16 %v6601
    %v6949 = vunpack.c.l.b16 %v6602
    %v6950 = vunpack.c.h.b16 %v6602
    %v6951 = vunpack.c.l.b16 %v6603
    %v6952 = vunpack.c.h.b16 %v6603
    %v6953 = vunpack.c.l.b16 %v6604
    %v6954 = vunpack.c.h.b16 %v6604
    %v6955 = vunpack.c.l.b16 %v6605
    %v6956 = vunpack.c.h.b16 %v6605
    %v6957 = vunpack.c.l.b16 %v6606
    %v6958 = vunpack.c.h.b16 %v6606
    %v6959 = vunpack.c.l.b16 %v6607
    %v6960 = vunpack.c.h.b16 %v6607
    %v6961 = vunpack.c.l.b16 %v6608
    %v6962 = vunpack.c.h.b16 %v6608
    %v6963 = vunpack.c.l.b16 %v6609
    %v6964 = vunpack.c.h.b16 %v6609
    %v6965 = vunpack.c.l.b16 %v6610
    %v6966 = vunpack.c.h.b16 %v6610
    %v6967 = vunpack.c.l.b16 %v6611
    %v6968 = vunpack.c.h.b16 %v6611
    %v6969 = vunpack.c.l.b16 %v6612
    %v6970 = vunpack.c.h.b16 %v6612
    %v6971 = vunpack.c.l.b16 %v6613
    %v6972 = vunpack.c.h.b16 %v6613
    %v6973 = vunpack.c.l.b16 %v6614
    %v6974 = vunpack.c.h.b16 %v6614
    %v6975 = vunpack.c.l.b16 %v6615
    %v6976 = vunpack.c.h.b16 %v6615
    %v6977 = vunpack.c.l.b16 %v6616
    %v6978 = vunpack.c.h.b16 %v6616
    %v6979 = vunpack.c.l.b16 %v6617
    %v6980 = vunpack.c.h.b16 %v6617
    %v6981 = vunpack.c.l.b16 %v6618
    %v6982 = vunpack.c.h.b16 %v6618
    %v6983 = vunpack.c.l.b16 %v6619
    %v6984 = vunpack.c.h.b16 %v6619
    %v6985 = vunpack.c.l.b16 %v6620
    %v6986 = vunpack.c.h.b16 %v6620
    %v6987 = vunpack.c.l.b16 %v6621
    %v6988 = vunpack.c.h.b16 %v6621
    %v6989 = vunpack.c.l.b16 %v6622
    %v6990 = vunpack.c.h.b16 %v6622
    %v6991 = vunpack.c.l.b16 %v6623
    %v6992 = vunpack.c.h.b16 %v6623
    %v6993 = vunpack.c.l.b16 %v6624
    %v6994 = vunpack.c.h.b16 %v6624
    %v6995 = vunpack.c.l.b16 %v6625
    %v6996 = vunpack.c.h.b16 %v6625
    %v6997 = vunpack.c.l.b16 %v6626
    %v6998 = vunpack.c.h.b16 %v6626
    %v6999 = vunpack.c.l.b16 %v6627
    %v7000 = vunpack.c.h.b16 %v6627
    %v7001 = vunpack.c.l.b16 %v6628
    %v7002 = vunpack.c.h.b16 %v6628
    %v7003 = vunpack.c.l.b16 %v6629
    %v7004 = vunpack.c.h.b16 %v6629
    %v7005 = vunpack.c.l.b16 %v6630
    %v7006 = vunpack.c.h.b16 %v6630
    %v7007 = vunpack.c.l.b16 %v6631
    %v7008 = vunpack.c.h.b16 %v6631
    %v7009 = vunpack.c.l.b16 %v6632
    %v7010 = vunpack.c.h.b16 %v6632
    %v7011 = vunpack.c.l.b16 %v6633
    %v7012 = vunpack.c.h.b16 %v6633
    %v7013 = vunpack.c.l.b16 %v6634
    %v7014 = vunpack.c.h.b16 %v6634
    %v7015 = vunpack.c.l.b16 %v6635
    %v7016 = vunpack.c.h.b16 %v6635
    %v7017 = vunpack.c.l.b16 %v6636
    %v7018 = vunpack.c.h.b16 %v6636
    %v7019 = vunpack.c.l.b16 %v6637
    %v7020 = vunpack.c.h.b16 %v6637
    %v7021 = vunpack.c.l.b16 %v6638
    %v7022 = vunpack.c.h.b16 %v6638
    %v7023 = vunpack.c.l.b16 %v6639
    %v7024 = vunpack.c.h.b16 %v6639
    %v7025 = vunpack.c.l.b16 %v6640
    %v7026 = vunpack.c.h.b16 %v6640
    %v7027 = vunpack.c.l.b16 %v6641
    %v7028 = vunpack.c.h.b16 %v6641
    %v7029 = vunpack.c.l.b16 %v6642
    %v7030 = vunpack.c.h.b16 %v6642
    %v7031 = vunpack.c.l.b16 %v6643
    %v7032 = vunpack.c.h.b16 %v6643
    %v7033 = vunpack.c.l.b16 %v6644
    %v7034 = vunpack.c.h.b16 %v6644
    %v7035 = vunpack.c.l.b16 %v6645
    %v7036 = vunpack.c.h.b16 %v6645
    %v7037 = vunpack.c.l.b16 %v6646
    %v7038 = vunpack.c.h.b16 %v6646
    %v7039 = vunpack.c.l.b16 %v6647
    %v7040 = vunpack.c.h.b16 %v6647
    %v7041 = vunpack.c.l.b16 %v6648
    %v7042 = vunpack.c.h.b16 %v6648
    %v7043 = vunpack.c.l.b16 %v6649
    %v7044 = vunpack.c.h.b16 %v6649
    %v7045 = vunpack.c.l.b16 %v6650
    %v7046 = vunpack.c.h.b16 %v6650
    %v7047 = vunpack.c.l.b16 %v6651
    %v7048 = vunpack.c.h.b16 %v6651
    %v7049 = vunpack.c.l.b16 %v6652
    %v7050 = vunpack.c.h.b16 %v6652
    %v7051 = vpack.c.b16 %v6797, %v6795
    %v7052 = vpack.c.b16 %v6798, %v6796
    %v7053 = vpack.c.b16 %v6801, %v6799
    %v7054 = vpack.c.b16 %v6802, %v6800
    %v7055 = vpack.c.b16 %v6805, %v6803
    %v7056 = vpack.c.b16 %v6806, %v6804
    %v7057 = vpack.c.b16 %v6809, %v6807
    %v7058 = vpack.c.b16 %v6810, %v6808
    %v7059 = vpack.c.b16 %v6813, %v6811
    %v7060 = vpack.c.b16 %v6814, %v6812
    %v7061 = vpack.c.b16 %v6817, %v6815
    %v7062 = vpack.c.b16 %v6818, %v6816
    %v7063 = vpack.c.b16 %v6821, %v6819
    %v7064 = vpack.c.b16 %v6822, %v6820
    %v7065 = vpack.c.b16 %v6825, %v6823
    %v7066 = vpack.c.b16 %v6826, %v6824
    %v7067 = vpack.c.b16 %v6829, %v6827
    %v7068 = vpack.c.b16 %v6830, %v6828
    %v7069 = vpack.c.b16 %v6833, %v6831
    %v7070 = vpack.c.b16 %v6834, %v6832
    %v7071 = vpack.c.b16 %v6837, %v6835
    %v7072 = vpack.c.b16 %v6838, %v6836
    %v7073 = vpack.c.b16 %v6841, %v6839
    %v7074 = vpack.c.b16 %v6842, %v6840
    %v7075 = vpack.c.b16 %v6845, %v6843
    %v7076 = vpack.c.b16 %v6846, %v6844
    %v7077 = vpack.c.b16 %v6849, %v6847
    %v7078 = vpack.c.b16 %v6850, %v6848
    %v7079 = vpack.c.b16 %v6853, %v6851
    %v7080 = vpack.c.b16 %v6854, %v6852
    %v7081 = vpack.c.b16 %v6857, %v6855
    %v7082 = vpack.c.b16 %v6858, %v6856
    %v7083 = vpack.c.b16 %v6861, %v6859
    %v7084 = vpack.c.b16 %v6862, %v6860
    %v7085 = vpack.c.b16 %v6865, %v6863
    %v7086 = vpack.c.b16 %v6866, %v6864
    %v7087 = vpack.c.b16 %v6869, %v6867
    %v7088 = vpack.c.b16 %v6870, %v6868
    %v7089 = vpack.c.b16 %v6873, %v6871
    %v7090 = vpack.c.b16 %v6874, %v6872
    %v7091 = vpack.c.b16 %v6877, %v6875
    %v7092 = vpack.c.b16 %v6878, %v6876
    %v7093 = vpack.c.b16 %v6881, %v6879
    %v7094 = vpack.c.b16 %v6882, %v6880
    %v7095 = vpack.c.b16 %v6885, %v6883
    %v7096 = vpack.c.b16 %v6886, %v6884
    %v7097 = vpack.c.b16 %v6889, %v6887
    %v7098 = vpack.c.b16 %v6890, %v6888
    %v7099 = vpack.c.b16 %v6893, %v6891
    %v7100 = vpack.c.b16 %v6894, %v6892
    %v7101 = vpack.c.b16 %v6897, %v6895
    %v7102 = vpack.c.b16 %v6898, %v6896
    %v7103 = vpack.c.b16 %v6901, %v6899
    %v7104 = vpack.c.b16 %v6902, %v6900
    %v7105 = vpack.c.b16 %v6905, %v6903
    %v7106 = vpack.c.b16 %v6906, %v6904
    %v7107 = vpack.c.b16 %v6909, %v6907
    %v7108 = vpack.c.b16 %v6910, %v6908
    %v7109 = vpack.c.b16 %v6913, %v6911
    %v7110 = vpack.c.b16 %v6914, %v6912
    %v7111 = vpack.c.b16 %v6917, %v6915
    %v7112 = vpack.c.b16 %v6918, %v6916
    %v7113 = vpack.c.b16 %v6921, %v6919
    %v7114 = vpack.c.b16 %v6922, %v6920
    %v7115 = vpack.c.b16 %v6925, %v6923
    %v7116 = vpack.c.b16 %v6926, %v6924
    %v7117 = vpack.c.b16 %v6929, %v6927
    %v7118 = vpack.c.b16 %v6930, %v6928
    %v7119 = vpack.c.b16 %v6933, %v6931
    %v7120 = vpack.c.b16 %v6934, %v6932
    %v7121 = vpack.c.b16 %v6937, %v6935
    %v7122 = vpack.c.b16 %v6938, %v6936
    %v7123 = vpack.c.b16 %v6941, %v6939
    %v7124 = vpack.c.b16 %v6942, %v6940
    %v7125 = vpack.c.b16 %v6945, %v6943
    %v7126 = vpack.c.b16 %v6946, %v6944
    %v7127 = vpack.c.b16 %v6949, %v6947
    %v7128 = vpack.c.b16 %v6950, %v6948
    %v7129 = vpack.c.b16 %v6953, %v6951
    %v7130 = vpack.c.b16 %v6954, %v6952
    %v7131 = vpack.c.b16 %v6957, %v6955
    %v7132 = vpack.c.b16 %v6958, %v6956
    %v7133 = vpack.c.b16 %v6961, %v6959
    %v7134 = vpack.c.b16 %v6962, %v6960
    %v7135 = vpack.c.b16 %v6965, %v6963
    %v7136 = vpack.c.b16 %v6966, %v6964
    %v7137 = vpack.c.b16 %v6969, %v6967
    %v7138 = vpack.c.b16 %v6970, %v6968
    %v7139 = vpack.c.b16 %v6973, %v6971
    %v7140 = vpack.c.b16 %v6974, %v6972
    %v7141 = vpack.c.b16 %v6977, %v6975
    %v7142 = vpack.c.b16 %v6978, %v6976
    %v7143 = vpack.c.b16 %v6981, %v6979
    %v7144 = vpack.c.b16 %v6982, %v6980
    %v7145 = vpack.c.b16 %v6985, %v6983
    %v7146 = vpack.c.b16 %v6986, %v6984
    %v7147 = vpack.c.b16 %v6989, %v6987
    %v7148 = vpack.c.b16 %v6990, %v6988
    %v7149 = vpack.c.b16 %v6993, %v6991
    %v7150 = vpack.c.b16 %v6994, %v6992
    %v7151 = vpack.c.b16 %v6997, %v6995
    %v7152 = vpack.c.b16 %v6998, %v6996
    %v7153 = vpack.c.b16 %v7001, %v6999
    %v7154 = vpack.c.b16 %v7002, %v7000
    %v7155 = vpack.c.b16 %v7005, %v7003
    %v7156 = vpack.c.b16 %v7006, %v7004
    %v7157 = vpack.c.b16 %v7009, %v7007
    %v7158 = vpack.c.b16 %v7010, %v7008
    %v7159 = vpack.c.b16 %v7013, %v7011
    %v7160 = vpack.c.b16 %v7014, %v7012
    %v7161 = vpack.c.b16 %v7017, %v7015
    %v7162 = vpack.c.b16 %v7018, %v7016
    %v7163 = vpack.c.b16 %v7021, %v7019
    %v7164 = vpack.c.b16 %v7022, %v7020
    %v7165 = vpack.c.b16 %v7025, %v7023
    %v7166 = vpack.c.b16 %v7026, %v7024
    %v7167 = vpack.c.b16 %v7029, %v7027
    %v7168 = vpack.c.b16 %v7030, %v7028
    %v7169 = vpack.c.b16 %v7033, %v7031
    %v7170 = vpack.c.b16 %v7034, %v7032
    %v7171 = vpack.c.b16 %v7037, %v7035
    %v7172 = vpack.c.b16 %v7038, %v7036
    %v7173 = vpack.c.b16 %v7041, %v7039
    %v7174 = vpack.c.b16 %v7042, %v7040
    %v7175 = vpack.c.b16 %v7045, %v7043
    %v7176 = vpack.c.b16 %v7046, %v7044
    %v7177 = vpack.c.b16 %v7049, %v7047
    %v7178 = vpack.c.b16 %v7050, %v7048
    %7307 = vmatpush.bf16.msra.mxu0 %v7065
    %7308 = vmatpush.bf16.msra.mxu0 %v7063
    %7309 = vmatpush.bf16.msra.mxu0 %v7061
    %7310 = vmatpush.bf16.msra.mxu0 %v7059
    %7311 = vmatpush.bf16.msra.mxu0 %v7057
    %7312 = vmatpush.bf16.msra.mxu0 %v7055
    %7313 = vmatpush.bf16.msra.mxu0 %v7053
    %7314 = vmatpush.bf16.msra.mxu0 %v7051
    %7315 = vmatmul.bf16.gmra.mxu0 %v6654
    %v7316 = vpop.f32.mrf.mxu0
    %v7317 = vadd.f32 %v6663, %v7316
    %v7318 = vpop.f32.mrf.mxu0
    %7319 = vdwg.mxu0
    %7320 = vmatpush.bf16.msra.mxu0 %v7081
    %7321 = vmatpush.bf16.msra.mxu0 %v7079
    %7322 = vmatpush.bf16.msra.mxu0 %v7077
    %7323 = vmatpush.bf16.msra.mxu0 %v7075
    %7324 = vmatpush.bf16.msra.mxu0 %v7073
    %7325 = vmatpush.bf16.msra.mxu0 %v7071
    %7326 = vmatpush.bf16.msra.mxu0 %v7069
    %7327 = vmatpush.bf16.msra.mxu0 %v7067
    %7328 = vmatmul.bf16.gmra.mxu0 %v6655
    %v7329 = vpop.f32.mrf.mxu0
    %v7330 = vadd.f32 %v7317, %v7329
    %v7331 = vpop.f32.mrf.mxu0
    %7332 = vdwg.mxu0
    %7333 = vmatpush.bf16.msra.mxu0 %v7097
    %7334 = vmatpush.bf16.msra.mxu0 %v7095
    %7335 = vmatpush.bf16.msra.mxu0 %v7093
    %7336 = vmatpush.bf16.msra.mxu0 %v7091
    %7337 = vmatpush.bf16.msra.mxu0 %v7089
    %7338 = vmatpush.bf16.msra.mxu0 %v7087
    %7339 = vmatpush.bf16.msra.mxu0 %v7085
    %7340 = vmatpush.bf16.msra.mxu0 %v7083
    %7341 = vmatmul.bf16.gmra.mxu0 %v6656
    %v7342 = vpop.f32.mrf.mxu0
    %v7343 = vadd.f32 %v7330, %v7342
    %v7344 = vpop.f32.mrf.mxu0
    %7345 = vdwg.mxu0
    %7346 = vmatpush.bf16.msra.mxu0 %v7113
    %7347 = vmatpush.bf16.msra.mxu0 %v7111
    %7348 = vmatpush.bf16.msra.mxu0 %v7109
    %7349 = vmatpush.bf16.msra.mxu0 %v7107
    %7350 = vmatpush.bf16.msra.mxu0 %v7105
    %7351 = vmatpush.bf16.msra.mxu0 %v7103
    %7352 = vmatpush.bf16.msra.mxu0 %v7101
    %7353 = vmatpush.bf16.msra.mxu0 %v7099
    %7354 = vmatmul.bf16.gmra.mxu0 %v6657
    %v7355 = vpop.f32.mrf.mxu0
    %v7356 = vadd.f32 %v7343, %v7355
    %v7357 = vpop.f32.mrf.mxu0
    %7358 = vdwg.mxu0
    %7359 = vmatpush.bf16.msra.mxu0 %v7129
    %7360 = vmatpush.bf16.msra.mxu0 %v7127
    %7361 = vmatpush.bf16.msra.mxu0 %v7125
    %7362 = vmatpush.bf16.msra.mxu0 %v7123
    %7363 = vmatpush.bf16.msra.mxu0 %v7121
    %7364 = vmatpush.bf16.msra.mxu0 %v7119
    %7365 = vmatpush.bf16.msra.mxu0 %v7117
    %7366 = vmatpush.bf16.msra.mxu0 %v7115
    %7367 = vmatmul.bf16.gmra.mxu0 %v6658
    %v7368 = vpop.f32.mrf.mxu0
    %v7369 = vadd.f32 %v7356, %v7368
    %v7370 = vpop.f32.mrf.mxu0
    %7371 = vdwg.mxu0
    %7372 = vmatpush.bf16.msra.mxu0 %v7145
    %7373 = vmatpush.bf16.msra.mxu0 %v7143
    %7374 = vmatpush.bf16.msra.mxu0 %v7141
    %7375 = vmatpush.bf16.msra.mxu0 %v7139
    %7376 = vmatpush.bf16.msra.mxu0 %v7137
    %7377 = vmatpush.bf16.msra.mxu0 %v7135
    %7378 = vmatpush.bf16.msra.mxu0 %v7133
    %7379 = vmatpush.bf16.msra.mxu0 %v7131
    %7380 = vmatmul.bf16.gmra.mxu0 %v6659
    %v7381 = vpop.f32.mrf.mxu0
    %v7382 = vadd.f32 %v7369, %v7381
    %v7383 = vpop.f32.mrf.mxu0
    %7384 = vdwg.mxu0
    %7385 = vmatpush.bf16.msra.mxu0 %v7161
    %7386 = vmatpush.bf16.msra.mxu0 %v7159
    %7387 = vmatpush.bf16.msra.mxu0 %v7157
    %7388 = vmatpush.bf16.msra.mxu0 %v7155
    %7389 = vmatpush.bf16.msra.mxu0 %v7153
    %7390 = vmatpush.bf16.msra.mxu0 %v7151
    %7391 = vmatpush.bf16.msra.mxu0 %v7149
    %7392 = vmatpush.bf16.msra.mxu0 %v7147
    %7393 = vmatmul.bf16.gmra.mxu0 %v6660
    %v7394 = vpop.f32.mrf.mxu0
    %v7395 = vadd.f32 %v7382, %v7394
    %v7396 = vpop.f32.mrf.mxu0
    %7397 = vdwg.mxu0
    %7398 = vmatpush.bf16.msra.mxu0 %v7177
    %7399 = vmatpush.bf16.msra.mxu0 %v7175
    %7400 = vmatpush.bf16.msra.mxu0 %v7173
    %7401 = vmatpush.bf16.msra.mxu0 %v7171
    %7402 = vmatpush.bf16.msra.mxu0 %v7169
    %7403 = vmatpush.bf16.msra.mxu0 %v7167
    %7404 = vmatpush.bf16.msra.mxu0 %v7165
    %7405 = vmatpush.bf16.msra.mxu0 %v7163
    %7406 = vmatmul.bf16.gmra.mxu0 %v6661
    %v7407 = vpop.f32.mrf.mxu0
    %v7408 = vadd.f32 %v7395, %v7407
    %v7409 = vpop.f32.mrf.mxu0
    %7410 = vdwg.mxu0
    %7411 = vmatpush.bf16.msra.mxu0 %v7066
    %7412 = vmatpush.bf16.msra.mxu0 %v7064
    %7413 = vmatpush.bf16.msra.mxu0 %v7062
    %7414 = vmatpush.bf16.msra.mxu0 %v7060
    %7415 = vmatpush.bf16.msra.mxu0 %v7058
    %7416 = vmatpush.bf16.msra.mxu0 %v7056
    %7417 = vmatpush.bf16.msra.mxu0 %v7054
    %7418 = vmatpush.bf16.msra.mxu0 %v7052
    %7419 = vmatmul.bf16.gmra.mxu0 %v6654
    %v7420 = vpop.f32.mrf.mxu0
    %v7421 = vadd.f32 %v6664, %v7420
    %v7422 = vpop.f32.mrf.mxu0
    %7423 = vdwg.mxu0
    %7424 = vmatpush.bf16.msra.mxu0 %v7082
    %7425 = vmatpush.bf16.msra.mxu0 %v7080
    %7426 = vmatpush.bf16.msra.mxu0 %v7078
    %7427 = vmatpush.bf16.msra.mxu0 %v7076
    %7428 = vmatpush.bf16.msra.mxu0 %v7074
    %7429 = vmatpush.bf16.msra.mxu0 %v7072
    %7430 = vmatpush.bf16.msra.mxu0 %v7070
    %7431 = vmatpush.bf16.msra.mxu0 %v7068
    %7432 = vmatmul.bf16.gmra.mxu0 %v6655
    %v7433 = vpop.f32.mrf.mxu0
    %v7434 = vadd.f32 %v7421, %v7433
    %v7435 = vpop.f32.mrf.mxu0
    %7436 = vdwg.mxu0
    %7437 = vmatpush.bf16.msra.mxu0 %v7098
    %7438 = vmatpush.bf16.msra.mxu0 %v7096
    %7439 = vmatpush.bf16.msra.mxu0 %v7094
    %7440 = vmatpush.bf16.msra.mxu0 %v7092
    %7441 = vmatpush.bf16.msra.mxu0 %v7090
    %7442 = vmatpush.bf16.msra.mxu0 %v7088
    %7443 = vmatpush.bf16.msra.mxu0 %v7086
    %7444 = vmatpush.bf16.msra.mxu0 %v7084
    %7445 = vmatmul.bf16.gmra.mxu0 %v6656
    %v7446 = vpop.f32.mrf.mxu0
    %v7447 = vadd.f32 %v7434, %v7446
    %v7448 = vpop.f32.mrf.mxu0
    %7449 = vdwg.mxu0
    %7450 = vmatpush.bf16.msra.mxu0 %v7114
    %7451 = vmatpush.bf16.msra.mxu0 %v7112
    %7452 = vmatpush.bf16.msra.mxu0 %v7110
    %7453 = vmatpush.bf16.msra.mxu0 %v7108
    %7454 = vmatpush.bf16.msra.mxu0 %v7106
    %7455 = vmatpush.bf16.msra.mxu0 %v7104
    %7456 = vmatpush.bf16.msra.mxu0 %v7102
    %7457 = vmatpush.bf16.msra.mxu0 %v7100
    %7458 = vmatmul.bf16.gmra.mxu0 %v6657
    %v7459 = vpop.f32.mrf.mxu0
    %v7460 = vadd.f32 %v7447, %v7459
    %v7461 = vpop.f32.mrf.mxu0
    %7462 = vdwg.mxu0
    %7463 = vmatpush.bf16.msra.mxu0 %v7130
    %7464 = vmatpush.bf16.msra.mxu0 %v7128
    %7465 = vmatpush.bf16.msra.mxu0 %v7126
    %7466 = vmatpush.bf16.msra.mxu0 %v7124
    %7467 = vmatpush.bf16.msra.mxu0 %v7122
    %7468 = vmatpush.bf16.msra.mxu0 %v7120
    %7469 = vmatpush.bf16.msra.mxu0 %v7118
    %7470 = vmatpush.bf16.msra.mxu0 %v7116
    %7471 = vmatmul.bf16.gmra.mxu0 %v6658
    %v7472 = vpop.f32.mrf.mxu0
    %v7473 = vadd.f32 %v7460, %v7472
    %v7474 = vpop.f32.mrf.mxu0
    %7475 = vdwg.mxu0
    %7476 = vmatpush.bf16.msra.mxu0 %v7146
    %7477 = vmatpush.bf16.msra.mxu0 %v7144
    %7478 = vmatpush.bf16.msra.mxu0 %v7142
    %7479 = vmatpush.bf16.msra.mxu0 %v7140
    %7480 = vmatpush.bf16.msra.mxu0 %v7138
    %7481 = vmatpush.bf16.msra.mxu0 %v7136
    %7482 = vmatpush.bf16.msra.mxu0 %v7134
    %7483 = vmatpush.bf16.msra.mxu0 %v7132
    %7484 = vmatmul.bf16.gmra.mxu0 %v6659
    %v7485 = vpop.f32.mrf.mxu0
    %v7486 = vadd.f32 %v7473, %v7485
    %v7487 = vpop.f32.mrf.mxu0
    %7488 = vdwg.mxu0
    %7489 = vmatpush.bf16.msra.mxu0 %v7162
    %7490 = vmatpush.bf16.msra.mxu0 %v7160
    %7491 = vmatpush.bf16.msra.mxu0 %v7158
    %7492 = vmatpush.bf16.msra.mxu0 %v7156
    %7493 = vmatpush.bf16.msra.mxu0 %v7154
    %7494 = vmatpush.bf16.msra.mxu0 %v7152
    %7495 = vmatpush.bf16.msra.mxu0 %v7150
    %7496 = vmatpush.bf16.msra.mxu0 %v7148
    %7497 = vmatmul.bf16.gmra.mxu0 %v6660
    %v7498 = vpop.f32.mrf.mxu0
    %v7499 = vadd.f32 %v7486, %v7498
    %v7500 = vpop.f32.mrf.mxu0
    %7501 = vdwg.mxu0
    %7502 = vmatpush.bf16.msra.mxu0 %v7178
    %7503 = vmatpush.bf16.msra.mxu0 %v7176
    %7504 = vmatpush.bf16.msra.mxu0 %v7174
    %7505 = vmatpush.bf16.msra.mxu0 %v7172
    %7506 = vmatpush.bf16.msra.mxu0 %v7170
    %7507 = vmatpush.bf16.msra.mxu0 %v7168
    %7508 = vmatpush.bf16.msra.mxu0 %v7166
    %7509 = vmatpush.bf16.msra.mxu0 %v7164
    %7510 = vmatmul.bf16.gmra.mxu0 %v6661
    %v7511 = vpop.f32.mrf.mxu0
    %v7512 = vadd.f32 %v7499, %v7511
    %v7513 = vpop.f32.mrf.mxu0
    %7514 = vdwg.mxu0
    %7515 = vst [vmem:[#allocation25] sm:$0xff] %v7408
    %7516 = vst [vmem:[#allocation25 + $0x8] sm:$0xff] %v7512
    // Predicated region
    $region126: #{tpu_custom_call.1} parent=1 // pred_check
      _
    $region127: #{tpu_custom_call.1} parent=1 // pred_check_branch
      %7518 = sbr.rel (0) target = $region129
    $region128: #{tpu_custom_call.1} parent=1 // pred_region
      %7520 = vsyncadd [#allocation4], 0
      %s7522 = sshll.u32 [#allocation25], 4
      %s7523 = int_to_ptr.vmem [resolvable:$true] %s7522
      %s7524 = sshll.u32 %s17, 4
      %s7525 = int_to_ptr.hbm [resolvable:$true] %s7524
      %7527 = dma.vmem_to_hbm [thread:$0]  %s7523, 256, %s7525, [#allocation4]
    $region129: #{tpu_custom_call.1} parent=1 // pred_fallthru
      _
    // Predicated region
    $region130: #{tpu_custom_call.1} parent=1 // pred_check
      _
    $region131: #{tpu_custom_call.1} parent=1 // pred_check_branch
      %7529 = sbr.rel (0) target = $region133
    $region132: #{tpu_custom_call.1} parent=1 // pred_region
      %7531 = dma.done [#allocation4], 256
    $region133: #{tpu_custom_call.1} parent=1 // pred_fallthru
      _
    %7532 = vsyncpa [#allocation3], 1
    %7533 = vsyncpa [#allocation6], 1
    %7534 = vsyncpa [#allocation9], 1
    %7535 = vsyncpa [#allocation12], 1
    %7536 = vsyncpa [#allocation15], 1
    %7537 = vsyncpa [#allocation18], 1
    %7538 = vsyncpa [#allocation21], 1
    %7539 = vsyncpa [#allocation24], 1
    %7540 = vsyncpa [#allocation4], 1

</llo_original>
